<compile_context>
chip_gen: v7x
topology: tpu7x:2x2x1
jax: 0.10.0
libtpu: 0.0.40
codegen_flags: <defaults>
</compile_context>

<pallas_src>
import numpy as np

import jax
import jax.numpy as jnp
from jax import lax
from jax.experimental import pallas as pl
from jax.experimental.pallas import tpu as pltpu


# -----------------------------------------------------------------------------
# Layout constants.
#   Input:  lane r = h*32 + w                     (32x32, extent 1024)
#   Conv1:  lane s = oh*32 + ow                   (28x28, extent 892)
#   Pool1:  dense lane t = i*14 + j               (14x14, extent 196)
#   Conv2:  lane u*14 + v                         (10x10, extent 136)
# Batch rides on sublanes: activation row index = channel*TB + image.
# -----------------------------------------------------------------------------
TB = 8                       # images per grid step (sublane tile)
IMG = 32
S0 = IMG * IMG               # 1024 input lanes
C1_EXT = 27 * IMG + 27 + 1   # 892  conv1 output lane extent
P1_N = 14 * 14               # 196  dense pool1 lanes
C2_EXT = 9 * 14 + 9 + 1      # 136  conv2 output lane extent


def _sigmoid(v):
    return 1.0 / (1.0 + jnp.exp(-v))


# -----------------------------------------------------------------------------
# Fused kernel: TB images per grid step, all layers in one body.
# -----------------------------------------------------------------------------
def _lenet5_kernel(x_ref, w1_ref, b1_ref, p1_ref, w2_ref, b2_ref,
                   g_ref, f1b_ref, f2w_ref, f2b_ref, f3w_ref, f3b_ref,
                   out_ref):
    f32 = jnp.float32
    x = x_ref[...]                                           # (TB, 1024)

    # ---- Conv1 (1 -> 6, k=5) + sigmoid: 25-tap im2col + ONE MXU matmul -----
    # x_cols rows = tap*TB + image; w1_ref is block-diagonal over the image.
    x_cols = jnp.concatenate(
        [x[:, kh * IMG + kw: kh * IMG + kw + C1_EXT]
         for kh in range(5) for kw in range(5)], axis=0)     # (25*TB, 892)
    a1 = _sigmoid(jnp.dot(w1_ref[...], x_cols,
                          preferred_element_type=f32)
                  + b1_ref[...])                             # (6*TB, 892)

    # ---- AvgPool1 (2x2/2) + dense 14x14 compaction: ONE selection matmul ---
    a2 = jnp.dot(a1, p1_ref[...], preferred_element_type=f32)   # (6*TB, 196)

    # ---- Conv2 (6 -> 16, k=5) + sigmoid: 25-tap im2col + ONE MXU matmul ----
    # a2_cols rows = tap*(6*TB) + channel*TB + image (block-diag weight).
    a2_cols = jnp.concatenate(
        [a2[:, kh * 14 + kw: kh * 14 + kw + C2_EXT]
         for kh in range(5) for kw in range(5)], axis=0)     # (25*6*TB, 136)
    a3 = _sigmoid(jnp.dot(w2_ref[...], a2_cols,
                          preferred_element_type=f32)
                  + b2_ref[...])                             # (16*TB, 136)

    # ---- AvgPool2 + NCHW flatten + Fc_1 folded into G (16, 136, 120) -------
    # 16 sublane-tile-aligned (TB, 136)@(136, 120) accumulating matmuls.
    acc = jnp.zeros((TB, 120), f32)
    for c in range(16):
        acc = acc + jnp.dot(a3[c * TB:(c + 1) * TB, :], g_ref[c],
                            preferred_element_type=f32)
    z = _sigmoid(acc + f1b_ref[...])                         # (TB, 120)

    # ---- Fc_2 / Fc_3 (output lane-padded to 128) ----------------------------
    z = _sigmoid(jnp.dot(z, f2w_ref[...], preferred_element_type=f32)
                 + f2b_ref[...])                             # (TB, 84)
    out_ref[...] = (jnp.dot(z, f3w_ref[...], preferred_element_type=f32)
                    + f3b_ref[...])                          # (TB, 128)


# -----------------------------------------------------------------------------
# One-time host-side parameter re-layout (outside the hot path).
# -----------------------------------------------------------------------------
def prepare_params(params):
    w1, b1, w2, b2, fw1, fb1, fw2, fb2, fw3, fb3 = [
        np.asarray(p, np.float32) for p in params]
    nc = fw3.shape[0]
    nout = ((nc + 127) // 128) * 128
    eye = np.eye(TB, dtype=np.float32)

    # Conv1 block-diagonal weight: W1[c*TB+b, t*TB+b] = w1[c, t]
    w1f = w1.reshape(6, 25)
    w1blk = np.einsum('ct,bd->cbtd', w1f, eye).reshape(6 * TB, 25 * TB)
    b1rep = np.repeat(b1, TB).reshape(6 * TB, 1)

    # Pool1 + dense compaction selection matrix (892, 196).
    p1 = np.zeros((C1_EXT, P1_N), np.float32)
    for i in range(14):
        for j in range(14):
            base = 64 * i + 2 * j
            for d in (0, 1, IMG, IMG + 1):
                p1[base + d, i * 14 + j] = 0.25

    # Conv2 block-diagonal weight: W2[co*TB+b, t*(6*TB)+ci*TB+b] = w2[co,ci,t]
    w2r = w2.transpose(2, 3, 1, 0).reshape(25, 6, 16)        # [tap, ci, co]
    w2blk = np.einsum('tic,bd->cbtid', w2r, eye).reshape(16 * TB, 25 * 6 * TB)
    b2rep = np.repeat(b2, TB).reshape(16 * TB, 1)

    # Pool2 selection (136, 25), then fold pool2 + NCHW flatten into Fc_1:
    # G[c, s, j] = sum_p pool2sel[s, p] * fw1[j, c*25 + p]
    p2 = np.zeros((C2_EXT, 25), np.float32)
    for p in range(5):
        for q in range(5):
            base = 28 * p + 2 * q
            for d in (0, 1, 14, 15):
                p2[base + d, p * 5 + q] = 0.25
    g = np.stack([p2 @ fw1[:, c * 25:(c + 1) * 25].T for c in range(16)],
                 axis=0)                                     # (16, 136, 120)

    # Lane-dense (128-padded) classifier.
    f3w_pad = np.zeros((84, nout), np.float32)
    f3w_pad[:, :nc] = fw3.T
    f3b_pad = np.zeros((1, nout), np.float32)
    f3b_pad[0, :nc] = fb3

    prep = (w1blk, b1rep, p1, w2blk, b2rep, g,
            fb1.reshape(1, 120), np.ascontiguousarray(fw2.T),
            fb2.reshape(1, 84), f3w_pad, f3b_pad)
    return tuple(jnp.asarray(a) for a in prep)


# -----------------------------------------------------------------------------
# Forward pass: single pallas_call, grid over image blocks of TB.
# -----------------------------------------------------------------------------
def lenet5_forward(x, prep, n_classes):
    n = x.shape[0]
    nout = prep[-1].shape[-1]
    n_pad = ((n + TB - 1) // TB) * TB
    xf = x.reshape(n, S0).astype(jnp.float32)
    if n_pad != n:
        xf = jnp.pad(xf, ((0, n_pad - n), (0, 0)))

    def resident(arr):
        zeros = (0,) * arr.ndim
        return pl.BlockSpec(arr.shape, lambda i, _z=zeros: _z)

    out = pl.pallas_call(
        _lenet5_kernel,
        out_shape=jax.ShapeDtypeStruct((n_pad, nout), jnp.float32),
        grid=(n_pad // TB,),
        in_specs=[pl.BlockSpec((TB, S0), lambda i: (i, 0))]
                 + [resident(a) for a in prep],
        out_specs=pl.BlockSpec((TB, nout), lambda i: (i, 0)),
        compiler_params=pltpu.CompilerParams(
            dimension_semantics=("parallel",)),
    )(xf, *prep)
    return out[:n, :n_classes]


# -----------------------------------------------------------------------------
# Pure-JAX reference (correctness check for the Pallas path).
# -----------------------------------------------------------------------------
def lenet5_reference(x, params):
    w1, b1, w2, b2, fw1, fb1, fw2, fb2, fw3, fb3 = params
    dn = ("NCHW", "OIHW", "NCHW")

    def pool(v):
        n, c, h, w = v.shape
        return v.reshape(n, c, h // 2, 2, w // 2, 2).mean(axis=(3, 5))

    y = lax.conv_general_dilated(x, w1, (1, 1), "VALID", dimension_numbers=dn)
    y = jax.nn.sigmoid(y + b1[None, :, None, None])
    y = pool(y)
    y = lax.conv_general_dilated(y, w2, (1, 1), "VALID", dimension_numbers=dn)
    y = jax.nn.sigmoid(y + b2[None, :, None, None])
    y = pool(y)
    y = y.reshape(y.shape[0], -1)
    y = jax.nn.sigmoid(y @ fw1.T + fb1)
    y = jax.nn.sigmoid(y @ fw2.T + fb2)
    y = y @ fw3.T + fb3
    return y


# -----------------------------------------------------------------------------
# Deterministic parameter construction (PyTorch-style uniform fan-in init).
# -----------------------------------------------------------------------------
def init_params(key, n_classes):
    def u(k, shape, fan_in):
        bound = 1.0 / (fan_in ** 0.5)
        return jax.random.uniform(k, shape, jnp.float32, -bound, bound)

    ks = jax.random.split(key, 10)
    w1 = u(ks[0], (6, 1, 5, 5), 1 * 5 * 5)
    b1 = u(ks[1], (6,), 1 * 5 * 5)
    w2 = u(ks[2], (16, 6, 5, 5), 6 * 5 * 5)
    b2 = u(ks[3], (16,), 6 * 5 * 5)
    fw1 = u(ks[4], (120, 400), 400)
    fb1 = u(ks[5], (120,), 400)
    fw2 = u(ks[6], (84, 120), 120)
    fb2 = u(ks[7], (84,), 120)
    fw3 = u(ks[8], (n_classes, 84), 84)
    fb3 = u(ks[9], (n_classes,), 84)
    return (w1, b1, w2, b2, fw1, fb1, fw2, fb2, fw3, fb3)


if __name__ == "__main__":
    n_classes = 10
    key = jax.random.PRNGKey(0)
    k_x, k_p = jax.random.split(key)

    # LeNet-5 requires 32x32 single-channel input for the 16*5*5 flatten.
    # Batch of 16 -> 2 grid steps of TB=8 (keeps both v7x TensorCores busy).
    x = jax.random.normal(k_x, (16, 1, 32, 32), jnp.float32)
    params = init_params(k_p, n_classes)
    prep = prepare_params(params)          # one-time weight re-layout

    fwd = jax.jit(lenet5_forward, static_argnums=2)
    out = jax.block_until_ready(fwd(x, prep, n_classes))
    ref = jax.block_until_ready(lenet5_reference(x, params))

    assert out.shape == (16, n_classes)
    err = jnp.max(jnp.abs(out - ref))
    assert jnp.allclose(out, ref, rtol=1e-4, atol=1e-4), f"max abs err = {err}"
    print("KERNEL_OK")
</pallas_src>

<mosaic_0001>
module attributes {stable_mosaic.version = 11 : i64} {
  func.func @_lenet5_kernel(%arg0: i32, %arg1: memref<8x1024xf32, #tpu.memory_space<vmem>>, %arg2: memref<48x200xf32, #tpu.memory_space<vmem>>, %arg3: memref<48x1xf32, #tpu.memory_space<vmem>>, %arg4: memref<892x196xf32, #tpu.memory_space<vmem>>, %arg5: memref<128x1200xf32, #tpu.memory_space<vmem>>, %arg6: memref<128x1xf32, #tpu.memory_space<vmem>>, %arg7: memref<16x136x120xf32, #tpu.memory_space<vmem>>, %arg8: memref<1x120xf32, #tpu.memory_space<vmem>>, %arg9: memref<120x84xf32, #tpu.memory_space<vmem>>, %arg10: memref<1x84xf32, #tpu.memory_space<vmem>>, %arg11: memref<84x128xf32, #tpu.memory_space<vmem>>, %arg12: memref<1x128xf32, #tpu.memory_space<vmem>>, %arg13: memref<8x128xf32, #tpu.memory_space<vmem>>) attributes {dimension_semantics = [#tpu.dimension_semantics<parallel>], iteration_bounds = array<i64: 2>, scalar_prefetch = 0 : i64, scratch_operands = 0 : i64, tpu.core_type = #tpu.core_type<tc>, window_params = [{transform_indices = @transform_0, window_bounds = array<i64: 8, 1024>}, {pipeline_mode = #tpu.pipeline_mode<synchronous>, transform_indices = @transform_1, window_bounds = array<i64: 48, 200>}, {pipeline_mode = #tpu.pipeline_mode<synchronous>, transform_indices = @transform_2, window_bounds = array<i64: 48, 1>}, {pipeline_mode = #tpu.pipeline_mode<synchronous>, transform_indices = @transform_3, window_bounds = array<i64: 892, 196>}, {pipeline_mode = #tpu.pipeline_mode<synchronous>, transform_indices = @transform_4, window_bounds = array<i64: 128, 1200>}, {pipeline_mode = #tpu.pipeline_mode<synchronous>, transform_indices = @transform_5, window_bounds = array<i64: 128, 1>}, {pipeline_mode = #tpu.pipeline_mode<synchronous>, transform_indices = @transform_6, window_bounds = array<i64: 16, 136, 120>}, {pipeline_mode = #tpu.pipeline_mode<synchronous>, transform_indices = @transform_7, window_bounds = array<i64: 1, 120>}, {pipeline_mode = #tpu.pipeline_mode<synchronous>, transform_indices = @transform_8, window_bounds = array<i64: 120, 84>}, {pipeline_mode = #tpu.pipeline_mode<synchronous>, transform_indices = @transform_9, window_bounds = array<i64: 1, 84>}, {pipeline_mode = #tpu.pipeline_mode<synchronous>, transform_indices = @transform_10, window_bounds = array<i64: 84, 128>}, {pipeline_mode = #tpu.pipeline_mode<synchronous>, transform_indices = @transform_11, window_bounds = array<i64: 1, 128>}, {transform_indices = @transform_12, window_bounds = array<i64: 8, 128>}]} {
    %c0 = arith.constant 0 : index
    %c0_0 = arith.constant 0 : index
    %0 = vector.load %arg1[%c0, %c0_0] : memref<8x1024xf32, #tpu.memory_space<vmem>>, vector<8x1024xf32>
    %1 = vector.extract_strided_slice %0 {offsets = [0, 0], sizes = [8, 892], strides = [1, 1]} : vector<8x1024xf32> to vector<8x892xf32>
    %2 = vector.extract_strided_slice %0 {offsets = [0, 1], sizes = [8, 892], strides = [1, 1]} : vector<8x1024xf32> to vector<8x892xf32>
    %3 = vector.extract_strided_slice %0 {offsets = [0, 2], sizes = [8, 892], strides = [1, 1]} : vector<8x1024xf32> to vector<8x892xf32>
    %4 = vector.extract_strided_slice %0 {offsets = [0, 3], sizes = [8, 892], strides = [1, 1]} : vector<8x1024xf32> to vector<8x892xf32>
    %5 = vector.extract_strided_slice %0 {offsets = [0, 4], sizes = [8, 892], strides = [1, 1]} : vector<8x1024xf32> to vector<8x892xf32>
    %6 = vector.extract_strided_slice %0 {offsets = [0, 32], sizes = [8, 892], strides = [1, 1]} : vector<8x1024xf32> to vector<8x892xf32>
    %7 = vector.extract_strided_slice %0 {offsets = [0, 33], sizes = [8, 892], strides = [1, 1]} : vector<8x1024xf32> to vector<8x892xf32>
    %8 = vector.extract_strided_slice %0 {offsets = [0, 34], sizes = [8, 892], strides = [1, 1]} : vector<8x1024xf32> to vector<8x892xf32>
    %9 = vector.extract_strided_slice %0 {offsets = [0, 35], sizes = [8, 892], strides = [1, 1]} : vector<8x1024xf32> to vector<8x892xf32>
    %10 = vector.extract_strided_slice %0 {offsets = [0, 36], sizes = [8, 892], strides = [1, 1]} : vector<8x1024xf32> to vector<8x892xf32>
    %11 = vector.extract_strided_slice %0 {offsets = [0, 64], sizes = [8, 892], strides = [1, 1]} : vector<8x1024xf32> to vector<8x892xf32>
    %12 = vector.extract_strided_slice %0 {offsets = [0, 65], sizes = [8, 892], strides = [1, 1]} : vector<8x1024xf32> to vector<8x892xf32>
    %13 = vector.extract_strided_slice %0 {offsets = [0, 66], sizes = [8, 892], strides = [1, 1]} : vector<8x1024xf32> to vector<8x892xf32>
    %14 = vector.extract_strided_slice %0 {offsets = [0, 67], sizes = [8, 892], strides = [1, 1]} : vector<8x1024xf32> to vector<8x892xf32>
    %15 = vector.extract_strided_slice %0 {offsets = [0, 68], sizes = [8, 892], strides = [1, 1]} : vector<8x1024xf32> to vector<8x892xf32>
    %16 = vector.extract_strided_slice %0 {offsets = [0, 96], sizes = [8, 892], strides = [1, 1]} : vector<8x1024xf32> to vector<8x892xf32>
    %17 = vector.extract_strided_slice %0 {offsets = [0, 97], sizes = [8, 892], strides = [1, 1]} : vector<8x1024xf32> to vector<8x892xf32>
    %18 = vector.extract_strided_slice %0 {offsets = [0, 98], sizes = [8, 892], strides = [1, 1]} : vector<8x1024xf32> to vector<8x892xf32>
    %19 = vector.extract_strided_slice %0 {offsets = [0, 99], sizes = [8, 892], strides = [1, 1]} : vector<8x1024xf32> to vector<8x892xf32>
    %20 = vector.extract_strided_slice %0 {offsets = [0, 100], sizes = [8, 892], strides = [1, 1]} : vector<8x1024xf32> to vector<8x892xf32>
    %21 = vector.extract_strided_slice %0 {offsets = [0, 128], sizes = [8, 892], strides = [1, 1]} : vector<8x1024xf32> to vector<8x892xf32>
    %22 = vector.extract_strided_slice %0 {offsets = [0, 129], sizes = [8, 892], strides = [1, 1]} : vector<8x1024xf32> to vector<8x892xf32>
    %23 = vector.extract_strided_slice %0 {offsets = [0, 130], sizes = [8, 892], strides = [1, 1]} : vector<8x1024xf32> to vector<8x892xf32>
    %24 = vector.extract_strided_slice %0 {offsets = [0, 131], sizes = [8, 892], strides = [1, 1]} : vector<8x1024xf32> to vector<8x892xf32>
    %25 = vector.extract_strided_slice %0 {offsets = [0, 132], sizes = [8, 892], strides = [1, 1]} : vector<8x1024xf32> to vector<8x892xf32>
    %26 = tpu.concatenate %1, %2, %3, %4, %5, %6, %7, %8, %9, %10, %11, %12, %13, %14, %15, %16 in 0 : vector<8x892xf32>, vector<8x892xf32>, vector<8x892xf32>, vector<8x892xf32>, vector<8x892xf32>, vector<8x892xf32>, vector<8x892xf32>, vector<8x892xf32>, vector<8x892xf32>, vector<8x892xf32>, vector<8x892xf32>, vector<8x892xf32>, vector<8x892xf32>, vector<8x892xf32>, vector<8x892xf32>, vector<8x892xf32> -> vector<128x892xf32>
    %27 = tpu.concatenate %17, %18, %19, %20, %21, %22, %23, %24, %25 in 0 : vector<8x892xf32>, vector<8x892xf32>, vector<8x892xf32>, vector<8x892xf32>, vector<8x892xf32>, vector<8x892xf32>, vector<8x892xf32>, vector<8x892xf32>, vector<8x892xf32> -> vector<72x892xf32>
    %28 = tpu.concatenate %26, %27 in 0 : vector<128x892xf32>, vector<72x892xf32> -> vector<200x892xf32>
    %c0_1 = arith.constant 0 : index
    %c0_2 = arith.constant 0 : index
    %29 = vector.load %arg2[%c0_1, %c0_2] : memref<48x200xf32, #tpu.memory_space<vmem>>, vector<48x200xf32>
    %cst = arith.constant dense<0.000000e+00> : vector<48x892xf32>
    %30 = tpu.matmul %29, %28, %cst {dimension_numbers = #tpu.dot_dimension_numbers<[1], [0], [0], [1], [0, 0, 1, 1], [], []>} : vector<48x200xf32>, vector<200x892xf32>, vector<48x892xf32> -> vector<48x892xf32>
    %c0_3 = arith.constant 0 : index
    %c0_4 = arith.constant 0 : index
    %31 = vector.load %arg3[%c0_3, %c0_4] : memref<48x1xf32, #tpu.memory_space<vmem>>, vector<48x1xf32>
    %32 = vector.broadcast %31 : vector<48x1xf32> to vector<48x892xf32>
    %33 = arith.addf %30, %32 : vector<48x892xf32>
    %cst_5 = arith.constant 0.000000e+00 : f32
    %34 = vector.broadcast %cst_5 : f32 to vector<48x892xf32>
    %35 = arith.subf %34, %33 : vector<48x892xf32>
    %36 = math.exp %35 : vector<48x892xf32>
    %cst_6 = arith.constant 1.000000e+00 : f32
    %37 = vector.broadcast %cst_6 : f32 to vector<48x892xf32>
    %38 = arith.addf %37, %36 : vector<48x892xf32>
    %cst_7 = arith.constant 1.000000e+00 : f32
    %39 = vector.broadcast %cst_7 : f32 to vector<48x892xf32>
    %40 = arith.divf %39, %38 : vector<48x892xf32>
    %c0_8 = arith.constant 0 : index
    %c0_9 = arith.constant 0 : index
    %41 = vector.load %arg4[%c0_8, %c0_9] : memref<892x196xf32, #tpu.memory_space<vmem>>, vector<892x196xf32>
    %cst_10 = arith.constant dense<0.000000e+00> : vector<48x196xf32>
    %42 = tpu.matmul %40, %41, %cst_10 {dimension_numbers = #tpu.dot_dimension_numbers<[1], [0], [0], [1], [0, 0, 1, 1], [], []>} : vector<48x892xf32>, vector<892x196xf32>, vector<48x196xf32> -> vector<48x196xf32>
    %43 = vector.extract_strided_slice %42 {offsets = [0, 0], sizes = [48, 136], strides = [1, 1]} : vector<48x196xf32> to vector<48x136xf32>
    %44 = vector.extract_strided_slice %42 {offsets = [0, 1], sizes = [48, 136], strides = [1, 1]} : vector<48x196xf32> to vector<48x136xf32>
    %45 = vector.extract_strided_slice %42 {offsets = [0, 2], sizes = [48, 136], strides = [1, 1]} : vector<48x196xf32> to vector<48x136xf32>
    %46 = vector.extract_strided_slice %42 {offsets = [0, 3], sizes = [48, 136], strides = [1, 1]} : vector<48x196xf32> to vector<48x136xf32>
    %47 = vector.extract_strided_slice %42 {offsets = [0, 4], sizes = [48, 136], strides = [1, 1]} : vector<48x196xf32> to vector<48x136xf32>
    %48 = vector.extract_strided_slice %42 {offsets = [0, 14], sizes = [48, 136], strides = [1, 1]} : vector<48x196xf32> to vector<48x136xf32>
    %49 = vector.extract_strided_slice %42 {offsets = [0, 15], sizes = [48, 136], strides = [1, 1]} : vector<48x196xf32> to vector<48x136xf32>
    %50 = vector.extract_strided_slice %42 {offsets = [0, 16], sizes = [48, 136], strides = [1, 1]} : vector<48x196xf32> to vector<48x136xf32>
    %51 = vector.extract_strided_slice %42 {offsets = [0, 17], sizes = [48, 136], strides = [1, 1]} : vector<48x196xf32> to vector<48x136xf32>
    %52 = vector.extract_strided_slice %42 {offsets = [0, 18], sizes = [48, 136], strides = [1, 1]} : vector<48x196xf32> to vector<48x136xf32>
    %53 = vector.extract_strided_slice %42 {offsets = [0, 28], sizes = [48, 136], strides = [1, 1]} : vector<48x196xf32> to vector<48x136xf32>
    %54 = vector.extract_strided_slice %42 {offsets = [0, 29], sizes = [48, 136], strides = [1, 1]} : vector<48x196xf32> to vector<48x136xf32>
    %55 = vector.extract_strided_slice %42 {offsets = [0, 30], sizes = [48, 136], strides = [1, 1]} : vector<48x196xf32> to vector<48x136xf32>
    %56 = vector.extract_strided_slice %42 {offsets = [0, 31], sizes = [48, 136], strides = [1, 1]} : vector<48x196xf32> to vector<48x136xf32>
    %57 = vector.extract_strided_slice %42 {offsets = [0, 32], sizes = [48, 136], strides = [1, 1]} : vector<48x196xf32> to vector<48x136xf32>
    %58 = vector.extract_strided_slice %42 {offsets = [0, 42], sizes = [48, 136], strides = [1, 1]} : vector<48x196xf32> to vector<48x136xf32>
    %59 = vector.extract_strided_slice %42 {offsets = [0, 43], sizes = [48, 136], strides = [1, 1]} : vector<48x196xf32> to vector<48x136xf32>
    %60 = vector.extract_strided_slice %42 {offsets = [0, 44], sizes = [48, 136], strides = [1, 1]} : vector<48x196xf32> to vector<48x136xf32>
    %61 = vector.extract_strided_slice %42 {offsets = [0, 45], sizes = [48, 136], strides = [1, 1]} : vector<48x196xf32> to vector<48x136xf32>
    %62 = vector.extract_strided_slice %42 {offsets = [0, 46], sizes = [48, 136], strides = [1, 1]} : vector<48x196xf32> to vector<48x136xf32>
    %63 = vector.extract_strided_slice %42 {offsets = [0, 56], sizes = [48, 136], strides = [1, 1]} : vector<48x196xf32> to vector<48x136xf32>
    %64 = vector.extract_strided_slice %42 {offsets = [0, 57], sizes = [48, 136], strides = [1, 1]} : vector<48x196xf32> to vector<48x136xf32>
    %65 = vector.extract_strided_slice %42 {offsets = [0, 58], sizes = [48, 136], strides = [1, 1]} : vector<48x196xf32> to vector<48x136xf32>
    %66 = vector.extract_strided_slice %42 {offsets = [0, 59], sizes = [48, 136], strides = [1, 1]} : vector<48x196xf32> to vector<48x136xf32>
    %67 = vector.extract_strided_slice %42 {offsets = [0, 60], sizes = [48, 136], strides = [1, 1]} : vector<48x196xf32> to vector<48x136xf32>
    %68 = tpu.concatenate %43, %44, %45, %46, %47, %48, %49, %50, %51, %52, %53, %54, %55, %56, %57, %58 in 0 : vector<48x136xf32>, vector<48x136xf32>, vector<48x136xf32>, vector<48x136xf32>, vector<48x136xf32>, vector<48x136xf32>, vector<48x136xf32>, vector<48x136xf32>, vector<48x136xf32>, vector<48x136xf32>, vector<48x136xf32>, vector<48x136xf32>, vector<48x136xf32>, vector<48x136xf32>, vector<48x136xf32>, vector<48x136xf32> -> vector<768x136xf32>
    %69 = tpu.concatenate %59, %60, %61, %62, %63, %64, %65, %66, %67 in 0 : vector<48x136xf32>, vector<48x136xf32>, vector<48x136xf32>, vector<48x136xf32>, vector<48x136xf32>, vector<48x136xf32>, vector<48x136xf32>, vector<48x136xf32>, vector<48x136xf32> -> vector<432x136xf32>
    %70 = tpu.concatenate %68, %69 in 0 : vector<768x136xf32>, vector<432x136xf32> -> vector<1200x136xf32>
    %c0_11 = arith.constant 0 : index
    %c0_12 = arith.constant 0 : index
    %71 = vector.load %arg5[%c0_11, %c0_12] : memref<128x1200xf32, #tpu.memory_space<vmem>>, vector<128x1200xf32>
    %cst_13 = arith.constant dense<0.000000e+00> : vector<128x136xf32>
    %72 = tpu.matmul %71, %70, %cst_13 {dimension_numbers = #tpu.dot_dimension_numbers<[1], [0], [0], [1], [0, 0, 1, 1], [], []>} : vector<128x1200xf32>, vector<1200x136xf32>, vector<128x136xf32> -> vector<128x136xf32>
    %c0_14 = arith.constant 0 : index
    %c0_15 = arith.constant 0 : index
    %73 = vector.load %arg6[%c0_14, %c0_15] : memref<128x1xf32, #tpu.memory_space<vmem>>, vector<128x1xf32>
    %74 = vector.broadcast %73 : vector<128x1xf32> to vector<128x136xf32>
    %75 = arith.addf %72, %74 : vector<128x136xf32>
    %cst_16 = arith.constant 0.000000e+00 : f32
    %76 = vector.broadcast %cst_16 : f32 to vector<128x136xf32>
    %77 = arith.subf %76, %75 : vector<128x136xf32>
    %78 = math.exp %77 : vector<128x136xf32>
    %cst_17 = arith.constant 1.000000e+00 : f32
    %79 = vector.broadcast %cst_17 : f32 to vector<128x136xf32>
    %80 = arith.addf %79, %78 : vector<128x136xf32>
    %cst_18 = arith.constant 1.000000e+00 : f32
    %81 = vector.broadcast %cst_18 : f32 to vector<128x136xf32>
    %82 = arith.divf %81, %80 : vector<128x136xf32>
    %cst_19 = arith.constant 0.000000e+00 : f32
    %83 = vector.broadcast %cst_19 : f32 to vector<8x120xf32>
    %84 = vector.extract_strided_slice %82 {offsets = [0, 0], sizes = [8, 136], strides = [1, 1]} : vector<128x136xf32> to vector<8x136xf32>
    %c0_20 = arith.constant 0 : index
    %c0_21 = arith.constant 0 : index
    %c0_22 = arith.constant 0 : index
    %85 = vector.load %arg7[%c0_20, %c0_21, %c0_22] : memref<16x136x120xf32, #tpu.memory_space<vmem>>, vector<1x136x120xf32>
    %86 = vector.shape_cast %85 : vector<1x136x120xf32> to vector<136x120xf32>
    %cst_23 = arith.constant dense<0.000000e+00> : vector<8x120xf32>
    %87 = tpu.matmul %84, %86, %cst_23 {dimension_numbers = #tpu.dot_dimension_numbers<[1], [0], [0], [1], [0, 0, 1, 1], [], []>} : vector<8x136xf32>, vector<136x120xf32>, vector<8x120xf32> -> vector<8x120xf32>
    %88 = arith.addf %83, %87 : vector<8x120xf32>
    %89 = vector.extract_strided_slice %82 {offsets = [8, 0], sizes = [8, 136], strides = [1, 1]} : vector<128x136xf32> to vector<8x136xf32>
    %c1 = arith.constant 1 : index
    %c0_24 = arith.constant 0 : index
    %c0_25 = arith.constant 0 : index
    %90 = vector.load %arg7[%c1, %c0_24, %c0_25] : memref<16x136x120xf32, #tpu.memory_space<vmem>>, vector<1x136x120xf32>
    %91 = vector.shape_cast %90 : vector<1x136x120xf32> to vector<136x120xf32>
    %cst_26 = arith.constant dense<0.000000e+00> : vector<8x120xf32>
    %92 = tpu.matmul %89, %91, %cst_26 {dimension_numbers = #tpu.dot_dimension_numbers<[1], [0], [0], [1], [0, 0, 1, 1], [], []>} : vector<8x136xf32>, vector<136x120xf32>, vector<8x120xf32> -> vector<8x120xf32>
    %93 = arith.addf %88, %92 : vector<8x120xf32>
    %94 = vector.extract_strided_slice %82 {offsets = [16, 0], sizes = [8, 136], strides = [1, 1]} : vector<128x136xf32> to vector<8x136xf32>
    %c2 = arith.constant 2 : index
    %c0_27 = arith.constant 0 : index
    %c0_28 = arith.constant 0 : index
    %95 = vector.load %arg7[%c2, %c0_27, %c0_28] : memref<16x136x120xf32, #tpu.memory_space<vmem>>, vector<1x136x120xf32>
    %96 = vector.shape_cast %95 : vector<1x136x120xf32> to vector<136x120xf32>
    %cst_29 = arith.constant dense<0.000000e+00> : vector<8x120xf32>
    %97 = tpu.matmul %94, %96, %cst_29 {dimension_numbers = #tpu.dot_dimension_numbers<[1], [0], [0], [1], [0, 0, 1, 1], [], []>} : vector<8x136xf32>, vector<136x120xf32>, vector<8x120xf32> -> vector<8x120xf32>
    %98 = arith.addf %93, %97 : vector<8x120xf32>
    %99 = vector.extract_strided_slice %82 {offsets = [24, 0], sizes = [8, 136], strides = [1, 1]} : vector<128x136xf32> to vector<8x136xf32>
    %c3 = arith.constant 3 : index
    %c0_30 = arith.constant 0 : index
    %c0_31 = arith.constant 0 : index
    %100 = vector.load %arg7[%c3, %c0_30, %c0_31] : memref<16x136x120xf32, #tpu.memory_space<vmem>>, vector<1x136x120xf32>
    %101 = vector.shape_cast %100 : vector<1x136x120xf32> to vector<136x120xf32>
    %cst_32 = arith.constant dense<0.000000e+00> : vector<8x120xf32>
    %102 = tpu.matmul %99, %101, %cst_32 {dimension_numbers = #tpu.dot_dimension_numbers<[1], [0], [0], [1], [0, 0, 1, 1], [], []>} : vector<8x136xf32>, vector<136x120xf32>, vector<8x120xf32> -> vector<8x120xf32>
    %103 = arith.addf %98, %102 : vector<8x120xf32>
    %104 = vector.extract_strided_slice %82 {offsets = [32, 0], sizes = [8, 136], strides = [1, 1]} : vector<128x136xf32> to vector<8x136xf32>
    %c4 = arith.constant 4 : index
    %c0_33 = arith.constant 0 : index
    %c0_34 = arith.constant 0 : index
    %105 = vector.load %arg7[%c4, %c0_33, %c0_34] : memref<16x136x120xf32, #tpu.memory_space<vmem>>, vector<1x136x120xf32>
    %106 = vector.shape_cast %105 : vector<1x136x120xf32> to vector<136x120xf32>
    %cst_35 = arith.constant dense<0.000000e+00> : vector<8x120xf32>
    %107 = tpu.matmul %104, %106, %cst_35 {dimension_numbers = #tpu.dot_dimension_numbers<[1], [0], [0], [1], [0, 0, 1, 1], [], []>} : vector<8x136xf32>, vector<136x120xf32>, vector<8x120xf32> -> vector<8x120xf32>
    %108 = arith.addf %103, %107 : vector<8x120xf32>
    %109 = vector.extract_strided_slice %82 {offsets = [40, 0], sizes = [8, 136], strides = [1, 1]} : vector<128x136xf32> to vector<8x136xf32>
    %c5 = arith.constant 5 : index
    %c0_36 = arith.constant 0 : index
    %c0_37 = arith.constant 0 : index
    %110 = vector.load %arg7[%c5, %c0_36, %c0_37] : memref<16x136x120xf32, #tpu.memory_space<vmem>>, vector<1x136x120xf32>
    %111 = vector.shape_cast %110 : vector<1x136x120xf32> to vector<136x120xf32>
    %cst_38 = arith.constant dense<0.000000e+00> : vector<8x120xf32>
    %112 = tpu.matmul %109, %111, %cst_38 {dimension_numbers = #tpu.dot_dimension_numbers<[1], [0], [0], [1], [0, 0, 1, 1], [], []>} : vector<8x136xf32>, vector<136x120xf32>, vector<8x120xf32> -> vector<8x120xf32>
    %113 = arith.addf %108, %112 : vector<8x120xf32>
    %114 = vector.extract_strided_slice %82 {offsets = [48, 0], sizes = [8, 136], strides = [1, 1]} : vector<128x136xf32> to vector<8x136xf32>
    %c6 = arith.constant 6 : index
    %c0_39 = arith.constant 0 : index
    %c0_40 = arith.constant 0 : index
    %115 = vector.load %arg7[%c6, %c0_39, %c0_40] : memref<16x136x120xf32, #tpu.memory_space<vmem>>, vector<1x136x120xf32>
    %116 = vector.shape_cast %115 : vector<1x136x120xf32> to vector<136x120xf32>
    %cst_41 = arith.constant dense<0.000000e+00> : vector<8x120xf32>
    %117 = tpu.matmul %114, %116, %cst_41 {dimension_numbers = #tpu.dot_dimension_numbers<[1], [0], [0], [1], [0, 0, 1, 1], [], []>} : vector<8x136xf32>, vector<136x120xf32>, vector<8x120xf32> -> vector<8x120xf32>
    %118 = arith.addf %113, %117 : vector<8x120xf32>
    %119 = vector.extract_strided_slice %82 {offsets = [56, 0], sizes = [8, 136], strides = [1, 1]} : vector<128x136xf32> to vector<8x136xf32>
    %c7 = arith.constant 7 : index
    %c0_42 = arith.constant 0 : index
    %c0_43 = arith.constant 0 : index
    %120 = vector.load %arg7[%c7, %c0_42, %c0_43] : memref<16x136x120xf32, #tpu.memory_space<vmem>>, vector<1x136x120xf32>
    %121 = vector.shape_cast %120 : vector<1x136x120xf32> to vector<136x120xf32>
    %cst_44 = arith.constant dense<0.000000e+00> : vector<8x120xf32>
    %122 = tpu.matmul %119, %121, %cst_44 {dimension_numbers = #tpu.dot_dimension_numbers<[1], [0], [0], [1], [0, 0, 1, 1], [], []>} : vector<8x136xf32>, vector<136x120xf32>, vector<8x120xf32> -> vector<8x120xf32>
    %123 = arith.addf %118, %122 : vector<8x120xf32>
    %124 = vector.extract_strided_slice %82 {offsets = [64, 0], sizes = [8, 136], strides = [1, 1]} : vector<128x136xf32> to vector<8x136xf32>
    %c8 = arith.constant 8 : index
    %c0_45 = arith.constant 0 : index
    %c0_46 = arith.constant 0 : index
    %125 = vector.load %arg7[%c8, %c0_45, %c0_46] : memref<16x136x120xf32, #tpu.memory_space<vmem>>, vector<1x136x120xf32>
    %126 = vector.shape_cast %125 : vector<1x136x120xf32> to vector<136x120xf32>
    %cst_47 = arith.constant dense<0.000000e+00> : vector<8x120xf32>
    %127 = tpu.matmul %124, %126, %cst_47 {dimension_numbers = #tpu.dot_dimension_numbers<[1], [0], [0], [1], [0, 0, 1, 1], [], []>} : vector<8x136xf32>, vector<136x120xf32>, vector<8x120xf32> -> vector<8x120xf32>
    %128 = arith.addf %123, %127 : vector<8x120xf32>
    %129 = vector.extract_strided_slice %82 {offsets = [72, 0], sizes = [8, 136], strides = [1, 1]} : vector<128x136xf32> to vector<8x136xf32>
    %c9 = arith.constant 9 : index
    %c0_48 = arith.constant 0 : index
    %c0_49 = arith.constant 0 : index
    %130 = vector.load %arg7[%c9, %c0_48, %c0_49] : memref<16x136x120xf32, #tpu.memory_space<vmem>>, vector<1x136x120xf32>
    %131 = vector.shape_cast %130 : vector<1x136x120xf32> to vector<136x120xf32>
    %cst_50 = arith.constant dense<0.000000e+00> : vector<8x120xf32>
    %132 = tpu.matmul %129, %131, %cst_50 {dimension_numbers = #tpu.dot_dimension_numbers<[1], [0], [0], [1], [0, 0, 1, 1], [], []>} : vector<8x136xf32>, vector<136x120xf32>, vector<8x120xf32> -> vector<8x120xf32>
    %133 = arith.addf %128, %132 : vector<8x120xf32>
    %134 = vector.extract_strided_slice %82 {offsets = [80, 0], sizes = [8, 136], strides = [1, 1]} : vector<128x136xf32> to vector<8x136xf32>
    %c10 = arith.constant 10 : index
    %c0_51 = arith.constant 0 : index
    %c0_52 = arith.constant 0 : index
    %135 = vector.load %arg7[%c10, %c0_51, %c0_52] : memref<16x136x120xf32, #tpu.memory_space<vmem>>, vector<1x136x120xf32>
    %136 = vector.shape_cast %135 : vector<1x136x120xf32> to vector<136x120xf32>
    %cst_53 = arith.constant dense<0.000000e+00> : vector<8x120xf32>
    %137 = tpu.matmul %134, %136, %cst_53 {dimension_numbers = #tpu.dot_dimension_numbers<[1], [0], [0], [1], [0, 0, 1, 1], [], []>} : vector<8x136xf32>, vector<136x120xf32>, vector<8x120xf32> -> vector<8x120xf32>
    %138 = arith.addf %133, %137 : vector<8x120xf32>
    %139 = vector.extract_strided_slice %82 {offsets = [88, 0], sizes = [8, 136], strides = [1, 1]} : vector<128x136xf32> to vector<8x136xf32>
    %c11 = arith.constant 11 : index
    %c0_54 = arith.constant 0 : index
    %c0_55 = arith.constant 0 : index
    %140 = vector.load %arg7[%c11, %c0_54, %c0_55] : memref<16x136x120xf32, #tpu.memory_space<vmem>>, vector<1x136x120xf32>
    %141 = vector.shape_cast %140 : vector<1x136x120xf32> to vector<136x120xf32>
    %cst_56 = arith.constant dense<0.000000e+00> : vector<8x120xf32>
    %142 = tpu.matmul %139, %141, %cst_56 {dimension_numbers = #tpu.dot_dimension_numbers<[1], [0], [0], [1], [0, 0, 1, 1], [], []>} : vector<8x136xf32>, vector<136x120xf32>, vector<8x120xf32> -> vector<8x120xf32>
    %143 = arith.addf %138, %142 : vector<8x120xf32>
    %144 = vector.extract_strided_slice %82 {offsets = [96, 0], sizes = [8, 136], strides = [1, 1]} : vector<128x136xf32> to vector<8x136xf32>
    %c12 = arith.constant 12 : index
    %c0_57 = arith.constant 0 : index
    %c0_58 = arith.constant 0 : index
    %145 = vector.load %arg7[%c12, %c0_57, %c0_58] : memref<16x136x120xf32, #tpu.memory_space<vmem>>, vector<1x136x120xf32>
    %146 = vector.shape_cast %145 : vector<1x136x120xf32> to vector<136x120xf32>
    %cst_59 = arith.constant dense<0.000000e+00> : vector<8x120xf32>
    %147 = tpu.matmul %144, %146, %cst_59 {dimension_numbers = #tpu.dot_dimension_numbers<[1], [0], [0], [1], [0, 0, 1, 1], [], []>} : vector<8x136xf32>, vector<136x120xf32>, vector<8x120xf32> -> vector<8x120xf32>
    %148 = arith.addf %143, %147 : vector<8x120xf32>
    %149 = vector.extract_strided_slice %82 {offsets = [104, 0], sizes = [8, 136], strides = [1, 1]} : vector<128x136xf32> to vector<8x136xf32>
    %c13 = arith.constant 13 : index
    %c0_60 = arith.constant 0 : index
    %c0_61 = arith.constant 0 : index
    %150 = vector.load %arg7[%c13, %c0_60, %c0_61] : memref<16x136x120xf32, #tpu.memory_space<vmem>>, vector<1x136x120xf32>
    %151 = vector.shape_cast %150 : vector<1x136x120xf32> to vector<136x120xf32>
    %cst_62 = arith.constant dense<0.000000e+00> : vector<8x120xf32>
    %152 = tpu.matmul %149, %151, %cst_62 {dimension_numbers = #tpu.dot_dimension_numbers<[1], [0], [0], [1], [0, 0, 1, 1], [], []>} : vector<8x136xf32>, vector<136x120xf32>, vector<8x120xf32> -> vector<8x120xf32>
    %153 = arith.addf %148, %152 : vector<8x120xf32>
    %154 = vector.extract_strided_slice %82 {offsets = [112, 0], sizes = [8, 136], strides = [1, 1]} : vector<128x136xf32> to vector<8x136xf32>
    %c14 = arith.constant 14 : index
    %c0_63 = arith.constant 0 : index
    %c0_64 = arith.constant 0 : index
    %155 = vector.load %arg7[%c14, %c0_63, %c0_64] : memref<16x136x120xf32, #tpu.memory_space<vmem>>, vector<1x136x120xf32>
    %156 = vector.shape_cast %155 : vector<1x136x120xf32> to vector<136x120xf32>
    %cst_65 = arith.constant dense<0.000000e+00> : vector<8x120xf32>
    %157 = tpu.matmul %154, %156, %cst_65 {dimension_numbers = #tpu.dot_dimension_numbers<[1], [0], [0], [1], [0, 0, 1, 1], [], []>} : vector<8x136xf32>, vector<136x120xf32>, vector<8x120xf32> -> vector<8x120xf32>
    %158 = arith.addf %153, %157 : vector<8x120xf32>
    %159 = vector.extract_strided_slice %82 {offsets = [120, 0], sizes = [8, 136], strides = [1, 1]} : vector<128x136xf32> to vector<8x136xf32>
    %c15 = arith.constant 15 : index
    %c0_66 = arith.constant 0 : index
    %c0_67 = arith.constant 0 : index
    %160 = vector.load %arg7[%c15, %c0_66, %c0_67] : memref<16x136x120xf32, #tpu.memory_space<vmem>>, vector<1x136x120xf32>
    %161 = vector.shape_cast %160 : vector<1x136x120xf32> to vector<136x120xf32>
    %cst_68 = arith.constant dense<0.000000e+00> : vector<8x120xf32>
    %162 = tpu.matmul %159, %161, %cst_68 {dimension_numbers = #tpu.dot_dimension_numbers<[1], [0], [0], [1], [0, 0, 1, 1], [], []>} : vector<8x136xf32>, vector<136x120xf32>, vector<8x120xf32> -> vector<8x120xf32>
    %163 = arith.addf %158, %162 : vector<8x120xf32>
    %c0_69 = arith.constant 0 : index
    %c0_70 = arith.constant 0 : index
    %164 = vector.load %arg8[%c0_69, %c0_70] : memref<1x120xf32, #tpu.memory_space<vmem>>, vector<1x120xf32>
    %165 = vector.broadcast %164 : vector<1x120xf32> to vector<8x120xf32>
    %166 = arith.addf %163, %165 : vector<8x120xf32>
    %cst_71 = arith.constant 0.000000e+00 : f32
    %167 = vector.broadcast %cst_71 : f32 to vector<8x120xf32>
    %168 = arith.subf %167, %166 : vector<8x120xf32>
    %169 = math.exp %168 : vector<8x120xf32>
    %cst_72 = arith.constant 1.000000e+00 : f32
    %170 = vector.broadcast %cst_72 : f32 to vector<8x120xf32>
    %171 = arith.addf %170, %169 : vector<8x120xf32>
    %cst_73 = arith.constant 1.000000e+00 : f32
    %172 = vector.broadcast %cst_73 : f32 to vector<8x120xf32>
    %173 = arith.divf %172, %171 : vector<8x120xf32>
    %c0_74 = arith.constant 0 : index
    %c0_75 = arith.constant 0 : index
    %174 = vector.load %arg9[%c0_74, %c0_75] : memref<120x84xf32, #tpu.memory_space<vmem>>, vector<120x84xf32>
    %cst_76 = arith.constant dense<0.000000e+00> : vector<8x84xf32>
    %175 = tpu.matmul %173, %174, %cst_76 {dimension_numbers = #tpu.dot_dimension_numbers<[1], [0], [0], [1], [0, 0, 1, 1], [], []>} : vector<8x120xf32>, vector<120x84xf32>, vector<8x84xf32> -> vector<8x84xf32>
    %c0_77 = arith.constant 0 : index
    %c0_78 = arith.constant 0 : index
    %176 = vector.load %arg10[%c0_77, %c0_78] : memref<1x84xf32, #tpu.memory_space<vmem>>, vector<1x84xf32>
    %177 = vector.broadcast %176 : vector<1x84xf32> to vector<8x84xf32>
    %178 = arith.addf %175, %177 : vector<8x84xf32>
    %cst_79 = arith.constant 0.000000e+00 : f32
    %179 = vector.broadcast %cst_79 : f32 to vector<8x84xf32>
    %180 = arith.subf %179, %178 : vector<8x84xf32>
    %181 = math.exp %180 : vector<8x84xf32>
    %cst_80 = arith.constant 1.000000e+00 : f32
    %182 = vector.broadcast %cst_80 : f32 to vector<8x84xf32>
    %183 = arith.addf %182, %181 : vector<8x84xf32>
    %cst_81 = arith.constant 1.000000e+00 : f32
    %184 = vector.broadcast %cst_81 : f32 to vector<8x84xf32>
    %185 = arith.divf %184, %183 : vector<8x84xf32>
    %c0_82 = arith.constant 0 : index
    %c0_83 = arith.constant 0 : index
    %186 = vector.load %arg11[%c0_82, %c0_83] : memref<84x128xf32, #tpu.memory_space<vmem>>, vector<84x128xf32>
    %cst_84 = arith.constant dense<0.000000e+00> : vector<8x128xf32>
    %187 = tpu.matmul %185, %186, %cst_84 {dimension_numbers = #tpu.dot_dimension_numbers<[1], [0], [0], [1], [0, 0, 1, 1], [], []>} : vector<8x84xf32>, vector<84x128xf32>, vector<8x128xf32> -> vector<8x128xf32>
    %c0_85 = arith.constant 0 : index
    %c0_86 = arith.constant 0 : index
    %188 = vector.load %arg12[%c0_85, %c0_86] : memref<1x128xf32, #tpu.memory_space<vmem>>, vector<1x128xf32>
    %189 = vector.broadcast %188 : vector<1x128xf32> to vector<8x128xf32>
    %190 = arith.addf %187, %189 : vector<8x128xf32>
    %c0_87 = arith.constant 0 : index
    %c0_88 = arith.constant 0 : index
    %191 = vector.load %arg13[%c0_87, %c0_88] : memref<8x128xf32, #tpu.memory_space<vmem>>, vector<8x128xf32>
    tpu.vector_store %arg13[%c0_87, %c0_88], %190 {strides = array<i32>} : memref<8x128xf32, #tpu.memory_space<vmem>>, vector<8x128xf32>,
    return
  }
  func.func @transform_0(%arg0: i32) -> (i32, i32) {
    %c0_i32 = arith.constant 0 : i32
    %c0_i32_0 = arith.constant 0 : i32
    return %arg0, %c0_i32 : i32, i32
  }
  func.func @transform_1(%arg0: i32) -> (i32, i32) {
    %c0_i32 = arith.constant 0 : i32
    %c0_i32_0 = arith.constant 0 : i32
    %c0_i32_1 = arith.constant 0 : i32
    return %c0_i32, %c0_i32_0 : i32, i32
  }
  func.func @transform_2(%arg0: i32) -> (i32, i32) {
    %c0_i32 = arith.constant 0 : i32
    %c0_i32_0 = arith.constant 0 : i32
    %c0_i32_1 = arith.constant 0 : i32
    return %c0_i32, %c0_i32_0 : i32, i32
  }
  func.func @transform_3(%arg0: i32) -> (i32, i32) {
    %c0_i32 = arith.constant 0 : i32
    %c0_i32_0 = arith.constant 0 : i32
    %c0_i32_1 = arith.constant 0 : i32
    return %c0_i32, %c0_i32_0 : i32, i32
  }
  func.func @transform_4(%arg0: i32) -> (i32, i32) {
    %c0_i32 = arith.constant 0 : i32
    %c0_i32_0 = arith.constant 0 : i32
    %c0_i32_1 = arith.constant 0 : i32
    return %c0_i32, %c0_i32_0 : i32, i32
  }
  func.func @transform_5(%arg0: i32) -> (i32, i32) {
    %c0_i32 = arith.constant 0 : i32
    %c0_i32_0 = arith.constant 0 : i32
    %c0_i32_1 = arith.constant 0 : i32
    return %c0_i32, %c0_i32_0 : i32, i32
  }
  func.func @transform_6(%arg0: i32) -> (i32, i32, i32) {
    %c0_i32 = arith.constant 0 : i32
    %c0_i32_0 = arith.constant 0 : i32
    %c0_i32_1 = arith.constant 0 : i32
    %c0_i32_2 = arith.constant 0 : i32
    return %c0_i32, %c0_i32_0, %c0_i32_1 : i32, i32, i32
  }
  func.func @transform_7(%arg0: i32) -> (i32, i32) {
    %c0_i32 = arith.constant 0 : i32
    %c0_i32_0 = arith.constant 0 : i32
    %c0_i32_1 = arith.constant 0 : i32
    return %c0_i32, %c0_i32_0 : i32, i32
  }
  func.func @transform_8(%arg0: i32) -> (i32, i32) {
    %c0_i32 = arith.constant 0 : i32
    %c0_i32_0 = arith.constant 0 : i32
    %c0_i32_1 = arith.constant 0 : i32
    return %c0_i32, %c0_i32_0 : i32, i32
  }
  func.func @transform_9(%arg0: i32) -> (i32, i32) {
    %c0_i32 = arith.constant 0 : i32
    %c0_i32_0 = arith.constant 0 : i32
    %c0_i32_1 = arith.constant 0 : i32
    return %c0_i32, %c0_i32_0 : i32, i32
  }
  func.func @transform_10(%arg0: i32) -> (i32, i32) {
    %c0_i32 = arith.constant 0 : i32
    %c0_i32_0 = arith.constant 0 : i32
    %c0_i32_1 = arith.constant 0 : i32
    return %c0_i32, %c0_i32_0 : i32, i32
  }
  func.func @transform_11(%arg0: i32) -> (i32, i32) {
    %c0_i32 = arith.constant 0 : i32
    %c0_i32_0 = arith.constant 0 : i32
    %c0_i32_1 = arith.constant 0 : i32
    return %c0_i32, %c0_i32_0 : i32, i32
  }
  func.func @transform_12(%arg0: i32) -> (i32, i32) {
    %c0_i32 = arith.constant 0 : i32
    %c0_i32_0 = arith.constant 0 : i32
    return %arg0, %c0_i32 : i32, i32
  }
}

</mosaic_0001>

<llo_original>
// kernel: lenet5_forward.1
$region0: #{lenet5_forward.1}
  #allocation0 [shape = 'u32[]', space=smem, size = 0x4, offset = 0x4, fixed_abs, tag = 'smem constant byte address 0x4 - core index']
  #allocation1 [shape = 'u32[144,128]{1,0:T(1,128)}', space=vmem, size = 0x12000, scoped, tag = 'internal scratch']
  %s0 = inlined_call_operand.vmem [shape: f32[16,1024], index: 0, kind: input, shape index: {}]
  %s1 = inlined_call_operand.vmem [shape: f32[48,200], index: 1, kind: input, shape index: {}]
  %s2 = inlined_call_operand.vmem [shape: f32[48,1], index: 2, kind: input, shape index: {}]
  %s3 = inlined_call_operand.vmem [shape: f32[892,196], index: 3, kind: input, shape index: {}]
  %s4 = inlined_call_operand.vmem [shape: f32[128,1200], index: 4, kind: input, shape index: {}]
  %s5 = inlined_call_operand.vmem [shape: f32[128,1], index: 5, kind: input, shape index: {}]
  %s6 = inlined_call_operand.vmem [shape: f32[16,136,120], index: 6, kind: input, shape index: {}]
  %s7 = inlined_call_operand.vmem [shape: f32[1,120], index: 7, kind: input, shape index: {}]
  %s8 = inlined_call_operand.vmem [shape: f32[120,84], index: 8, kind: input, shape index: {}]
  %s9 = inlined_call_operand.vmem [shape: f32[1,84], index: 9, kind: input, shape index: {}]
  %s10 = inlined_call_operand.vmem [shape: f32[84,128], index: 10, kind: input, shape index: {}]
  %s11 = inlined_call_operand.vmem [shape: f32[1,128], index: 11, kind: input, shape index: {}]
  %s12 = inlined_call_operand.hbm [shape: f32[16,128], index: 12, kind: output, shape index: {}]
  %s13 = sld [smem:[#allocation0]]
  $region81: #{lenet5_forward.1} parent=0
    _
  %s15 = ssub.s32 1, %s13
  %s16 = scalar_select 0, %s15, %s13
  $region1: #{lenet5_forward.1} parent=0
    #allocation2 [shape = 'u8[8192]{0}', space=vmem, size = 0x2000, scoped, tag = 'output window, operand 0']
    #allocation3 [shape = 's32[2]{0}', space=sflag, size = 0x8, scoped, tag = 'scoped memory for lenet5_forward.1']
    %17 = vsyncpa [#allocation3], 0
    %s18 = scalar_lea.sflag [#allocation3], 1
    %19 = vsyncpa %s18, 0
    loop: start=0, step=1, limit=4
    $region2: #{lenet5_forward.1} parent=1 // loop_pre_header
      _
    $region3: #{lenet5_forward.1} parent=1 // loop_header
      %s21 = sphi 0, %s25
      %p22 = scmp.ge.s32.totalorder %s21, 4
      %s31 = sphi 0, %s33
      %s34 = sphi 0, %s31
      %s35 = sphi 0, %s34
      %s51 = sphi 0, %s35
      %s55 = sphi 0, %s55
      %s57 = sphi 0, %s55
      %s58 = sphi 0, %s57
      %s72 = sphi 0, %s58
      %s76 = sphi 0, %s76
      %s78 = sphi 0, %s76
      %s79 = sphi 0, %s78
      %s93 = sphi 0, %s79
      %s97 = sphi 0, %s97
      %s99 = sphi 0, %s97
      %s100 = sphi 0, %s99
      %s114 = sphi 0, %s100
      %s118 = sphi 0, %s118
      %s120 = sphi 0, %s118
      %s121 = sphi 0, %s120
      %s135 = sphi 0, %s121
      %s139 = sphi 0, %s139
      %s141 = sphi 0, %s139
      %s142 = sphi 0, %s141
      %s156 = sphi 0, %s142
      %s160 = sphi 0, %s160
      %s162 = sphi 0, %s160
      %s163 = sphi 0, %s162
      %s177 = sphi 0, %s163
      %s181 = sphi 0, %s181
      %s183 = sphi 0, %s181
      %s184 = sphi 0, %s183
      %s198 = sphi 0, %s184
      %s202 = sphi 0, %s202
      %s204 = sphi 0, %s202
      %s205 = sphi 0, %s204
      %s219 = sphi 0, %s205
      %s223 = sphi 0, %s223
      %s225 = sphi 0, %s223
      %s226 = sphi 0, %s225
      %s240 = sphi 0, %s226
      %s244 = sphi 0, %s244
      %s246 = sphi 0, %s244
      %s247 = sphi 0, %s246
      %s261 = sphi 0, %s247
      %s265 = sphi 0, %s265
      %s267 = sphi 0, %s265
      %s268 = sphi 0, %s267
      %s282 = sphi 0, %s268
      %s288 = sphi 0, %s290
      %s291 = sphi 0, %s288
      %s292 = sphi 0, %s291
      %s308 = sphi 0, %s292
    $region4: #{lenet5_forward.1} parent=1 // loop_header_branch
      %24 = sbr.rel (%p22) target = $region8
    $region5: #{lenet5_forward.1} parent=1 // loop_body
      %s26 = ssub.s32 %s21, 1
      %s27 = ssub.s32 %s21, 2
      %s28 = sadd.s32 %s21, 1
      %s29 = ssub.s32 %s21, %s28
      %p30 = scmp.eq.s32.totalorder %s29, 0
      %s32 = sadd.s32 %s31, 1
      %s33 = scalar_select %p30, %s31, %s32
      %p36 = pneg %p30
      %p37 = scmp.eq.s32.totalorder %s21, 1
      %p38 = por %p36, %p37
      %p39 = scmp.ne.s32.totalorder %s31, %s34
      %p40 = scmp.eq.s32.totalorder %s21, 0
      %p41 = por %p39, %p40
      %p42 = scmp.ne.s32.totalorder %s31, %s34
      %p43 = scmp.eq.s32.totalorder %s26, 1
      %p44 = por %p42, %p43
      %p45 = scmp.ne.s32.totalorder %s34, %s35
      %p46 = scmp.eq.s32.totalorder %s26, 0
      %p47 = por %p45, %p46
      %p48 = scmp.ne.s32.totalorder %s34, %s35
      %p49 = scmp.eq.s32.totalorder %s27, 1
      %p50 = por %p48, %p49
      %p52 = scmp.ne.s32.totalorder %s35, %s51
      %p53 = scmp.eq.s32.totalorder %s27, 0
      %p54 = por %p52, %p53
      %s56 = sadd.s32 %s55, 1
      %p59 = scmp.eq.s32.totalorder %s21, 1
      %p60 = scmp.ne.s32.totalorder %s55, %s57
      %p61 = scmp.eq.s32.totalorder %s21, 0
      %p62 = por %p60, %p61
      %p63 = scmp.ne.s32.totalorder %s55, %s57
      %p64 = scmp.eq.s32.totalorder %s26, 1
      %p65 = por %p63, %p64
      %p66 = scmp.ne.s32.totalorder %s57, %s58
      %p67 = scmp.eq.s32.totalorder %s26, 0
      %p68 = por %p66, %p67
      %p69 = scmp.ne.s32.totalorder %s57, %s58
      %p70 = scmp.eq.s32.totalorder %s27, 1
      %p71 = por %p69, %p70
      %p73 = scmp.ne.s32.totalorder %s58, %s72
      %p74 = scmp.eq.s32.totalorder %s27, 0
      %p75 = por %p73, %p74
      %s77 = sadd.s32 %s76, 1
      %p80 = scmp.eq.s32.totalorder %s21, 1
      %p81 = scmp.ne.s32.totalorder %s76, %s78
      %p82 = scmp.eq.s32.totalorder %s21, 0
      %p83 = por %p81, %p82
      %p84 = scmp.ne.s32.totalorder %s76, %s78
      %p85 = scmp.eq.s32.totalorder %s26, 1
      %p86 = por %p84, %p85
      %p87 = scmp.ne.s32.totalorder %s78, %s79
      %p88 = scmp.eq.s32.totalorder %s26, 0
      %p89 = por %p87, %p88
      %p90 = scmp.ne.s32.totalorder %s78, %s79
      %p91 = scmp.eq.s32.totalorder %s27, 1
      %p92 = por %p90, %p91
      %p94 = scmp.ne.s32.totalorder %s79, %s93
      %p95 = scmp.eq.s32.totalorder %s27, 0
      %p96 = por %p94, %p95
      %s98 = sadd.s32 %s97, 1
      %p101 = scmp.eq.s32.totalorder %s21, 1
      %p102 = scmp.ne.s32.totalorder %s97, %s99
      %p103 = scmp.eq.s32.totalorder %s21, 0
      %p104 = por %p102, %p103
      %p105 = scmp.ne.s32.totalorder %s97, %s99
      %p106 = scmp.eq.s32.totalorder %s26, 1
      %p107 = por %p105, %p106
      %p108 = scmp.ne.s32.totalorder %s99, %s100
      %p109 = scmp.eq.s32.totalorder %s26, 0
      %p110 = por %p108, %p109
      %p111 = scmp.ne.s32.totalorder %s99, %s100
      %p112 = scmp.eq.s32.totalorder %s27, 1
      %p113 = por %p111, %p112
      %p115 = scmp.ne.s32.totalorder %s100, %s114
      %p116 = scmp.eq.s32.totalorder %s27, 0
      %p117 = por %p115, %p116
      %s119 = sadd.s32 %s118, 1
      %p122 = scmp.eq.s32.totalorder %s21, 1
      %p123 = scmp.ne.s32.totalorder %s118, %s120
      %p124 = scmp.eq.s32.totalorder %s21, 0
      %p125 = por %p123, %p124
      %p126 = scmp.ne.s32.totalorder %s118, %s120
      %p127 = scmp.eq.s32.totalorder %s26, 1
      %p128 = por %p126, %p127
      %p129 = scmp.ne.s32.totalorder %s120, %s121
      %p130 = scmp.eq.s32.totalorder %s26, 0
      %p131 = por %p129, %p130
      %p132 = scmp.ne.s32.totalorder %s120, %s121
      %p133 = scmp.eq.s32.totalorder %s27, 1
      %p134 = por %p132, %p133
      %p136 = scmp.ne.s32.totalorder %s121, %s135
      %p137 = scmp.eq.s32.totalorder %s27, 0
      %p138 = por %p136, %p137
      %s140 = sadd.s32 %s139, 1
      %p143 = scmp.eq.s32.totalorder %s21, 1
      %p144 = scmp.ne.s32.totalorder %s139, %s141
      %p145 = scmp.eq.s32.totalorder %s21, 0
      %p146 = por %p144, %p145
      %p147 = scmp.ne.s32.totalorder %s139, %s141
      %p148 = scmp.eq.s32.totalorder %s26, 1
      %p149 = por %p147, %p148
      %p150 = scmp.ne.s32.totalorder %s141, %s142
      %p151 = scmp.eq.s32.totalorder %s26, 0
      %p152 = por %p150, %p151
      %p153 = scmp.ne.s32.totalorder %s141, %s142
      %p154 = scmp.eq.s32.totalorder %s27, 1
      %p155 = por %p153, %p154
      %p157 = scmp.ne.s32.totalorder %s142, %s156
      %p158 = scmp.eq.s32.totalorder %s27, 0
      %p159 = por %p157, %p158
      %s161 = sadd.s32 %s160, 1
      %p164 = scmp.eq.s32.totalorder %s21, 1
      %p165 = scmp.ne.s32.totalorder %s160, %s162
      %p166 = scmp.eq.s32.totalorder %s21, 0
      %p167 = por %p165, %p166
      %p168 = scmp.ne.s32.totalorder %s160, %s162
      %p169 = scmp.eq.s32.totalorder %s26, 1
      %p170 = por %p168, %p169
      %p171 = scmp.ne.s32.totalorder %s162, %s163
      %p172 = scmp.eq.s32.totalorder %s26, 0
      %p173 = por %p171, %p172
      %p174 = scmp.ne.s32.totalorder %s162, %s163
      %p175 = scmp.eq.s32.totalorder %s27, 1
      %p176 = por %p174, %p175
      %p178 = scmp.ne.s32.totalorder %s163, %s177
      %p179 = scmp.eq.s32.totalorder %s27, 0
      %p180 = por %p178, %p179
      %s182 = sadd.s32 %s181, 1
      %p185 = scmp.eq.s32.totalorder %s21, 1
      %p186 = scmp.ne.s32.totalorder %s181, %s183
      %p187 = scmp.eq.s32.totalorder %s21, 0
      %p188 = por %p186, %p187
      %p189 = scmp.ne.s32.totalorder %s181, %s183
      %p190 = scmp.eq.s32.totalorder %s26, 1
      %p191 = por %p189, %p190
      %p192 = scmp.ne.s32.totalorder %s183, %s184
      %p193 = scmp.eq.s32.totalorder %s26, 0
      %p194 = por %p192, %p193
      %p195 = scmp.ne.s32.totalorder %s183, %s184
      %p196 = scmp.eq.s32.totalorder %s27, 1
      %p197 = por %p195, %p196
      %p199 = scmp.ne.s32.totalorder %s184, %s198
      %p200 = scmp.eq.s32.totalorder %s27, 0
      %p201 = por %p199, %p200
      %s203 = sadd.s32 %s202, 1
      %p206 = scmp.eq.s32.totalorder %s21, 1
      %p207 = scmp.ne.s32.totalorder %s202, %s204
      %p208 = scmp.eq.s32.totalorder %s21, 0
      %p209 = por %p207, %p208
      %p210 = scmp.ne.s32.totalorder %s202, %s204
      %p211 = scmp.eq.s32.totalorder %s26, 1
      %p212 = por %p210, %p211
      %p213 = scmp.ne.s32.totalorder %s204, %s205
      %p214 = scmp.eq.s32.totalorder %s26, 0
      %p215 = por %p213, %p214
      %p216 = scmp.ne.s32.totalorder %s204, %s205
      %p217 = scmp.eq.s32.totalorder %s27, 1
      %p218 = por %p216, %p217
      %p220 = scmp.ne.s32.totalorder %s205, %s219
      %p221 = scmp.eq.s32.totalorder %s27, 0
      %p222 = por %p220, %p221
      %s224 = sadd.s32 %s223, 1
      %p227 = scmp.eq.s32.totalorder %s21, 1
      %p228 = scmp.ne.s32.totalorder %s223, %s225
      %p229 = scmp.eq.s32.totalorder %s21, 0
      %p230 = por %p228, %p229
      %p231 = scmp.ne.s32.totalorder %s223, %s225
      %p232 = scmp.eq.s32.totalorder %s26, 1
      %p233 = por %p231, %p232
      %p234 = scmp.ne.s32.totalorder %s225, %s226
      %p235 = scmp.eq.s32.totalorder %s26, 0
      %p236 = por %p234, %p235
      %p237 = scmp.ne.s32.totalorder %s225, %s226
      %p238 = scmp.eq.s32.totalorder %s27, 1
      %p239 = por %p237, %p238
      %p241 = scmp.ne.s32.totalorder %s226, %s240
      %p242 = scmp.eq.s32.totalorder %s27, 0
      %p243 = por %p241, %p242
      %s245 = sadd.s32 %s244, 1
      %p248 = scmp.eq.s32.totalorder %s21, 1
      %p249 = scmp.ne.s32.totalorder %s244, %s246
      %p250 = scmp.eq.s32.totalorder %s21, 0
      %p251 = por %p249, %p250
      %p252 = scmp.ne.s32.totalorder %s244, %s246
      %p253 = scmp.eq.s32.totalorder %s26, 1
      %p254 = por %p252, %p253
      %p255 = scmp.ne.s32.totalorder %s246, %s247
      %p256 = scmp.eq.s32.totalorder %s26, 0
      %p257 = por %p255, %p256
      %p258 = scmp.ne.s32.totalorder %s246, %s247
      %p259 = scmp.eq.s32.totalorder %s27, 1
      %p260 = por %p258, %p259
      %p262 = scmp.ne.s32.totalorder %s247, %s261
      %p263 = scmp.eq.s32.totalorder %s27, 0
      %p264 = por %p262, %p263
      %s266 = sadd.s32 %s265, 1
      %p269 = scmp.eq.s32.totalorder %s21, 1
      %p270 = scmp.ne.s32.totalorder %s265, %s267
      %p271 = scmp.eq.s32.totalorder %s21, 0
      %p272 = por %p270, %p271
      %p273 = scmp.ne.s32.totalorder %s265, %s267
      %p274 = scmp.eq.s32.totalorder %s26, 1
      %p275 = por %p273, %p274
      %p276 = scmp.ne.s32.totalorder %s267, %s268
      %p277 = scmp.eq.s32.totalorder %s26, 0
      %p278 = por %p276, %p277
      %p279 = scmp.ne.s32.totalorder %s267, %s268
      %p280 = scmp.eq.s32.totalorder %s27, 1
      %p281 = por %p279, %p280
      %p283 = scmp.ne.s32.totalorder %s268, %s282
      %p284 = scmp.eq.s32.totalorder %s27, 0
      %p285 = por %p283, %p284
      %s286 = ssub.s32 %s21, %s28
      %p287 = scmp.eq.s32.totalorder %s286, 0
      %s289 = sadd.s32 %s288, 1
      %s290 = scalar_select %p287, %s288, %s289
      %p293 = pneg %p287
      %p294 = scmp.eq.s32.totalorder %s21, 1
      %p295 = por %p293, %p294
      %p296 = scmp.ne.s32.totalorder %s288, %s291
      %p297 = scmp.eq.s32.totalorder %s21, 0
      %p298 = por %p296, %p297
      %p299 = scmp.ne.s32.totalorder %s288, %s291
      %p300 = scmp.eq.s32.totalorder %s26, 1
      %p301 = por %p299, %p300
      %p302 = scmp.ne.s32.totalorder %s291, %s292
      %p303 = scmp.eq.s32.totalorder %s26, 0
      %p304 = por %p302, %p303
      %p305 = scmp.ne.s32.totalorder %s291, %s292
      %p306 = scmp.eq.s32.totalorder %s27, 1
      %p307 = por %p305, %p306
      %p309 = scmp.ne.s32.totalorder %s292, %s308
      %p310 = scmp.eq.s32.totalorder %s27, 0
      %p311 = por %p309, %p310
      %p312 = scmp.le.s32.totalorder 1, %s21
      %p313 = scmp.lt.s32.totalorder %s21, 3
      %p314 = pnand %p312, %p313
      %p315 = pneg %p314
      // Predicated region
      $region9: #{lenet5_forward.1} parent=5 // pred_check
        _
      $region10: #{lenet5_forward.1} parent=5 // pred_check_branch
        %317 = sbr.rel (%p314) target = $region12
      $region11: #{lenet5_forward.1} parent=5 // pred_region
        %s318 = ssub.s32 %s21, 1
        // Predicated region
        $region13: #{lenet5_forward.1} parent=11 // pred_check
          %p319 = pneg %p68
        $region14: #{lenet5_forward.1} parent=11 // pred_check_branch
          %321 = sbr.rel (%p319) target = $region16
        $region15: #{lenet5_forward.1} parent=11 // pred_region
          _
        $region16: #{lenet5_forward.1} parent=11 // pred_fallthru
          _
        // Predicated region
        $region17: #{lenet5_forward.1} parent=11 // pred_check
          %p322 = pneg %p89
        $region18: #{lenet5_forward.1} parent=11 // pred_check_branch
          %324 = sbr.rel (%p322) target = $region20
        $region19: #{lenet5_forward.1} parent=11 // pred_region
          _
        $region20: #{lenet5_forward.1} parent=11 // pred_fallthru
          _
        // Predicated region
        $region21: #{lenet5_forward.1} parent=11 // pred_check
          %p325 = pneg %p110
        $region22: #{lenet5_forward.1} parent=11 // pred_check_branch
          %327 = sbr.rel (%p325) target = $region24
        $region23: #{lenet5_forward.1} parent=11 // pred_region
          _
        $region24: #{lenet5_forward.1} parent=11 // pred_fallthru
          _
        // Predicated region
        $region25: #{lenet5_forward.1} parent=11 // pred_check
          %p328 = pneg %p131
        $region26: #{lenet5_forward.1} parent=11 // pred_check_branch
          %330 = sbr.rel (%p328) target = $region28
        $region27: #{lenet5_forward.1} parent=11 // pred_region
          _
        $region28: #{lenet5_forward.1} parent=11 // pred_fallthru
          _
        // Predicated region
        $region29: #{lenet5_forward.1} parent=11 // pred_check
          %p331 = pneg %p152
        $region30: #{lenet5_forward.1} parent=11 // pred_check_branch
          %333 = sbr.rel (%p331) target = $region32
        $region31: #{lenet5_forward.1} parent=11 // pred_region
          _
        $region32: #{lenet5_forward.1} parent=11 // pred_fallthru
          _
        // Predicated region
        $region33: #{lenet5_forward.1} parent=11 // pred_check
          %p334 = pneg %p173
        $region34: #{lenet5_forward.1} parent=11 // pred_check_branch
          %336 = sbr.rel (%p334) target = $region36
        $region35: #{lenet5_forward.1} parent=11 // pred_region
          _
        $region36: #{lenet5_forward.1} parent=11 // pred_fallthru
          _
        // Predicated region
        $region37: #{lenet5_forward.1} parent=11 // pred_check
          %p337 = pneg %p194
        $region38: #{lenet5_forward.1} parent=11 // pred_check_branch
          %339 = sbr.rel (%p337) target = $region40
        $region39: #{lenet5_forward.1} parent=11 // pred_region
          _
        $region40: #{lenet5_forward.1} parent=11 // pred_fallthru
          _
        // Predicated region
        $region41: #{lenet5_forward.1} parent=11 // pred_check
          %p340 = pneg %p215
        $region42: #{lenet5_forward.1} parent=11 // pred_check_branch
          %342 = sbr.rel (%p340) target = $region44
        $region43: #{lenet5_forward.1} parent=11 // pred_region
          _
        $region44: #{lenet5_forward.1} parent=11 // pred_fallthru
          _
        // Predicated region
        $region45: #{lenet5_forward.1} parent=11 // pred_check
          %p343 = pneg %p236
        $region46: #{lenet5_forward.1} parent=11 // pred_check_branch
          %345 = sbr.rel (%p343) target = $region48
        $region47: #{lenet5_forward.1} parent=11 // pred_region
          _
        $region48: #{lenet5_forward.1} parent=11 // pred_fallthru
          _
        // Predicated region
        $region49: #{lenet5_forward.1} parent=11 // pred_check
          %p346 = pneg %p257
        $region50: #{lenet5_forward.1} parent=11 // pred_check_branch
          %348 = sbr.rel (%p346) target = $region52
        $region51: #{lenet5_forward.1} parent=11 // pred_region
          _
        $region52: #{lenet5_forward.1} parent=11 // pred_fallthru
          _
        // Predicated region
        $region53: #{lenet5_forward.1} parent=11 // pred_check
          %p349 = pneg %p278
        $region54: #{lenet5_forward.1} parent=11 // pred_check_branch
          %351 = sbr.rel (%p349) target = $region56
        $region55: #{lenet5_forward.1} parent=11 // pred_region
          _
        $region56: #{lenet5_forward.1} parent=11 // pred_fallthru
          _
      $region12: #{lenet5_forward.1} parent=5 // pred_fallthru
        _
      %p352 = scmp.lt.s32.totalorder %s21, 2
      // Predicated region
      $region57: #{lenet5_forward.1} parent=5 // pred_check
        %p353 = pneg %p352
      $region58: #{lenet5_forward.1} parent=5 // pred_check_branch
        %355 = sbr.rel (%p353) target = $region60
      $region59: #{lenet5_forward.1} parent=5 // pred_region
        // Predicated region
        $region61: #{lenet5_forward.1} parent=59 // pred_check
          %p356 = pneg %p41
        $region62: #{lenet5_forward.1} parent=59 // pred_check_branch
          %358 = sbr.rel (%p356) target = $region64
        $region63: #{lenet5_forward.1} parent=59 // pred_region
          %p359 = scmp.lt.s32.totalorder %s21, 1
          %s360 = scalar_select %p359, %s21, 1
          %s361 = smul.addr %s360, 8
          %s362 = smul.addr %s361, 8
          %s363 = scalar_lea.vmem %s0, %s362
        $region64: #{lenet5_forward.1} parent=59 // pred_fallthru
          _
      $region60: #{lenet5_forward.1} parent=5 // pred_fallthru
        _
      %p364 = scmp.le.s32.totalorder 1, %s21
      %p365 = scmp.lt.s32.totalorder %s21, 3
      %p366 = pnand %p364, %p365
      %p367 = pneg %p366
      // Predicated region
      $region65: #{lenet5_forward.1} parent=5 // pred_check
        _
      $region66: #{lenet5_forward.1} parent=5 // pred_check_branch
        %369 = sbr.rel (%p366) target = $region68
      $region67: #{lenet5_forward.1} parent=5 // pred_region
        %s370 = ssub.s32 %s21, 1
        %p371 = scmp.lt.s32.totalorder %s26, 1
        %s372 = scalar_select %p371, %s26, 1
        %s373 = smul.addr %s372, 8
        %s374 = smul.addr %s373, 8
        %s375 = scalar_lea.vmem %s0, %s374
        %p376 = pneg %p47
        %p377 = pneg %p44
        %p378 = pneg %p68
        %p379 = pneg %p65
        %p380 = pneg %p89
        %p381 = pneg %p86
        %p382 = pneg %p110
        %p383 = pneg %p107
        %p384 = pneg %p131
        %p385 = pneg %p128
        %p386 = pneg %p152
        %p387 = pneg %p149
        %p388 = pneg %p173
        %p389 = pneg %p170
        %p390 = pneg %p194
        %p391 = pneg %p191
        %p392 = pneg %p215
        %p393 = pneg %p212
        %p394 = pneg %p236
        %p395 = pneg %p233
        %p396 = pneg %p257
        %p397 = pneg %p254
        %p398 = pneg %p278
        %p399 = pneg %p275
        %p400 = pneg %p304
        %p401 = pneg %p301
        %s402 = sand.u32 %s291, 1
        %s403 = scalar_lea.sflag [#allocation3], %s402
        %s404 = sand.u32 %s291, 1
        %s405 = smul.addr %s404, 8
        %s406 = scalar_lea.vmem [#allocation2], %s405
        %p407 = scmp.lt.s32.totalorder %s26, 1
        %s408 = scalar_select %p407, %s26, 1
        %s409 = smul.addr %s408, 8
        %s410 = smul.addr %s409, 8
        %s411 = scalar_lea.vmem %s0, %s410
        %v412 = vld [vmem:[%s411] sm:$0xff]
        %v413 = vld [vmem:[%s411 + $0x8] sm:$0xff]
        %v414 = vld [vmem:[%s411 + $0x10] sm:$0xff]
        %v415 = vld [vmem:[%s411 + $0x18] sm:$0xff]
        %v416 = vld [vmem:[%s411 + $0x20] sm:$0xff]
        %v417 = vld [vmem:[%s411 + $0x28] sm:$0xff]
        %v418 = vld [vmem:[%s411 + $0x30] sm:$0xff]
        %v419 = vld [vmem:[%s411 + $0x38] sm:$0xff]
        %427 = vrot.lane.b32.xlu0 %v412, 127
        %v428 = vpop.permute.xlu0 %427
        %429 = vrot.lane.b32.xlu0 %v413, 127
        %v430 = vpop.permute.xlu0 %429
        %431 = vrot.lane.b32.xlu0 %v414, 127
        %v432 = vpop.permute.xlu0 %431
        %433 = vrot.lane.b32.xlu0 %v415, 127
        %v434 = vpop.permute.xlu0 %433
        %435 = vrot.lane.b32.xlu0 %v416, 127
        %v436 = vpop.permute.xlu0 %435
        %437 = vrot.lane.b32.xlu0 %v417, 127
        %v438 = vpop.permute.xlu0 %437
        %439 = vrot.lane.b32.xlu0 %v418, 127
        %v440 = vpop.permute.xlu0 %439
        %vm441 = vcmask 1039360
        %v442 = vsel %vm441, %v428, %v430
        %v443 = vsel %vm441, %v430, %v432
        %v444 = vsel %vm441, %v432, %v434
        %v445 = vsel %vm441, %v434, %v436
        %v446 = vsel %vm441, %v436, %v438
        %v447 = vsel %vm441, %v438, %v440
        %455 = vrot.lane.b32.xlu0 %v412, 126
        %v456 = vpop.permute.xlu0 %455
        %457 = vrot.lane.b32.xlu0 %v413, 126
        %v458 = vpop.permute.xlu0 %457
        %459 = vrot.lane.b32.xlu0 %v414, 126
        %v460 = vpop.permute.xlu0 %459
        %461 = vrot.lane.b32.xlu0 %v415, 126
        %v462 = vpop.permute.xlu0 %461
        %463 = vrot.lane.b32.xlu0 %v416, 126
        %v464 = vpop.permute.xlu0 %463
        %465 = vrot.lane.b32.xlu0 %v417, 126
        %v466 = vpop.permute.xlu0 %465
        %467 = vrot.lane.b32.xlu0 %v418, 126
        %v468 = vpop.permute.xlu0 %467
        %vm469 = vcmask 1031168
        %v470 = vsel %vm469, %v456, %v458
        %v471 = vsel %vm469, %v458, %v460
        %v472 = vsel %vm469, %v460, %v462
        %v473 = vsel %vm469, %v462, %v464
        %v474 = vsel %vm469, %v464, %v466
        %v475 = vsel %vm469, %v466, %v468
        %483 = vrot.lane.b32.xlu0 %v412, 125
        %v484 = vpop.permute.xlu0 %483
        %485 = vrot.lane.b32.xlu0 %v413, 125
        %v486 = vpop.permute.xlu0 %485
        %487 = vrot.lane.b32.xlu0 %v414, 125
        %v488 = vpop.permute.xlu0 %487
        %489 = vrot.lane.b32.xlu0 %v415, 125
        %v490 = vpop.permute.xlu0 %489
        %491 = vrot.lane.b32.xlu0 %v416, 125
        %v492 = vpop.permute.xlu0 %491
        %493 = vrot.lane.b32.xlu0 %v417, 125
        %v494 = vpop.permute.xlu0 %493
        %495 = vrot.lane.b32.xlu0 %v418, 125
        %v496 = vpop.permute.xlu0 %495
        %vm497 = vcmask 1022976
        %v498 = vsel %vm497, %v484, %v486
        %v499 = vsel %vm497, %v486, %v488
        %v500 = vsel %vm497, %v488, %v490
        %v501 = vsel %vm497, %v490, %v492
        %v502 = vsel %vm497, %v492, %v494
        %v503 = vsel %vm497, %v494, %v496
        %511 = vrot.lane.b32.xlu0 %v412, 124
        %v512 = vpop.permute.xlu0 %511
        %513 = vrot.lane.b32.xlu0 %v413, 124
        %v514 = vpop.permute.xlu0 %513
        %515 = vrot.lane.b32.xlu0 %v414, 124
        %v516 = vpop.permute.xlu0 %515
        %517 = vrot.lane.b32.xlu0 %v415, 124
        %v518 = vpop.permute.xlu0 %517
        %519 = vrot.lane.b32.xlu0 %v416, 124
        %v520 = vpop.permute.xlu0 %519
        %521 = vrot.lane.b32.xlu0 %v417, 124
        %v522 = vpop.permute.xlu0 %521
        %523 = vrot.lane.b32.xlu0 %v418, 124
        %v524 = vpop.permute.xlu0 %523
        %vm525 = vcmask 1014784
        %v526 = vsel %vm525, %v512, %v514
        %v527 = vsel %vm525, %v514, %v516
        %v528 = vsel %vm525, %v516, %v518
        %v529 = vsel %vm525, %v518, %v520
        %v530 = vsel %vm525, %v520, %v522
        %v531 = vsel %vm525, %v522, %v524
        %540 = vrot.lane.b32.xlu0 %v412, 96
        %v541 = vpop.permute.xlu0 %540
        %542 = vrot.lane.b32.xlu0 %v413, 96
        %v543 = vpop.permute.xlu0 %542
        %544 = vrot.lane.b32.xlu0 %v414, 96
        %v545 = vpop.permute.xlu0 %544
        %546 = vrot.lane.b32.xlu0 %v415, 96
        %v547 = vpop.permute.xlu0 %546
        %548 = vrot.lane.b32.xlu0 %v416, 96
        %v549 = vpop.permute.xlu0 %548
        %550 = vrot.lane.b32.xlu0 %v417, 96
        %v551 = vpop.permute.xlu0 %550
        %552 = vrot.lane.b32.xlu0 %v418, 96
        %v553 = vpop.permute.xlu0 %552
        %554 = vrot.lane.b32.xlu0 %v419, 96
        %v555 = vpop.permute.xlu0 %554
        %vm556 = vcmask 785408
        %v557 = vsel %vm556, %v541, %v543
        %v558 = vsel %vm556, %v543, %v545
        %v559 = vsel %vm556, %v545, %v547
        %v560 = vsel %vm556, %v547, %v549
        %v561 = vsel %vm556, %v549, %v551
        %v562 = vsel %vm556, %v551, %v553
        %v563 = vsel %vm556, %v553, %v555
        %571 = vrot.lane.b32.xlu0 %v412, 95
        %v572 = vpop.permute.xlu0 %571
        %573 = vrot.lane.b32.xlu0 %v413, 95
        %v574 = vpop.permute.xlu0 %573
        %575 = vrot.lane.b32.xlu0 %v414, 95
        %v576 = vpop.permute.xlu0 %575
        %577 = vrot.lane.b32.xlu0 %v415, 95
        %v578 = vpop.permute.xlu0 %577
        %579 = vrot.lane.b32.xlu0 %v416, 95
        %v580 = vpop.permute.xlu0 %579
        %581 = vrot.lane.b32.xlu0 %v417, 95
        %v582 = vpop.permute.xlu0 %581
        %583 = vrot.lane.b32.xlu0 %v418, 95
        %v584 = vpop.permute.xlu0 %583
        %585 = vrot.lane.b32.xlu0 %v419, 95
        %v586 = vpop.permute.xlu0 %585
        %vm587 = vcmask 777216
        %v588 = vsel %vm587, %v572, %v574
        %v589 = vsel %vm587, %v574, %v576
        %v590 = vsel %vm587, %v576, %v578
        %v591 = vsel %vm587, %v578, %v580
        %v592 = vsel %vm587, %v580, %v582
        %v593 = vsel %vm587, %v582, %v584
        %v594 = vsel %vm587, %v584, %v586
        %602 = vrot.lane.b32.xlu0 %v412, 94
        %v603 = vpop.permute.xlu0 %602
        %604 = vrot.lane.b32.xlu0 %v413, 94
        %v605 = vpop.permute.xlu0 %604
        %606 = vrot.lane.b32.xlu0 %v414, 94
        %v607 = vpop.permute.xlu0 %606
        %608 = vrot.lane.b32.xlu0 %v415, 94
        %v609 = vpop.permute.xlu0 %608
        %610 = vrot.lane.b32.xlu0 %v416, 94
        %v611 = vpop.permute.xlu0 %610
        %612 = vrot.lane.b32.xlu0 %v417, 94
        %v613 = vpop.permute.xlu0 %612
        %614 = vrot.lane.b32.xlu0 %v418, 94
        %v615 = vpop.permute.xlu0 %614
        %616 = vrot.lane.b32.xlu0 %v419, 94
        %v617 = vpop.permute.xlu0 %616
        %vm618 = vcmask 769024
        %v619 = vsel %vm618, %v603, %v605
        %v620 = vsel %vm618, %v605, %v607
        %v621 = vsel %vm618, %v607, %v609
        %v622 = vsel %vm618, %v609, %v611
        %v623 = vsel %vm618, %v611, %v613
        %v624 = vsel %vm618, %v613, %v615
        %v625 = vsel %vm618, %v615, %v617
        %633 = vrot.lane.b32.xlu0 %v412, 93
        %v634 = vpop.permute.xlu0 %633
        %635 = vrot.lane.b32.xlu0 %v413, 93
        %v636 = vpop.permute.xlu0 %635
        %637 = vrot.lane.b32.xlu0 %v414, 93
        %v638 = vpop.permute.xlu0 %637
        %639 = vrot.lane.b32.xlu0 %v415, 93
        %v640 = vpop.permute.xlu0 %639
        %641 = vrot.lane.b32.xlu0 %v416, 93
        %v642 = vpop.permute.xlu0 %641
        %643 = vrot.lane.b32.xlu0 %v417, 93
        %v644 = vpop.permute.xlu0 %643
        %645 = vrot.lane.b32.xlu0 %v418, 93
        %v646 = vpop.permute.xlu0 %645
        %647 = vrot.lane.b32.xlu0 %v419, 93
        %v648 = vpop.permute.xlu0 %647
        %vm649 = vcmask 760832
        %v650 = vsel %vm649, %v634, %v636
        %v651 = vsel %vm649, %v636, %v638
        %v652 = vsel %vm649, %v638, %v640
        %v653 = vsel %vm649, %v640, %v642
        %v654 = vsel %vm649, %v642, %v644
        %v655 = vsel %vm649, %v644, %v646
        %v656 = vsel %vm649, %v646, %v648
        %664 = vrot.lane.b32.xlu0 %v412, 92
        %v665 = vpop.permute.xlu0 %664
        %666 = vrot.lane.b32.xlu0 %v413, 92
        %v667 = vpop.permute.xlu0 %666
        %668 = vrot.lane.b32.xlu0 %v414, 92
        %v669 = vpop.permute.xlu0 %668
        %670 = vrot.lane.b32.xlu0 %v415, 92
        %v671 = vpop.permute.xlu0 %670
        %672 = vrot.lane.b32.xlu0 %v416, 92
        %v673 = vpop.permute.xlu0 %672
        %674 = vrot.lane.b32.xlu0 %v417, 92
        %v675 = vpop.permute.xlu0 %674
        %676 = vrot.lane.b32.xlu0 %v418, 92
        %v677 = vpop.permute.xlu0 %676
        %678 = vrot.lane.b32.xlu0 %v419, 92
        %v679 = vpop.permute.xlu0 %678
        %vm680 = vcmask 752640
        %v681 = vsel %vm680, %v665, %v667
        %v682 = vsel %vm680, %v667, %v669
        %v683 = vsel %vm680, %v669, %v671
        %v684 = vsel %vm680, %v671, %v673
        %v685 = vsel %vm680, %v673, %v675
        %v686 = vsel %vm680, %v675, %v677
        %v687 = vsel %vm680, %v677, %v679
        %695 = vrot.lane.b32.xlu0 %v412, 64
        %v696 = vpop.permute.xlu0 %695
        %697 = vrot.lane.b32.xlu0 %v413, 64
        %v698 = vpop.permute.xlu0 %697
        %699 = vrot.lane.b32.xlu0 %v414, 64
        %v700 = vpop.permute.xlu0 %699
        %701 = vrot.lane.b32.xlu0 %v415, 64
        %v702 = vpop.permute.xlu0 %701
        %703 = vrot.lane.b32.xlu0 %v416, 64
        %v704 = vpop.permute.xlu0 %703
        %705 = vrot.lane.b32.xlu0 %v417, 64
        %v706 = vpop.permute.xlu0 %705
        %707 = vrot.lane.b32.xlu0 %v418, 64
        %v708 = vpop.permute.xlu0 %707
        %709 = vrot.lane.b32.xlu0 %v419, 64
        %v710 = vpop.permute.xlu0 %709
        %vm711 = vcmask 523264
        %v712 = vsel %vm711, %v696, %v698
        %v713 = vsel %vm711, %v698, %v700
        %v714 = vsel %vm711, %v700, %v702
        %v715 = vsel %vm711, %v702, %v704
        %v716 = vsel %vm711, %v704, %v706
        %v717 = vsel %vm711, %v706, %v708
        %v718 = vsel %vm711, %v708, %v710
        %726 = vrot.lane.b32.xlu0 %v412, 63
        %v727 = vpop.permute.xlu0 %726
        %728 = vrot.lane.b32.xlu0 %v413, 63
        %v729 = vpop.permute.xlu0 %728
        %730 = vrot.lane.b32.xlu0 %v414, 63
        %v731 = vpop.permute.xlu0 %730
        %732 = vrot.lane.b32.xlu0 %v415, 63
        %v733 = vpop.permute.xlu0 %732
        %734 = vrot.lane.b32.xlu0 %v416, 63
        %v735 = vpop.permute.xlu0 %734
        %736 = vrot.lane.b32.xlu0 %v417, 63
        %v737 = vpop.permute.xlu0 %736
        %738 = vrot.lane.b32.xlu0 %v418, 63
        %v739 = vpop.permute.xlu0 %738
        %740 = vrot.lane.b32.xlu0 %v419, 63
        %v741 = vpop.permute.xlu0 %740
        %vm742 = vcmask 515072
        %v743 = vsel %vm742, %v727, %v729
        %v744 = vsel %vm742, %v729, %v731
        %v745 = vsel %vm742, %v731, %v733
        %v746 = vsel %vm742, %v733, %v735
        %v747 = vsel %vm742, %v735, %v737
        %v748 = vsel %vm742, %v737, %v739
        %v749 = vsel %vm742, %v739, %v741
        %757 = vrot.lane.b32.xlu0 %v412, 62
        %v758 = vpop.permute.xlu0 %757
        %759 = vrot.lane.b32.xlu0 %v413, 62
        %v760 = vpop.permute.xlu0 %759
        %761 = vrot.lane.b32.xlu0 %v414, 62
        %v762 = vpop.permute.xlu0 %761
        %763 = vrot.lane.b32.xlu0 %v415, 62
        %v764 = vpop.permute.xlu0 %763
        %765 = vrot.lane.b32.xlu0 %v416, 62
        %v766 = vpop.permute.xlu0 %765
        %767 = vrot.lane.b32.xlu0 %v417, 62
        %v768 = vpop.permute.xlu0 %767
        %769 = vrot.lane.b32.xlu0 %v418, 62
        %v770 = vpop.permute.xlu0 %769
        %771 = vrot.lane.b32.xlu0 %v419, 62
        %v772 = vpop.permute.xlu0 %771
        %vm773 = vcmask 506880
        %v774 = vsel %vm773, %v758, %v760
        %v775 = vsel %vm773, %v760, %v762
        %v776 = vsel %vm773, %v762, %v764
        %v777 = vsel %vm773, %v764, %v766
        %v778 = vsel %vm773, %v766, %v768
        %v779 = vsel %vm773, %v768, %v770
        %v780 = vsel %vm773, %v770, %v772
        %788 = vrot.lane.b32.xlu0 %v412, 61
        %v789 = vpop.permute.xlu0 %788
        %790 = vrot.lane.b32.xlu0 %v413, 61
        %v791 = vpop.permute.xlu0 %790
        %792 = vrot.lane.b32.xlu0 %v414, 61
        %v793 = vpop.permute.xlu0 %792
        %794 = vrot.lane.b32.xlu0 %v415, 61
        %v795 = vpop.permute.xlu0 %794
        %796 = vrot.lane.b32.xlu0 %v416, 61
        %v797 = vpop.permute.xlu0 %796
        %798 = vrot.lane.b32.xlu0 %v417, 61
        %v799 = vpop.permute.xlu0 %798
        %800 = vrot.lane.b32.xlu0 %v418, 61
        %v801 = vpop.permute.xlu0 %800
        %802 = vrot.lane.b32.xlu0 %v419, 61
        %v803 = vpop.permute.xlu0 %802
        %vm804 = vcmask 498688
        %v805 = vsel %vm804, %v789, %v791
        %v806 = vsel %vm804, %v791, %v793
        %v807 = vsel %vm804, %v793, %v795
        %v808 = vsel %vm804, %v795, %v797
        %v809 = vsel %vm804, %v797, %v799
        %v810 = vsel %vm804, %v799, %v801
        %v811 = vsel %vm804, %v801, %v803
        %819 = vrot.lane.b32.xlu0 %v412, 60
        %v820 = vpop.permute.xlu0 %819
        %821 = vrot.lane.b32.xlu0 %v413, 60
        %v822 = vpop.permute.xlu0 %821
        %823 = vrot.lane.b32.xlu0 %v414, 60
        %v824 = vpop.permute.xlu0 %823
        %825 = vrot.lane.b32.xlu0 %v415, 60
        %v826 = vpop.permute.xlu0 %825
        %827 = vrot.lane.b32.xlu0 %v416, 60
        %v828 = vpop.permute.xlu0 %827
        %829 = vrot.lane.b32.xlu0 %v417, 60
        %v830 = vpop.permute.xlu0 %829
        %831 = vrot.lane.b32.xlu0 %v418, 60
        %v832 = vpop.permute.xlu0 %831
        %833 = vrot.lane.b32.xlu0 %v419, 60
        %v834 = vpop.permute.xlu0 %833
        %vm835 = vcmask 490496
        %v836 = vsel %vm835, %v820, %v822
        %v837 = vsel %vm835, %v822, %v824
        %v838 = vsel %vm835, %v824, %v826
        %v839 = vsel %vm835, %v826, %v828
        %v840 = vsel %vm835, %v828, %v830
        %v841 = vsel %vm835, %v830, %v832
        %v842 = vsel %vm835, %v832, %v834
        %850 = vrot.lane.b32.xlu0 %v412, 32
        %v851 = vpop.permute.xlu0 %850
        %852 = vrot.lane.b32.xlu0 %v413, 32
        %v853 = vpop.permute.xlu0 %852
        %854 = vrot.lane.b32.xlu0 %v414, 32
        %v855 = vpop.permute.xlu0 %854
        %856 = vrot.lane.b32.xlu0 %v415, 32
        %v857 = vpop.permute.xlu0 %856
        %858 = vrot.lane.b32.xlu0 %v416, 32
        %v859 = vpop.permute.xlu0 %858
        %860 = vrot.lane.b32.xlu0 %v417, 32
        %v861 = vpop.permute.xlu0 %860
        %862 = vrot.lane.b32.xlu0 %v418, 32
        %v863 = vpop.permute.xlu0 %862
        %864 = vrot.lane.b32.xlu0 %v419, 32
        %v865 = vpop.permute.xlu0 %864
        %vm866 = vcmask 261120
        %v867 = vsel %vm866, %v851, %v853
        %v868 = vsel %vm866, %v853, %v855
        %v869 = vsel %vm866, %v855, %v857
        %v870 = vsel %vm866, %v857, %v859
        %v871 = vsel %vm866, %v859, %v861
        %v872 = vsel %vm866, %v861, %v863
        %v873 = vsel %vm866, %v863, %v865
        %881 = vrot.lane.b32.xlu0 %v419, 127
        %v882 = vpop.permute.xlu0 %881
        %v883 = vsel %vm441, %v440, %v882
        %884 = vrot.lane.b32.xlu0 %v419, 126
        %v885 = vpop.permute.xlu0 %884
        %v886 = vsel %vm469, %v468, %v885
        %887 = vrot.lane.b32.xlu0 %v419, 125
        %v888 = vpop.permute.xlu0 %887
        %v889 = vsel %vm497, %v496, %v888
        %890 = vrot.lane.b32.xlu0 %v413, 97
        %v891 = vpop.permute.xlu0 %890
        %892 = vrot.lane.b32.xlu0 %v414, 97
        %v893 = vpop.permute.xlu0 %892
        %894 = vrot.lane.b32.xlu0 %v415, 97
        %v895 = vpop.permute.xlu0 %894
        %896 = vrot.lane.b32.xlu0 %v416, 97
        %v897 = vpop.permute.xlu0 %896
        %898 = vrot.lane.b32.xlu0 %v417, 97
        %v899 = vpop.permute.xlu0 %898
        %900 = vrot.lane.b32.xlu0 %v418, 97
        %v901 = vpop.permute.xlu0 %900
        %902 = vrot.lane.b32.xlu0 %v419, 97
        %v903 = vpop.permute.xlu0 %902
        %vm904 = vcmask 793600
        %v905 = vsel %vm904, %v891, %v893
        %v906 = vsel %vm904, %v893, %v895
        %v907 = vsel %vm904, %v895, %v897
        %v908 = vsel %vm904, %v897, %v899
        %v909 = vsel %vm904, %v899, %v901
        %v910 = vsel %vm904, %v901, %v903
        %911 = vrot.lane.b32.xlu0 %v412, 31
        %v912 = vpop.permute.xlu0 %911
        %913 = vrot.lane.b32.xlu0 %v413, 31
        %v914 = vpop.permute.xlu0 %913
        %915 = vrot.lane.b32.xlu0 %v414, 31
        %v916 = vpop.permute.xlu0 %915
        %917 = vrot.lane.b32.xlu0 %v415, 31
        %v918 = vpop.permute.xlu0 %917
        %919 = vrot.lane.b32.xlu0 %v416, 31
        %v920 = vpop.permute.xlu0 %919
        %921 = vrot.lane.b32.xlu0 %v417, 31
        %v922 = vpop.permute.xlu0 %921
        %923 = vrot.lane.b32.xlu0 %v418, 31
        %v924 = vpop.permute.xlu0 %923
        %925 = vrot.lane.b32.xlu0 %v419, 31
        %v926 = vpop.permute.xlu0 %925
        %927 = vrot.lane.b32.xlu0 %v442, 31
        %v928 = vpop.permute.xlu0 %927
        %929 = vrot.lane.b32.xlu0 %v443, 31
        %v930 = vpop.permute.xlu0 %929
        %931 = vrot.lane.b32.xlu0 %v444, 31
        %v932 = vpop.permute.xlu0 %931
        %933 = vrot.lane.b32.xlu0 %v445, 31
        %v934 = vpop.permute.xlu0 %933
        %935 = vrot.lane.b32.xlu0 %v446, 31
        %v936 = vpop.permute.xlu0 %935
        %937 = vrot.lane.b32.xlu0 %v447, 31
        %v938 = vpop.permute.xlu0 %937
        %939 = vrot.lane.b32.xlu0 %v883, 31
        %v940 = vpop.permute.xlu0 %939
        %941 = vrot.lane.b32.xlu0 %v882, 31
        %v942 = vpop.permute.xlu0 %941
        %943 = vrot.lane.b32.xlu0 %v470, 31
        %v944 = vpop.permute.xlu0 %943
        %945 = vrot.lane.b32.xlu0 %v471, 31
        %v946 = vpop.permute.xlu0 %945
        %947 = vrot.lane.b32.xlu0 %v472, 31
        %v948 = vpop.permute.xlu0 %947
        %949 = vrot.lane.b32.xlu0 %v473, 31
        %v950 = vpop.permute.xlu0 %949
        %951 = vrot.lane.b32.xlu0 %v474, 31
        %v952 = vpop.permute.xlu0 %951
        %953 = vrot.lane.b32.xlu0 %v475, 31
        %v954 = vpop.permute.xlu0 %953
        %955 = vrot.lane.b32.xlu0 %v886, 31
        %v956 = vpop.permute.xlu0 %955
        %957 = vrot.lane.b32.xlu0 %v885, 31
        %v958 = vpop.permute.xlu0 %957
        %959 = vrot.lane.b32.xlu0 %v498, 31
        %v960 = vpop.permute.xlu0 %959
        %961 = vrot.lane.b32.xlu0 %v499, 31
        %v962 = vpop.permute.xlu0 %961
        %963 = vrot.lane.b32.xlu0 %v500, 31
        %v964 = vpop.permute.xlu0 %963
        %965 = vrot.lane.b32.xlu0 %v501, 31
        %v966 = vpop.permute.xlu0 %965
        %967 = vrot.lane.b32.xlu0 %v502, 31
        %v968 = vpop.permute.xlu0 %967
        %969 = vrot.lane.b32.xlu0 %v503, 31
        %v970 = vpop.permute.xlu0 %969
        %971 = vrot.lane.b32.xlu0 %v889, 31
        %v972 = vpop.permute.xlu0 %971
        %973 = vrot.lane.b32.xlu0 %v888, 31
        %v974 = vpop.permute.xlu0 %973
        %975 = vrot.lane.b32.xlu0 %v891, 31
        %v976 = vpop.permute.xlu0 %975
        %977 = vrot.lane.b32.xlu0 %v905, 31
        %v978 = vpop.permute.xlu0 %977
        %979 = vrot.lane.b32.xlu0 %v906, 31
        %v980 = vpop.permute.xlu0 %979
        %981 = vrot.lane.b32.xlu0 %v907, 31
        %v982 = vpop.permute.xlu0 %981
        %983 = vrot.lane.b32.xlu0 %v908, 31
        %v984 = vpop.permute.xlu0 %983
        %985 = vrot.lane.b32.xlu0 %v909, 31
        %v986 = vpop.permute.xlu0 %985
        %987 = vrot.lane.b32.xlu0 %v910, 31
        %v988 = vpop.permute.xlu0 %987
        %989 = vrot.lane.b32.xlu0 %v903, 31
        %v990 = vpop.permute.xlu0 %989
        %991 = vrot.lane.b32.xlu0 %v543, 31
        %v992 = vpop.permute.xlu0 %991
        %993 = vrot.lane.b32.xlu0 %v558, 31
        %v994 = vpop.permute.xlu0 %993
        %995 = vrot.lane.b32.xlu0 %v559, 31
        %v996 = vpop.permute.xlu0 %995
        %997 = vrot.lane.b32.xlu0 %v560, 31
        %v998 = vpop.permute.xlu0 %997
        %999 = vrot.lane.b32.xlu0 %v561, 31
        %v1000 = vpop.permute.xlu0 %999
        %1001 = vrot.lane.b32.xlu0 %v562, 31
        %v1002 = vpop.permute.xlu0 %1001
        %1003 = vrot.lane.b32.xlu0 %v563, 31
        %v1004 = vpop.permute.xlu0 %1003
        %1005 = vrot.lane.b32.xlu0 %v555, 31
        %v1006 = vpop.permute.xlu0 %1005
        %1007 = vrot.lane.b32.xlu0 %v574, 31
        %v1008 = vpop.permute.xlu0 %1007
        %1009 = vrot.lane.b32.xlu0 %v589, 31
        %v1010 = vpop.permute.xlu0 %1009
        %1011 = vrot.lane.b32.xlu0 %v590, 31
        %v1012 = vpop.permute.xlu0 %1011
        %1013 = vrot.lane.b32.xlu0 %v591, 31
        %v1014 = vpop.permute.xlu0 %1013
        %1015 = vrot.lane.b32.xlu0 %v592, 31
        %v1016 = vpop.permute.xlu0 %1015
        %1017 = vrot.lane.b32.xlu0 %v593, 31
        %v1018 = vpop.permute.xlu0 %1017
        %1019 = vrot.lane.b32.xlu0 %v594, 31
        %v1020 = vpop.permute.xlu0 %1019
        %1021 = vrot.lane.b32.xlu0 %v586, 31
        %v1022 = vpop.permute.xlu0 %1021
        %1023 = vrot.lane.b32.xlu0 %v605, 31
        %v1024 = vpop.permute.xlu0 %1023
        %1025 = vrot.lane.b32.xlu0 %v620, 31
        %v1026 = vpop.permute.xlu0 %1025
        %1027 = vrot.lane.b32.xlu0 %v621, 31
        %v1028 = vpop.permute.xlu0 %1027
        %1029 = vrot.lane.b32.xlu0 %v622, 31
        %v1030 = vpop.permute.xlu0 %1029
        %1031 = vrot.lane.b32.xlu0 %v623, 31
        %v1032 = vpop.permute.xlu0 %1031
        %1033 = vrot.lane.b32.xlu0 %v624, 31
        %v1034 = vpop.permute.xlu0 %1033
        %1035 = vrot.lane.b32.xlu0 %v625, 31
        %v1036 = vpop.permute.xlu0 %1035
        %1037 = vrot.lane.b32.xlu0 %v617, 31
        %v1038 = vpop.permute.xlu0 %1037
        %1039 = vrot.lane.b32.xlu0 %v636, 31
        %v1040 = vpop.permute.xlu0 %1039
        %1041 = vrot.lane.b32.xlu0 %v651, 31
        %v1042 = vpop.permute.xlu0 %1041
        %1043 = vrot.lane.b32.xlu0 %v652, 31
        %v1044 = vpop.permute.xlu0 %1043
        %1045 = vrot.lane.b32.xlu0 %v653, 31
        %v1046 = vpop.permute.xlu0 %1045
        %1047 = vrot.lane.b32.xlu0 %v654, 31
        %v1048 = vpop.permute.xlu0 %1047
        %1049 = vrot.lane.b32.xlu0 %v655, 31
        %v1050 = vpop.permute.xlu0 %1049
        %1051 = vrot.lane.b32.xlu0 %v656, 31
        %v1052 = vpop.permute.xlu0 %1051
        %1053 = vrot.lane.b32.xlu0 %v648, 31
        %v1054 = vpop.permute.xlu0 %1053
        %vm1055 = vcmask 252928
        %v1056 = vsel %vm1055, %v912, %v914
        %v1057 = vsel %vm1055, %v914, %v916
        %v1058 = vsel %vm1055, %v916, %v918
        %v1059 = vsel %vm1055, %v918, %v920
        %v1060 = vsel %vm1055, %v920, %v922
        %v1061 = vsel %vm1055, %v922, %v924
        %v1062 = vsel %vm1055, %v924, %v926
        %v1063 = vsel %vm1055, %v928, %v930
        %v1064 = vsel %vm1055, %v930, %v932
        %v1065 = vsel %vm1055, %v932, %v934
        %v1066 = vsel %vm1055, %v934, %v936
        %v1067 = vsel %vm1055, %v936, %v938
        %v1068 = vsel %vm1055, %v938, %v940
        %v1069 = vsel %vm1055, %v940, %v942
        %v1070 = vsel %vm1055, %v944, %v946
        %v1071 = vsel %vm1055, %v946, %v948
        %v1072 = vsel %vm1055, %v948, %v950
        %v1073 = vsel %vm1055, %v950, %v952
        %v1074 = vsel %vm1055, %v952, %v954
        %v1075 = vsel %vm1055, %v954, %v956
        %v1076 = vsel %vm1055, %v956, %v958
        %v1077 = vsel %vm1055, %v960, %v962
        %v1078 = vsel %vm1055, %v962, %v964
        %v1079 = vsel %vm1055, %v964, %v966
        %v1080 = vsel %vm1055, %v966, %v968
        %v1081 = vsel %vm1055, %v968, %v970
        %v1082 = vsel %vm1055, %v970, %v972
        %v1083 = vsel %vm1055, %v972, %v974
        %v1084 = vsel %vm1055, %v976, %v978
        %v1085 = vsel %vm1055, %v978, %v980
        %v1086 = vsel %vm1055, %v980, %v982
        %v1087 = vsel %vm1055, %v982, %v984
        %v1088 = vsel %vm1055, %v984, %v986
        %v1089 = vsel %vm1055, %v986, %v988
        %v1090 = vsel %vm1055, %v988, %v990
        %v1091 = vsel %vm1055, %v992, %v994
        %v1092 = vsel %vm1055, %v994, %v996
        %v1093 = vsel %vm1055, %v996, %v998
        %v1094 = vsel %vm1055, %v998, %v1000
        %v1095 = vsel %vm1055, %v1000, %v1002
        %v1096 = vsel %vm1055, %v1002, %v1004
        %v1097 = vsel %vm1055, %v1004, %v1006
        %v1098 = vsel %vm1055, %v1008, %v1010
        %v1099 = vsel %vm1055, %v1010, %v1012
        %v1100 = vsel %vm1055, %v1012, %v1014
        %v1101 = vsel %vm1055, %v1014, %v1016
        %v1102 = vsel %vm1055, %v1016, %v1018
        %v1103 = vsel %vm1055, %v1018, %v1020
        %v1104 = vsel %vm1055, %v1020, %v1022
        %v1105 = vsel %vm1055, %v1024, %v1026
        %v1106 = vsel %vm1055, %v1026, %v1028
        %v1107 = vsel %vm1055, %v1028, %v1030
        %v1108 = vsel %vm1055, %v1030, %v1032
        %v1109 = vsel %vm1055, %v1032, %v1034
        %v1110 = vsel %vm1055, %v1034, %v1036
        %v1111 = vsel %vm1055, %v1036, %v1038
        %v1112 = vsel %vm1055, %v1040, %v1042
        %v1113 = vsel %vm1055, %v1042, %v1044
        %v1114 = vsel %vm1055, %v1044, %v1046
        %v1115 = vsel %vm1055, %v1046, %v1048
        %v1116 = vsel %vm1055, %v1048, %v1050
        %v1117 = vsel %vm1055, %v1050, %v1052
        %v1118 = vsel %vm1055, %v1052, %v1054
        %v1182 = vld [vmem:[%s1] sm:$0xff]
        %v1183 = vld [vmem:[%s1 + $0x8] sm:$0xff]
        %v1184 = vld [vmem:[%s1 + $0x10] sm:$0xff]
        %v1185 = vld [vmem:[%s1 + $0x18] sm:$0xff]
        %v1186 = vld [vmem:[%s1 + $0x20] sm:$0xff]
        %v1187 = vld [vmem:[%s1 + $0x28] sm:$0xff]
        %v1188 = vld [vmem:[%s1 + $0x30] sm:$0xff]
        %v1189 = vld [vmem:[%s1 + $0x38] sm:$0xff]
        %v1190 = vld [vmem:[%s1 + $0x40] sm:$0xff]
        %v1191 = vld [vmem:[%s1 + $0x48] sm:$0xff]
        %v1192 = vld [vmem:[%s1 + $0x50] sm:$0xff]
        %v1193 = vld [vmem:[%s1 + $0x58] sm:$0xff]
        %v1194 = vld [vmem:[%s2] sm:$0xff]
        %v1195 = vld [vmem:[%s2 + $0x8] sm:$0xff]
        %v1196 = vld [vmem:[%s2 + $0x10] sm:$0xff]
        %v1197 = vld [vmem:[%s2 + $0x18] sm:$0xff]
        %v1198 = vld [vmem:[%s2 + $0x20] sm:$0xff]
        %v1199 = vld [vmem:[%s2 + $0x28] sm:$0xff]
        %1201 = vset.pattern.permute.xlu0 0
        %1202 = vperm.xlu0 %1201, %v1194
        %v1203 = vpop.permute.xlu0 %1202
        %1206 = vset.pattern.permute.xlu0 0
        %1207 = vperm.xlu0 %1206, %v1195
        %v1208 = vpop.permute.xlu0 %1207
        %1211 = vset.pattern.permute.xlu0 0
        %1212 = vperm.xlu0 %1211, %v1196
        %v1213 = vpop.permute.xlu0 %1212
        %1216 = vset.pattern.permute.xlu0 0
        %1217 = vperm.xlu0 %1216, %v1197
        %v1218 = vpop.permute.xlu0 %1217
        %1221 = vset.pattern.permute.xlu0 0
        %1222 = vperm.xlu0 %1221, %v1198
        %v1223 = vpop.permute.xlu0 %1222
        %1226 = vset.pattern.permute.xlu0 0
        %1227 = vperm.xlu0 %1226, %v1199
        %v1228 = vpop.permute.xlu0 %1227
        %vm1230 = vcmask 588800
        %v1232 = vsel %vm1230, %v1183, 0
        %v1235 = vsel %vm1230, %v1185, 0
        %v1238 = vsel %vm1230, %v1187, 0
        %v1241 = vsel %vm1230, %v1189, 0
        %v1244 = vsel %vm1230, %v1191, 0
        %v1247 = vsel %vm1230, %v1193, 0
        %1249 = vmatprep.subr.mxu0 %v413
        %1250 = vmatpush1.msra.mxu0 %v412
        %1251 = vmatprep.subr.mxu0 %v443
        %1252 = vmatpush1.msra.mxu0 %v442
        %1253 = vmatprep.subr.mxu0 %v471
        %1254 = vmatpush1.msra.mxu0 %v470
        %1255 = vmatprep.subr.mxu0 %v499
        %1256 = vmatpush1.msra.mxu0 %v498
        %1257 = vmatprep.subr.mxu0 %v527
        %1258 = vmatpush1.msra.mxu0 %v526
        %1259 = vmatprep.subr.mxu0 %v558
        %1260 = vmatpush1.msra.mxu0 %v557
        %1261 = vmatprep.subr.mxu0 %v589
        %1262 = vmatpush1.msra.mxu0 %v588
        %1263 = vmatprep.subr.mxu0 %v620
        %1264 = vmatpush1.msra.mxu0 %v619
        %1265 = vmatprep.subr.mxu0 %v651
        %1266 = vmatpush1.msra.mxu0 %v650
        %1267 = vmatprep.subr.mxu0 %v682
        %1268 = vmatpush1.msra.mxu0 %v681
        %1269 = vmatprep.subr.mxu0 %v713
        %1270 = vmatpush1.msra.mxu0 %v712
        %1271 = vmatprep.subr.mxu0 %v744
        %1272 = vmatpush1.msra.mxu0 %v743
        %1273 = vmatprep.subr.mxu0 %v775
        %1274 = vmatpush1.msra.mxu0 %v774
        %1275 = vmatprep.subr.mxu0 %v806
        %1276 = vmatpush1.msra.mxu0 %v805
        %1277 = vmatprep.subr.mxu0 %v837
        %1278 = vmatpush1.msra.mxu0 %v836
        %1279 = vmatprep.subr.mxu0 %v868
        %1280 = vmatpush1.msra.mxu0 %v867
        %1281 = vmatprep.subr.mxu0 %v1057
        %1282 = vmatpush1.msra.mxu0 %v1056
        %1283 = vmatprep.subr.mxu0 %v1064
        %1284 = vmatpush1.msra.mxu0 %v1063
        %1285 = vmatprep.subr.mxu0 %v1071
        %1286 = vmatpush1.msra.mxu0 %v1070
        %1287 = vmatprep.subr.mxu0 %v1078
        %1288 = vmatpush1.msra.mxu0 %v1077
        %1289 = vmatprep.subr.mxu0 %v1085
        %1290 = vmatpush1.msra.mxu0 %v1084
        %1291 = vmatprep.subr.mxu0 %v1092
        %1292 = vmatpush1.msra.mxu0 %v1091
        %1293 = vmatprep.subr.mxu0 %v1099
        %1294 = vmatpush1.msra.mxu0 %v1098
        %1295 = vmatprep.subr.mxu0 %v1106
        %1296 = vmatpush1.msra.mxu0 %v1105
        %1297 = vmatprep.subr.mxu0 %v1113
        %1298 = vmatpush1.msra.mxu0 %v1112
        %1299 = vmatprep.subr.mxu0 0.0
        %1300 = vmatpush1.msra.mxu0 0.0
        %1301 = vmatprep.subr.mxu0 0.0
        %1302 = vmatpush1.msra.mxu0 0.0
        %1303 = vmatprep.subr.mxu0 0.0
        %1304 = vmatpush1.msra.mxu0 0.0
        %1305 = vmatprep.subr.mxu0 0.0
        %1306 = vmatpush1.msra.mxu0 0.0
        %1307 = vmatprep.subr.mxu0 0.0
        %1308 = vmatpush1.msra.mxu0 0.0
        %1309 = vmatprep.subr.mxu0 0.0
        %1310 = vmatpush1.msra.mxu0 0.0
        %1311 = vmatprep.subr.mxu0 0.0
        %1312 = vmatpush1.msra.mxu0 0.0
        %1313 = vmatprep.mubr.f32.mxu0 %v1232
        %1314 = vmatmul.mubr.f32.gmra.mrb[0].mxu0 %v1182
        %v1315 = vpop.f32.mrb[0].mxu0
        %v1316 = vadd.f32 %v1203, %v1315
        %v1317 = vpop.f32.mrb[0].mxu0
        %v1318 = vadd.f32 %v1203, %v1317
        %1319 = vmatprep.mubr.f32.mxu0 %v1235
        %1320 = vmatmul.mubr.f32.gmra.mrb[0].mxu0 %v1184
        %v1321 = vpop.f32.mrb[0].mxu0
        %v1322 = vadd.f32 %v1208, %v1321
        %v1323 = vpop.f32.mrb[0].mxu0
        %v1324 = vadd.f32 %v1208, %v1323
        %1325 = vmatprep.mubr.f32.mxu0 %v1238
        %1326 = vmatmul.mubr.f32.gmra.mrb[0].mxu0 %v1186
        %v1327 = vpop.f32.mrb[0].mxu0
        %v1328 = vadd.f32 %v1213, %v1327
        %v1329 = vpop.f32.mrb[0].mxu0
        %v1330 = vadd.f32 %v1213, %v1329
        %1331 = vmatprep.mubr.f32.mxu0 %v1241
        %1332 = vmatmul.mubr.f32.gmra.mrb[0].mxu0 %v1188
        %v1333 = vpop.f32.mrb[0].mxu0
        %v1334 = vadd.f32 %v1218, %v1333
        %v1335 = vpop.f32.mrb[0].mxu0
        %v1336 = vadd.f32 %v1218, %v1335
        %1337 = vmatprep.mubr.f32.mxu0 %v1244
        %1338 = vmatmul.mubr.f32.gmra.mrb[0].mxu0 %v1190
        %v1339 = vpop.f32.mrb[0].mxu0
        %v1340 = vadd.f32 %v1223, %v1339
        %v1341 = vpop.f32.mrb[0].mxu0
        %v1342 = vadd.f32 %v1223, %v1341
        %1343 = vmatprep.mubr.f32.mxu0 %v1247
        %1344 = vmatmul.mubr.f32.gmra.mrb[0].mxu0 %v1192
        %v1345 = vpop.f32.mrb[0].mxu0
        %v1346 = vadd.f32 %v1228, %v1345
        %v1347 = vpop.f32.mrb[0].mxu0
        %v1348 = vadd.f32 %v1228, %v1347
        %1349 = vdwg.mxu0
        %1350 = vmatprep.subr.mxu0 %v415
        %1351 = vmatpush1.msra.mxu0 %v414
        %1352 = vmatprep.subr.mxu0 %v445
        %1353 = vmatpush1.msra.mxu0 %v444
        %1354 = vmatprep.subr.mxu0 %v473
        %1355 = vmatpush1.msra.mxu0 %v472
        %1356 = vmatprep.subr.mxu0 %v501
        %1357 = vmatpush1.msra.mxu0 %v500
        %1358 = vmatprep.subr.mxu0 %v529
        %1359 = vmatpush1.msra.mxu0 %v528
        %1360 = vmatprep.subr.mxu0 %v560
        %1361 = vmatpush1.msra.mxu0 %v559
        %1362 = vmatprep.subr.mxu0 %v591
        %1363 = vmatpush1.msra.mxu0 %v590
        %1364 = vmatprep.subr.mxu0 %v622
        %1365 = vmatpush1.msra.mxu0 %v621
        %1366 = vmatprep.subr.mxu0 %v653
        %1367 = vmatpush1.msra.mxu0 %v652
        %1368 = vmatprep.subr.mxu0 %v684
        %1369 = vmatpush1.msra.mxu0 %v683
        %1370 = vmatprep.subr.mxu0 %v715
        %1371 = vmatpush1.msra.mxu0 %v714
        %1372 = vmatprep.subr.mxu0 %v746
        %1373 = vmatpush1.msra.mxu0 %v745
        %1374 = vmatprep.subr.mxu0 %v777
        %1375 = vmatpush1.msra.mxu0 %v776
        %1376 = vmatprep.subr.mxu0 %v808
        %1377 = vmatpush1.msra.mxu0 %v807
        %1378 = vmatprep.subr.mxu0 %v839
        %1379 = vmatpush1.msra.mxu0 %v838
        %1380 = vmatprep.subr.mxu0 %v870
        %1381 = vmatpush1.msra.mxu0 %v869
        %1382 = vmatprep.subr.mxu0 %v1059
        %1383 = vmatpush1.msra.mxu0 %v1058
        %1384 = vmatprep.subr.mxu0 %v1066
        %1385 = vmatpush1.msra.mxu0 %v1065
        %1386 = vmatprep.subr.mxu0 %v1073
        %1387 = vmatpush1.msra.mxu0 %v1072
        %1388 = vmatprep.subr.mxu0 %v1080
        %1389 = vmatpush1.msra.mxu0 %v1079
        %1390 = vmatprep.subr.mxu0 %v1087
        %1391 = vmatpush1.msra.mxu0 %v1086
        %1392 = vmatprep.subr.mxu0 %v1094
        %1393 = vmatpush1.msra.mxu0 %v1093
        %1394 = vmatprep.subr.mxu0 %v1101
        %1395 = vmatpush1.msra.mxu0 %v1100
        %1396 = vmatprep.subr.mxu0 %v1108
        %1397 = vmatpush1.msra.mxu0 %v1107
        %1398 = vmatprep.subr.mxu0 %v1115
        %1399 = vmatpush1.msra.mxu0 %v1114
        %1400 = vmatprep.subr.mxu0 0.0
        %1401 = vmatpush1.msra.mxu0 0.0
        %1402 = vmatprep.subr.mxu0 0.0
        %1403 = vmatpush1.msra.mxu0 0.0
        %1404 = vmatprep.subr.mxu0 0.0
        %1405 = vmatpush1.msra.mxu0 0.0
        %1406 = vmatprep.subr.mxu0 0.0
        %1407 = vmatpush1.msra.mxu0 0.0
        %1408 = vmatprep.subr.mxu0 0.0
        %1409 = vmatpush1.msra.mxu0 0.0
        %1410 = vmatprep.subr.mxu0 0.0
        %1411 = vmatpush1.msra.mxu0 0.0
        %1412 = vmatprep.subr.mxu0 0.0
        %1413 = vmatpush1.msra.mxu0 0.0
        %1414 = vmatprep.mubr.f32.mxu0 %v1232
        %1415 = vmatmul.mubr.f32.gmra.mrb[0].mxu0 %v1182
        %v1416 = vpop.f32.mrb[0].mxu0
        %v1417 = vadd.f32 %v1203, %v1416
        %v1418 = vpop.f32.mrb[0].mxu0
        %v1419 = vadd.f32 %v1203, %v1418
        %1420 = vmatprep.mubr.f32.mxu0 %v1235
        %1421 = vmatmul.mubr.f32.gmra.mrb[0].mxu0 %v1184
        %v1422 = vpop.f32.mrb[0].mxu0
        %v1423 = vadd.f32 %v1208, %v1422
        %v1424 = vpop.f32.mrb[0].mxu0
        %v1425 = vadd.f32 %v1208, %v1424
        %1426 = vmatprep.mubr.f32.mxu0 %v1238
        %1427 = vmatmul.mubr.f32.gmra.mrb[0].mxu0 %v1186
        %v1428 = vpop.f32.mrb[0].mxu0
        %v1429 = vadd.f32 %v1213, %v1428
        %v1430 = vpop.f32.mrb[0].mxu0
        %v1431 = vadd.f32 %v1213, %v1430
        %1432 = vmatprep.mubr.f32.mxu0 %v1241
        %1433 = vmatmul.mubr.f32.gmra.mrb[0].mxu0 %v1188
        %v1434 = vpop.f32.mrb[0].mxu0
        %v1435 = vadd.f32 %v1218, %v1434
        %v1436 = vpop.f32.mrb[0].mxu0
        %v1437 = vadd.f32 %v1218, %v1436
        %1438 = vmatprep.mubr.f32.mxu0 %v1244
        %1439 = vmatmul.mubr.f32.gmra.mrb[0].mxu0 %v1190
        %v1440 = vpop.f32.mrb[0].mxu0
        %v1441 = vadd.f32 %v1223, %v1440
        %v1442 = vpop.f32.mrb[0].mxu0
        %v1443 = vadd.f32 %v1223, %v1442
        %1444 = vmatprep.mubr.f32.mxu0 %v1247
        %1445 = vmatmul.mubr.f32.gmra.mrb[0].mxu0 %v1192
        %v1446 = vpop.f32.mrb[0].mxu0
        %v1447 = vadd.f32 %v1228, %v1446
        %v1448 = vpop.f32.mrb[0].mxu0
        %v1449 = vadd.f32 %v1228, %v1448
        %1450 = vdwg.mxu0
        %1451 = vmatprep.subr.mxu0 %v417
        %1452 = vmatpush1.msra.mxu0 %v416
        %1453 = vmatprep.subr.mxu0 %v447
        %1454 = vmatpush1.msra.mxu0 %v446
        %1455 = vmatprep.subr.mxu0 %v475
        %1456 = vmatpush1.msra.mxu0 %v474
        %1457 = vmatprep.subr.mxu0 %v503
        %1458 = vmatpush1.msra.mxu0 %v502
        %1459 = vmatprep.subr.mxu0 %v531
        %1460 = vmatpush1.msra.mxu0 %v530
        %1461 = vmatprep.subr.mxu0 %v562
        %1462 = vmatpush1.msra.mxu0 %v561
        %1463 = vmatprep.subr.mxu0 %v593
        %1464 = vmatpush1.msra.mxu0 %v592
        %1465 = vmatprep.subr.mxu0 %v624
        %1466 = vmatpush1.msra.mxu0 %v623
        %1467 = vmatprep.subr.mxu0 %v655
        %1468 = vmatpush1.msra.mxu0 %v654
        %1469 = vmatprep.subr.mxu0 %v686
        %1470 = vmatpush1.msra.mxu0 %v685
        %1471 = vmatprep.subr.mxu0 %v717
        %1472 = vmatpush1.msra.mxu0 %v716
        %1473 = vmatprep.subr.mxu0 %v748
        %1474 = vmatpush1.msra.mxu0 %v747
        %1475 = vmatprep.subr.mxu0 %v779
        %1476 = vmatpush1.msra.mxu0 %v778
        %1477 = vmatprep.subr.mxu0 %v810
        %1478 = vmatpush1.msra.mxu0 %v809
        %1479 = vmatprep.subr.mxu0 %v841
        %1480 = vmatpush1.msra.mxu0 %v840
        %1481 = vmatprep.subr.mxu0 %v872
        %1482 = vmatpush1.msra.mxu0 %v871
        %1483 = vmatprep.subr.mxu0 %v1061
        %1484 = vmatpush1.msra.mxu0 %v1060
        %1485 = vmatprep.subr.mxu0 %v1068
        %1486 = vmatpush1.msra.mxu0 %v1067
        %1487 = vmatprep.subr.mxu0 %v1075
        %1488 = vmatpush1.msra.mxu0 %v1074
        %1489 = vmatprep.subr.mxu0 %v1082
        %1490 = vmatpush1.msra.mxu0 %v1081
        %1491 = vmatprep.subr.mxu0 %v1089
        %1492 = vmatpush1.msra.mxu0 %v1088
        %1493 = vmatprep.subr.mxu0 %v1096
        %1494 = vmatpush1.msra.mxu0 %v1095
        %1495 = vmatprep.subr.mxu0 %v1103
        %1496 = vmatpush1.msra.mxu0 %v1102
        %1497 = vmatprep.subr.mxu0 %v1110
        %1498 = vmatpush1.msra.mxu0 %v1109
        %1499 = vmatprep.subr.mxu0 %v1117
        %1500 = vmatpush1.msra.mxu0 %v1116
        %1501 = vmatprep.subr.mxu0 0.0
        %1502 = vmatpush1.msra.mxu0 0.0
        %1503 = vmatprep.subr.mxu0 0.0
        %1504 = vmatpush1.msra.mxu0 0.0
        %1505 = vmatprep.subr.mxu0 0.0
        %1506 = vmatpush1.msra.mxu0 0.0
        %1507 = vmatprep.subr.mxu0 0.0
        %1508 = vmatpush1.msra.mxu0 0.0
        %1509 = vmatprep.subr.mxu0 0.0
        %1510 = vmatpush1.msra.mxu0 0.0
        %1511 = vmatprep.subr.mxu0 0.0
        %1512 = vmatpush1.msra.mxu0 0.0
        %1513 = vmatprep.subr.mxu0 0.0
        %1514 = vmatpush1.msra.mxu0 0.0
        %1515 = vmatprep.mubr.f32.mxu0 %v1232
        %1516 = vmatmul.mubr.f32.gmra.mrb[0].mxu0 %v1182
        %v1517 = vpop.f32.mrb[0].mxu0
        %v1518 = vadd.f32 %v1203, %v1517
        %v1519 = vpop.f32.mrb[0].mxu0
        %v1520 = vadd.f32 %v1203, %v1519
        %1521 = vmatprep.mubr.f32.mxu0 %v1235
        %1522 = vmatmul.mubr.f32.gmra.mrb[0].mxu0 %v1184
        %v1523 = vpop.f32.mrb[0].mxu0
        %v1524 = vadd.f32 %v1208, %v1523
        %v1525 = vpop.f32.mrb[0].mxu0
        %v1526 = vadd.f32 %v1208, %v1525
        %1527 = vmatprep.mubr.f32.mxu0 %v1238
        %1528 = vmatmul.mubr.f32.gmra.mrb[0].mxu0 %v1186
        %v1529 = vpop.f32.mrb[0].mxu0
        %v1530 = vadd.f32 %v1213, %v1529
        %v1531 = vpop.f32.mrb[0].mxu0
        %v1532 = vadd.f32 %v1213, %v1531
        %1533 = vmatprep.mubr.f32.mxu0 %v1241
        %1534 = vmatmul.mubr.f32.gmra.mrb[0].mxu0 %v1188
        %v1535 = vpop.f32.mrb[0].mxu0
        %v1536 = vadd.f32 %v1218, %v1535
        %v1537 = vpop.f32.mrb[0].mxu0
        %v1538 = vadd.f32 %v1218, %v1537
        %1539 = vmatprep.mubr.f32.mxu0 %v1244
        %1540 = vmatmul.mubr.f32.gmra.mrb[0].mxu0 %v1190
        %v1541 = vpop.f32.mrb[0].mxu0
        %v1542 = vadd.f32 %v1223, %v1541
        %v1543 = vpop.f32.mrb[0].mxu0
        %v1544 = vadd.f32 %v1223, %v1543
        %1545 = vmatprep.mubr.f32.mxu0 %v1247
        %1546 = vmatmul.mubr.f32.gmra.mrb[0].mxu0 %v1192
        %v1547 = vpop.f32.mrb[0].mxu0
        %v1548 = vadd.f32 %v1228, %v1547
        %v1549 = vpop.f32.mrb[0].mxu0
        %v1550 = vadd.f32 %v1228, %v1549
        %1551 = vdwg.mxu0
        %1552 = vmatprep.subr.mxu0 0.0
        %1553 = vmatpush1.msra.mxu0 %v418
        %1554 = vmatprep.subr.mxu0 0.0
        %1555 = vmatpush1.msra.mxu0 %v440
        %1556 = vmatprep.subr.mxu0 0.0
        %1557 = vmatpush1.msra.mxu0 %v468
        %1558 = vmatprep.subr.mxu0 0.0
        %1559 = vmatpush1.msra.mxu0 %v496
        %1560 = vmatprep.subr.mxu0 0.0
        %1561 = vmatpush1.msra.mxu0 %v524
        %1562 = vmatprep.subr.mxu0 0.0
        %1563 = vmatpush1.msra.mxu0 %v563
        %1564 = vmatprep.subr.mxu0 0.0
        %1565 = vmatpush1.msra.mxu0 %v594
        %1566 = vmatprep.subr.mxu0 0.0
        %1567 = vmatpush1.msra.mxu0 %v625
        %1568 = vmatprep.subr.mxu0 0.0
        %1569 = vmatpush1.msra.mxu0 %v656
        %1570 = vmatprep.subr.mxu0 0.0
        %1571 = vmatpush1.msra.mxu0 %v687
        %1572 = vmatprep.subr.mxu0 0.0
        %1573 = vmatpush1.msra.mxu0 %v718
        %1574 = vmatprep.subr.mxu0 0.0
        %1575 = vmatpush1.msra.mxu0 %v749
        %1576 = vmatprep.subr.mxu0 0.0
        %1577 = vmatpush1.msra.mxu0 %v780
        %1578 = vmatprep.subr.mxu0 0.0
        %1579 = vmatpush1.msra.mxu0 %v811
        %1580 = vmatprep.subr.mxu0 0.0
        %1581 = vmatpush1.msra.mxu0 %v842
        %1582 = vmatprep.subr.mxu0 0.0
        %1583 = vmatpush1.msra.mxu0 %v873
        %1584 = vmatprep.subr.mxu0 0.0
        %1585 = vmatpush1.msra.mxu0 %v1062
        %1586 = vmatprep.subr.mxu0 0.0
        %1587 = vmatpush1.msra.mxu0 %v1069
        %1588 = vmatprep.subr.mxu0 0.0
        %1589 = vmatpush1.msra.mxu0 %v1076
        %1590 = vmatprep.subr.mxu0 0.0
        %1591 = vmatpush1.msra.mxu0 %v1083
        %1592 = vmatprep.subr.mxu0 0.0
        %1593 = vmatpush1.msra.mxu0 %v1090
        %1594 = vmatprep.subr.mxu0 0.0
        %1595 = vmatpush1.msra.mxu0 %v1097
        %1596 = vmatprep.subr.mxu0 0.0
        %1597 = vmatpush1.msra.mxu0 %v1104
        %1598 = vmatprep.subr.mxu0 0.0
        %1599 = vmatpush1.msra.mxu0 %v1111
        %1600 = vmatprep.subr.mxu0 0.0
        %1601 = vmatpush1.msra.mxu0 %v1118
        %1602 = vmatprep.subr.mxu0 0.0
        %1603 = vmatpush1.msra.mxu0 0.0
        %1604 = vmatprep.subr.mxu0 0.0
        %1605 = vmatpush1.msra.mxu0 0.0
        %1606 = vmatprep.subr.mxu0 0.0
        %1607 = vmatpush1.msra.mxu0 0.0
        %1608 = vmatprep.subr.mxu0 0.0
        %1609 = vmatpush1.msra.mxu0 0.0
        %1610 = vmatprep.subr.mxu0 0.0
        %1611 = vmatpush1.msra.mxu0 0.0
        %1612 = vmatprep.subr.mxu0 0.0
        %1613 = vmatpush1.msra.mxu0 0.0
        %1614 = vmatprep.subr.mxu0 0.0
        %1615 = vmatpush1.msra.mxu0 0.0
        %1616 = vmatprep.mubr.f32.mxu0 %v1232
        %1617 = vmatmul.mubr.f32.gmra.mrb[0].mxu0 %v1182
        %v1618 = vpop.f32.mrb[0].mxu0
        %v1619 = vadd.f32 %v1203, %v1618
        %v1620 = vpop.f32.mrb[0].mxu0
        %1621 = vmatprep.mubr.f32.mxu0 %v1235
        %1622 = vmatmul.mubr.f32.gmra.mrb[0].mxu0 %v1184
        %v1623 = vpop.f32.mrb[0].mxu0
        %v1624 = vadd.f32 %v1208, %v1623
        %v1625 = vpop.f32.mrb[0].mxu0
        %1626 = vmatprep.mubr.f32.mxu0 %v1238
        %1627 = vmatmul.mubr.f32.gmra.mrb[0].mxu0 %v1186
        %v1628 = vpop.f32.mrb[0].mxu0
        %v1629 = vadd.f32 %v1213, %v1628
        %v1630 = vpop.f32.mrb[0].mxu0
        %1631 = vmatprep.mubr.f32.mxu0 %v1241
        %1632 = vmatmul.mubr.f32.gmra.mrb[0].mxu0 %v1188
        %v1633 = vpop.f32.mrb[0].mxu0
        %v1634 = vadd.f32 %v1218, %v1633
        %v1635 = vpop.f32.mrb[0].mxu0
        %1636 = vmatprep.mubr.f32.mxu0 %v1244
        %1637 = vmatmul.mubr.f32.gmra.mrb[0].mxu0 %v1190
        %v1638 = vpop.f32.mrb[0].mxu0
        %v1639 = vadd.f32 %v1223, %v1638
        %v1640 = vpop.f32.mrb[0].mxu0
        %1641 = vmatprep.mubr.f32.mxu0 %v1247
        %1642 = vmatmul.mubr.f32.gmra.mrb[0].mxu0 %v1192
        %v1643 = vpop.f32.mrb[0].mxu0
        %v1644 = vadd.f32 %v1228, %v1643
        %v1645 = vpop.f32.mrb[0].mxu0
        %1646 = vdwg.mxu0
        %v1647 = vsub.f32 0.0, %v1316
        %v1648 = vsub.f32 0.0, %v1318
        %v1649 = vsub.f32 0.0, %v1417
        %v1650 = vsub.f32 0.0, %v1419
        %v1651 = vsub.f32 0.0, %v1518
        %v1652 = vsub.f32 0.0, %v1520
        %v1653 = vsub.f32 0.0, %v1619
        %v1654 = vsub.f32 0.0, %v1322
        %v1655 = vsub.f32 0.0, %v1324
        %v1656 = vsub.f32 0.0, %v1423
        %v1657 = vsub.f32 0.0, %v1425
        %v1658 = vsub.f32 0.0, %v1524
        %v1659 = vsub.f32 0.0, %v1526
        %v1660 = vsub.f32 0.0, %v1624
        %v1661 = vsub.f32 0.0, %v1328
        %v1662 = vsub.f32 0.0, %v1330
        %v1663 = vsub.f32 0.0, %v1429
        %v1664 = vsub.f32 0.0, %v1431
        %v1665 = vsub.f32 0.0, %v1530
        %v1666 = vsub.f32 0.0, %v1532
        %v1667 = vsub.f32 0.0, %v1629
        %v1668 = vsub.f32 0.0, %v1334
        %v1669 = vsub.f32 0.0, %v1336
        %v1670 = vsub.f32 0.0, %v1435
        %v1671 = vsub.f32 0.0, %v1437
        %v1672 = vsub.f32 0.0, %v1536
        %v1673 = vsub.f32 0.0, %v1538
        %v1674 = vsub.f32 0.0, %v1634
        %v1675 = vsub.f32 0.0, %v1340
        %v1676 = vsub.f32 0.0, %v1342
        %v1677 = vsub.f32 0.0, %v1441
        %v1678 = vsub.f32 0.0, %v1443
        %v1679 = vsub.f32 0.0, %v1542
        %v1680 = vsub.f32 0.0, %v1544
        %v1681 = vsub.f32 0.0, %v1639
        %v1682 = vsub.f32 0.0, %v1346
        %v1683 = vsub.f32 0.0, %v1348
        %v1684 = vsub.f32 0.0, %v1447
        %v1685 = vsub.f32 0.0, %v1449
        %v1686 = vsub.f32 0.0, %v1548
        %v1687 = vsub.f32 0.0, %v1550
        %v1688 = vsub.f32 0.0, %v1644
        %v1689 = vmul.f32 %v1647, 1.442695
        %v1690 = vpow.pop %v1689
        %v1691 = vmul.f32 %v1648, 1.442695
        %v1692 = vpow.pop %v1691
        %v1693 = vmul.f32 %v1649, 1.442695
        %v1694 = vpow.pop %v1693
        %v1695 = vmul.f32 %v1650, 1.442695
        %v1696 = vpow.pop %v1695
        %v1697 = vmul.f32 %v1651, 1.442695
        %v1698 = vpow.pop %v1697
        %v1699 = vmul.f32 %v1652, 1.442695
        %v1700 = vpow.pop %v1699
        %v1701 = vmul.f32 %v1653, 1.442695
        %v1702 = vpow.pop %v1701
        %v1703 = vmul.f32 %v1654, 1.442695
        %v1704 = vpow.pop %v1703
        %v1705 = vmul.f32 %v1655, 1.442695
        %v1706 = vpow.pop %v1705
        %v1707 = vmul.f32 %v1656, 1.442695
        %v1708 = vpow.pop %v1707
        %v1709 = vmul.f32 %v1657, 1.442695
        %v1710 = vpow.pop %v1709
        %v1711 = vmul.f32 %v1658, 1.442695
        %v1712 = vpow.pop %v1711
        %v1713 = vmul.f32 %v1659, 1.442695
        %v1714 = vpow.pop %v1713
        %v1715 = vmul.f32 %v1660, 1.442695
        %v1716 = vpow.pop %v1715
        %v1717 = vmul.f32 %v1661, 1.442695
        %v1718 = vpow.pop %v1717
        %v1719 = vmul.f32 %v1662, 1.442695
        %v1720 = vpow.pop %v1719
        %v1721 = vmul.f32 %v1663, 1.442695
        %v1722 = vpow.pop %v1721
        %v1723 = vmul.f32 %v1664, 1.442695
        %v1724 = vpow.pop %v1723
        %v1725 = vmul.f32 %v1665, 1.442695
        %v1726 = vpow.pop %v1725
        %v1727 = vmul.f32 %v1666, 1.442695
        %v1728 = vpow.pop %v1727
        %v1729 = vmul.f32 %v1667, 1.442695
        %v1730 = vpow.pop %v1729
        %v1731 = vmul.f32 %v1668, 1.442695
        %v1732 = vpow.pop %v1731
        %v1733 = vmul.f32 %v1669, 1.442695
        %v1734 = vpow.pop %v1733
        %v1735 = vmul.f32 %v1670, 1.442695
        %v1736 = vpow.pop %v1735
        %v1737 = vmul.f32 %v1671, 1.442695
        %v1738 = vpow.pop %v1737
        %v1739 = vmul.f32 %v1672, 1.442695
        %v1740 = vpow.pop %v1739
        %v1741 = vmul.f32 %v1673, 1.442695
        %v1742 = vpow.pop %v1741
        %v1743 = vmul.f32 %v1674, 1.442695
        %v1744 = vpow.pop %v1743
        %v1745 = vmul.f32 %v1675, 1.442695
        %v1746 = vpow.pop %v1745
        %v1747 = vmul.f32 %v1676, 1.442695
        %v1748 = vpow.pop %v1747
        %v1749 = vmul.f32 %v1677, 1.442695
        %v1750 = vpow.pop %v1749
        %v1751 = vmul.f32 %v1678, 1.442695
        %v1752 = vpow.pop %v1751
        %v1753 = vmul.f32 %v1679, 1.442695
        %v1754 = vpow.pop %v1753
        %v1755 = vmul.f32 %v1680, 1.442695
        %v1756 = vpow.pop %v1755
        %v1757 = vmul.f32 %v1681, 1.442695
        %v1758 = vpow.pop %v1757
        %v1759 = vmul.f32 %v1682, 1.442695
        %v1760 = vpow.pop %v1759
        %v1761 = vmul.f32 %v1683, 1.442695
        %v1762 = vpow.pop %v1761
        %v1763 = vmul.f32 %v1684, 1.442695
        %v1764 = vpow.pop %v1763
        %v1765 = vmul.f32 %v1685, 1.442695
        %v1766 = vpow.pop %v1765
        %v1767 = vmul.f32 %v1686, 1.442695
        %v1768 = vpow.pop %v1767
        %v1769 = vmul.f32 %v1687, 1.442695
        %v1770 = vpow.pop %v1769
        %v1771 = vmul.f32 %v1688, 1.442695
        %v1772 = vpow.pop %v1771
        %v1773 = vadd.f32 %v1690, 1.0
        %v1774 = vadd.f32 %v1692, 1.0
        %v1775 = vadd.f32 %v1694, 1.0
        %v1776 = vadd.f32 %v1696, 1.0
        %v1777 = vadd.f32 %v1698, 1.0
        %v1778 = vadd.f32 %v1700, 1.0
        %v1779 = vadd.f32 %v1702, 1.0
        %v1780 = vadd.f32 %v1704, 1.0
        %v1781 = vadd.f32 %v1706, 1.0
        %v1782 = vadd.f32 %v1708, 1.0
        %v1783 = vadd.f32 %v1710, 1.0
        %v1784 = vadd.f32 %v1712, 1.0
        %v1785 = vadd.f32 %v1714, 1.0
        %v1786 = vadd.f32 %v1716, 1.0
        %v1787 = vadd.f32 %v1718, 1.0
        %v1788 = vadd.f32 %v1720, 1.0
        %v1789 = vadd.f32 %v1722, 1.0
        %v1790 = vadd.f32 %v1724, 1.0
        %v1791 = vadd.f32 %v1726, 1.0
        %v1792 = vadd.f32 %v1728, 1.0
        %v1793 = vadd.f32 %v1730, 1.0
        %v1794 = vadd.f32 %v1732, 1.0
        %v1795 = vadd.f32 %v1734, 1.0
        %v1796 = vadd.f32 %v1736, 1.0
        %v1797 = vadd.f32 %v1738, 1.0
        %v1798 = vadd.f32 %v1740, 1.0
        %v1799 = vadd.f32 %v1742, 1.0
        %v1800 = vadd.f32 %v1744, 1.0
        %v1801 = vadd.f32 %v1746, 1.0
        %v1802 = vadd.f32 %v1748, 1.0
        %v1803 = vadd.f32 %v1750, 1.0
        %v1804 = vadd.f32 %v1752, 1.0
        %v1805 = vadd.f32 %v1754, 1.0
        %v1806 = vadd.f32 %v1756, 1.0
        %v1807 = vadd.f32 %v1758, 1.0
        %v1808 = vadd.f32 %v1760, 1.0
        %v1809 = vadd.f32 %v1762, 1.0
        %v1810 = vadd.f32 %v1764, 1.0
        %v1811 = vadd.f32 %v1766, 1.0
        %v1812 = vadd.f32 %v1768, 1.0
        %v1813 = vadd.f32 %v1770, 1.0
        %v1814 = vadd.f32 %v1772, 1.0
        %v1815 = vrcp.pop %v1773
        %v1816 = vmul.f32 1.0, %v1815
        %v1817 = vrcp.pop %v1774
        %v1818 = vmul.f32 1.0, %v1817
        %v1819 = vrcp.pop %v1775
        %v1820 = vmul.f32 1.0, %v1819
        %v1821 = vrcp.pop %v1776
        %v1822 = vmul.f32 1.0, %v1821
        %v1823 = vrcp.pop %v1777
        %v1824 = vmul.f32 1.0, %v1823
        %v1825 = vrcp.pop %v1778
        %v1826 = vmul.f32 1.0, %v1825
        %v1827 = vrcp.pop %v1779
        %v1828 = vmul.f32 1.0, %v1827
        %v1829 = vrcp.pop %v1780
        %v1830 = vmul.f32 1.0, %v1829
        %v1831 = vrcp.pop %v1781
        %v1832 = vmul.f32 1.0, %v1831
        %v1833 = vrcp.pop %v1782
        %v1834 = vmul.f32 1.0, %v1833
        %v1835 = vrcp.pop %v1783
        %v1836 = vmul.f32 1.0, %v1835
        %v1837 = vrcp.pop %v1784
        %v1838 = vmul.f32 1.0, %v1837
        %v1839 = vrcp.pop %v1785
        %v1840 = vmul.f32 1.0, %v1839
        %v1841 = vrcp.pop %v1786
        %v1842 = vmul.f32 1.0, %v1841
        %v1843 = vrcp.pop %v1787
        %v1844 = vmul.f32 1.0, %v1843
        %v1845 = vrcp.pop %v1788
        %v1846 = vmul.f32 1.0, %v1845
        %v1847 = vrcp.pop %v1789
        %v1848 = vmul.f32 1.0, %v1847
        %v1849 = vrcp.pop %v1790
        %v1850 = vmul.f32 1.0, %v1849
        %v1851 = vrcp.pop %v1791
        %v1852 = vmul.f32 1.0, %v1851
        %v1853 = vrcp.pop %v1792
        %v1854 = vmul.f32 1.0, %v1853
        %v1855 = vrcp.pop %v1793
        %v1856 = vmul.f32 1.0, %v1855
        %v1857 = vrcp.pop %v1794
        %v1858 = vmul.f32 1.0, %v1857
        %v1859 = vrcp.pop %v1795
        %v1860 = vmul.f32 1.0, %v1859
        %v1861 = vrcp.pop %v1796
        %v1862 = vmul.f32 1.0, %v1861
        %v1863 = vrcp.pop %v1797
        %v1864 = vmul.f32 1.0, %v1863
        %v1865 = vrcp.pop %v1798
        %v1866 = vmul.f32 1.0, %v1865
        %v1867 = vrcp.pop %v1799
        %v1868 = vmul.f32 1.0, %v1867
        %v1869 = vrcp.pop %v1800
        %v1870 = vmul.f32 1.0, %v1869
        %v1871 = vrcp.pop %v1801
        %v1872 = vmul.f32 1.0, %v1871
        %v1873 = vrcp.pop %v1802
        %v1874 = vmul.f32 1.0, %v1873
        %v1875 = vrcp.pop %v1803
        %v1876 = vmul.f32 1.0, %v1875
        %v1877 = vrcp.pop %v1804
        %v1878 = vmul.f32 1.0, %v1877
        %v1879 = vrcp.pop %v1805
        %v1880 = vmul.f32 1.0, %v1879
        %v1881 = vrcp.pop %v1806
        %v1882 = vmul.f32 1.0, %v1881
        %v1883 = vrcp.pop %v1807
        %v1884 = vmul.f32 1.0, %v1883
        %v1885 = vrcp.pop %v1808
        %v1886 = vmul.f32 1.0, %v1885
        %v1887 = vrcp.pop %v1809
        %v1888 = vmul.f32 1.0, %v1887
        %v1889 = vrcp.pop %v1810
        %v1890 = vmul.f32 1.0, %v1889
        %v1891 = vrcp.pop %v1811
        %v1892 = vmul.f32 1.0, %v1891
        %v1893 = vrcp.pop %v1812
        %v1894 = vmul.f32 1.0, %v1893
        %v1895 = vrcp.pop %v1813
        %v1896 = vmul.f32 1.0, %v1895
        %v1897 = vrcp.pop %v1814
        %v1898 = vmul.f32 1.0, %v1897
        %v1899 = vld [vmem:[%s3] sm:$0xff]
        %v1900 = vld [vmem:[%s3 + $0x8] sm:$0xff]
        %v1901 = vld [vmem:[%s3 + $0x10] sm:$0xff]
        %v1902 = vld [vmem:[%s3 + $0x18] sm:$0xff]
        %v1903 = vld [vmem:[%s3 + $0x20] sm:$0xff]
        %v1904 = vld [vmem:[%s3 + $0x28] sm:$0xff]
        %v1905 = vld [vmem:[%s3 + $0x30] sm:$0xff]
        %v1906 = vld [vmem:[%s3 + $0x38] sm:$0xff]
        %v1907 = vld [vmem:[%s3 + $0x40] sm:$0xff]
        %v1908 = vld [vmem:[%s3 + $0x48] sm:$0xff]
        %v1909 = vld [vmem:[%s3 + $0x50] sm:$0xff]
        %v1910 = vld [vmem:[%s3 + $0x58] sm:$0xff]
        %v1911 = vld [vmem:[%s3 + $0x60] sm:$0xff]
        %v1912 = vld [vmem:[%s3 + $0x68] sm:$0xff]
        %v1913 = vld [vmem:[%s3 + $0x70] sm:$0xff]
        %v1914 = vld [vmem:[%s3 + $0x78] sm:$0xff]
        %v1915 = vld [vmem:[%s3 + $0x80] sm:$0xff]
        %v1916 = vld [vmem:[%s3 + $0x88] sm:$0xff]
        %v1917 = vld [vmem:[%s3 + $0x90] sm:$0xff]
        %v1918 = vld [vmem:[%s3 + $0x98] sm:$0xff]
        %v1919 = vld [vmem:[%s3 + $0xa0] sm:$0xff]
        %v1920 = vld [vmem:[%s3 + $0xa8] sm:$0xff]
        %v1921 = vld [vmem:[%s3 + $0xb0] sm:$0xff]
        %v1922 = vld [vmem:[%s3 + $0xb8] sm:$0xff]
        %v1923 = vld [vmem:[%s3 + $0xc0] sm:$0xff]
        %v1924 = vld [vmem:[%s3 + $0xc8] sm:$0xff]
        %v1925 = vld [vmem:[%s3 + $0xd0] sm:$0xff]
        %v1926 = vld [vmem:[%s3 + $0xd8] sm:$0xff]
        %v1927 = vld [vmem:[%s3 + $0xe0] sm:$0xff]
        %v1928 = vld [vmem:[%s3 + $0xe8] sm:$0xff]
        %v1929 = vld [vmem:[%s3 + $0xf0] sm:$0xff]
        %v1930 = vld [vmem:[%s3 + $0xf8] sm:$0xff]
        %v1931 = vld [vmem:[%s3 + $0x100] sm:$0xff]
        %v1932 = vld [vmem:[%s3 + $0x108] sm:$0xff]
        %v1933 = vld [vmem:[%s3 + $0x110] sm:$0xff]
        %v1934 = vld [vmem:[%s3 + $0x118] sm:$0xff]
        %v1935 = vld [vmem:[%s3 + $0x120] sm:$0xff]
        %v1936 = vld [vmem:[%s3 + $0x128] sm:$0xff]
        %v1937 = vld [vmem:[%s3 + $0x130] sm:$0xff]
        %v1938 = vld [vmem:[%s3 + $0x138] sm:$0xff]
        %v1939 = vld [vmem:[%s3 + $0x140] sm:$0xff]
        %v1940 = vld [vmem:[%s3 + $0x148] sm:$0xff]
        %v1941 = vld [vmem:[%s3 + $0x150] sm:$0xff]
        %v1942 = vld [vmem:[%s3 + $0x158] sm:$0xff]
        %v1943 = vld [vmem:[%s3 + $0x160] sm:$0xff]
        %v1944 = vld [vmem:[%s3 + $0x168] sm:$0xff]
        %v1945 = vld [vmem:[%s3 + $0x170] sm:$0xff]
        %v1946 = vld [vmem:[%s3 + $0x178] sm:$0xff]
        %v1947 = vld [vmem:[%s3 + $0x180] sm:$0xff]
        %v1948 = vld [vmem:[%s3 + $0x188] sm:$0xff]
        %v1949 = vld [vmem:[%s3 + $0x190] sm:$0xff]
        %v1950 = vld [vmem:[%s3 + $0x198] sm:$0xff]
        %v1951 = vld [vmem:[%s3 + $0x1a0] sm:$0xff]
        %v1952 = vld [vmem:[%s3 + $0x1a8] sm:$0xff]
        %v1953 = vld [vmem:[%s3 + $0x1b0] sm:$0xff]
        %v1954 = vld [vmem:[%s3 + $0x1b8] sm:$0xff]
        %v1955 = vld [vmem:[%s3 + $0x1c0] sm:$0xff]
        %v1956 = vld [vmem:[%s3 + $0x1c8] sm:$0xff]
        %v1957 = vld [vmem:[%s3 + $0x1d0] sm:$0xff]
        %v1958 = vld [vmem:[%s3 + $0x1d8] sm:$0xff]
        %v1959 = vld [vmem:[%s3 + $0x1e0] sm:$0xff]
        %v1960 = vld [vmem:[%s3 + $0x1e8] sm:$0xff]
        %v1961 = vld [vmem:[%s3 + $0x1f0] sm:$0xff]
        %v1962 = vld [vmem:[%s3 + $0x1f8] sm:$0xff]
        %v1963 = vld [vmem:[%s3 + $0x200] sm:$0xff]
        %v1964 = vld [vmem:[%s3 + $0x208] sm:$0xff]
        %v1965 = vld [vmem:[%s3 + $0x210] sm:$0xff]
        %v1966 = vld [vmem:[%s3 + $0x218] sm:$0xff]
        %v1967 = vld [vmem:[%s3 + $0x220] sm:$0xff]
        %v1968 = vld [vmem:[%s3 + $0x228] sm:$0xff]
        %v1969 = vld [vmem:[%s3 + $0x230] sm:$0xff]
        %v1970 = vld [vmem:[%s3 + $0x238] sm:$0xff]
        %v1971 = vld [vmem:[%s3 + $0x240] sm:$0xff]
        %v1972 = vld [vmem:[%s3 + $0x248] sm:$0xff]
        %v1973 = vld [vmem:[%s3 + $0x250] sm:$0xff]
        %v1974 = vld [vmem:[%s3 + $0x258] sm:$0xff]
        %v1975 = vld [vmem:[%s3 + $0x260] sm:$0xff]
        %v1976 = vld [vmem:[%s3 + $0x268] sm:$0xff]
        %v1977 = vld [vmem:[%s3 + $0x270] sm:$0xff]
        %v1978 = vld [vmem:[%s3 + $0x278] sm:$0xff]
        %v1979 = vld [vmem:[%s3 + $0x280] sm:$0xff]
        %v1980 = vld [vmem:[%s3 + $0x288] sm:$0xff]
        %v1981 = vld [vmem:[%s3 + $0x290] sm:$0xff]
        %v1982 = vld [vmem:[%s3 + $0x298] sm:$0xff]
        %v1983 = vld [vmem:[%s3 + $0x2a0] sm:$0xff]
        %v1984 = vld [vmem:[%s3 + $0x2a8] sm:$0xff]
        %v1985 = vld [vmem:[%s3 + $0x2b0] sm:$0xff]
        %v1986 = vld [vmem:[%s3 + $0x2b8] sm:$0xff]
        %v1987 = vld [vmem:[%s3 + $0x2c0] sm:$0xff]
        %v1988 = vld [vmem:[%s3 + $0x2c8] sm:$0xff]
        %v1989 = vld [vmem:[%s3 + $0x2d0] sm:$0xff]
        %v1990 = vld [vmem:[%s3 + $0x2d8] sm:$0xff]
        %v1991 = vld [vmem:[%s3 + $0x2e0] sm:$0xff]
        %v1992 = vld [vmem:[%s3 + $0x2e8] sm:$0xff]
        %v1993 = vld [vmem:[%s3 + $0x2f0] sm:$0xff]
        %v1994 = vld [vmem:[%s3 + $0x2f8] sm:$0xff]
        %v1995 = vld [vmem:[%s3 + $0x300] sm:$0xff]
        %v1996 = vld [vmem:[%s3 + $0x308] sm:$0xff]
        %v1997 = vld [vmem:[%s3 + $0x310] sm:$0xff]
        %v1998 = vld [vmem:[%s3 + $0x318] sm:$0xff]
        %v1999 = vld [vmem:[%s3 + $0x320] sm:$0xff]
        %v2000 = vld [vmem:[%s3 + $0x328] sm:$0xff]
        %v2001 = vld [vmem:[%s3 + $0x330] sm:$0xff]
        %v2002 = vld [vmem:[%s3 + $0x338] sm:$0xff]
        %v2003 = vld [vmem:[%s3 + $0x340] sm:$0xff]
        %v2004 = vld [vmem:[%s3 + $0x348] sm:$0xff]
        %v2005 = vld [vmem:[%s3 + $0x350] sm:$0xff]
        %v2006 = vld [vmem:[%s3 + $0x358] sm:$0xff]
        %v2007 = vld [vmem:[%s3 + $0x360] sm:$0xff]
        %v2008 = vld [vmem:[%s3 + $0x368] sm:$0xff]
        %v2009 = vld [vmem:[%s3 + $0x370] sm:$0xff]
        %v2010 = vld [vmem:[%s3 + $0x378] sm:$0xff]
        %v2011 = vld [vmem:[%s3 + $0x380] sm:$0xff]
        %v2012 = vld [vmem:[%s3 + $0x388] sm:$0xff]
        %v2013 = vld [vmem:[%s3 + $0x390] sm:$0xff]
        %v2014 = vld [vmem:[%s3 + $0x398] sm:$0xff]
        %v2015 = vld [vmem:[%s3 + $0x3a0] sm:$0xff]
        %v2016 = vld [vmem:[%s3 + $0x3a8] sm:$0xff]
        %v2017 = vld [vmem:[%s3 + $0x3b0] sm:$0xff]
        %v2018 = vld [vmem:[%s3 + $0x3b8] sm:$0xff]
        %v2019 = vld [vmem:[%s3 + $0x3c0] sm:$0xff]
        %v2020 = vld [vmem:[%s3 + $0x3c8] sm:$0xff]
        %v2021 = vld [vmem:[%s3 + $0x3d0] sm:$0xff]
        %v2022 = vld [vmem:[%s3 + $0x3d8] sm:$0xff]
        %v2023 = vld [vmem:[%s3 + $0x3e0] sm:$0xff]
        %v2024 = vld [vmem:[%s3 + $0x3e8] sm:$0xff]
        %v2025 = vld [vmem:[%s3 + $0x3f0] sm:$0xff]
        %v2026 = vld [vmem:[%s3 + $0x3f8] sm:$0xff]
        %v2027 = vld [vmem:[%s3 + $0x400] sm:$0xff]
        %v2028 = vld [vmem:[%s3 + $0x408] sm:$0xff]
        %v2029 = vld [vmem:[%s3 + $0x410] sm:$0xff]
        %v2030 = vld [vmem:[%s3 + $0x418] sm:$0xff]
        %v2031 = vld [vmem:[%s3 + $0x420] sm:$0xff]
        %v2032 = vld [vmem:[%s3 + $0x428] sm:$0xff]
        %v2033 = vld [vmem:[%s3 + $0x430] sm:$0xff]
        %v2034 = vld [vmem:[%s3 + $0x438] sm:$0xff]
        %v2035 = vld [vmem:[%s3 + $0x440] sm:$0xff]
        %v2036 = vld [vmem:[%s3 + $0x448] sm:$0xff]
        %v2037 = vld [vmem:[%s3 + $0x450] sm:$0xff]
        %v2038 = vld [vmem:[%s3 + $0x458] sm:$0xff]
        %v2039 = vld [vmem:[%s3 + $0x460] sm:$0xff]
        %v2040 = vld [vmem:[%s3 + $0x468] sm:$0xff]
        %v2041 = vld [vmem:[%s3 + $0x470] sm:$0xff]
        %v2042 = vld [vmem:[%s3 + $0x478] sm:$0xff]
        %v2043 = vld [vmem:[%s3 + $0x480] sm:$0xff]
        %v2044 = vld [vmem:[%s3 + $0x488] sm:$0xff]
        %v2045 = vld [vmem:[%s3 + $0x490] sm:$0xff]
        %v2046 = vld [vmem:[%s3 + $0x498] sm:$0xff]
        %v2047 = vld [vmem:[%s3 + $0x4a0] sm:$0xff]
        %v2048 = vld [vmem:[%s3 + $0x4a8] sm:$0xff]
        %v2049 = vld [vmem:[%s3 + $0x4b0] sm:$0xff]
        %v2050 = vld [vmem:[%s3 + $0x4b8] sm:$0xff]
        %v2051 = vld [vmem:[%s3 + $0x4c0] sm:$0xff]
        %v2052 = vld [vmem:[%s3 + $0x4c8] sm:$0xff]
        %v2053 = vld [vmem:[%s3 + $0x4d0] sm:$0xff]
        %v2054 = vld [vmem:[%s3 + $0x4d8] sm:$0xff]
        %v2055 = vld [vmem:[%s3 + $0x4e0] sm:$0xff]
        %v2056 = vld [vmem:[%s3 + $0x4e8] sm:$0xff]
        %v2057 = vld [vmem:[%s3 + $0x4f0] sm:$0xff]
        %v2058 = vld [vmem:[%s3 + $0x4f8] sm:$0xff]
        %v2059 = vld [vmem:[%s3 + $0x500] sm:$0xff]
        %v2060 = vld [vmem:[%s3 + $0x508] sm:$0xff]
        %v2061 = vld [vmem:[%s3 + $0x510] sm:$0xff]
        %v2062 = vld [vmem:[%s3 + $0x518] sm:$0xff]
        %v2063 = vld [vmem:[%s3 + $0x520] sm:$0xff]
        %v2064 = vld [vmem:[%s3 + $0x528] sm:$0xff]
        %v2065 = vld [vmem:[%s3 + $0x530] sm:$0xff]
        %v2066 = vld [vmem:[%s3 + $0x538] sm:$0xff]
        %v2067 = vld [vmem:[%s3 + $0x540] sm:$0xff]
        %v2068 = vld [vmem:[%s3 + $0x548] sm:$0xff]
        %v2069 = vld [vmem:[%s3 + $0x550] sm:$0xff]
        %v2070 = vld [vmem:[%s3 + $0x558] sm:$0xff]
        %v2071 = vld [vmem:[%s3 + $0x560] sm:$0xff]
        %v2072 = vld [vmem:[%s3 + $0x568] sm:$0xff]
        %v2073 = vld [vmem:[%s3 + $0x570] sm:$0xff]
        %v2074 = vld [vmem:[%s3 + $0x578] sm:$0xff]
        %v2075 = vld [vmem:[%s3 + $0x580] sm:$0xff]
        %v2076 = vld [vmem:[%s3 + $0x588] sm:$0xff]
        %v2077 = vld [vmem:[%s3 + $0x590] sm:$0xff]
        %v2078 = vld [vmem:[%s3 + $0x598] sm:$0xff]
        %v2079 = vld [vmem:[%s3 + $0x5a0] sm:$0xff]
        %v2080 = vld [vmem:[%s3 + $0x5a8] sm:$0xff]
        %v2081 = vld [vmem:[%s3 + $0x5b0] sm:$0xff]
        %v2082 = vld [vmem:[%s3 + $0x5b8] sm:$0xff]
        %v2083 = vld [vmem:[%s3 + $0x5c0] sm:$0xff]
        %v2084 = vld [vmem:[%s3 + $0x5c8] sm:$0xff]
        %v2085 = vld [vmem:[%s3 + $0x5d0] sm:$0xff]
        %v2086 = vld [vmem:[%s3 + $0x5d8] sm:$0xff]
        %v2087 = vld [vmem:[%s3 + $0x5e0] sm:$0xff]
        %v2088 = vld [vmem:[%s3 + $0x5e8] sm:$0xff]
        %v2089 = vld [vmem:[%s3 + $0x5f0] sm:$0xff]
        %v2090 = vld [vmem:[%s3 + $0x5f8] sm:$0xff]
        %v2091 = vld [vmem:[%s3 + $0x600] sm:$0xff]
        %v2092 = vld [vmem:[%s3 + $0x608] sm:$0xff]
        %v2093 = vld [vmem:[%s3 + $0x610] sm:$0xff]
        %v2094 = vld [vmem:[%s3 + $0x618] sm:$0xff]
        %v2095 = vld [vmem:[%s3 + $0x620] sm:$0xff]
        %v2096 = vld [vmem:[%s3 + $0x628] sm:$0xff]
        %v2097 = vld [vmem:[%s3 + $0x630] sm:$0xff]
        %v2098 = vld [vmem:[%s3 + $0x638] sm:$0xff]
        %v2099 = vld [vmem:[%s3 + $0x640] sm:$0xff]
        %v2100 = vld [vmem:[%s3 + $0x648] sm:$0xff]
        %v2101 = vld [vmem:[%s3 + $0x650] sm:$0xff]
        %v2102 = vld [vmem:[%s3 + $0x658] sm:$0xff]
        %v2103 = vld [vmem:[%s3 + $0x660] sm:$0xff]
        %v2104 = vld [vmem:[%s3 + $0x668] sm:$0xff]
        %v2105 = vld [vmem:[%s3 + $0x670] sm:$0xff]
        %v2106 = vld [vmem:[%s3 + $0x678] sm:$0xff]
        %v2107 = vld [vmem:[%s3 + $0x680] sm:$0xff]
        %v2108 = vld [vmem:[%s3 + $0x688] sm:$0xff]
        %v2109 = vld [vmem:[%s3 + $0x690] sm:$0xff]
        %v2110 = vld [vmem:[%s3 + $0x698] sm:$0xff]
        %v2111 = vld [vmem:[%s3 + $0x6a0] sm:$0xff]
        %v2112 = vld [vmem:[%s3 + $0x6a8] sm:$0xff]
        %v2113 = vld [vmem:[%s3 + $0x6b0] sm:$0xff]
        %v2114 = vld [vmem:[%s3 + $0x6b8] sm:$0xff]
        %v2115 = vld [vmem:[%s3 + $0x6c0] sm:$0xff]
        %v2116 = vld [vmem:[%s3 + $0x6c8] sm:$0xff]
        %v2117 = vld [vmem:[%s3 + $0x6d0] sm:$0xff]
        %v2118 = vld [vmem:[%s3 + $0x6d8] sm:$0xff]
        %v2119 = vld [vmem:[%s3 + $0x6e0] sm:$0xff]
        %v2120 = vld [vmem:[%s3 + $0x6e8] sm:$0xff]
        %v2121 = vld [vmem:[%s3 + $0x6f0] sm:$0xf]
        %v2122 = vld [vmem:[%s3 + $0x6f8] sm:$0xf]
        %v2124 = vsel %vm525, %v1828, 0
        %v2127 = vsel %vm525, %v1842, 0
        %v2130 = vsel %vm525, %v1856, 0
        %v2133 = vsel %vm525, %v1870, 0
        %v2136 = vsel %vm525, %v1884, 0
        %v2139 = vsel %vm525, %v1898, 0
        %vm2141 = vcmask 1043456
        %v2143 = vsel %vm2141, %v2121, 0
        %v2146 = vsel %vm2141, %v2122, 0
        %2148 = vmatprep.subr.mxu0 %v1900
        %2149 = vmatpush1.msra.mxu0 %v1899
        %2150 = vmatprep.subr.mxu0 %v1902
        %2151 = vmatpush1.msra.mxu0 %v1901
        %2152 = vmatprep.subr.mxu0 %v1904
        %2153 = vmatpush1.msra.mxu0 %v1903
        %2154 = vmatprep.subr.mxu0 %v1906
        %2155 = vmatpush1.msra.mxu0 %v1905
        %2156 = vmatprep.subr.mxu0 %v1908
        %2157 = vmatpush1.msra.mxu0 %v1907
        %2158 = vmatprep.subr.mxu0 %v1910
        %2159 = vmatpush1.msra.mxu0 %v1909
        %2160 = vmatprep.subr.mxu0 %v1912
        %2161 = vmatpush1.msra.mxu0 %v1911
        %2162 = vmatprep.subr.mxu0 %v1914
        %2163 = vmatpush1.msra.mxu0 %v1913
        %2164 = vmatprep.subr.mxu0 %v1916
        %2165 = vmatpush1.msra.mxu0 %v1915
        %2166 = vmatprep.subr.mxu0 %v1918
        %2167 = vmatpush1.msra.mxu0 %v1917
        %2168 = vmatprep.subr.mxu0 %v1920
        %2169 = vmatpush1.msra.mxu0 %v1919
        %2170 = vmatprep.subr.mxu0 %v1922
        %2171 = vmatpush1.msra.mxu0 %v1921
        %2172 = vmatprep.subr.mxu0 %v1924
        %2173 = vmatpush1.msra.mxu0 %v1923
        %2174 = vmatprep.subr.mxu0 %v1926
        %2175 = vmatpush1.msra.mxu0 %v1925
        %2176 = vmatprep.subr.mxu0 %v1928
        %2177 = vmatpush1.msra.mxu0 %v1927
        %2178 = vmatprep.subr.mxu0 %v1930
        %2179 = vmatpush1.msra.mxu0 %v1929
        %2180 = vmatprep.subr.mxu0 %v1932
        %2181 = vmatpush1.msra.mxu0 %v1931
        %2182 = vmatprep.subr.mxu0 %v1934
        %2183 = vmatpush1.msra.mxu0 %v1933
        %2184 = vmatprep.subr.mxu0 %v1936
        %2185 = vmatpush1.msra.mxu0 %v1935
        %2186 = vmatprep.subr.mxu0 %v1938
        %2187 = vmatpush1.msra.mxu0 %v1937
        %2188 = vmatprep.subr.mxu0 %v1940
        %2189 = vmatpush1.msra.mxu0 %v1939
        %2190 = vmatprep.subr.mxu0 %v1942
        %2191 = vmatpush1.msra.mxu0 %v1941
        %2192 = vmatprep.subr.mxu0 %v1944
        %2193 = vmatpush1.msra.mxu0 %v1943
        %2194 = vmatprep.subr.mxu0 %v1946
        %2195 = vmatpush1.msra.mxu0 %v1945
        %2196 = vmatprep.subr.mxu0 %v1948
        %2197 = vmatpush1.msra.mxu0 %v1947
        %2198 = vmatprep.subr.mxu0 %v1950
        %2199 = vmatpush1.msra.mxu0 %v1949
        %2200 = vmatprep.subr.mxu0 %v1952
        %2201 = vmatpush1.msra.mxu0 %v1951
        %2202 = vmatprep.subr.mxu0 %v1954
        %2203 = vmatpush1.msra.mxu0 %v1953
        %2204 = vmatprep.subr.mxu0 %v1956
        %2205 = vmatpush1.msra.mxu0 %v1955
        %2206 = vmatprep.subr.mxu0 %v1958
        %2207 = vmatpush1.msra.mxu0 %v1957
        %2208 = vmatprep.subr.mxu0 %v1960
        %2209 = vmatpush1.msra.mxu0 %v1959
        %2210 = vmatprep.subr.mxu0 %v1962
        %2211 = vmatpush1.msra.mxu0 %v1961
        %2212 = vmatprep.mubr.f32.mxu0 %v1818
        %2213 = vmatmul.mubr.f32.gmra.mrb[0].mxu0 %v1816
        %v2214 = vpop.f32.mrb[0].mxu0
        %v2215 = vadd.f32 0.0, %v2214
        %v2216 = vpop.f32.mrb[0].mxu0
        %v2217 = vadd.f32 0.0, %v2216
        %2218 = vmatprep.mubr.f32.mxu0 %v1832
        %2219 = vmatmul.mubr.f32.gmra.mrb[0].mxu0 %v1830
        %v2220 = vpop.f32.mrb[0].mxu0
        %v2221 = vadd.f32 0.0, %v2220
        %v2222 = vpop.f32.mrb[0].mxu0
        %v2223 = vadd.f32 0.0, %v2222
        %2224 = vmatprep.mubr.f32.mxu0 %v1846
        %2225 = vmatmul.mubr.f32.gmra.mrb[0].mxu0 %v1844
        %v2226 = vpop.f32.mrb[0].mxu0
        %v2227 = vadd.f32 0.0, %v2226
        %v2228 = vpop.f32.mrb[0].mxu0
        %v2229 = vadd.f32 0.0, %v2228
        %2230 = vmatprep.mubr.f32.mxu0 %v1860
        %2231 = vmatmul.mubr.f32.gmra.mrb[0].mxu0 %v1858
        %v2232 = vpop.f32.mrb[0].mxu0
        %v2233 = vadd.f32 0.0, %v2232
        %v2234 = vpop.f32.mrb[0].mxu0
        %v2235 = vadd.f32 0.0, %v2234
        %2236 = vmatprep.mubr.f32.mxu0 %v1874
        %2237 = vmatmul.mubr.f32.gmra.mrb[0].mxu0 %v1872
        %v2238 = vpop.f32.mrb[0].mxu0
        %v2239 = vadd.f32 0.0, %v2238
        %v2240 = vpop.f32.mrb[0].mxu0
        %v2241 = vadd.f32 0.0, %v2240
        %2242 = vmatprep.mubr.f32.mxu0 %v1888
        %2243 = vmatmul.mubr.f32.gmra.mrb[0].mxu0 %v1886
        %v2244 = vpop.f32.mrb[0].mxu0
        %v2245 = vadd.f32 0.0, %v2244
        %v2246 = vpop.f32.mrb[0].mxu0
        %v2247 = vadd.f32 0.0, %v2246
        %2248 = vdwg.mxu0
        %2249 = vmatprep.subr.mxu0 %v1964
        %2250 = vmatpush1.msra.mxu0 %v1963
        %2251 = vmatprep.subr.mxu0 %v1966
        %2252 = vmatpush1.msra.mxu0 %v1965
        %2253 = vmatprep.subr.mxu0 %v1968
        %2254 = vmatpush1.msra.mxu0 %v1967
        %2255 = vmatprep.subr.mxu0 %v1970
        %2256 = vmatpush1.msra.mxu0 %v1969
        %2257 = vmatprep.subr.mxu0 %v1972
        %2258 = vmatpush1.msra.mxu0 %v1971
        %2259 = vmatprep.subr.mxu0 %v1974
        %2260 = vmatpush1.msra.mxu0 %v1973
        %2261 = vmatprep.subr.mxu0 %v1976
        %2262 = vmatpush1.msra.mxu0 %v1975
        %2263 = vmatprep.subr.mxu0 %v1978
        %2264 = vmatpush1.msra.mxu0 %v1977
        %2265 = vmatprep.subr.mxu0 %v1980
        %2266 = vmatpush1.msra.mxu0 %v1979
        %2267 = vmatprep.subr.mxu0 %v1982
        %2268 = vmatpush1.msra.mxu0 %v1981
        %2269 = vmatprep.subr.mxu0 %v1984
        %2270 = vmatpush1.msra.mxu0 %v1983
        %2271 = vmatprep.subr.mxu0 %v1986
        %2272 = vmatpush1.msra.mxu0 %v1985
        %2273 = vmatprep.subr.mxu0 %v1988
        %2274 = vmatpush1.msra.mxu0 %v1987
        %2275 = vmatprep.subr.mxu0 %v1990
        %2276 = vmatpush1.msra.mxu0 %v1989
        %2277 = vmatprep.subr.mxu0 %v1992
        %2278 = vmatpush1.msra.mxu0 %v1991
        %2279 = vmatprep.subr.mxu0 %v1994
        %2280 = vmatpush1.msra.mxu0 %v1993
        %2281 = vmatprep.subr.mxu0 %v1996
        %2282 = vmatpush1.msra.mxu0 %v1995
        %2283 = vmatprep.subr.mxu0 %v1998
        %2284 = vmatpush1.msra.mxu0 %v1997
        %2285 = vmatprep.subr.mxu0 %v2000
        %2286 = vmatpush1.msra.mxu0 %v1999
        %2287 = vmatprep.subr.mxu0 %v2002
        %2288 = vmatpush1.msra.mxu0 %v2001
        %2289 = vmatprep.subr.mxu0 %v2004
        %2290 = vmatpush1.msra.mxu0 %v2003
        %2291 = vmatprep.subr.mxu0 %v2006
        %2292 = vmatpush1.msra.mxu0 %v2005
        %2293 = vmatprep.subr.mxu0 %v2008
        %2294 = vmatpush1.msra.mxu0 %v2007
        %2295 = vmatprep.subr.mxu0 %v2010
        %2296 = vmatpush1.msra.mxu0 %v2009
        %2297 = vmatprep.subr.mxu0 %v2012
        %2298 = vmatpush1.msra.mxu0 %v2011
        %2299 = vmatprep.subr.mxu0 %v2014
        %2300 = vmatpush1.msra.mxu0 %v2013
        %2301 = vmatprep.subr.mxu0 %v2016
        %2302 = vmatpush1.msra.mxu0 %v2015
        %2303 = vmatprep.subr.mxu0 %v2018
        %2304 = vmatpush1.msra.mxu0 %v2017
        %2305 = vmatprep.subr.mxu0 %v2020
        %2306 = vmatpush1.msra.mxu0 %v2019
        %2307 = vmatprep.subr.mxu0 %v2022
        %2308 = vmatpush1.msra.mxu0 %v2021
        %2309 = vmatprep.subr.mxu0 %v2024
        %2310 = vmatpush1.msra.mxu0 %v2023
        %2311 = vmatprep.subr.mxu0 %v2026
        %2312 = vmatpush1.msra.mxu0 %v2025
        %2313 = vmatprep.mubr.f32.mxu0 %v1822
        %2314 = vmatmul.mubr.f32.gmra.mrb[0].mxu0 %v1820
        %v2315 = vpop.f32.mrb[0].mxu0
        %v2316 = vadd.f32 %v2215, %v2315
        %v2317 = vpop.f32.mrb[0].mxu0
        %v2318 = vadd.f32 %v2217, %v2317
        %2319 = vmatprep.mubr.f32.mxu0 %v1836
        %2320 = vmatmul.mubr.f32.gmra.mrb[0].mxu0 %v1834
        %v2321 = vpop.f32.mrb[0].mxu0
        %v2322 = vadd.f32 %v2221, %v2321
        %v2323 = vpop.f32.mrb[0].mxu0
        %v2324 = vadd.f32 %v2223, %v2323
        %2325 = vmatprep.mubr.f32.mxu0 %v1850
        %2326 = vmatmul.mubr.f32.gmra.mrb[0].mxu0 %v1848
        %v2327 = vpop.f32.mrb[0].mxu0
        %v2328 = vadd.f32 %v2227, %v2327
        %v2329 = vpop.f32.mrb[0].mxu0
        %v2330 = vadd.f32 %v2229, %v2329
        %2331 = vmatprep.mubr.f32.mxu0 %v1864
        %2332 = vmatmul.mubr.f32.gmra.mrb[0].mxu0 %v1862
        %v2333 = vpop.f32.mrb[0].mxu0
        %v2334 = vadd.f32 %v2233, %v2333
        %v2335 = vpop.f32.mrb[0].mxu0
        %v2336 = vadd.f32 %v2235, %v2335
        %2337 = vmatprep.mubr.f32.mxu0 %v1878
        %2338 = vmatmul.mubr.f32.gmra.mrb[0].mxu0 %v1876
        %v2339 = vpop.f32.mrb[0].mxu0
        %v2340 = vadd.f32 %v2239, %v2339
        %v2341 = vpop.f32.mrb[0].mxu0
        %v2342 = vadd.f32 %v2241, %v2341
        %2343 = vmatprep.mubr.f32.mxu0 %v1892
        %2344 = vmatmul.mubr.f32.gmra.mrb[0].mxu0 %v1890
        %v2345 = vpop.f32.mrb[0].mxu0
        %v2346 = vadd.f32 %v2245, %v2345
        %v2347 = vpop.f32.mrb[0].mxu0
        %v2348 = vadd.f32 %v2247, %v2347
        %2349 = vdwg.mxu0
        %2350 = vmatprep.subr.mxu0 %v2028
        %2351 = vmatpush1.msra.mxu0 %v2027
        %2352 = vmatprep.subr.mxu0 %v2030
        %2353 = vmatpush1.msra.mxu0 %v2029
        %2354 = vmatprep.subr.mxu0 %v2032
        %2355 = vmatpush1.msra.mxu0 %v2031
        %2356 = vmatprep.subr.mxu0 %v2034
        %2357 = vmatpush1.msra.mxu0 %v2033
        %2358 = vmatprep.subr.mxu0 %v2036
        %2359 = vmatpush1.msra.mxu0 %v2035
        %2360 = vmatprep.subr.mxu0 %v2038
        %2361 = vmatpush1.msra.mxu0 %v2037
        %2362 = vmatprep.subr.mxu0 %v2040
        %2363 = vmatpush1.msra.mxu0 %v2039
        %2364 = vmatprep.subr.mxu0 %v2042
        %2365 = vmatpush1.msra.mxu0 %v2041
        %2366 = vmatprep.subr.mxu0 %v2044
        %2367 = vmatpush1.msra.mxu0 %v2043
        %2368 = vmatprep.subr.mxu0 %v2046
        %2369 = vmatpush1.msra.mxu0 %v2045
        %2370 = vmatprep.subr.mxu0 %v2048
        %2371 = vmatpush1.msra.mxu0 %v2047
        %2372 = vmatprep.subr.mxu0 %v2050
        %2373 = vmatpush1.msra.mxu0 %v2049
        %2374 = vmatprep.subr.mxu0 %v2052
        %2375 = vmatpush1.msra.mxu0 %v2051
        %2376 = vmatprep.subr.mxu0 %v2054
        %2377 = vmatpush1.msra.mxu0 %v2053
        %2378 = vmatprep.subr.mxu0 %v2056
        %2379 = vmatpush1.msra.mxu0 %v2055
        %2380 = vmatprep.subr.mxu0 %v2058
        %2381 = vmatpush1.msra.mxu0 %v2057
        %2382 = vmatprep.subr.mxu0 %v2060
        %2383 = vmatpush1.msra.mxu0 %v2059
        %2384 = vmatprep.subr.mxu0 %v2062
        %2385 = vmatpush1.msra.mxu0 %v2061
        %2386 = vmatprep.subr.mxu0 %v2064
        %2387 = vmatpush1.msra.mxu0 %v2063
        %2388 = vmatprep.subr.mxu0 %v2066
        %2389 = vmatpush1.msra.mxu0 %v2065
        %2390 = vmatprep.subr.mxu0 %v2068
        %2391 = vmatpush1.msra.mxu0 %v2067
        %2392 = vmatprep.subr.mxu0 %v2070
        %2393 = vmatpush1.msra.mxu0 %v2069
        %2394 = vmatprep.subr.mxu0 %v2072
        %2395 = vmatpush1.msra.mxu0 %v2071
        %2396 = vmatprep.subr.mxu0 %v2074
        %2397 = vmatpush1.msra.mxu0 %v2073
        %2398 = vmatprep.subr.mxu0 %v2076
        %2399 = vmatpush1.msra.mxu0 %v2075
        %2400 = vmatprep.subr.mxu0 %v2078
        %2401 = vmatpush1.msra.mxu0 %v2077
        %2402 = vmatprep.subr.mxu0 %v2080
        %2403 = vmatpush1.msra.mxu0 %v2079
        %2404 = vmatprep.subr.mxu0 %v2082
        %2405 = vmatpush1.msra.mxu0 %v2081
        %2406 = vmatprep.subr.mxu0 %v2084
        %2407 = vmatpush1.msra.mxu0 %v2083
        %2408 = vmatprep.subr.mxu0 %v2086
        %2409 = vmatpush1.msra.mxu0 %v2085
        %2410 = vmatprep.subr.mxu0 %v2088
        %2411 = vmatpush1.msra.mxu0 %v2087
        %2412 = vmatprep.subr.mxu0 %v2090
        %2413 = vmatpush1.msra.mxu0 %v2089
        %2414 = vmatprep.mubr.f32.mxu0 %v1826
        %2415 = vmatmul.mubr.f32.gmra.mrb[0].mxu0 %v1824
        %v2416 = vpop.f32.mrb[0].mxu0
        %v2417 = vadd.f32 %v2316, %v2416
        %v2418 = vpop.f32.mrb[0].mxu0
        %v2419 = vadd.f32 %v2318, %v2418
        %2420 = vmatprep.mubr.f32.mxu0 %v1840
        %2421 = vmatmul.mubr.f32.gmra.mrb[0].mxu0 %v1838
        %v2422 = vpop.f32.mrb[0].mxu0
        %v2423 = vadd.f32 %v2322, %v2422
        %v2424 = vpop.f32.mrb[0].mxu0
        %v2425 = vadd.f32 %v2324, %v2424
        %2426 = vmatprep.mubr.f32.mxu0 %v1854
        %2427 = vmatmul.mubr.f32.gmra.mrb[0].mxu0 %v1852
        %v2428 = vpop.f32.mrb[0].mxu0
        %v2429 = vadd.f32 %v2328, %v2428
        %v2430 = vpop.f32.mrb[0].mxu0
        %v2431 = vadd.f32 %v2330, %v2430
        %2432 = vmatprep.mubr.f32.mxu0 %v1868
        %2433 = vmatmul.mubr.f32.gmra.mrb[0].mxu0 %v1866
        %v2434 = vpop.f32.mrb[0].mxu0
        %v2435 = vadd.f32 %v2334, %v2434
        %v2436 = vpop.f32.mrb[0].mxu0
        %v2437 = vadd.f32 %v2336, %v2436
        %2438 = vmatprep.mubr.f32.mxu0 %v1882
        %2439 = vmatmul.mubr.f32.gmra.mrb[0].mxu0 %v1880
        %v2440 = vpop.f32.mrb[0].mxu0
        %v2441 = vadd.f32 %v2340, %v2440
        %v2442 = vpop.f32.mrb[0].mxu0
        %v2443 = vadd.f32 %v2342, %v2442
        %2444 = vmatprep.mubr.f32.mxu0 %v1896
        %2445 = vmatmul.mubr.f32.gmra.mrb[0].mxu0 %v1894
        %v2446 = vpop.f32.mrb[0].mxu0
        %v2447 = vadd.f32 %v2346, %v2446
        %v2448 = vpop.f32.mrb[0].mxu0
        %v2449 = vadd.f32 %v2348, %v2448
        %2450 = vdwg.mxu0
        %2451 = vmatprep.subr.mxu0 %v2092
        %2452 = vmatpush1.msra.mxu0 %v2091
        %2453 = vmatprep.subr.mxu0 %v2094
        %2454 = vmatpush1.msra.mxu0 %v2093
        %2455 = vmatprep.subr.mxu0 %v2096
        %2456 = vmatpush1.msra.mxu0 %v2095
        %2457 = vmatprep.subr.mxu0 %v2098
        %2458 = vmatpush1.msra.mxu0 %v2097
        %2459 = vmatprep.subr.mxu0 %v2100
        %2460 = vmatpush1.msra.mxu0 %v2099
        %2461 = vmatprep.subr.mxu0 %v2102
        %2462 = vmatpush1.msra.mxu0 %v2101
        %2463 = vmatprep.subr.mxu0 %v2104
        %2464 = vmatpush1.msra.mxu0 %v2103
        %2465 = vmatprep.subr.mxu0 %v2106
        %2466 = vmatpush1.msra.mxu0 %v2105
        %2467 = vmatprep.subr.mxu0 %v2108
        %2468 = vmatpush1.msra.mxu0 %v2107
        %2469 = vmatprep.subr.mxu0 %v2110
        %2470 = vmatpush1.msra.mxu0 %v2109
        %2471 = vmatprep.subr.mxu0 %v2112
        %2472 = vmatpush1.msra.mxu0 %v2111
        %2473 = vmatprep.subr.mxu0 %v2114
        %2474 = vmatpush1.msra.mxu0 %v2113
        %2475 = vmatprep.subr.mxu0 %v2116
        %2476 = vmatpush1.msra.mxu0 %v2115
        %2477 = vmatprep.subr.mxu0 %v2118
        %2478 = vmatpush1.msra.mxu0 %v2117
        %2479 = vmatprep.subr.mxu0 %v2120
        %2480 = vmatpush1.msra.mxu0 %v2119
        %2481 = vmatprep.subr.mxu0 %v2146
        %2482 = vmatpush1.msra.mxu0 %v2143
        %2483 = vmatprep.subr.mxu0 0.0
        %2484 = vmatpush1.msra.mxu0 0.0
        %2485 = vmatprep.subr.mxu0 0.0
        %2486 = vmatpush1.msra.mxu0 0.0
        %2487 = vmatprep.subr.mxu0 0.0
        %2488 = vmatpush1.msra.mxu0 0.0
        %2489 = vmatprep.subr.mxu0 0.0
        %2490 = vmatpush1.msra.mxu0 0.0
        %2491 = vmatprep.subr.mxu0 0.0
        %2492 = vmatpush1.msra.mxu0 0.0
        %2493 = vmatprep.subr.mxu0 0.0
        %2494 = vmatpush1.msra.mxu0 0.0
        %2495 = vmatprep.subr.mxu0 0.0
        %2496 = vmatpush1.msra.mxu0 0.0
        %2497 = vmatprep.subr.mxu0 0.0
        %2498 = vmatpush1.msra.mxu0 0.0
        %2499 = vmatprep.subr.mxu0 0.0
        %2500 = vmatpush1.msra.mxu0 0.0
        %2501 = vmatprep.subr.mxu0 0.0
        %2502 = vmatpush1.msra.mxu0 0.0
        %2503 = vmatprep.subr.mxu0 0.0
        %2504 = vmatpush1.msra.mxu0 0.0
        %2505 = vmatprep.subr.mxu0 0.0
        %2506 = vmatpush1.msra.mxu0 0.0
        %2507 = vmatprep.subr.mxu0 0.0
        %2508 = vmatpush1.msra.mxu0 0.0
        %2509 = vmatprep.subr.mxu0 0.0
        %2510 = vmatpush1.msra.mxu0 0.0
        %2511 = vmatprep.subr.mxu0 0.0
        %2512 = vmatpush1.msra.mxu0 0.0
        %2513 = vmatprep.subr.mxu0 0.0
        %2514 = vmatpush1.msra.mxu0 0.0
        %2515 = vmatprep.mubr.f32.mxu0 0.0
        %2516 = vmatmul.mubr.f32.gmra.mrb[0].mxu0 %v2124
        %v2517 = vpop.f32.mrb[0].mxu0
        %v2518 = vadd.f32 %v2417, %v2517
        %v2519 = vpop.f32.mrb[0].mxu0
        %v2520 = vadd.f32 %v2419, %v2519
        %2521 = vmatprep.mubr.f32.mxu0 0.0
        %2522 = vmatmul.mubr.f32.gmra.mrb[0].mxu0 %v2127
        %v2523 = vpop.f32.mrb[0].mxu0
        %v2524 = vadd.f32 %v2423, %v2523
        %v2525 = vpop.f32.mrb[0].mxu0
        %v2526 = vadd.f32 %v2425, %v2525
        %2527 = vmatprep.mubr.f32.mxu0 0.0
        %2528 = vmatmul.mubr.f32.gmra.mrb[0].mxu0 %v2130
        %v2529 = vpop.f32.mrb[0].mxu0
        %v2530 = vadd.f32 %v2429, %v2529
        %v2531 = vpop.f32.mrb[0].mxu0
        %v2532 = vadd.f32 %v2431, %v2531
        %2533 = vmatprep.mubr.f32.mxu0 0.0
        %2534 = vmatmul.mubr.f32.gmra.mrb[0].mxu0 %v2133
        %v2535 = vpop.f32.mrb[0].mxu0
        %v2536 = vadd.f32 %v2435, %v2535
        %v2537 = vpop.f32.mrb[0].mxu0
        %v2538 = vadd.f32 %v2437, %v2537
        %2539 = vmatprep.mubr.f32.mxu0 0.0
        %2540 = vmatmul.mubr.f32.gmra.mrb[0].mxu0 %v2136
        %v2541 = vpop.f32.mrb[0].mxu0
        %v2542 = vadd.f32 %v2441, %v2541
        %v2543 = vpop.f32.mrb[0].mxu0
        %v2544 = vadd.f32 %v2443, %v2543
        %2545 = vmatprep.mubr.f32.mxu0 0.0
        %2546 = vmatmul.mubr.f32.gmra.mrb[0].mxu0 %v2139
        %v2547 = vpop.f32.mrb[0].mxu0
        %v2548 = vadd.f32 %v2447, %v2547
        %v2549 = vpop.f32.mrb[0].mxu0
        %v2550 = vadd.f32 %v2449, %v2549
        %2551 = vdwg.mxu0
        %2564 = vrot.lane.b32.xlu0 %v2518, 127
        %v2565 = vpop.permute.xlu0 %2564
        %2566 = vrot.lane.b32.xlu0 %v2520, 127
        %v2567 = vpop.permute.xlu0 %2566
        %2568 = vrot.lane.b32.xlu0 %v2524, 127
        %v2569 = vpop.permute.xlu0 %2568
        %2570 = vrot.lane.b32.xlu0 %v2526, 127
        %v2571 = vpop.permute.xlu0 %2570
        %2572 = vrot.lane.b32.xlu0 %v2530, 127
        %v2573 = vpop.permute.xlu0 %2572
        %2574 = vrot.lane.b32.xlu0 %v2532, 127
        %v2575 = vpop.permute.xlu0 %2574
        %2576 = vrot.lane.b32.xlu0 %v2536, 127
        %v2577 = vpop.permute.xlu0 %2576
        %2578 = vrot.lane.b32.xlu0 %v2538, 127
        %v2579 = vpop.permute.xlu0 %2578
        %2580 = vrot.lane.b32.xlu0 %v2542, 127
        %v2581 = vpop.permute.xlu0 %2580
        %2582 = vrot.lane.b32.xlu0 %v2544, 127
        %v2583 = vpop.permute.xlu0 %2582
        %2584 = vrot.lane.b32.xlu0 %v2548, 127
        %v2585 = vpop.permute.xlu0 %2584
        %2586 = vrot.lane.b32.xlu0 %v2550, 127
        %v2587 = vpop.permute.xlu0 %2586
        %v2588 = vsel %vm441, %v2565, %v2567
        %v2589 = vsel %vm441, %v2569, %v2571
        %v2590 = vsel %vm441, %v2573, %v2575
        %v2591 = vsel %vm441, %v2577, %v2579
        %v2592 = vsel %vm441, %v2581, %v2583
        %v2593 = vsel %vm441, %v2585, %v2587
        %2606 = vrot.lane.b32.xlu0 %v2518, 126
        %v2607 = vpop.permute.xlu0 %2606
        %2608 = vrot.lane.b32.xlu0 %v2520, 126
        %v2609 = vpop.permute.xlu0 %2608
        %2610 = vrot.lane.b32.xlu0 %v2524, 126
        %v2611 = vpop.permute.xlu0 %2610
        %2612 = vrot.lane.b32.xlu0 %v2526, 126
        %v2613 = vpop.permute.xlu0 %2612
        %2614 = vrot.lane.b32.xlu0 %v2530, 126
        %v2615 = vpop.permute.xlu0 %2614
        %2616 = vrot.lane.b32.xlu0 %v2532, 126
        %v2617 = vpop.permute.xlu0 %2616
        %2618 = vrot.lane.b32.xlu0 %v2536, 126
        %v2619 = vpop.permute.xlu0 %2618
        %2620 = vrot.lane.b32.xlu0 %v2538, 126
        %v2621 = vpop.permute.xlu0 %2620
        %2622 = vrot.lane.b32.xlu0 %v2542, 126
        %v2623 = vpop.permute.xlu0 %2622
        %2624 = vrot.lane.b32.xlu0 %v2544, 126
        %v2625 = vpop.permute.xlu0 %2624
        %2626 = vrot.lane.b32.xlu0 %v2548, 126
        %v2627 = vpop.permute.xlu0 %2626
        %2628 = vrot.lane.b32.xlu0 %v2550, 126
        %v2629 = vpop.permute.xlu0 %2628
        %v2630 = vsel %vm469, %v2607, %v2609
        %v2631 = vsel %vm469, %v2611, %v2613
        %v2632 = vsel %vm469, %v2615, %v2617
        %v2633 = vsel %vm469, %v2619, %v2621
        %v2634 = vsel %vm469, %v2623, %v2625
        %v2635 = vsel %vm469, %v2627, %v2629
        %2648 = vrot.lane.b32.xlu0 %v2518, 125
        %v2649 = vpop.permute.xlu0 %2648
        %2650 = vrot.lane.b32.xlu0 %v2520, 125
        %v2651 = vpop.permute.xlu0 %2650
        %2652 = vrot.lane.b32.xlu0 %v2524, 125
        %v2653 = vpop.permute.xlu0 %2652
        %2654 = vrot.lane.b32.xlu0 %v2526, 125
        %v2655 = vpop.permute.xlu0 %2654
        %2656 = vrot.lane.b32.xlu0 %v2530, 125
        %v2657 = vpop.permute.xlu0 %2656
        %2658 = vrot.lane.b32.xlu0 %v2532, 125
        %v2659 = vpop.permute.xlu0 %2658
        %2660 = vrot.lane.b32.xlu0 %v2536, 125
        %v2661 = vpop.permute.xlu0 %2660
        %2662 = vrot.lane.b32.xlu0 %v2538, 125
        %v2663 = vpop.permute.xlu0 %2662
        %2664 = vrot.lane.b32.xlu0 %v2542, 125
        %v2665 = vpop.permute.xlu0 %2664
        %2666 = vrot.lane.b32.xlu0 %v2544, 125
        %v2667 = vpop.permute.xlu0 %2666
        %2668 = vrot.lane.b32.xlu0 %v2548, 125
        %v2669 = vpop.permute.xlu0 %2668
        %2670 = vrot.lane.b32.xlu0 %v2550, 125
        %v2671 = vpop.permute.xlu0 %2670
        %v2672 = vsel %vm497, %v2649, %v2651
        %v2673 = vsel %vm497, %v2653, %v2655
        %v2674 = vsel %vm497, %v2657, %v2659
        %v2675 = vsel %vm497, %v2661, %v2663
        %v2676 = vsel %vm497, %v2665, %v2667
        %v2677 = vsel %vm497, %v2669, %v2671
        %2690 = vrot.lane.b32.xlu0 %v2518, 124
        %v2691 = vpop.permute.xlu0 %2690
        %2692 = vrot.lane.b32.xlu0 %v2520, 124
        %v2693 = vpop.permute.xlu0 %2692
        %2694 = vrot.lane.b32.xlu0 %v2524, 124
        %v2695 = vpop.permute.xlu0 %2694
        %2696 = vrot.lane.b32.xlu0 %v2526, 124
        %v2697 = vpop.permute.xlu0 %2696
        %2698 = vrot.lane.b32.xlu0 %v2530, 124
        %v2699 = vpop.permute.xlu0 %2698
        %2700 = vrot.lane.b32.xlu0 %v2532, 124
        %v2701 = vpop.permute.xlu0 %2700
        %2702 = vrot.lane.b32.xlu0 %v2536, 124
        %v2703 = vpop.permute.xlu0 %2702
        %2704 = vrot.lane.b32.xlu0 %v2538, 124
        %v2705 = vpop.permute.xlu0 %2704
        %2706 = vrot.lane.b32.xlu0 %v2542, 124
        %v2707 = vpop.permute.xlu0 %2706
        %2708 = vrot.lane.b32.xlu0 %v2544, 124
        %v2709 = vpop.permute.xlu0 %2708
        %2710 = vrot.lane.b32.xlu0 %v2548, 124
        %v2711 = vpop.permute.xlu0 %2710
        %2712 = vrot.lane.b32.xlu0 %v2550, 124
        %v2713 = vpop.permute.xlu0 %2712
        %v2714 = vsel %vm525, %v2691, %v2693
        %v2715 = vsel %vm525, %v2695, %v2697
        %v2716 = vsel %vm525, %v2699, %v2701
        %v2717 = vsel %vm525, %v2703, %v2705
        %v2718 = vsel %vm525, %v2707, %v2709
        %v2719 = vsel %vm525, %v2711, %v2713
        %2732 = vrot.lane.b32.xlu0 %v2518, 114
        %v2733 = vpop.permute.xlu0 %2732
        %2734 = vrot.lane.b32.xlu0 %v2520, 114
        %v2735 = vpop.permute.xlu0 %2734
        %2736 = vrot.lane.b32.xlu0 %v2524, 114
        %v2737 = vpop.permute.xlu0 %2736
        %2738 = vrot.lane.b32.xlu0 %v2526, 114
        %v2739 = vpop.permute.xlu0 %2738
        %2740 = vrot.lane.b32.xlu0 %v2530, 114
        %v2741 = vpop.permute.xlu0 %2740
        %2742 = vrot.lane.b32.xlu0 %v2532, 114
        %v2743 = vpop.permute.xlu0 %2742
        %2744 = vrot.lane.b32.xlu0 %v2536, 114
        %v2745 = vpop.permute.xlu0 %2744
        %2746 = vrot.lane.b32.xlu0 %v2538, 114
        %v2747 = vpop.permute.xlu0 %2746
        %2748 = vrot.lane.b32.xlu0 %v2542, 114
        %v2749 = vpop.permute.xlu0 %2748
        %2750 = vrot.lane.b32.xlu0 %v2544, 114
        %v2751 = vpop.permute.xlu0 %2750
        %2752 = vrot.lane.b32.xlu0 %v2548, 114
        %v2753 = vpop.permute.xlu0 %2752
        %2754 = vrot.lane.b32.xlu0 %v2550, 114
        %v2755 = vpop.permute.xlu0 %2754
        %vm2756 = vcmask 932864
        %v2757 = vsel %vm2756, %v2733, %v2735
        %v2758 = vsel %vm2756, %v2737, %v2739
        %v2759 = vsel %vm2756, %v2741, %v2743
        %v2760 = vsel %vm2756, %v2745, %v2747
        %v2761 = vsel %vm2756, %v2749, %v2751
        %v2762 = vsel %vm2756, %v2753, %v2755
        %2775 = vrot.lane.b32.xlu0 %v2518, 113
        %v2776 = vpop.permute.xlu0 %2775
        %2777 = vrot.lane.b32.xlu0 %v2520, 113
        %v2778 = vpop.permute.xlu0 %2777
        %2779 = vrot.lane.b32.xlu0 %v2524, 113
        %v2780 = vpop.permute.xlu0 %2779
        %2781 = vrot.lane.b32.xlu0 %v2526, 113
        %v2782 = vpop.permute.xlu0 %2781
        %2783 = vrot.lane.b32.xlu0 %v2530, 113
        %v2784 = vpop.permute.xlu0 %2783
        %2785 = vrot.lane.b32.xlu0 %v2532, 113
        %v2786 = vpop.permute.xlu0 %2785
        %2787 = vrot.lane.b32.xlu0 %v2536, 113
        %v2788 = vpop.permute.xlu0 %2787
        %2789 = vrot.lane.b32.xlu0 %v2538, 113
        %v2790 = vpop.permute.xlu0 %2789
        %2791 = vrot.lane.b32.xlu0 %v2542, 113
        %v2792 = vpop.permute.xlu0 %2791
        %2793 = vrot.lane.b32.xlu0 %v2544, 113
        %v2794 = vpop.permute.xlu0 %2793
        %2795 = vrot.lane.b32.xlu0 %v2548, 113
        %v2796 = vpop.permute.xlu0 %2795
        %2797 = vrot.lane.b32.xlu0 %v2550, 113
        %v2798 = vpop.permute.xlu0 %2797
        %vm2799 = vcmask 924672
        %v2800 = vsel %vm2799, %v2776, %v2778
        %v2801 = vsel %vm2799, %v2780, %v2782
        %v2802 = vsel %vm2799, %v2784, %v2786
        %v2803 = vsel %vm2799, %v2788, %v2790
        %v2804 = vsel %vm2799, %v2792, %v2794
        %v2805 = vsel %vm2799, %v2796, %v2798
        %2818 = vrot.lane.b32.xlu0 %v2518, 112
        %v2819 = vpop.permute.xlu0 %2818
        %2820 = vrot.lane.b32.xlu0 %v2520, 112
        %v2821 = vpop.permute.xlu0 %2820
        %2822 = vrot.lane.b32.xlu0 %v2524, 112
        %v2823 = vpop.permute.xlu0 %2822
        %2824 = vrot.lane.b32.xlu0 %v2526, 112
        %v2825 = vpop.permute.xlu0 %2824
        %2826 = vrot.lane.b32.xlu0 %v2530, 112
        %v2827 = vpop.permute.xlu0 %2826
        %2828 = vrot.lane.b32.xlu0 %v2532, 112
        %v2829 = vpop.permute.xlu0 %2828
        %2830 = vrot.lane.b32.xlu0 %v2536, 112
        %v2831 = vpop.permute.xlu0 %2830
        %2832 = vrot.lane.b32.xlu0 %v2538, 112
        %v2833 = vpop.permute.xlu0 %2832
        %2834 = vrot.lane.b32.xlu0 %v2542, 112
        %v2835 = vpop.permute.xlu0 %2834
        %2836 = vrot.lane.b32.xlu0 %v2544, 112
        %v2837 = vpop.permute.xlu0 %2836
        %2838 = vrot.lane.b32.xlu0 %v2548, 112
        %v2839 = vpop.permute.xlu0 %2838
        %2840 = vrot.lane.b32.xlu0 %v2550, 112
        %v2841 = vpop.permute.xlu0 %2840
        %vm2842 = vcmask 916480
        %v2843 = vsel %vm2842, %v2819, %v2821
        %v2844 = vsel %vm2842, %v2823, %v2825
        %v2845 = vsel %vm2842, %v2827, %v2829
        %v2846 = vsel %vm2842, %v2831, %v2833
        %v2847 = vsel %vm2842, %v2835, %v2837
        %v2848 = vsel %vm2842, %v2839, %v2841
        %2861 = vrot.lane.b32.xlu0 %v2518, 111
        %v2862 = vpop.permute.xlu0 %2861
        %2863 = vrot.lane.b32.xlu0 %v2520, 111
        %v2864 = vpop.permute.xlu0 %2863
        %2865 = vrot.lane.b32.xlu0 %v2524, 111
        %v2866 = vpop.permute.xlu0 %2865
        %2867 = vrot.lane.b32.xlu0 %v2526, 111
        %v2868 = vpop.permute.xlu0 %2867
        %2869 = vrot.lane.b32.xlu0 %v2530, 111
        %v2870 = vpop.permute.xlu0 %2869
        %2871 = vrot.lane.b32.xlu0 %v2532, 111
        %v2872 = vpop.permute.xlu0 %2871
        %2873 = vrot.lane.b32.xlu0 %v2536, 111
        %v2874 = vpop.permute.xlu0 %2873
        %2875 = vrot.lane.b32.xlu0 %v2538, 111
        %v2876 = vpop.permute.xlu0 %2875
        %2877 = vrot.lane.b32.xlu0 %v2542, 111
        %v2878 = vpop.permute.xlu0 %2877
        %2879 = vrot.lane.b32.xlu0 %v2544, 111
        %v2880 = vpop.permute.xlu0 %2879
        %2881 = vrot.lane.b32.xlu0 %v2548, 111
        %v2882 = vpop.permute.xlu0 %2881
        %2883 = vrot.lane.b32.xlu0 %v2550, 111
        %v2884 = vpop.permute.xlu0 %2883
        %vm2885 = vcmask 908288
        %v2886 = vsel %vm2885, %v2862, %v2864
        %v2887 = vsel %vm2885, %v2866, %v2868
        %v2888 = vsel %vm2885, %v2870, %v2872
        %v2889 = vsel %vm2885, %v2874, %v2876
        %v2890 = vsel %vm2885, %v2878, %v2880
        %v2891 = vsel %vm2885, %v2882, %v2884
        %2904 = vrot.lane.b32.xlu0 %v2518, 110
        %v2905 = vpop.permute.xlu0 %2904
        %2906 = vrot.lane.b32.xlu0 %v2520, 110
        %v2907 = vpop.permute.xlu0 %2906
        %2908 = vrot.lane.b32.xlu0 %v2524, 110
        %v2909 = vpop.permute.xlu0 %2908
        %2910 = vrot.lane.b32.xlu0 %v2526, 110
        %v2911 = vpop.permute.xlu0 %2910
        %2912 = vrot.lane.b32.xlu0 %v2530, 110
        %v2913 = vpop.permute.xlu0 %2912
        %2914 = vrot.lane.b32.xlu0 %v2532, 110
        %v2915 = vpop.permute.xlu0 %2914
        %2916 = vrot.lane.b32.xlu0 %v2536, 110
        %v2917 = vpop.permute.xlu0 %2916
        %2918 = vrot.lane.b32.xlu0 %v2538, 110
        %v2919 = vpop.permute.xlu0 %2918
        %2920 = vrot.lane.b32.xlu0 %v2542, 110
        %v2921 = vpop.permute.xlu0 %2920
        %2922 = vrot.lane.b32.xlu0 %v2544, 110
        %v2923 = vpop.permute.xlu0 %2922
        %2924 = vrot.lane.b32.xlu0 %v2548, 110
        %v2925 = vpop.permute.xlu0 %2924
        %2926 = vrot.lane.b32.xlu0 %v2550, 110
        %v2927 = vpop.permute.xlu0 %2926
        %vm2928 = vcmask 900096
        %v2929 = vsel %vm2928, %v2905, %v2907
        %v2930 = vsel %vm2928, %v2909, %v2911
        %v2931 = vsel %vm2928, %v2913, %v2915
        %v2932 = vsel %vm2928, %v2917, %v2919
        %v2933 = vsel %vm2928, %v2921, %v2923
        %v2934 = vsel %vm2928, %v2925, %v2927
        %2947 = vrot.lane.b32.xlu0 %v2518, 100
        %v2948 = vpop.permute.xlu0 %2947
        %2949 = vrot.lane.b32.xlu0 %v2520, 100
        %v2950 = vpop.permute.xlu0 %2949
        %2951 = vrot.lane.b32.xlu0 %v2524, 100
        %v2952 = vpop.permute.xlu0 %2951
        %2953 = vrot.lane.b32.xlu0 %v2526, 100
        %v2954 = vpop.permute.xlu0 %2953
        %2955 = vrot.lane.b32.xlu0 %v2530, 100
        %v2956 = vpop.permute.xlu0 %2955
        %2957 = vrot.lane.b32.xlu0 %v2532, 100
        %v2958 = vpop.permute.xlu0 %2957
        %2959 = vrot.lane.b32.xlu0 %v2536, 100
        %v2960 = vpop.permute.xlu0 %2959
        %2961 = vrot.lane.b32.xlu0 %v2538, 100
        %v2962 = vpop.permute.xlu0 %2961
        %2963 = vrot.lane.b32.xlu0 %v2542, 100
        %v2964 = vpop.permute.xlu0 %2963
        %2965 = vrot.lane.b32.xlu0 %v2544, 100
        %v2966 = vpop.permute.xlu0 %2965
        %2967 = vrot.lane.b32.xlu0 %v2548, 100
        %v2968 = vpop.permute.xlu0 %2967
        %2969 = vrot.lane.b32.xlu0 %v2550, 100
        %v2970 = vpop.permute.xlu0 %2969
        %vm2971 = vcmask 818176
        %v2972 = vsel %vm2971, %v2948, %v2950
        %v2973 = vsel %vm2971, %v2952, %v2954
        %v2974 = vsel %vm2971, %v2956, %v2958
        %v2975 = vsel %vm2971, %v2960, %v2962
        %v2976 = vsel %vm2971, %v2964, %v2966
        %v2977 = vsel %vm2971, %v2968, %v2970
        %2990 = vrot.lane.b32.xlu0 %v2518, 99
        %v2991 = vpop.permute.xlu0 %2990
        %2992 = vrot.lane.b32.xlu0 %v2520, 99
        %v2993 = vpop.permute.xlu0 %2992
        %2994 = vrot.lane.b32.xlu0 %v2524, 99
        %v2995 = vpop.permute.xlu0 %2994
        %2996 = vrot.lane.b32.xlu0 %v2526, 99
        %v2997 = vpop.permute.xlu0 %2996
        %2998 = vrot.lane.b32.xlu0 %v2530, 99
        %v2999 = vpop.permute.xlu0 %2998
        %3000 = vrot.lane.b32.xlu0 %v2532, 99
        %v3001 = vpop.permute.xlu0 %3000
        %3002 = vrot.lane.b32.xlu0 %v2536, 99
        %v3003 = vpop.permute.xlu0 %3002
        %3004 = vrot.lane.b32.xlu0 %v2538, 99
        %v3005 = vpop.permute.xlu0 %3004
        %3006 = vrot.lane.b32.xlu0 %v2542, 99
        %v3007 = vpop.permute.xlu0 %3006
        %3008 = vrot.lane.b32.xlu0 %v2544, 99
        %v3009 = vpop.permute.xlu0 %3008
        %3010 = vrot.lane.b32.xlu0 %v2548, 99
        %v3011 = vpop.permute.xlu0 %3010
        %3012 = vrot.lane.b32.xlu0 %v2550, 99
        %v3013 = vpop.permute.xlu0 %3012
        %vm3014 = vcmask 809984
        %v3015 = vsel %vm3014, %v2991, %v2993
        %v3016 = vsel %vm3014, %v2995, %v2997
        %v3017 = vsel %vm3014, %v2999, %v3001
        %v3018 = vsel %vm3014, %v3003, %v3005
        %v3019 = vsel %vm3014, %v3007, %v3009
        %v3020 = vsel %vm3014, %v3011, %v3013
        %3033 = vrot.lane.b32.xlu0 %v2518, 98
        %v3034 = vpop.permute.xlu0 %3033
        %3035 = vrot.lane.b32.xlu0 %v2520, 98
        %v3036 = vpop.permute.xlu0 %3035
        %3037 = vrot.lane.b32.xlu0 %v2524, 98
        %v3038 = vpop.permute.xlu0 %3037
        %3039 = vrot.lane.b32.xlu0 %v2526, 98
        %v3040 = vpop.permute.xlu0 %3039
        %3041 = vrot.lane.b32.xlu0 %v2530, 98
        %v3042 = vpop.permute.xlu0 %3041
        %3043 = vrot.lane.b32.xlu0 %v2532, 98
        %v3044 = vpop.permute.xlu0 %3043
        %3045 = vrot.lane.b32.xlu0 %v2536, 98
        %v3046 = vpop.permute.xlu0 %3045
        %3047 = vrot.lane.b32.xlu0 %v2538, 98
        %v3048 = vpop.permute.xlu0 %3047
        %3049 = vrot.lane.b32.xlu0 %v2542, 98
        %v3050 = vpop.permute.xlu0 %3049
        %3051 = vrot.lane.b32.xlu0 %v2544, 98
        %v3052 = vpop.permute.xlu0 %3051
        %3053 = vrot.lane.b32.xlu0 %v2548, 98
        %v3054 = vpop.permute.xlu0 %3053
        %3055 = vrot.lane.b32.xlu0 %v2550, 98
        %v3056 = vpop.permute.xlu0 %3055
        %vm3057 = vcmask 801792
        %v3058 = vsel %vm3057, %v3034, %v3036
        %v3059 = vsel %vm3057, %v3038, %v3040
        %v3060 = vsel %vm3057, %v3042, %v3044
        %v3061 = vsel %vm3057, %v3046, %v3048
        %v3062 = vsel %vm3057, %v3050, %v3052
        %v3063 = vsel %vm3057, %v3054, %v3056
        %3076 = vrot.lane.b32.xlu0 %v2518, 97
        %v3077 = vpop.permute.xlu0 %3076
        %3078 = vrot.lane.b32.xlu0 %v2520, 97
        %v3079 = vpop.permute.xlu0 %3078
        %3080 = vrot.lane.b32.xlu0 %v2524, 97
        %v3081 = vpop.permute.xlu0 %3080
        %3082 = vrot.lane.b32.xlu0 %v2526, 97
        %v3083 = vpop.permute.xlu0 %3082
        %3084 = vrot.lane.b32.xlu0 %v2530, 97
        %v3085 = vpop.permute.xlu0 %3084
        %3086 = vrot.lane.b32.xlu0 %v2532, 97
        %v3087 = vpop.permute.xlu0 %3086
        %3088 = vrot.lane.b32.xlu0 %v2536, 97
        %v3089 = vpop.permute.xlu0 %3088
        %3090 = vrot.lane.b32.xlu0 %v2538, 97
        %v3091 = vpop.permute.xlu0 %3090
        %3092 = vrot.lane.b32.xlu0 %v2542, 97
        %v3093 = vpop.permute.xlu0 %3092
        %3094 = vrot.lane.b32.xlu0 %v2544, 97
        %v3095 = vpop.permute.xlu0 %3094
        %3096 = vrot.lane.b32.xlu0 %v2548, 97
        %v3097 = vpop.permute.xlu0 %3096
        %3098 = vrot.lane.b32.xlu0 %v2550, 97
        %v3099 = vpop.permute.xlu0 %3098
        %v3100 = vsel %vm904, %v3077, %v3079
        %v3101 = vsel %vm904, %v3081, %v3083
        %v3102 = vsel %vm904, %v3085, %v3087
        %v3103 = vsel %vm904, %v3089, %v3091
        %v3104 = vsel %vm904, %v3093, %v3095
        %v3105 = vsel %vm904, %v3097, %v3099
        %3118 = vrot.lane.b32.xlu0 %v2518, 96
        %v3119 = vpop.permute.xlu0 %3118
        %3120 = vrot.lane.b32.xlu0 %v2520, 96
        %v3121 = vpop.permute.xlu0 %3120
        %3122 = vrot.lane.b32.xlu0 %v2524, 96
        %v3123 = vpop.permute.xlu0 %3122
        %3124 = vrot.lane.b32.xlu0 %v2526, 96
        %v3125 = vpop.permute.xlu0 %3124
        %3126 = vrot.lane.b32.xlu0 %v2530, 96
        %v3127 = vpop.permute.xlu0 %3126
        %3128 = vrot.lane.b32.xlu0 %v2532, 96
        %v3129 = vpop.permute.xlu0 %3128
        %3130 = vrot.lane.b32.xlu0 %v2536, 96
        %v3131 = vpop.permute.xlu0 %3130
        %3132 = vrot.lane.b32.xlu0 %v2538, 96
        %v3133 = vpop.permute.xlu0 %3132
        %3134 = vrot.lane.b32.xlu0 %v2542, 96
        %v3135 = vpop.permute.xlu0 %3134
        %3136 = vrot.lane.b32.xlu0 %v2544, 96
        %v3137 = vpop.permute.xlu0 %3136
        %3138 = vrot.lane.b32.xlu0 %v2548, 96
        %v3139 = vpop.permute.xlu0 %3138
        %3140 = vrot.lane.b32.xlu0 %v2550, 96
        %v3141 = vpop.permute.xlu0 %3140
        %v3142 = vsel %vm556, %v3119, %v3121
        %v3143 = vsel %vm556, %v3123, %v3125
        %v3144 = vsel %vm556, %v3127, %v3129
        %v3145 = vsel %vm556, %v3131, %v3133
        %v3146 = vsel %vm556, %v3135, %v3137
        %v3147 = vsel %vm556, %v3139, %v3141
        %3160 = vrot.lane.b32.xlu0 %v2518, 86
        %v3161 = vpop.permute.xlu0 %3160
        %3162 = vrot.lane.b32.xlu0 %v2520, 86
        %v3163 = vpop.permute.xlu0 %3162
        %3164 = vrot.lane.b32.xlu0 %v2524, 86
        %v3165 = vpop.permute.xlu0 %3164
        %3166 = vrot.lane.b32.xlu0 %v2526, 86
        %v3167 = vpop.permute.xlu0 %3166
        %3168 = vrot.lane.b32.xlu0 %v2530, 86
        %v3169 = vpop.permute.xlu0 %3168
        %3170 = vrot.lane.b32.xlu0 %v2532, 86
        %v3171 = vpop.permute.xlu0 %3170
        %3172 = vrot.lane.b32.xlu0 %v2536, 86
        %v3173 = vpop.permute.xlu0 %3172
        %3174 = vrot.lane.b32.xlu0 %v2538, 86
        %v3175 = vpop.permute.xlu0 %3174
        %3176 = vrot.lane.b32.xlu0 %v2542, 86
        %v3177 = vpop.permute.xlu0 %3176
        %3178 = vrot.lane.b32.xlu0 %v2544, 86
        %v3179 = vpop.permute.xlu0 %3178
        %3180 = vrot.lane.b32.xlu0 %v2548, 86
        %v3181 = vpop.permute.xlu0 %3180
        %3182 = vrot.lane.b32.xlu0 %v2550, 86
        %v3183 = vpop.permute.xlu0 %3182
        %vm3184 = vcmask 703488
        %v3185 = vsel %vm3184, %v3161, %v3163
        %v3186 = vsel %vm3184, %v3165, %v3167
        %v3187 = vsel %vm3184, %v3169, %v3171
        %v3188 = vsel %vm3184, %v3173, %v3175
        %v3189 = vsel %vm3184, %v3177, %v3179
        %v3190 = vsel %vm3184, %v3181, %v3183
        %3203 = vrot.lane.b32.xlu0 %v2518, 115
        %v3204 = vpop.permute.xlu0 %3203
        %3205 = vrot.lane.b32.xlu0 %v2520, 115
        %v3206 = vpop.permute.xlu0 %3205
        %3207 = vrot.lane.b32.xlu0 %v2524, 115
        %v3208 = vpop.permute.xlu0 %3207
        %3209 = vrot.lane.b32.xlu0 %v2526, 115
        %v3210 = vpop.permute.xlu0 %3209
        %3211 = vrot.lane.b32.xlu0 %v2530, 115
        %v3212 = vpop.permute.xlu0 %3211
        %3213 = vrot.lane.b32.xlu0 %v2532, 115
        %v3214 = vpop.permute.xlu0 %3213
        %3215 = vrot.lane.b32.xlu0 %v2536, 115
        %v3216 = vpop.permute.xlu0 %3215
        %3217 = vrot.lane.b32.xlu0 %v2538, 115
        %v3218 = vpop.permute.xlu0 %3217
        %3219 = vrot.lane.b32.xlu0 %v2542, 115
        %v3220 = vpop.permute.xlu0 %3219
        %3221 = vrot.lane.b32.xlu0 %v2544, 115
        %v3222 = vpop.permute.xlu0 %3221
        %3223 = vrot.lane.b32.xlu0 %v2548, 115
        %v3224 = vpop.permute.xlu0 %3223
        %3225 = vrot.lane.b32.xlu0 %v2550, 115
        %v3226 = vpop.permute.xlu0 %3225
        %vm3227 = vcmask 941056
        %v3228 = vsel %vm3227, %v3204, %v3206
        %v3229 = vsel %vm3227, %v3208, %v3210
        %v3230 = vsel %vm3227, %v3212, %v3214
        %v3231 = vsel %vm3227, %v3216, %v3218
        %v3232 = vsel %vm3227, %v3220, %v3222
        %v3233 = vsel %vm3227, %v3224, %v3226
        %3234 = vrot.lane.b32.xlu0 %v2518, 85
        %v3235 = vpop.permute.xlu0 %3234
        %3236 = vrot.lane.b32.xlu0 %v2520, 85
        %v3237 = vpop.permute.xlu0 %3236
        %3238 = vrot.lane.b32.xlu0 %v2524, 85
        %v3239 = vpop.permute.xlu0 %3238
        %3240 = vrot.lane.b32.xlu0 %v2526, 85
        %v3241 = vpop.permute.xlu0 %3240
        %3242 = vrot.lane.b32.xlu0 %v2530, 85
        %v3243 = vpop.permute.xlu0 %3242
        %3244 = vrot.lane.b32.xlu0 %v2532, 85
        %v3245 = vpop.permute.xlu0 %3244
        %3246 = vrot.lane.b32.xlu0 %v2536, 85
        %v3247 = vpop.permute.xlu0 %3246
        %3248 = vrot.lane.b32.xlu0 %v2538, 85
        %v3249 = vpop.permute.xlu0 %3248
        %3250 = vrot.lane.b32.xlu0 %v2542, 85
        %v3251 = vpop.permute.xlu0 %3250
        %3252 = vrot.lane.b32.xlu0 %v2544, 85
        %v3253 = vpop.permute.xlu0 %3252
        %3254 = vrot.lane.b32.xlu0 %v2548, 85
        %v3255 = vpop.permute.xlu0 %3254
        %3256 = vrot.lane.b32.xlu0 %v2550, 85
        %v3257 = vpop.permute.xlu0 %3256
        %3258 = vrot.lane.b32.xlu0 %v2588, 85
        %v3259 = vpop.permute.xlu0 %3258
        %3260 = vrot.lane.b32.xlu0 %v2567, 85
        %v3261 = vpop.permute.xlu0 %3260
        %3262 = vrot.lane.b32.xlu0 %v2589, 85
        %v3263 = vpop.permute.xlu0 %3262
        %3264 = vrot.lane.b32.xlu0 %v2571, 85
        %v3265 = vpop.permute.xlu0 %3264
        %3266 = vrot.lane.b32.xlu0 %v2590, 85
        %v3267 = vpop.permute.xlu0 %3266
        %3268 = vrot.lane.b32.xlu0 %v2575, 85
        %v3269 = vpop.permute.xlu0 %3268
        %3270 = vrot.lane.b32.xlu0 %v2591, 85
        %v3271 = vpop.permute.xlu0 %3270
        %3272 = vrot.lane.b32.xlu0 %v2579, 85
        %v3273 = vpop.permute.xlu0 %3272
        %3274 = vrot.lane.b32.xlu0 %v2592, 85
        %v3275 = vpop.permute.xlu0 %3274
        %3276 = vrot.lane.b32.xlu0 %v2583, 85
        %v3277 = vpop.permute.xlu0 %3276
        %3278 = vrot.lane.b32.xlu0 %v2593, 85
        %v3279 = vpop.permute.xlu0 %3278
        %3280 = vrot.lane.b32.xlu0 %v2587, 85
        %v3281 = vpop.permute.xlu0 %3280
        %3282 = vrot.lane.b32.xlu0 %v2630, 85
        %v3283 = vpop.permute.xlu0 %3282
        %3284 = vrot.lane.b32.xlu0 %v2609, 85
        %v3285 = vpop.permute.xlu0 %3284
        %3286 = vrot.lane.b32.xlu0 %v2631, 85
        %v3287 = vpop.permute.xlu0 %3286
        %3288 = vrot.lane.b32.xlu0 %v2613, 85
        %v3289 = vpop.permute.xlu0 %3288
        %3290 = vrot.lane.b32.xlu0 %v2632, 85
        %v3291 = vpop.permute.xlu0 %3290
        %3292 = vrot.lane.b32.xlu0 %v2617, 85
        %v3293 = vpop.permute.xlu0 %3292
        %3294 = vrot.lane.b32.xlu0 %v2633, 85
        %v3295 = vpop.permute.xlu0 %3294
        %3296 = vrot.lane.b32.xlu0 %v2621, 85
        %v3297 = vpop.permute.xlu0 %3296
        %3298 = vrot.lane.b32.xlu0 %v2634, 85
        %v3299 = vpop.permute.xlu0 %3298
        %3300 = vrot.lane.b32.xlu0 %v2625, 85
        %v3301 = vpop.permute.xlu0 %3300
        %3302 = vrot.lane.b32.xlu0 %v2635, 85
        %v3303 = vpop.permute.xlu0 %3302
        %3304 = vrot.lane.b32.xlu0 %v2629, 85
        %v3305 = vpop.permute.xlu0 %3304
        %3306 = vrot.lane.b32.xlu0 %v2672, 85
        %v3307 = vpop.permute.xlu0 %3306
        %3308 = vrot.lane.b32.xlu0 %v2651, 85
        %v3309 = vpop.permute.xlu0 %3308
        %3310 = vrot.lane.b32.xlu0 %v2673, 85
        %v3311 = vpop.permute.xlu0 %3310
        %3312 = vrot.lane.b32.xlu0 %v2655, 85
        %v3313 = vpop.permute.xlu0 %3312
        %3314 = vrot.lane.b32.xlu0 %v2674, 85
        %v3315 = vpop.permute.xlu0 %3314
        %3316 = vrot.lane.b32.xlu0 %v2659, 85
        %v3317 = vpop.permute.xlu0 %3316
        %3318 = vrot.lane.b32.xlu0 %v2675, 85
        %v3319 = vpop.permute.xlu0 %3318
        %3320 = vrot.lane.b32.xlu0 %v2663, 85
        %v3321 = vpop.permute.xlu0 %3320
        %3322 = vrot.lane.b32.xlu0 %v2676, 85
        %v3323 = vpop.permute.xlu0 %3322
        %3324 = vrot.lane.b32.xlu0 %v2667, 85
        %v3325 = vpop.permute.xlu0 %3324
        %3326 = vrot.lane.b32.xlu0 %v2677, 85
        %v3327 = vpop.permute.xlu0 %3326
        %3328 = vrot.lane.b32.xlu0 %v2671, 85
        %v3329 = vpop.permute.xlu0 %3328
        %3330 = vrot.lane.b32.xlu0 %v3228, 85
        %v3331 = vpop.permute.xlu0 %3330
        %3332 = vrot.lane.b32.xlu0 %v3206, 85
        %v3333 = vpop.permute.xlu0 %3332
        %3334 = vrot.lane.b32.xlu0 %v3229, 85
        %v3335 = vpop.permute.xlu0 %3334
        %3336 = vrot.lane.b32.xlu0 %v3210, 85
        %v3337 = vpop.permute.xlu0 %3336
        %3338 = vrot.lane.b32.xlu0 %v3230, 85
        %v3339 = vpop.permute.xlu0 %3338
        %3340 = vrot.lane.b32.xlu0 %v3214, 85
        %v3341 = vpop.permute.xlu0 %3340
        %3342 = vrot.lane.b32.xlu0 %v3231, 85
        %v3343 = vpop.permute.xlu0 %3342
        %3344 = vrot.lane.b32.xlu0 %v3218, 85
        %v3345 = vpop.permute.xlu0 %3344
        %3346 = vrot.lane.b32.xlu0 %v3232, 85
        %v3347 = vpop.permute.xlu0 %3346
        %3348 = vrot.lane.b32.xlu0 %v3222, 85
        %v3349 = vpop.permute.xlu0 %3348
        %3350 = vrot.lane.b32.xlu0 %v3233, 85
        %v3351 = vpop.permute.xlu0 %3350
        %3352 = vrot.lane.b32.xlu0 %v3226, 85
        %v3353 = vpop.permute.xlu0 %3352
        %3354 = vrot.lane.b32.xlu0 %v2757, 85
        %v3355 = vpop.permute.xlu0 %3354
        %3356 = vrot.lane.b32.xlu0 %v2735, 85
        %v3357 = vpop.permute.xlu0 %3356
        %3358 = vrot.lane.b32.xlu0 %v2758, 85
        %v3359 = vpop.permute.xlu0 %3358
        %3360 = vrot.lane.b32.xlu0 %v2739, 85
        %v3361 = vpop.permute.xlu0 %3360
        %3362 = vrot.lane.b32.xlu0 %v2759, 85
        %v3363 = vpop.permute.xlu0 %3362
        %3364 = vrot.lane.b32.xlu0 %v2743, 85
        %v3365 = vpop.permute.xlu0 %3364
        %3366 = vrot.lane.b32.xlu0 %v2760, 85
        %v3367 = vpop.permute.xlu0 %3366
        %3368 = vrot.lane.b32.xlu0 %v2747, 85
        %v3369 = vpop.permute.xlu0 %3368
        %3370 = vrot.lane.b32.xlu0 %v2761, 85
        %v3371 = vpop.permute.xlu0 %3370
        %3372 = vrot.lane.b32.xlu0 %v2751, 85
        %v3373 = vpop.permute.xlu0 %3372
        %3374 = vrot.lane.b32.xlu0 %v2762, 85
        %v3375 = vpop.permute.xlu0 %3374
        %3376 = vrot.lane.b32.xlu0 %v2755, 85
        %v3377 = vpop.permute.xlu0 %3376
        %3378 = vrot.lane.b32.xlu0 %v2800, 85
        %v3379 = vpop.permute.xlu0 %3378
        %3380 = vrot.lane.b32.xlu0 %v2778, 85
        %v3381 = vpop.permute.xlu0 %3380
        %3382 = vrot.lane.b32.xlu0 %v2801, 85
        %v3383 = vpop.permute.xlu0 %3382
        %3384 = vrot.lane.b32.xlu0 %v2782, 85
        %v3385 = vpop.permute.xlu0 %3384
        %3386 = vrot.lane.b32.xlu0 %v2802, 85
        %v3387 = vpop.permute.xlu0 %3386
        %3388 = vrot.lane.b32.xlu0 %v2786, 85
        %v3389 = vpop.permute.xlu0 %3388
        %3390 = vrot.lane.b32.xlu0 %v2803, 85
        %v3391 = vpop.permute.xlu0 %3390
        %3392 = vrot.lane.b32.xlu0 %v2790, 85
        %v3393 = vpop.permute.xlu0 %3392
        %3394 = vrot.lane.b32.xlu0 %v2804, 85
        %v3395 = vpop.permute.xlu0 %3394
        %3396 = vrot.lane.b32.xlu0 %v2794, 85
        %v3397 = vpop.permute.xlu0 %3396
        %3398 = vrot.lane.b32.xlu0 %v2805, 85
        %v3399 = vpop.permute.xlu0 %3398
        %3400 = vrot.lane.b32.xlu0 %v2798, 85
        %v3401 = vpop.permute.xlu0 %3400
        %3402 = vrot.lane.b32.xlu0 %v2843, 85
        %v3403 = vpop.permute.xlu0 %3402
        %3404 = vrot.lane.b32.xlu0 %v2821, 85
        %v3405 = vpop.permute.xlu0 %3404
        %3406 = vrot.lane.b32.xlu0 %v2844, 85
        %v3407 = vpop.permute.xlu0 %3406
        %3408 = vrot.lane.b32.xlu0 %v2825, 85
        %v3409 = vpop.permute.xlu0 %3408
        %3410 = vrot.lane.b32.xlu0 %v2845, 85
        %v3411 = vpop.permute.xlu0 %3410
        %3412 = vrot.lane.b32.xlu0 %v2829, 85
        %v3413 = vpop.permute.xlu0 %3412
        %3414 = vrot.lane.b32.xlu0 %v2846, 85
        %v3415 = vpop.permute.xlu0 %3414
        %3416 = vrot.lane.b32.xlu0 %v2833, 85
        %v3417 = vpop.permute.xlu0 %3416
        %3418 = vrot.lane.b32.xlu0 %v2847, 85
        %v3419 = vpop.permute.xlu0 %3418
        %3420 = vrot.lane.b32.xlu0 %v2837, 85
        %v3421 = vpop.permute.xlu0 %3420
        %3422 = vrot.lane.b32.xlu0 %v2848, 85
        %v3423 = vpop.permute.xlu0 %3422
        %3424 = vrot.lane.b32.xlu0 %v2841, 85
        %v3425 = vpop.permute.xlu0 %3424
        %3426 = vrot.lane.b32.xlu0 %v2886, 85
        %v3427 = vpop.permute.xlu0 %3426
        %3428 = vrot.lane.b32.xlu0 %v2864, 85
        %v3429 = vpop.permute.xlu0 %3428
        %3430 = vrot.lane.b32.xlu0 %v2887, 85
        %v3431 = vpop.permute.xlu0 %3430
        %3432 = vrot.lane.b32.xlu0 %v2868, 85
        %v3433 = vpop.permute.xlu0 %3432
        %3434 = vrot.lane.b32.xlu0 %v2888, 85
        %v3435 = vpop.permute.xlu0 %3434
        %3436 = vrot.lane.b32.xlu0 %v2872, 85
        %v3437 = vpop.permute.xlu0 %3436
        %3438 = vrot.lane.b32.xlu0 %v2889, 85
        %v3439 = vpop.permute.xlu0 %3438
        %3440 = vrot.lane.b32.xlu0 %v2876, 85
        %v3441 = vpop.permute.xlu0 %3440
        %3442 = vrot.lane.b32.xlu0 %v2890, 85
        %v3443 = vpop.permute.xlu0 %3442
        %3444 = vrot.lane.b32.xlu0 %v2880, 85
        %v3445 = vpop.permute.xlu0 %3444
        %3446 = vrot.lane.b32.xlu0 %v2891, 85
        %v3447 = vpop.permute.xlu0 %3446
        %3448 = vrot.lane.b32.xlu0 %v2884, 85
        %v3449 = vpop.permute.xlu0 %3448
        %vm3450 = vcmask 695296
        %v3451 = vsel %vm3450, %v3235, %v3237
        %v3452 = vsel %vm3450, %v3239, %v3241
        %v3453 = vsel %vm3450, %v3243, %v3245
        %v3454 = vsel %vm3450, %v3247, %v3249
        %v3455 = vsel %vm3450, %v3251, %v3253
        %v3456 = vsel %vm3450, %v3255, %v3257
        %v3457 = vsel %vm3450, %v3259, %v3261
        %v3458 = vsel %vm3450, %v3263, %v3265
        %v3459 = vsel %vm3450, %v3267, %v3269
        %v3460 = vsel %vm3450, %v3271, %v3273
        %v3461 = vsel %vm3450, %v3275, %v3277
        %v3462 = vsel %vm3450, %v3279, %v3281
        %v3463 = vsel %vm3450, %v3283, %v3285
        %v3464 = vsel %vm3450, %v3287, %v3289
        %v3465 = vsel %vm3450, %v3291, %v3293
        %v3466 = vsel %vm3450, %v3295, %v3297
        %v3467 = vsel %vm3450, %v3299, %v3301
        %v3468 = vsel %vm3450, %v3303, %v3305
        %v3469 = vsel %vm3450, %v3307, %v3309
        %v3470 = vsel %vm3450, %v3311, %v3313
        %v3471 = vsel %vm3450, %v3315, %v3317
        %v3472 = vsel %vm3450, %v3319, %v3321
        %v3473 = vsel %vm3450, %v3323, %v3325
        %v3474 = vsel %vm3450, %v3327, %v3329
        %v3475 = vsel %vm3450, %v3331, %v3333
        %v3476 = vsel %vm3450, %v3335, %v3337
        %v3477 = vsel %vm3450, %v3339, %v3341
        %v3478 = vsel %vm3450, %v3343, %v3345
        %v3479 = vsel %vm3450, %v3347, %v3349
        %v3480 = vsel %vm3450, %v3351, %v3353
        %v3481 = vsel %vm3450, %v3355, %v3357
        %v3482 = vsel %vm3450, %v3359, %v3361
        %v3483 = vsel %vm3450, %v3363, %v3365
        %v3484 = vsel %vm3450, %v3367, %v3369
        %v3485 = vsel %vm3450, %v3371, %v3373
        %v3486 = vsel %vm3450, %v3375, %v3377
        %v3487 = vsel %vm3450, %v3379, %v3381
        %v3488 = vsel %vm3450, %v3383, %v3385
        %v3489 = vsel %vm3450, %v3387, %v3389
        %v3490 = vsel %vm3450, %v3391, %v3393
        %v3491 = vsel %vm3450, %v3395, %v3397
        %v3492 = vsel %vm3450, %v3399, %v3401
        %v3493 = vsel %vm3450, %v3403, %v3405
        %v3494 = vsel %vm3450, %v3407, %v3409
        %v3495 = vsel %vm3450, %v3411, %v3413
        %v3496 = vsel %vm3450, %v3415, %v3417
        %v3497 = vsel %vm3450, %v3419, %v3421
        %v3498 = vsel %vm3450, %v3423, %v3425
        %v3499 = vsel %vm3450, %v3427, %v3429
        %v3500 = vsel %vm3450, %v3431, %v3433
        %v3501 = vsel %vm3450, %v3435, %v3437
        %v3502 = vsel %vm3450, %v3439, %v3441
        %v3503 = vsel %vm3450, %v3443, %v3445
        %v3504 = vsel %vm3450, %v3447, %v3449
        %v3613 = vld [vmem:[%s4] sm:$0xff]
        %v3614 = vld [vmem:[%s4 + $0x8] sm:$0xff]
        %v3615 = vld [vmem:[%s4 + $0x10] sm:$0xff]
        %v3616 = vld [vmem:[%s4 + $0x18] sm:$0xff]
        %v3617 = vld [vmem:[%s4 + $0x20] sm:$0xff]
        %v3618 = vld [vmem:[%s4 + $0x28] sm:$0xff]
        %v3619 = vld [vmem:[%s4 + $0x30] sm:$0xff]
        %v3620 = vld [vmem:[%s4 + $0x38] sm:$0xff]
        %v3621 = vld [vmem:[%s4 + $0x40] sm:$0xff]
        %v3622 = vld [vmem:[%s4 + $0x48] sm:$0xff]
        %v3623 = vld [vmem:[%s4 + $0x50] sm:$0xff]
        %v3624 = vld [vmem:[%s4 + $0x58] sm:$0xff]
        %v3625 = vld [vmem:[%s4 + $0x60] sm:$0xff]
        %v3626 = vld [vmem:[%s4 + $0x68] sm:$0xff]
        %v3627 = vld [vmem:[%s4 + $0x70] sm:$0xff]
        %v3628 = vld [vmem:[%s4 + $0x78] sm:$0xff]
        %v3629 = vld [vmem:[%s4 + $0x80] sm:$0xff]
        %v3630 = vld [vmem:[%s4 + $0x88] sm:$0xff]
        %v3631 = vld [vmem:[%s4 + $0x90] sm:$0xff]
        %v3632 = vld [vmem:[%s4 + $0x98] sm:$0xff]
        %v3633 = vld [vmem:[%s4 + $0xa0] sm:$0xff]
        %v3634 = vld [vmem:[%s4 + $0xa8] sm:$0xff]
        %v3635 = vld [vmem:[%s4 + $0xb0] sm:$0xff]
        %v3636 = vld [vmem:[%s4 + $0xb8] sm:$0xff]
        %v3637 = vld [vmem:[%s4 + $0xc0] sm:$0xff]
        %v3638 = vld [vmem:[%s4 + $0xc8] sm:$0xff]
        %v3639 = vld [vmem:[%s4 + $0xd0] sm:$0xff]
        %v3640 = vld [vmem:[%s4 + $0xd8] sm:$0xff]
        %v3641 = vld [vmem:[%s4 + $0xe0] sm:$0xff]
        %v3642 = vld [vmem:[%s4 + $0xe8] sm:$0xff]
        %v3643 = vld [vmem:[%s4 + $0xf0] sm:$0xff]
        %v3644 = vld [vmem:[%s4 + $0xf8] sm:$0xff]
        %v3645 = vld [vmem:[%s4 + $0x100] sm:$0xff]
        %v3646 = vld [vmem:[%s4 + $0x108] sm:$0xff]
        %v3647 = vld [vmem:[%s4 + $0x110] sm:$0xff]
        %v3648 = vld [vmem:[%s4 + $0x118] sm:$0xff]
        %v3649 = vld [vmem:[%s4 + $0x120] sm:$0xff]
        %v3650 = vld [vmem:[%s4 + $0x128] sm:$0xff]
        %v3651 = vld [vmem:[%s4 + $0x130] sm:$0xff]
        %v3652 = vld [vmem:[%s4 + $0x138] sm:$0xff]
        %v3653 = vld [vmem:[%s4 + $0x140] sm:$0xff]
        %v3654 = vld [vmem:[%s4 + $0x148] sm:$0xff]
        %v3655 = vld [vmem:[%s4 + $0x150] sm:$0xff]
        %v3656 = vld [vmem:[%s4 + $0x158] sm:$0xff]
        %v3657 = vld [vmem:[%s4 + $0x160] sm:$0xff]
        %v3658 = vld [vmem:[%s4 + $0x168] sm:$0xff]
        %v3659 = vld [vmem:[%s4 + $0x170] sm:$0xff]
        %v3660 = vld [vmem:[%s4 + $0x178] sm:$0xff]
        %v3661 = vld [vmem:[%s4 + $0x180] sm:$0xff]
        %v3662 = vld [vmem:[%s4 + $0x188] sm:$0xff]
        %v3663 = vld [vmem:[%s4 + $0x190] sm:$0xff]
        %v3664 = vld [vmem:[%s4 + $0x198] sm:$0xff]
        %v3665 = vld [vmem:[%s4 + $0x1a0] sm:$0xff]
        %v3666 = vld [vmem:[%s4 + $0x1a8] sm:$0xff]
        %v3667 = vld [vmem:[%s4 + $0x1b0] sm:$0xff]
        %v3668 = vld [vmem:[%s4 + $0x1b8] sm:$0xff]
        %v3669 = vld [vmem:[%s4 + $0x1c0] sm:$0xff]
        %v3670 = vld [vmem:[%s4 + $0x1c8] sm:$0xff]
        %v3671 = vld [vmem:[%s4 + $0x1d0] sm:$0xff]
        %v3672 = vld [vmem:[%s4 + $0x1d8] sm:$0xff]
        %v3673 = vld [vmem:[%s4 + $0x1e0] sm:$0xff]
        %v3674 = vld [vmem:[%s4 + $0x1e8] sm:$0xff]
        %v3675 = vld [vmem:[%s4 + $0x1f0] sm:$0xff]
        %v3676 = vld [vmem:[%s4 + $0x1f8] sm:$0xff]
        %v3677 = vld [vmem:[%s4 + $0x200] sm:$0xff]
        %v3678 = vld [vmem:[%s4 + $0x208] sm:$0xff]
        %v3679 = vld [vmem:[%s4 + $0x210] sm:$0xff]
        %v3680 = vld [vmem:[%s4 + $0x218] sm:$0xff]
        %v3681 = vld [vmem:[%s4 + $0x220] sm:$0xff]
        %v3682 = vld [vmem:[%s4 + $0x228] sm:$0xff]
        %v3683 = vld [vmem:[%s4 + $0x230] sm:$0xff]
        %v3684 = vld [vmem:[%s4 + $0x238] sm:$0xff]
        %v3685 = vld [vmem:[%s4 + $0x240] sm:$0xff]
        %v3686 = vld [vmem:[%s4 + $0x248] sm:$0xff]
        %v3687 = vld [vmem:[%s4 + $0x250] sm:$0xff]
        %v3688 = vld [vmem:[%s4 + $0x258] sm:$0xff]
        %v3689 = vld [vmem:[%s4 + $0x260] sm:$0xff]
        %v3690 = vld [vmem:[%s4 + $0x268] sm:$0xff]
        %v3691 = vld [vmem:[%s4 + $0x270] sm:$0xff]
        %v3692 = vld [vmem:[%s4 + $0x278] sm:$0xff]
        %v3693 = vld [vmem:[%s4 + $0x280] sm:$0xff]
        %v3694 = vld [vmem:[%s4 + $0x288] sm:$0xff]
        %v3695 = vld [vmem:[%s4 + $0x290] sm:$0xff]
        %v3696 = vld [vmem:[%s4 + $0x298] sm:$0xff]
        %v3697 = vld [vmem:[%s4 + $0x2a0] sm:$0xff]
        %v3698 = vld [vmem:[%s4 + $0x2a8] sm:$0xff]
        %v3699 = vld [vmem:[%s4 + $0x2b0] sm:$0xff]
        %v3700 = vld [vmem:[%s4 + $0x2b8] sm:$0xff]
        %v3701 = vld [vmem:[%s4 + $0x2c0] sm:$0xff]
        %v3702 = vld [vmem:[%s4 + $0x2c8] sm:$0xff]
        %v3703 = vld [vmem:[%s4 + $0x2d0] sm:$0xff]
        %v3704 = vld [vmem:[%s4 + $0x2d8] sm:$0xff]
        %v3705 = vld [vmem:[%s4 + $0x2e0] sm:$0xff]
        %v3706 = vld [vmem:[%s4 + $0x2e8] sm:$0xff]
        %v3707 = vld [vmem:[%s4 + $0x2f0] sm:$0xff]
        %v3708 = vld [vmem:[%s4 + $0x2f8] sm:$0xff]
        %v3709 = vld [vmem:[%s4 + $0x300] sm:$0xff]
        %v3710 = vld [vmem:[%s4 + $0x308] sm:$0xff]
        %v3711 = vld [vmem:[%s4 + $0x310] sm:$0xff]
        %v3712 = vld [vmem:[%s4 + $0x318] sm:$0xff]
        %v3713 = vld [vmem:[%s4 + $0x320] sm:$0xff]
        %v3714 = vld [vmem:[%s4 + $0x328] sm:$0xff]
        %v3715 = vld [vmem:[%s4 + $0x330] sm:$0xff]
        %v3716 = vld [vmem:[%s4 + $0x338] sm:$0xff]
        %v3717 = vld [vmem:[%s4 + $0x340] sm:$0xff]
        %v3718 = vld [vmem:[%s4 + $0x348] sm:$0xff]
        %v3719 = vld [vmem:[%s4 + $0x350] sm:$0xff]
        %v3720 = vld [vmem:[%s4 + $0x358] sm:$0xff]
        %v3721 = vld [vmem:[%s4 + $0x360] sm:$0xff]
        %v3722 = vld [vmem:[%s4 + $0x368] sm:$0xff]
        %v3723 = vld [vmem:[%s4 + $0x370] sm:$0xff]
        %v3724 = vld [vmem:[%s4 + $0x378] sm:$0xff]
        %v3725 = vld [vmem:[%s4 + $0x380] sm:$0xff]
        %v3726 = vld [vmem:[%s4 + $0x388] sm:$0xff]
        %v3727 = vld [vmem:[%s4 + $0x390] sm:$0xff]
        %v3728 = vld [vmem:[%s4 + $0x398] sm:$0xff]
        %v3729 = vld [vmem:[%s4 + $0x3a0] sm:$0xff]
        %v3730 = vld [vmem:[%s4 + $0x3a8] sm:$0xff]
        %v3731 = vld [vmem:[%s4 + $0x3b0] sm:$0xff]
        %v3732 = vld [vmem:[%s4 + $0x3b8] sm:$0xff]
        %v3733 = vld [vmem:[%s4 + $0x3c0] sm:$0xff]
        %v3734 = vld [vmem:[%s4 + $0x3c8] sm:$0xff]
        %v3735 = vld [vmem:[%s4 + $0x3d0] sm:$0xff]
        %v3736 = vld [vmem:[%s4 + $0x3d8] sm:$0xff]
        %v3737 = vld [vmem:[%s4 + $0x3e0] sm:$0xff]
        %v3738 = vld [vmem:[%s4 + $0x3e8] sm:$0xff]
        %v3739 = vld [vmem:[%s4 + $0x3f0] sm:$0xff]
        %v3740 = vld [vmem:[%s4 + $0x3f8] sm:$0xff]
        %v3741 = vld [vmem:[%s4 + $0x400] sm:$0xff]
        %v3742 = vld [vmem:[%s4 + $0x408] sm:$0xff]
        %v3743 = vld [vmem:[%s4 + $0x410] sm:$0xff]
        %v3744 = vld [vmem:[%s4 + $0x418] sm:$0xff]
        %v3745 = vld [vmem:[%s4 + $0x420] sm:$0xff]
        %v3746 = vld [vmem:[%s4 + $0x428] sm:$0xff]
        %v3747 = vld [vmem:[%s4 + $0x430] sm:$0xff]
        %v3748 = vld [vmem:[%s4 + $0x438] sm:$0xff]
        %v3749 = vld [vmem:[%s4 + $0x440] sm:$0xff]
        %v3750 = vld [vmem:[%s4 + $0x448] sm:$0xff]
        %v3751 = vld [vmem:[%s4 + $0x450] sm:$0xff]
        %v3752 = vld [vmem:[%s4 + $0x458] sm:$0xff]
        %v3753 = vld [vmem:[%s4 + $0x460] sm:$0xff]
        %v3754 = vld [vmem:[%s4 + $0x468] sm:$0xff]
        %v3755 = vld [vmem:[%s4 + $0x470] sm:$0xff]
        %v3756 = vld [vmem:[%s4 + $0x478] sm:$0xff]
        %v3757 = vld [vmem:[%s4 + $0x480] sm:$0xff]
        %v3758 = vld [vmem:[%s4 + $0x488] sm:$0xff]
        %v3759 = vld [vmem:[%s4 + $0x490] sm:$0xff]
        %v3760 = vld [vmem:[%s4 + $0x498] sm:$0xff]
        %v3761 = vld [vmem:[%s4 + $0x4a0] sm:$0xff]
        %v3762 = vld [vmem:[%s4 + $0x4a8] sm:$0xff]
        %v3763 = vld [vmem:[%s4 + $0x4b0] sm:$0xff]
        %v3764 = vld [vmem:[%s4 + $0x4b8] sm:$0xff]
        %v3765 = vld [vmem:[%s4 + $0x4c0] sm:$0xff]
        %v3766 = vld [vmem:[%s4 + $0x4c8] sm:$0xff]
        %v3767 = vld [vmem:[%s4 + $0x4d0] sm:$0xff]
        %v3768 = vld [vmem:[%s4 + $0x4d8] sm:$0xff]
        %v3769 = vld [vmem:[%s4 + $0x4e0] sm:$0xff]
        %v3770 = vld [vmem:[%s4 + $0x4e8] sm:$0xff]
        %v3771 = vld [vmem:[%s4 + $0x4f0] sm:$0xff]
        %v3772 = vld [vmem:[%s4 + $0x4f8] sm:$0xff]
        %v3773 = vld [vmem:[%s5] sm:$0xff]
        %v3774 = vld [vmem:[%s5 + $0x8] sm:$0xff]
        %v3775 = vld [vmem:[%s5 + $0x10] sm:$0xff]
        %v3776 = vld [vmem:[%s5 + $0x18] sm:$0xff]
        %v3777 = vld [vmem:[%s5 + $0x20] sm:$0xff]
        %v3778 = vld [vmem:[%s5 + $0x28] sm:$0xff]
        %v3779 = vld [vmem:[%s5 + $0x30] sm:$0xff]
        %v3780 = vld [vmem:[%s5 + $0x38] sm:$0xff]
        %v3781 = vld [vmem:[%s5 + $0x40] sm:$0xff]
        %v3782 = vld [vmem:[%s5 + $0x48] sm:$0xff]
        %v3783 = vld [vmem:[%s5 + $0x50] sm:$0xff]
        %v3784 = vld [vmem:[%s5 + $0x58] sm:$0xff]
        %v3785 = vld [vmem:[%s5 + $0x60] sm:$0xff]
        %v3786 = vld [vmem:[%s5 + $0x68] sm:$0xff]
        %v3787 = vld [vmem:[%s5 + $0x70] sm:$0xff]
        %v3788 = vld [vmem:[%s5 + $0x78] sm:$0xff]
        %3790 = vset.pattern.permute.xlu0 0
        %3791 = vperm.xlu0 %3790, %v3773
        %v3792 = vpop.permute.xlu0 %3791
        %3795 = vset.pattern.permute.xlu0 0
        %3796 = vperm.xlu0 %3795, %v3774
        %v3797 = vpop.permute.xlu0 %3796
        %3800 = vset.pattern.permute.xlu0 0
        %3801 = vperm.xlu0 %3800, %v3775
        %v3802 = vpop.permute.xlu0 %3801
        %3805 = vset.pattern.permute.xlu0 0
        %3806 = vperm.xlu0 %3805, %v3776
        %v3807 = vpop.permute.xlu0 %3806
        %3810 = vset.pattern.permute.xlu0 0
        %3811 = vperm.xlu0 %3810, %v3777
        %v3812 = vpop.permute.xlu0 %3811
        %3815 = vset.pattern.permute.xlu0 0
        %3816 = vperm.xlu0 %3815, %v3778
        %v3817 = vpop.permute.xlu0 %3816
        %3820 = vset.pattern.permute.xlu0 0
        %3821 = vperm.xlu0 %3820, %v3779
        %v3822 = vpop.permute.xlu0 %3821
        %3825 = vset.pattern.permute.xlu0 0
        %3826 = vperm.xlu0 %3825, %v3780
        %v3827 = vpop.permute.xlu0 %3826
        %3830 = vset.pattern.permute.xlu0 0
        %3831 = vperm.xlu0 %3830, %v3781
        %v3832 = vpop.permute.xlu0 %3831
        %3835 = vset.pattern.permute.xlu0 0
        %3836 = vperm.xlu0 %3835, %v3782
        %v3837 = vpop.permute.xlu0 %3836
        %3840 = vset.pattern.permute.xlu0 0
        %3841 = vperm.xlu0 %3840, %v3783
        %v3842 = vpop.permute.xlu0 %3841
        %3845 = vset.pattern.permute.xlu0 0
        %3846 = vperm.xlu0 %3845, %v3784
        %v3847 = vpop.permute.xlu0 %3846
        %3850 = vset.pattern.permute.xlu0 0
        %3851 = vperm.xlu0 %3850, %v3785
        %v3852 = vpop.permute.xlu0 %3851
        %3855 = vset.pattern.permute.xlu0 0
        %3856 = vperm.xlu0 %3855, %v3786
        %v3857 = vpop.permute.xlu0 %3856
        %3860 = vset.pattern.permute.xlu0 0
        %3861 = vperm.xlu0 %3860, %v3787
        %v3862 = vpop.permute.xlu0 %3861
        %3865 = vset.pattern.permute.xlu0 0
        %3866 = vperm.xlu0 %3865, %v3788
        %v3867 = vpop.permute.xlu0 %3866
        %vm3869 = vcmask 392192
        %v3871 = vsel %vm3869, %v3622, 0
        %v3874 = vsel %vm3869, %v3632, 0
        %v3877 = vsel %vm3869, %v3642, 0
        %v3880 = vsel %vm3869, %v3652, 0
        %v3883 = vsel %vm3869, %v3662, 0
        %v3886 = vsel %vm3869, %v3672, 0
        %v3889 = vsel %vm3869, %v3682, 0
        %v3892 = vsel %vm3869, %v3692, 0
        %v3895 = vsel %vm3869, %v3702, 0
        %v3898 = vsel %vm3869, %v3712, 0
        %v3901 = vsel %vm3869, %v3722, 0
        %v3904 = vsel %vm3869, %v3732, 0
        %v3907 = vsel %vm3869, %v3742, 0
        %v3910 = vsel %vm3869, %v3752, 0
        %v3913 = vsel %vm3869, %v3762, 0
        %v3916 = vsel %vm3869, %v3772, 0
        %3918 = vmatprep.subr.mxu0 %v2520
        %3919 = vmatpush1.msra.mxu0 %v2518
        %3920 = vmatprep.subr.mxu0 %v2526
        %3921 = vmatpush1.msra.mxu0 %v2524
        %3922 = vmatprep.subr.mxu0 %v2532
        %3923 = vmatpush1.msra.mxu0 %v2530
        %3924 = vmatprep.subr.mxu0 %v2538
        %3925 = vmatpush1.msra.mxu0 %v2536
        %3926 = vmatprep.subr.mxu0 %v2544
        %3927 = vmatpush1.msra.mxu0 %v2542
        %3928 = vmatprep.subr.mxu0 %v2550
        %3929 = vmatpush1.msra.mxu0 %v2548
        %3930 = vmatprep.subr.mxu0 %v2567
        %3931 = vmatpush1.msra.mxu0 %v2588
        %3932 = vmatprep.subr.mxu0 %v2571
        %3933 = vmatpush1.msra.mxu0 %v2589
        %3934 = vmatprep.subr.mxu0 %v2575
        %3935 = vmatpush1.msra.mxu0 %v2590
        %3936 = vmatprep.subr.mxu0 %v2579
        %3937 = vmatpush1.msra.mxu0 %v2591
        %3938 = vmatprep.subr.mxu0 %v2583
        %3939 = vmatpush1.msra.mxu0 %v2592
        %3940 = vmatprep.subr.mxu0 %v2587
        %3941 = vmatpush1.msra.mxu0 %v2593
        %3942 = vmatprep.subr.mxu0 %v2609
        %3943 = vmatpush1.msra.mxu0 %v2630
        %3944 = vmatprep.subr.mxu0 %v2613
        %3945 = vmatpush1.msra.mxu0 %v2631
        %3946 = vmatprep.subr.mxu0 %v2617
        %3947 = vmatpush1.msra.mxu0 %v2632
        %3948 = vmatprep.subr.mxu0 %v2621
        %3949 = vmatpush1.msra.mxu0 %v2633
        %3950 = vmatprep.subr.mxu0 %v2625
        %3951 = vmatpush1.msra.mxu0 %v2634
        %3952 = vmatprep.subr.mxu0 %v2629
        %3953 = vmatpush1.msra.mxu0 %v2635
        %3954 = vmatprep.subr.mxu0 %v2651
        %3955 = vmatpush1.msra.mxu0 %v2672
        %3956 = vmatprep.subr.mxu0 %v2655
        %3957 = vmatpush1.msra.mxu0 %v2673
        %3958 = vmatprep.subr.mxu0 %v2659
        %3959 = vmatpush1.msra.mxu0 %v2674
        %3960 = vmatprep.subr.mxu0 %v2663
        %3961 = vmatpush1.msra.mxu0 %v2675
        %3962 = vmatprep.subr.mxu0 %v2667
        %3963 = vmatpush1.msra.mxu0 %v2676
        %3964 = vmatprep.subr.mxu0 %v2671
        %3965 = vmatpush1.msra.mxu0 %v2677
        %3966 = vmatprep.subr.mxu0 %v2693
        %3967 = vmatpush1.msra.mxu0 %v2714
        %3968 = vmatprep.subr.mxu0 %v2697
        %3969 = vmatpush1.msra.mxu0 %v2715
        %3970 = vmatprep.subr.mxu0 %v2701
        %3971 = vmatpush1.msra.mxu0 %v2716
        %3972 = vmatprep.subr.mxu0 %v2705
        %3973 = vmatpush1.msra.mxu0 %v2717
        %3974 = vmatprep.subr.mxu0 %v2709
        %3975 = vmatpush1.msra.mxu0 %v2718
        %3976 = vmatprep.subr.mxu0 %v2713
        %3977 = vmatpush1.msra.mxu0 %v2719
        %3978 = vmatprep.subr.mxu0 %v2735
        %3979 = vmatpush1.msra.mxu0 %v2757
        %3980 = vmatprep.subr.mxu0 %v2739
        %3981 = vmatpush1.msra.mxu0 %v2758
        %3982 = vmatprep.mubr.f32.mxu0 %v3614
        %3983 = vmatmul.mubr.f32.gmra.mrb[0].mxu0 %v3613
        %v3984 = vpop.f32.mrb[0].mxu0
        %v3985 = vadd.f32 %v3792, %v3984
        %v3986 = vpop.f32.mrb[0].mxu0
        %v3987 = vadd.f32 %v3792, %v3986
        %3988 = vmatprep.mubr.f32.mxu0 %v3624
        %3989 = vmatmul.mubr.f32.gmra.mrb[0].mxu0 %v3623
        %v3990 = vpop.f32.mrb[0].mxu0
        %v3991 = vadd.f32 %v3797, %v3990
        %v3992 = vpop.f32.mrb[0].mxu0
        %v3993 = vadd.f32 %v3797, %v3992
        %3994 = vmatprep.mubr.f32.mxu0 %v3634
        %3995 = vmatmul.mubr.f32.gmra.mrb[0].mxu0 %v3633
        %v3996 = vpop.f32.mrb[0].mxu0
        %v3997 = vadd.f32 %v3802, %v3996
        %v3998 = vpop.f32.mrb[0].mxu0
        %v3999 = vadd.f32 %v3802, %v3998
        %4000 = vmatprep.mubr.f32.mxu0 %v3644
        %4001 = vmatmul.mubr.f32.gmra.mrb[0].mxu0 %v3643
        %v4002 = vpop.f32.mrb[0].mxu0
        %v4003 = vadd.f32 %v3807, %v4002
        %v4004 = vpop.f32.mrb[0].mxu0
        %v4005 = vadd.f32 %v3807, %v4004
        %4006 = vmatprep.mubr.f32.mxu0 %v3654
        %4007 = vmatmul.mubr.f32.gmra.mrb[0].mxu0 %v3653
        %v4008 = vpop.f32.mrb[0].mxu0
        %v4009 = vadd.f32 %v3812, %v4008
        %v4010 = vpop.f32.mrb[0].mxu0
        %v4011 = vadd.f32 %v3812, %v4010
        %4012 = vmatprep.mubr.f32.mxu0 %v3664
        %4013 = vmatmul.mubr.f32.gmra.mrb[0].mxu0 %v3663
        %v4014 = vpop.f32.mrb[0].mxu0
        %v4015 = vadd.f32 %v3817, %v4014
        %v4016 = vpop.f32.mrb[0].mxu0
        %v4017 = vadd.f32 %v3817, %v4016
        %4018 = vmatprep.mubr.f32.mxu0 %v3674
        %4019 = vmatmul.mubr.f32.gmra.mrb[0].mxu0 %v3673
        %v4020 = vpop.f32.mrb[0].mxu0
        %v4021 = vadd.f32 %v3822, %v4020
        %v4022 = vpop.f32.mrb[0].mxu0
        %v4023 = vadd.f32 %v3822, %v4022
        %4024 = vmatprep.mubr.f32.mxu0 %v3684
        %4025 = vmatmul.mubr.f32.gmra.mrb[0].mxu0 %v3683
        %v4026 = vpop.f32.mrb[0].mxu0
        %v4027 = vadd.f32 %v3827, %v4026
        %v4028 = vpop.f32.mrb[0].mxu0
        %v4029 = vadd.f32 %v3827, %v4028
        %4030 = vmatprep.mubr.f32.mxu0 %v3694
        %4031 = vmatmul.mubr.f32.gmra.mrb[0].mxu0 %v3693
        %v4032 = vpop.f32.mrb[0].mxu0
        %v4033 = vadd.f32 %v3832, %v4032
        %v4034 = vpop.f32.mrb[0].mxu0
        %v4035 = vadd.f32 %v3832, %v4034
        %4036 = vmatprep.mubr.f32.mxu0 %v3704
        %4037 = vmatmul.mubr.f32.gmra.mrb[0].mxu0 %v3703
        %v4038 = vpop.f32.mrb[0].mxu0
        %v4039 = vadd.f32 %v3837, %v4038
        %v4040 = vpop.f32.mrb[0].mxu0
        %v4041 = vadd.f32 %v3837, %v4040
        %4042 = vmatprep.mubr.f32.mxu0 %v3714
        %4043 = vmatmul.mubr.f32.gmra.mrb[0].mxu0 %v3713
        %v4044 = vpop.f32.mrb[0].mxu0
        %v4045 = vadd.f32 %v3842, %v4044
        %v4046 = vpop.f32.mrb[0].mxu0
        %v4047 = vadd.f32 %v3842, %v4046
        %4048 = vmatprep.mubr.f32.mxu0 %v3724
        %4049 = vmatmul.mubr.f32.gmra.mrb[0].mxu0 %v3723
        %v4050 = vpop.f32.mrb[0].mxu0
        %v4051 = vadd.f32 %v3847, %v4050
        %v4052 = vpop.f32.mrb[0].mxu0
        %v4053 = vadd.f32 %v3847, %v4052
        %4054 = vmatprep.mubr.f32.mxu0 %v3734
        %4055 = vmatmul.mubr.f32.gmra.mrb[0].mxu0 %v3733
        %v4056 = vpop.f32.mrb[0].mxu0
        %v4057 = vadd.f32 %v3852, %v4056
        %v4058 = vpop.f32.mrb[0].mxu0
        %v4059 = vadd.f32 %v3852, %v4058
        %4060 = vmatprep.mubr.f32.mxu0 %v3744
        %4061 = vmatmul.mubr.f32.gmra.mrb[0].mxu0 %v3743
        %v4062 = vpop.f32.mrb[0].mxu0
        %v4063 = vadd.f32 %v3857, %v4062
        %v4064 = vpop.f32.mrb[0].mxu0
        %v4065 = vadd.f32 %v3857, %v4064
        %4066 = vmatprep.mubr.f32.mxu0 %v3754
        %4067 = vmatmul.mubr.f32.gmra.mrb[0].mxu0 %v3753
        %v4068 = vpop.f32.mrb[0].mxu0
        %v4069 = vadd.f32 %v3862, %v4068
        %v4070 = vpop.f32.mrb[0].mxu0
        %v4071 = vadd.f32 %v3862, %v4070
        %4072 = vmatprep.mubr.f32.mxu0 %v3764
        %4073 = vmatmul.mubr.f32.gmra.mrb[0].mxu0 %v3763
        %v4074 = vpop.f32.mrb[0].mxu0
        %v4075 = vadd.f32 %v3867, %v4074
        %v4076 = vpop.f32.mrb[0].mxu0
        %v4077 = vadd.f32 %v3867, %v4076
        %4078 = vdwg.mxu0
        %4079 = vmatprep.subr.mxu0 %v2743
        %4080 = vmatpush1.msra.mxu0 %v2759
        %4081 = vmatprep.subr.mxu0 %v2747
        %4082 = vmatpush1.msra.mxu0 %v2760
        %4083 = vmatprep.subr.mxu0 %v2751
        %4084 = vmatpush1.msra.mxu0 %v2761
        %4085 = vmatprep.subr.mxu0 %v2755
        %4086 = vmatpush1.msra.mxu0 %v2762
        %4087 = vmatprep.subr.mxu0 %v2778
        %4088 = vmatpush1.msra.mxu0 %v2800
        %4089 = vmatprep.subr.mxu0 %v2782
        %4090 = vmatpush1.msra.mxu0 %v2801
        %4091 = vmatprep.subr.mxu0 %v2786
        %4092 = vmatpush1.msra.mxu0 %v2802
        %4093 = vmatprep.subr.mxu0 %v2790
        %4094 = vmatpush1.msra.mxu0 %v2803
        %4095 = vmatprep.subr.mxu0 %v2794
        %4096 = vmatpush1.msra.mxu0 %v2804
        %4097 = vmatprep.subr.mxu0 %v2798
        %4098 = vmatpush1.msra.mxu0 %v2805
        %4099 = vmatprep.subr.mxu0 %v2821
        %4100 = vmatpush1.msra.mxu0 %v2843
        %4101 = vmatprep.subr.mxu0 %v2825
        %4102 = vmatpush1.msra.mxu0 %v2844
        %4103 = vmatprep.subr.mxu0 %v2829
        %4104 = vmatpush1.msra.mxu0 %v2845
        %4105 = vmatprep.subr.mxu0 %v2833
        %4106 = vmatpush1.msra.mxu0 %v2846
        %4107 = vmatprep.subr.mxu0 %v2837
        %4108 = vmatpush1.msra.mxu0 %v2847
        %4109 = vmatprep.subr.mxu0 %v2841
        %4110 = vmatpush1.msra.mxu0 %v2848
        %4111 = vmatprep.subr.mxu0 %v2864
        %4112 = vmatpush1.msra.mxu0 %v2886
        %4113 = vmatprep.subr.mxu0 %v2868
        %4114 = vmatpush1.msra.mxu0 %v2887
        %4115 = vmatprep.subr.mxu0 %v2872
        %4116 = vmatpush1.msra.mxu0 %v2888
        %4117 = vmatprep.subr.mxu0 %v2876
        %4118 = vmatpush1.msra.mxu0 %v2889
        %4119 = vmatprep.subr.mxu0 %v2880
        %4120 = vmatpush1.msra.mxu0 %v2890
        %4121 = vmatprep.subr.mxu0 %v2884
        %4122 = vmatpush1.msra.mxu0 %v2891
        %4123 = vmatprep.subr.mxu0 %v2907
        %4124 = vmatpush1.msra.mxu0 %v2929
        %4125 = vmatprep.subr.mxu0 %v2911
        %4126 = vmatpush1.msra.mxu0 %v2930
        %4127 = vmatprep.subr.mxu0 %v2915
        %4128 = vmatpush1.msra.mxu0 %v2931
        %4129 = vmatprep.subr.mxu0 %v2919
        %4130 = vmatpush1.msra.mxu0 %v2932
        %4131 = vmatprep.subr.mxu0 %v2923
        %4132 = vmatpush1.msra.mxu0 %v2933
        %4133 = vmatprep.subr.mxu0 %v2927
        %4134 = vmatpush1.msra.mxu0 %v2934
        %4135 = vmatprep.subr.mxu0 %v2950
        %4136 = vmatpush1.msra.mxu0 %v2972
        %4137 = vmatprep.subr.mxu0 %v2954
        %4138 = vmatpush1.msra.mxu0 %v2973
        %4139 = vmatprep.subr.mxu0 %v2958
        %4140 = vmatpush1.msra.mxu0 %v2974
        %4141 = vmatprep.subr.mxu0 %v2962
        %4142 = vmatpush1.msra.mxu0 %v2975
        %4143 = vmatprep.mubr.f32.mxu0 %v3616
        %4144 = vmatmul.mubr.f32.gmra.mrb[0].mxu0 %v3615
        %v4145 = vpop.f32.mrb[0].mxu0
        %v4146 = vadd.f32 %v3985, %v4145
        %v4147 = vpop.f32.mrb[0].mxu0
        %v4148 = vadd.f32 %v3987, %v4147
        %4149 = vmatprep.mubr.f32.mxu0 %v3626
        %4150 = vmatmul.mubr.f32.gmra.mrb[0].mxu0 %v3625
        %v4151 = vpop.f32.mrb[0].mxu0
        %v4152 = vadd.f32 %v3991, %v4151
        %v4153 = vpop.f32.mrb[0].mxu0
        %v4154 = vadd.f32 %v3993, %v4153
        %4155 = vmatprep.mubr.f32.mxu0 %v3636
        %4156 = vmatmul.mubr.f32.gmra.mrb[0].mxu0 %v3635
        %v4157 = vpop.f32.mrb[0].mxu0
        %v4158 = vadd.f32 %v3997, %v4157
        %v4159 = vpop.f32.mrb[0].mxu0
        %v4160 = vadd.f32 %v3999, %v4159
        %4161 = vmatprep.mubr.f32.mxu0 %v3646
        %4162 = vmatmul.mubr.f32.gmra.mrb[0].mxu0 %v3645
        %v4163 = vpop.f32.mrb[0].mxu0
        %v4164 = vadd.f32 %v4003, %v4163
        %v4165 = vpop.f32.mrb[0].mxu0
        %v4166 = vadd.f32 %v4005, %v4165
        %4167 = vmatprep.mubr.f32.mxu0 %v3656
        %4168 = vmatmul.mubr.f32.gmra.mrb[0].mxu0 %v3655
        %v4169 = vpop.f32.mrb[0].mxu0
        %v4170 = vadd.f32 %v4009, %v4169
        %v4171 = vpop.f32.mrb[0].mxu0
        %v4172 = vadd.f32 %v4011, %v4171
        %4173 = vmatprep.mubr.f32.mxu0 %v3666
        %4174 = vmatmul.mubr.f32.gmra.mrb[0].mxu0 %v3665
        %v4175 = vpop.f32.mrb[0].mxu0
        %v4176 = vadd.f32 %v4015, %v4175
        %v4177 = vpop.f32.mrb[0].mxu0
        %v4178 = vadd.f32 %v4017, %v4177
        %4179 = vmatprep.mubr.f32.mxu0 %v3676
        %4180 = vmatmul.mubr.f32.gmra.mrb[0].mxu0 %v3675
        %v4181 = vpop.f32.mrb[0].mxu0
        %v4182 = vadd.f32 %v4021, %v4181
        %v4183 = vpop.f32.mrb[0].mxu0
        %v4184 = vadd.f32 %v4023, %v4183
        %4185 = vmatprep.mubr.f32.mxu0 %v3686
        %4186 = vmatmul.mubr.f32.gmra.mrb[0].mxu0 %v3685
        %v4187 = vpop.f32.mrb[0].mxu0
        %v4188 = vadd.f32 %v4027, %v4187
        %v4189 = vpop.f32.mrb[0].mxu0
        %v4190 = vadd.f32 %v4029, %v4189
        %4191 = vmatprep.mubr.f32.mxu0 %v3696
        %4192 = vmatmul.mubr.f32.gmra.mrb[0].mxu0 %v3695
        %v4193 = vpop.f32.mrb[0].mxu0
        %v4194 = vadd.f32 %v4033, %v4193
        %v4195 = vpop.f32.mrb[0].mxu0
        %v4196 = vadd.f32 %v4035, %v4195
        %4197 = vmatprep.mubr.f32.mxu0 %v3706
        %4198 = vmatmul.mubr.f32.gmra.mrb[0].mxu0 %v3705
        %v4199 = vpop.f32.mrb[0].mxu0
        %v4200 = vadd.f32 %v4039, %v4199
        %v4201 = vpop.f32.mrb[0].mxu0
        %v4202 = vadd.f32 %v4041, %v4201
        %4203 = vmatprep.mubr.f32.mxu0 %v3716
        %4204 = vmatmul.mubr.f32.gmra.mrb[0].mxu0 %v3715
        %v4205 = vpop.f32.mrb[0].mxu0
        %v4206 = vadd.f32 %v4045, %v4205
        %v4207 = vpop.f32.mrb[0].mxu0
        %v4208 = vadd.f32 %v4047, %v4207
        %4209 = vmatprep.mubr.f32.mxu0 %v3726
        %4210 = vmatmul.mubr.f32.gmra.mrb[0].mxu0 %v3725
        %v4211 = vpop.f32.mrb[0].mxu0
        %v4212 = vadd.f32 %v4051, %v4211
        %v4213 = vpop.f32.mrb[0].mxu0
        %v4214 = vadd.f32 %v4053, %v4213
        %4215 = vmatprep.mubr.f32.mxu0 %v3736
        %4216 = vmatmul.mubr.f32.gmra.mrb[0].mxu0 %v3735
        %v4217 = vpop.f32.mrb[0].mxu0
        %v4218 = vadd.f32 %v4057, %v4217
        %v4219 = vpop.f32.mrb[0].mxu0
        %v4220 = vadd.f32 %v4059, %v4219
        %4221 = vmatprep.mubr.f32.mxu0 %v3746
        %4222 = vmatmul.mubr.f32.gmra.mrb[0].mxu0 %v3745
        %v4223 = vpop.f32.mrb[0].mxu0
        %v4224 = vadd.f32 %v4063, %v4223
        %v4225 = vpop.f32.mrb[0].mxu0
        %v4226 = vadd.f32 %v4065, %v4225
        %4227 = vmatprep.mubr.f32.mxu0 %v3756
        %4228 = vmatmul.mubr.f32.gmra.mrb[0].mxu0 %v3755
        %v4229 = vpop.f32.mrb[0].mxu0
        %v4230 = vadd.f32 %v4069, %v4229
        %v4231 = vpop.f32.mrb[0].mxu0
        %v4232 = vadd.f32 %v4071, %v4231
        %4233 = vmatprep.mubr.f32.mxu0 %v3766
        %4234 = vmatmul.mubr.f32.gmra.mrb[0].mxu0 %v3765
        %v4235 = vpop.f32.mrb[0].mxu0
        %v4236 = vadd.f32 %v4075, %v4235
        %v4237 = vpop.f32.mrb[0].mxu0
        %v4238 = vadd.f32 %v4077, %v4237
        %4239 = vdwg.mxu0
        %4240 = vmatprep.subr.mxu0 %v2966
        %4241 = vmatpush1.msra.mxu0 %v2976
        %4242 = vmatprep.subr.mxu0 %v2970
        %4243 = vmatpush1.msra.mxu0 %v2977
        %4244 = vmatprep.subr.mxu0 %v2993
        %4245 = vmatpush1.msra.mxu0 %v3015
        %4246 = vmatprep.subr.mxu0 %v2997
        %4247 = vmatpush1.msra.mxu0 %v3016
        %4248 = vmatprep.subr.mxu0 %v3001
        %4249 = vmatpush1.msra.mxu0 %v3017
        %4250 = vmatprep.subr.mxu0 %v3005
        %4251 = vmatpush1.msra.mxu0 %v3018
        %4252 = vmatprep.subr.mxu0 %v3009
        %4253 = vmatpush1.msra.mxu0 %v3019
        %4254 = vmatprep.subr.mxu0 %v3013
        %4255 = vmatpush1.msra.mxu0 %v3020
        %4256 = vmatprep.subr.mxu0 %v3036
        %4257 = vmatpush1.msra.mxu0 %v3058
        %4258 = vmatprep.subr.mxu0 %v3040
        %4259 = vmatpush1.msra.mxu0 %v3059
        %4260 = vmatprep.subr.mxu0 %v3044
        %4261 = vmatpush1.msra.mxu0 %v3060
        %4262 = vmatprep.subr.mxu0 %v3048
        %4263 = vmatpush1.msra.mxu0 %v3061
        %4264 = vmatprep.subr.mxu0 %v3052
        %4265 = vmatpush1.msra.mxu0 %v3062
        %4266 = vmatprep.subr.mxu0 %v3056
        %4267 = vmatpush1.msra.mxu0 %v3063
        %4268 = vmatprep.subr.mxu0 %v3079
        %4269 = vmatpush1.msra.mxu0 %v3100
        %4270 = vmatprep.subr.mxu0 %v3083
        %4271 = vmatpush1.msra.mxu0 %v3101
        %4272 = vmatprep.subr.mxu0 %v3087
        %4273 = vmatpush1.msra.mxu0 %v3102
        %4274 = vmatprep.subr.mxu0 %v3091
        %4275 = vmatpush1.msra.mxu0 %v3103
        %4276 = vmatprep.subr.mxu0 %v3095
        %4277 = vmatpush1.msra.mxu0 %v3104
        %4278 = vmatprep.subr.mxu0 %v3099
        %4279 = vmatpush1.msra.mxu0 %v3105
        %4280 = vmatprep.subr.mxu0 %v3121
        %4281 = vmatpush1.msra.mxu0 %v3142
        %4282 = vmatprep.subr.mxu0 %v3125
        %4283 = vmatpush1.msra.mxu0 %v3143
        %4284 = vmatprep.subr.mxu0 %v3129
        %4285 = vmatpush1.msra.mxu0 %v3144
        %4286 = vmatprep.subr.mxu0 %v3133
        %4287 = vmatpush1.msra.mxu0 %v3145
        %4288 = vmatprep.subr.mxu0 %v3137
        %4289 = vmatpush1.msra.mxu0 %v3146
        %4290 = vmatprep.subr.mxu0 %v3141
        %4291 = vmatpush1.msra.mxu0 %v3147
        %4292 = vmatprep.subr.mxu0 %v3163
        %4293 = vmatpush1.msra.mxu0 %v3185
        %4294 = vmatprep.subr.mxu0 %v3167
        %4295 = vmatpush1.msra.mxu0 %v3186
        %4296 = vmatprep.subr.mxu0 %v3171
        %4297 = vmatpush1.msra.mxu0 %v3187
        %4298 = vmatprep.subr.mxu0 %v3175
        %4299 = vmatpush1.msra.mxu0 %v3188
        %4300 = vmatprep.subr.mxu0 %v3179
        %4301 = vmatpush1.msra.mxu0 %v3189
        %4302 = vmatprep.subr.mxu0 %v3183
        %4303 = vmatpush1.msra.mxu0 %v3190
        %4304 = vmatprep.mubr.f32.mxu0 %v3618
        %4305 = vmatmul.mubr.f32.gmra.mrb[0].mxu0 %v3617
        %v4306 = vpop.f32.mrb[0].mxu0
        %v4307 = vadd.f32 %v4146, %v4306
        %v4308 = vpop.f32.mrb[0].mxu0
        %v4309 = vadd.f32 %v4148, %v4308
        %4310 = vmatprep.mubr.f32.mxu0 %v3628
        %4311 = vmatmul.mubr.f32.gmra.mrb[0].mxu0 %v3627
        %v4312 = vpop.f32.mrb[0].mxu0
        %v4313 = vadd.f32 %v4152, %v4312
        %v4314 = vpop.f32.mrb[0].mxu0
        %v4315 = vadd.f32 %v4154, %v4314
        %4316 = vmatprep.mubr.f32.mxu0 %v3638
        %4317 = vmatmul.mubr.f32.gmra.mrb[0].mxu0 %v3637
        %v4318 = vpop.f32.mrb[0].mxu0
        %v4319 = vadd.f32 %v4158, %v4318
        %v4320 = vpop.f32.mrb[0].mxu0
        %v4321 = vadd.f32 %v4160, %v4320
        %4322 = vmatprep.mubr.f32.mxu0 %v3648
        %4323 = vmatmul.mubr.f32.gmra.mrb[0].mxu0 %v3647
        %v4324 = vpop.f32.mrb[0].mxu0
        %v4325 = vadd.f32 %v4164, %v4324
        %v4326 = vpop.f32.mrb[0].mxu0
        %v4327 = vadd.f32 %v4166, %v4326
        %4328 = vmatprep.mubr.f32.mxu0 %v3658
        %4329 = vmatmul.mubr.f32.gmra.mrb[0].mxu0 %v3657
        %v4330 = vpop.f32.mrb[0].mxu0
        %v4331 = vadd.f32 %v4170, %v4330
        %v4332 = vpop.f32.mrb[0].mxu0
        %v4333 = vadd.f32 %v4172, %v4332
        %4334 = vmatprep.mubr.f32.mxu0 %v3668
        %4335 = vmatmul.mubr.f32.gmra.mrb[0].mxu0 %v3667
        %v4336 = vpop.f32.mrb[0].mxu0
        %v4337 = vadd.f32 %v4176, %v4336
        %v4338 = vpop.f32.mrb[0].mxu0
        %v4339 = vadd.f32 %v4178, %v4338
        %4340 = vmatprep.mubr.f32.mxu0 %v3678
        %4341 = vmatmul.mubr.f32.gmra.mrb[0].mxu0 %v3677
        %v4342 = vpop.f32.mrb[0].mxu0
        %v4343 = vadd.f32 %v4182, %v4342
        %v4344 = vpop.f32.mrb[0].mxu0
        %v4345 = vadd.f32 %v4184, %v4344
        %4346 = vmatprep.mubr.f32.mxu0 %v3688
        %4347 = vmatmul.mubr.f32.gmra.mrb[0].mxu0 %v3687
        %v4348 = vpop.f32.mrb[0].mxu0
        %v4349 = vadd.f32 %v4188, %v4348
        %v4350 = vpop.f32.mrb[0].mxu0
        %v4351 = vadd.f32 %v4190, %v4350
        %4352 = vmatprep.mubr.f32.mxu0 %v3698
        %4353 = vmatmul.mubr.f32.gmra.mrb[0].mxu0 %v3697
        %v4354 = vpop.f32.mrb[0].mxu0
        %v4355 = vadd.f32 %v4194, %v4354
        %v4356 = vpop.f32.mrb[0].mxu0
        %v4357 = vadd.f32 %v4196, %v4356
        %4358 = vmatprep.mubr.f32.mxu0 %v3708
        %4359 = vmatmul.mubr.f32.gmra.mrb[0].mxu0 %v3707
        %v4360 = vpop.f32.mrb[0].mxu0
        %v4361 = vadd.f32 %v4200, %v4360
        %v4362 = vpop.f32.mrb[0].mxu0
        %v4363 = vadd.f32 %v4202, %v4362
        %4364 = vmatprep.mubr.f32.mxu0 %v3718
        %4365 = vmatmul.mubr.f32.gmra.mrb[0].mxu0 %v3717
        %v4366 = vpop.f32.mrb[0].mxu0
        %v4367 = vadd.f32 %v4206, %v4366
        %v4368 = vpop.f32.mrb[0].mxu0
        %v4369 = vadd.f32 %v4208, %v4368
        %4370 = vmatprep.mubr.f32.mxu0 %v3728
        %4371 = vmatmul.mubr.f32.gmra.mrb[0].mxu0 %v3727
        %v4372 = vpop.f32.mrb[0].mxu0
        %v4373 = vadd.f32 %v4212, %v4372
        %v4374 = vpop.f32.mrb[0].mxu0
        %v4375 = vadd.f32 %v4214, %v4374
        %4376 = vmatprep.mubr.f32.mxu0 %v3738
        %4377 = vmatmul.mubr.f32.gmra.mrb[0].mxu0 %v3737
        %v4378 = vpop.f32.mrb[0].mxu0
        %v4379 = vadd.f32 %v4218, %v4378
        %v4380 = vpop.f32.mrb[0].mxu0
        %v4381 = vadd.f32 %v4220, %v4380
        %4382 = vmatprep.mubr.f32.mxu0 %v3748
        %4383 = vmatmul.mubr.f32.gmra.mrb[0].mxu0 %v3747
        %v4384 = vpop.f32.mrb[0].mxu0
        %v4385 = vadd.f32 %v4224, %v4384
        %v4386 = vpop.f32.mrb[0].mxu0
        %v4387 = vadd.f32 %v4226, %v4386
        %4388 = vmatprep.mubr.f32.mxu0 %v3758
        %4389 = vmatmul.mubr.f32.gmra.mrb[0].mxu0 %v3757
        %v4390 = vpop.f32.mrb[0].mxu0
        %v4391 = vadd.f32 %v4230, %v4390
        %v4392 = vpop.f32.mrb[0].mxu0
        %v4393 = vadd.f32 %v4232, %v4392
        %4394 = vmatprep.mubr.f32.mxu0 %v3768
        %4395 = vmatmul.mubr.f32.gmra.mrb[0].mxu0 %v3767
        %v4396 = vpop.f32.mrb[0].mxu0
        %v4397 = vadd.f32 %v4236, %v4396
        %v4398 = vpop.f32.mrb[0].mxu0
        %v4399 = vadd.f32 %v4238, %v4398
        %4400 = vdwg.mxu0
        %4401 = vmatprep.subr.mxu0 %v3237
        %4402 = vmatpush1.msra.mxu0 %v3451
        %4403 = vmatprep.subr.mxu0 %v3241
        %4404 = vmatpush1.msra.mxu0 %v3452
        %4405 = vmatprep.subr.mxu0 %v3245
        %4406 = vmatpush1.msra.mxu0 %v3453
        %4407 = vmatprep.subr.mxu0 %v3249
        %4408 = vmatpush1.msra.mxu0 %v3454
        %4409 = vmatprep.subr.mxu0 %v3253
        %4410 = vmatpush1.msra.mxu0 %v3455
        %4411 = vmatprep.subr.mxu0 %v3257
        %4412 = vmatpush1.msra.mxu0 %v3456
        %4413 = vmatprep.subr.mxu0 %v3261
        %4414 = vmatpush1.msra.mxu0 %v3457
        %4415 = vmatprep.subr.mxu0 %v3265
        %4416 = vmatpush1.msra.mxu0 %v3458
        %4417 = vmatprep.subr.mxu0 %v3269
        %4418 = vmatpush1.msra.mxu0 %v3459
        %4419 = vmatprep.subr.mxu0 %v3273
        %4420 = vmatpush1.msra.mxu0 %v3460
        %4421 = vmatprep.subr.mxu0 %v3277
        %4422 = vmatpush1.msra.mxu0 %v3461
        %4423 = vmatprep.subr.mxu0 %v3281
        %4424 = vmatpush1.msra.mxu0 %v3462
        %4425 = vmatprep.subr.mxu0 %v3285
        %4426 = vmatpush1.msra.mxu0 %v3463
        %4427 = vmatprep.subr.mxu0 %v3289
        %4428 = vmatpush1.msra.mxu0 %v3464
        %4429 = vmatprep.subr.mxu0 %v3293
        %4430 = vmatpush1.msra.mxu0 %v3465
        %4431 = vmatprep.subr.mxu0 %v3297
        %4432 = vmatpush1.msra.mxu0 %v3466
        %4433 = vmatprep.subr.mxu0 %v3301
        %4434 = vmatpush1.msra.mxu0 %v3467
        %4435 = vmatprep.subr.mxu0 %v3305
        %4436 = vmatpush1.msra.mxu0 %v3468
        %4437 = vmatprep.subr.mxu0 %v3309
        %4438 = vmatpush1.msra.mxu0 %v3469
        %4439 = vmatprep.subr.mxu0 %v3313
        %4440 = vmatpush1.msra.mxu0 %v3470
        %4441 = vmatprep.subr.mxu0 %v3317
        %4442 = vmatpush1.msra.mxu0 %v3471
        %4443 = vmatprep.subr.mxu0 %v3321
        %4444 = vmatpush1.msra.mxu0 %v3472
        %4445 = vmatprep.subr.mxu0 %v3325
        %4446 = vmatpush1.msra.mxu0 %v3473
        %4447 = vmatprep.subr.mxu0 %v3329
        %4448 = vmatpush1.msra.mxu0 %v3474
        %4449 = vmatprep.subr.mxu0 %v3333
        %4450 = vmatpush1.msra.mxu0 %v3475
        %4451 = vmatprep.subr.mxu0 %v3337
        %4452 = vmatpush1.msra.mxu0 %v3476
        %4453 = vmatprep.subr.mxu0 %v3341
        %4454 = vmatpush1.msra.mxu0 %v3477
        %4455 = vmatprep.subr.mxu0 %v3345
        %4456 = vmatpush1.msra.mxu0 %v3478
        %4457 = vmatprep.subr.mxu0 %v3349
        %4458 = vmatpush1.msra.mxu0 %v3479
        %4459 = vmatprep.subr.mxu0 %v3353
        %4460 = vmatpush1.msra.mxu0 %v3480
        %4461 = vmatprep.subr.mxu0 %v3357
        %4462 = vmatpush1.msra.mxu0 %v3481
        %4463 = vmatprep.subr.mxu0 %v3361
        %4464 = vmatpush1.msra.mxu0 %v3482
        %4465 = vmatprep.mubr.f32.mxu0 %v3620
        %4466 = vmatmul.mubr.f32.gmra.mrb[0].mxu0 %v3619
        %v4467 = vpop.f32.mrb[0].mxu0
        %v4468 = vadd.f32 %v4307, %v4467
        %v4469 = vpop.f32.mrb[0].mxu0
        %v4470 = vadd.f32 %v4309, %v4469
        %4471 = vmatprep.mubr.f32.mxu0 %v3630
        %4472 = vmatmul.mubr.f32.gmra.mrb[0].mxu0 %v3629
        %v4473 = vpop.f32.mrb[0].mxu0
        %v4474 = vadd.f32 %v4313, %v4473
        %v4475 = vpop.f32.mrb[0].mxu0
        %v4476 = vadd.f32 %v4315, %v4475
        %4477 = vmatprep.mubr.f32.mxu0 %v3640
        %4478 = vmatmul.mubr.f32.gmra.mrb[0].mxu0 %v3639
        %v4479 = vpop.f32.mrb[0].mxu0
        %v4480 = vadd.f32 %v4319, %v4479
        %v4481 = vpop.f32.mrb[0].mxu0
        %v4482 = vadd.f32 %v4321, %v4481
        %4483 = vmatprep.mubr.f32.mxu0 %v3650
        %4484 = vmatmul.mubr.f32.gmra.mrb[0].mxu0 %v3649
        %v4485 = vpop.f32.mrb[0].mxu0
        %v4486 = vadd.f32 %v4325, %v4485
        %v4487 = vpop.f32.mrb[0].mxu0
        %v4488 = vadd.f32 %v4327, %v4487
        %4489 = vmatprep.mubr.f32.mxu0 %v3660
        %4490 = vmatmul.mubr.f32.gmra.mrb[0].mxu0 %v3659
        %v4491 = vpop.f32.mrb[0].mxu0
        %v4492 = vadd.f32 %v4331, %v4491
        %v4493 = vpop.f32.mrb[0].mxu0
        %v4494 = vadd.f32 %v4333, %v4493
        %4495 = vmatprep.mubr.f32.mxu0 %v3670
        %4496 = vmatmul.mubr.f32.gmra.mrb[0].mxu0 %v3669
        %v4497 = vpop.f32.mrb[0].mxu0
        %v4498 = vadd.f32 %v4337, %v4497
        %v4499 = vpop.f32.mrb[0].mxu0
        %v4500 = vadd.f32 %v4339, %v4499
        %4501 = vmatprep.mubr.f32.mxu0 %v3680
        %4502 = vmatmul.mubr.f32.gmra.mrb[0].mxu0 %v3679
        %v4503 = vpop.f32.mrb[0].mxu0
        %v4504 = vadd.f32 %v4343, %v4503
        %v4505 = vpop.f32.mrb[0].mxu0
        %v4506 = vadd.f32 %v4345, %v4505
        %4507 = vmatprep.mubr.f32.mxu0 %v3690
        %4508 = vmatmul.mubr.f32.gmra.mrb[0].mxu0 %v3689
        %v4509 = vpop.f32.mrb[0].mxu0
        %v4510 = vadd.f32 %v4349, %v4509
        %v4511 = vpop.f32.mrb[0].mxu0
        %v4512 = vadd.f32 %v4351, %v4511
        %4513 = vmatprep.mubr.f32.mxu0 %v3700
        %4514 = vmatmul.mubr.f32.gmra.mrb[0].mxu0 %v3699
        %v4515 = vpop.f32.mrb[0].mxu0
        %v4516 = vadd.f32 %v4355, %v4515
        %v4517 = vpop.f32.mrb[0].mxu0
        %v4518 = vadd.f32 %v4357, %v4517
        %4519 = vmatprep.mubr.f32.mxu0 %v3710
        %4520 = vmatmul.mubr.f32.gmra.mrb[0].mxu0 %v3709
        %v4521 = vpop.f32.mrb[0].mxu0
        %v4522 = vadd.f32 %v4361, %v4521
        %v4523 = vpop.f32.mrb[0].mxu0
        %v4524 = vadd.f32 %v4363, %v4523
        %4525 = vmatprep.mubr.f32.mxu0 %v3720
        %4526 = vmatmul.mubr.f32.gmra.mrb[0].mxu0 %v3719
        %v4527 = vpop.f32.mrb[0].mxu0
        %v4528 = vadd.f32 %v4367, %v4527
        %v4529 = vpop.f32.mrb[0].mxu0
        %v4530 = vadd.f32 %v4369, %v4529
        %4531 = vmatprep.mubr.f32.mxu0 %v3730
        %4532 = vmatmul.mubr.f32.gmra.mrb[0].mxu0 %v3729
        %v4533 = vpop.f32.mrb[0].mxu0
        %v4534 = vadd.f32 %v4373, %v4533
        %v4535 = vpop.f32.mrb[0].mxu0
        %v4536 = vadd.f32 %v4375, %v4535
        %4537 = vmatprep.mubr.f32.mxu0 %v3740
        %4538 = vmatmul.mubr.f32.gmra.mrb[0].mxu0 %v3739
        %v4539 = vpop.f32.mrb[0].mxu0
        %v4540 = vadd.f32 %v4379, %v4539
        %v4541 = vpop.f32.mrb[0].mxu0
        %v4542 = vadd.f32 %v4381, %v4541
        %4543 = vmatprep.mubr.f32.mxu0 %v3750
        %4544 = vmatmul.mubr.f32.gmra.mrb[0].mxu0 %v3749
        %v4545 = vpop.f32.mrb[0].mxu0
        %v4546 = vadd.f32 %v4385, %v4545
        %v4547 = vpop.f32.mrb[0].mxu0
        %v4548 = vadd.f32 %v4387, %v4547
        %4549 = vmatprep.mubr.f32.mxu0 %v3760
        %4550 = vmatmul.mubr.f32.gmra.mrb[0].mxu0 %v3759
        %v4551 = vpop.f32.mrb[0].mxu0
        %v4552 = vadd.f32 %v4391, %v4551
        %v4553 = vpop.f32.mrb[0].mxu0
        %v4554 = vadd.f32 %v4393, %v4553
        %4555 = vmatprep.mubr.f32.mxu0 %v3770
        %4556 = vmatmul.mubr.f32.gmra.mrb[0].mxu0 %v3769
        %v4557 = vpop.f32.mrb[0].mxu0
        %v4558 = vadd.f32 %v4397, %v4557
        %v4559 = vpop.f32.mrb[0].mxu0
        %v4560 = vadd.f32 %v4399, %v4559
        %4561 = vdwg.mxu0
        %4562 = vmatprep.subr.mxu0 %v3365
        %4563 = vmatpush1.msra.mxu0 %v3483
        %4564 = vmatprep.subr.mxu0 %v3369
        %4565 = vmatpush1.msra.mxu0 %v3484
        %4566 = vmatprep.subr.mxu0 %v3373
        %4567 = vmatpush1.msra.mxu0 %v3485
        %4568 = vmatprep.subr.mxu0 %v3377
        %4569 = vmatpush1.msra.mxu0 %v3486
        %4570 = vmatprep.subr.mxu0 %v3381
        %4571 = vmatpush1.msra.mxu0 %v3487
        %4572 = vmatprep.subr.mxu0 %v3385
        %4573 = vmatpush1.msra.mxu0 %v3488
        %4574 = vmatprep.subr.mxu0 %v3389
        %4575 = vmatpush1.msra.mxu0 %v3489
        %4576 = vmatprep.subr.mxu0 %v3393
        %4577 = vmatpush1.msra.mxu0 %v3490
        %4578 = vmatprep.subr.mxu0 %v3397
        %4579 = vmatpush1.msra.mxu0 %v3491
        %4580 = vmatprep.subr.mxu0 %v3401
        %4581 = vmatpush1.msra.mxu0 %v3492
        %4582 = vmatprep.subr.mxu0 %v3405
        %4583 = vmatpush1.msra.mxu0 %v3493
        %4584 = vmatprep.subr.mxu0 %v3409
        %4585 = vmatpush1.msra.mxu0 %v3494
        %4586 = vmatprep.subr.mxu0 %v3413
        %4587 = vmatpush1.msra.mxu0 %v3495
        %4588 = vmatprep.subr.mxu0 %v3417
        %4589 = vmatpush1.msra.mxu0 %v3496
        %4590 = vmatprep.subr.mxu0 %v3421
        %4591 = vmatpush1.msra.mxu0 %v3497
        %4592 = vmatprep.subr.mxu0 %v3425
        %4593 = vmatpush1.msra.mxu0 %v3498
        %4594 = vmatprep.subr.mxu0 %v3429
        %4595 = vmatpush1.msra.mxu0 %v3499
        %4596 = vmatprep.subr.mxu0 %v3433
        %4597 = vmatpush1.msra.mxu0 %v3500
        %4598 = vmatprep.subr.mxu0 %v3437
        %4599 = vmatpush1.msra.mxu0 %v3501
        %4600 = vmatprep.subr.mxu0 %v3441
        %4601 = vmatpush1.msra.mxu0 %v3502
        %4602 = vmatprep.subr.mxu0 %v3445
        %4603 = vmatpush1.msra.mxu0 %v3503
        %4604 = vmatprep.subr.mxu0 %v3449
        %4605 = vmatpush1.msra.mxu0 %v3504
        %4606 = vmatprep.subr.mxu0 0.0
        %4607 = vmatpush1.msra.mxu0 0.0
        %4608 = vmatprep.subr.mxu0 0.0
        %4609 = vmatpush1.msra.mxu0 0.0
        %4610 = vmatprep.subr.mxu0 0.0
        %4611 = vmatpush1.msra.mxu0 0.0
        %4612 = vmatprep.subr.mxu0 0.0
        %4613 = vmatpush1.msra.mxu0 0.0
        %4614 = vmatprep.subr.mxu0 0.0
        %4615 = vmatpush1.msra.mxu0 0.0
        %4616 = vmatprep.subr.mxu0 0.0
        %4617 = vmatpush1.msra.mxu0 0.0
        %4618 = vmatprep.subr.mxu0 0.0
        %4619 = vmatpush1.msra.mxu0 0.0
        %4620 = vmatprep.subr.mxu0 0.0
        %4621 = vmatpush1.msra.mxu0 0.0
        %4622 = vmatprep.subr.mxu0 0.0
        %4623 = vmatpush1.msra.mxu0 0.0
        %4624 = vmatprep.subr.mxu0 0.0
        %4625 = vmatpush1.msra.mxu0 0.0
        %4626 = vmatprep.mubr.f32.mxu0 %v3871
        %4627 = vmatmul.mubr.f32.gmra.mrb[0].mxu0 %v3621
        %v4628 = vpop.f32.mrb[0].mxu0
        %v4629 = vadd.f32 %v4468, %v4628
        %v4630 = vpop.f32.mrb[0].mxu0
        %v4631 = vadd.f32 %v4470, %v4630
        %4632 = vmatprep.mubr.f32.mxu0 %v3874
        %4633 = vmatmul.mubr.f32.gmra.mrb[0].mxu0 %v3631
        %v4634 = vpop.f32.mrb[0].mxu0
        %v4635 = vadd.f32 %v4474, %v4634
        %v4636 = vpop.f32.mrb[0].mxu0
        %v4637 = vadd.f32 %v4476, %v4636
        %4638 = vmatprep.mubr.f32.mxu0 %v3877
        %4639 = vmatmul.mubr.f32.gmra.mrb[0].mxu0 %v3641
        %v4640 = vpop.f32.mrb[0].mxu0
        %v4641 = vadd.f32 %v4480, %v4640
        %v4642 = vpop.f32.mrb[0].mxu0
        %v4643 = vadd.f32 %v4482, %v4642
        %4644 = vmatprep.mubr.f32.mxu0 %v3880
        %4645 = vmatmul.mubr.f32.gmra.mrb[0].mxu0 %v3651
        %v4646 = vpop.f32.mrb[0].mxu0
        %v4647 = vadd.f32 %v4486, %v4646
        %v4648 = vpop.f32.mrb[0].mxu0
        %v4649 = vadd.f32 %v4488, %v4648
        %4650 = vmatprep.mubr.f32.mxu0 %v3883
        %4651 = vmatmul.mubr.f32.gmra.mrb[0].mxu0 %v3661
        %v4652 = vpop.f32.mrb[0].mxu0
        %v4653 = vadd.f32 %v4492, %v4652
        %v4654 = vpop.f32.mrb[0].mxu0
        %v4655 = vadd.f32 %v4494, %v4654
        %4656 = vmatprep.mubr.f32.mxu0 %v3886
        %4657 = vmatmul.mubr.f32.gmra.mrb[0].mxu0 %v3671
        %v4658 = vpop.f32.mrb[0].mxu0
        %v4659 = vadd.f32 %v4498, %v4658
        %v4660 = vpop.f32.mrb[0].mxu0
        %v4661 = vadd.f32 %v4500, %v4660
        %4662 = vmatprep.mubr.f32.mxu0 %v3889
        %4663 = vmatmul.mubr.f32.gmra.mrb[0].mxu0 %v3681
        %v4664 = vpop.f32.mrb[0].mxu0
        %v4665 = vadd.f32 %v4504, %v4664
        %v4666 = vpop.f32.mrb[0].mxu0
        %v4667 = vadd.f32 %v4506, %v4666
        %4668 = vmatprep.mubr.f32.mxu0 %v3892
        %4669 = vmatmul.mubr.f32.gmra.mrb[0].mxu0 %v3691
        %v4670 = vpop.f32.mrb[0].mxu0
        %v4671 = vadd.f32 %v4510, %v4670
        %v4672 = vpop.f32.mrb[0].mxu0
        %v4673 = vadd.f32 %v4512, %v4672
        %4674 = vmatprep.mubr.f32.mxu0 %v3895
        %4675 = vmatmul.mubr.f32.gmra.mrb[0].mxu0 %v3701
        %v4676 = vpop.f32.mrb[0].mxu0
        %v4677 = vadd.f32 %v4516, %v4676
        %v4678 = vpop.f32.mrb[0].mxu0
        %v4679 = vadd.f32 %v4518, %v4678
        %4680 = vmatprep.mubr.f32.mxu0 %v3898
        %4681 = vmatmul.mubr.f32.gmra.mrb[0].mxu0 %v3711
        %v4682 = vpop.f32.mrb[0].mxu0
        %v4683 = vadd.f32 %v4522, %v4682
        %v4684 = vpop.f32.mrb[0].mxu0
        %v4685 = vadd.f32 %v4524, %v4684
        %4686 = vmatprep.mubr.f32.mxu0 %v3901
        %4687 = vmatmul.mubr.f32.gmra.mrb[0].mxu0 %v3721
        %v4688 = vpop.f32.mrb[0].mxu0
        %v4689 = vadd.f32 %v4528, %v4688
        %v4690 = vpop.f32.mrb[0].mxu0
        %v4691 = vadd.f32 %v4530, %v4690
        %4692 = vmatprep.mubr.f32.mxu0 %v3904
        %4693 = vmatmul.mubr.f32.gmra.mrb[0].mxu0 %v3731
        %v4694 = vpop.f32.mrb[0].mxu0
        %v4695 = vadd.f32 %v4534, %v4694
        %v4696 = vpop.f32.mrb[0].mxu0
        %v4697 = vadd.f32 %v4536, %v4696
        %4698 = vmatprep.mubr.f32.mxu0 %v3907
        %4699 = vmatmul.mubr.f32.gmra.mrb[0].mxu0 %v3741
        %v4700 = vpop.f32.mrb[0].mxu0
        %v4701 = vadd.f32 %v4540, %v4700
        %v4702 = vpop.f32.mrb[0].mxu0
        %v4703 = vadd.f32 %v4542, %v4702
        %4704 = vmatprep.mubr.f32.mxu0 %v3910
        %4705 = vmatmul.mubr.f32.gmra.mrb[0].mxu0 %v3751
        %v4706 = vpop.f32.mrb[0].mxu0
        %v4707 = vadd.f32 %v4546, %v4706
        %v4708 = vpop.f32.mrb[0].mxu0
        %v4709 = vadd.f32 %v4548, %v4708
        %4710 = vmatprep.mubr.f32.mxu0 %v3913
        %4711 = vmatmul.mubr.f32.gmra.mrb[0].mxu0 %v3761
        %v4712 = vpop.f32.mrb[0].mxu0
        %v4713 = vadd.f32 %v4552, %v4712
        %v4714 = vpop.f32.mrb[0].mxu0
        %v4715 = vadd.f32 %v4554, %v4714
        %4716 = vmatprep.mubr.f32.mxu0 %v3916
        %4717 = vmatmul.mubr.f32.gmra.mrb[0].mxu0 %v3771
        %v4718 = vpop.f32.mrb[0].mxu0
        %v4719 = vadd.f32 %v4558, %v4718
        %v4720 = vpop.f32.mrb[0].mxu0
        %v4721 = vadd.f32 %v4560, %v4720
        %4722 = vdwg.mxu0
        %v4723 = vsub.f32 0.0, %v4629
        %v4724 = vsub.f32 0.0, %v4631
        %v4725 = vsub.f32 0.0, %v4635
        %v4726 = vsub.f32 0.0, %v4637
        %v4727 = vsub.f32 0.0, %v4641
        %v4728 = vsub.f32 0.0, %v4643
        %v4729 = vsub.f32 0.0, %v4647
        %v4730 = vsub.f32 0.0, %v4649
        %v4731 = vsub.f32 0.0, %v4653
        %v4732 = vsub.f32 0.0, %v4655
        %v4733 = vsub.f32 0.0, %v4659
        %v4734 = vsub.f32 0.0, %v4661
        %v4735 = vsub.f32 0.0, %v4665
        %v4736 = vsub.f32 0.0, %v4667
        %v4737 = vsub.f32 0.0, %v4671
        %v4738 = vsub.f32 0.0, %v4673
        %v4739 = vsub.f32 0.0, %v4677
        %v4740 = vsub.f32 0.0, %v4679
        %v4741 = vsub.f32 0.0, %v4683
        %v4742 = vsub.f32 0.0, %v4685
        %v4743 = vsub.f32 0.0, %v4689
        %v4744 = vsub.f32 0.0, %v4691
        %v4745 = vsub.f32 0.0, %v4695
        %v4746 = vsub.f32 0.0, %v4697
        %v4747 = vsub.f32 0.0, %v4701
        %v4748 = vsub.f32 0.0, %v4703
        %v4749 = vsub.f32 0.0, %v4707
        %v4750 = vsub.f32 0.0, %v4709
        %v4751 = vsub.f32 0.0, %v4713
        %v4752 = vsub.f32 0.0, %v4715
        %v4753 = vsub.f32 0.0, %v4719
        %v4754 = vsub.f32 0.0, %v4721
        %v4755 = vmul.f32 %v4723, 1.442695
        %v4756 = vpow.pop %v4755
        %v4757 = vmul.f32 %v4724, 1.442695
        %v4758 = vpow.pop %v4757
        %v4759 = vmul.f32 %v4725, 1.442695
        %v4760 = vpow.pop %v4759
        %v4761 = vmul.f32 %v4726, 1.442695
        %v4762 = vpow.pop %v4761
        %v4763 = vmul.f32 %v4727, 1.442695
        %v4764 = vpow.pop %v4763
        %v4765 = vmul.f32 %v4728, 1.442695
        %v4766 = vpow.pop %v4765
        %v4767 = vmul.f32 %v4729, 1.442695
        %v4768 = vpow.pop %v4767
        %v4769 = vmul.f32 %v4730, 1.442695
        %v4770 = vpow.pop %v4769
        %v4771 = vmul.f32 %v4731, 1.442695
        %v4772 = vpow.pop %v4771
        %v4773 = vmul.f32 %v4732, 1.442695
        %v4774 = vpow.pop %v4773
        %v4775 = vmul.f32 %v4733, 1.442695
        %v4776 = vpow.pop %v4775
        %v4777 = vmul.f32 %v4734, 1.442695
        %v4778 = vpow.pop %v4777
        %v4779 = vmul.f32 %v4735, 1.442695
        %v4780 = vpow.pop %v4779
        %v4781 = vmul.f32 %v4736, 1.442695
        %v4782 = vpow.pop %v4781
        %v4783 = vmul.f32 %v4737, 1.442695
        %v4784 = vpow.pop %v4783
        %v4785 = vmul.f32 %v4738, 1.442695
        %v4786 = vpow.pop %v4785
        %v4787 = vmul.f32 %v4739, 1.442695
        %v4788 = vpow.pop %v4787
        %v4789 = vmul.f32 %v4740, 1.442695
        %v4790 = vpow.pop %v4789
        %v4791 = vmul.f32 %v4741, 1.442695
        %v4792 = vpow.pop %v4791
        %v4793 = vmul.f32 %v4742, 1.442695
        %v4794 = vpow.pop %v4793
        %v4795 = vmul.f32 %v4743, 1.442695
        %v4796 = vpow.pop %v4795
        %v4797 = vmul.f32 %v4744, 1.442695
        %v4798 = vpow.pop %v4797
        %v4799 = vmul.f32 %v4745, 1.442695
        %v4800 = vpow.pop %v4799
        %v4801 = vmul.f32 %v4746, 1.442695
        %v4802 = vpow.pop %v4801
        %v4803 = vmul.f32 %v4747, 1.442695
        %v4804 = vpow.pop %v4803
        %v4805 = vmul.f32 %v4748, 1.442695
        %v4806 = vpow.pop %v4805
        %v4807 = vmul.f32 %v4749, 1.442695
        %v4808 = vpow.pop %v4807
        %v4809 = vmul.f32 %v4750, 1.442695
        %v4810 = vpow.pop %v4809
        %v4811 = vmul.f32 %v4751, 1.442695
        %v4812 = vpow.pop %v4811
        %v4813 = vmul.f32 %v4752, 1.442695
        %v4814 = vpow.pop %v4813
        %v4815 = vmul.f32 %v4753, 1.442695
        %v4816 = vpow.pop %v4815
        %v4817 = vmul.f32 %v4754, 1.442695
        %v4818 = vpow.pop %v4817
        %v4819 = vadd.f32 %v4756, 1.0
        %v4820 = vadd.f32 %v4758, 1.0
        %v4821 = vadd.f32 %v4760, 1.0
        %v4822 = vadd.f32 %v4762, 1.0
        %v4823 = vadd.f32 %v4764, 1.0
        %v4824 = vadd.f32 %v4766, 1.0
        %v4825 = vadd.f32 %v4768, 1.0
        %v4826 = vadd.f32 %v4770, 1.0
        %v4827 = vadd.f32 %v4772, 1.0
        %v4828 = vadd.f32 %v4774, 1.0
        %v4829 = vadd.f32 %v4776, 1.0
        %v4830 = vadd.f32 %v4778, 1.0
        %v4831 = vadd.f32 %v4780, 1.0
        %v4832 = vadd.f32 %v4782, 1.0
        %v4833 = vadd.f32 %v4784, 1.0
        %v4834 = vadd.f32 %v4786, 1.0
        %v4835 = vadd.f32 %v4788, 1.0
        %v4836 = vadd.f32 %v4790, 1.0
        %v4837 = vadd.f32 %v4792, 1.0
        %v4838 = vadd.f32 %v4794, 1.0
        %v4839 = vadd.f32 %v4796, 1.0
        %v4840 = vadd.f32 %v4798, 1.0
        %v4841 = vadd.f32 %v4800, 1.0
        %v4842 = vadd.f32 %v4802, 1.0
        %v4843 = vadd.f32 %v4804, 1.0
        %v4844 = vadd.f32 %v4806, 1.0
        %v4845 = vadd.f32 %v4808, 1.0
        %v4846 = vadd.f32 %v4810, 1.0
        %v4847 = vadd.f32 %v4812, 1.0
        %v4848 = vadd.f32 %v4814, 1.0
        %v4849 = vadd.f32 %v4816, 1.0
        %v4850 = vadd.f32 %v4818, 1.0
        %v4851 = vrcp.pop %v4819
        %v4852 = vmul.f32 1.0, %v4851
        %v4853 = vrcp.pop %v4820
        %v4854 = vmul.f32 1.0, %v4853
        %v4855 = vrcp.pop %v4821
        %v4856 = vmul.f32 1.0, %v4855
        %v4857 = vrcp.pop %v4822
        %v4858 = vmul.f32 1.0, %v4857
        %v4859 = vrcp.pop %v4823
        %v4860 = vmul.f32 1.0, %v4859
        %v4861 = vrcp.pop %v4824
        %v4862 = vmul.f32 1.0, %v4861
        %v4863 = vrcp.pop %v4825
        %v4864 = vmul.f32 1.0, %v4863
        %v4865 = vrcp.pop %v4826
        %v4866 = vmul.f32 1.0, %v4865
        %v4867 = vrcp.pop %v4827
        %v4868 = vmul.f32 1.0, %v4867
        %v4869 = vrcp.pop %v4828
        %v4870 = vmul.f32 1.0, %v4869
        %v4871 = vrcp.pop %v4829
        %v4872 = vmul.f32 1.0, %v4871
        %v4873 = vrcp.pop %v4830
        %v4874 = vmul.f32 1.0, %v4873
        %v4875 = vrcp.pop %v4831
        %v4876 = vmul.f32 1.0, %v4875
        %v4877 = vrcp.pop %v4832
        %v4878 = vmul.f32 1.0, %v4877
        %v4879 = vrcp.pop %v4833
        %v4880 = vmul.f32 1.0, %v4879
        %v4881 = vrcp.pop %v4834
        %v4882 = vmul.f32 1.0, %v4881
        %v4883 = vrcp.pop %v4835
        %v4884 = vmul.f32 1.0, %v4883
        %v4885 = vrcp.pop %v4836
        %v4886 = vmul.f32 1.0, %v4885
        %v4887 = vrcp.pop %v4837
        %v4888 = vmul.f32 1.0, %v4887
        %v4889 = vrcp.pop %v4838
        %v4890 = vmul.f32 1.0, %v4889
        %v4891 = vrcp.pop %v4839
        %v4892 = vmul.f32 1.0, %v4891
        %v4893 = vrcp.pop %v4840
        %v4894 = vmul.f32 1.0, %v4893
        %v4895 = vrcp.pop %v4841
        %v4896 = vmul.f32 1.0, %v4895
        %v4897 = vrcp.pop %v4842
        %v4898 = vmul.f32 1.0, %v4897
        %v4899 = vrcp.pop %v4843
        %v4900 = vmul.f32 1.0, %v4899
        %v4901 = vrcp.pop %v4844
        %v4902 = vmul.f32 1.0, %v4901
        %v4903 = vrcp.pop %v4845
        %v4904 = vmul.f32 1.0, %v4903
        %v4905 = vrcp.pop %v4846
        %v4906 = vmul.f32 1.0, %v4905
        %v4907 = vrcp.pop %v4847
        %v4908 = vmul.f32 1.0, %v4907
        %v4909 = vrcp.pop %v4848
        %v4910 = vmul.f32 1.0, %v4909
        %v4911 = vrcp.pop %v4849
        %v4912 = vmul.f32 1.0, %v4911
        %v4913 = vrcp.pop %v4850
        %v4914 = vmul.f32 1.0, %v4913
        %v4915 = vld [vmem:[%s6] sm:$0xff]
        %v4916 = vld [vmem:[%s6 + $0x8] sm:$0xff]
        %v4917 = vld [vmem:[%s6 + $0x10] sm:$0xff]
        %v4918 = vld [vmem:[%s6 + $0x18] sm:$0xff]
        %v4919 = vld [vmem:[%s6 + $0x20] sm:$0xff]
        %v4920 = vld [vmem:[%s6 + $0x28] sm:$0xff]
        %v4921 = vld [vmem:[%s6 + $0x30] sm:$0xff]
        %v4922 = vld [vmem:[%s6 + $0x38] sm:$0xff]
        %v4923 = vld [vmem:[%s6 + $0x40] sm:$0xff]
        %v4924 = vld [vmem:[%s6 + $0x48] sm:$0xff]
        %v4925 = vld [vmem:[%s6 + $0x50] sm:$0xff]
        %v4926 = vld [vmem:[%s6 + $0x58] sm:$0xff]
        %v4927 = vld [vmem:[%s6 + $0x60] sm:$0xff]
        %v4928 = vld [vmem:[%s6 + $0x68] sm:$0xff]
        %v4929 = vld [vmem:[%s6 + $0x70] sm:$0xff]
        %v4930 = vld [vmem:[%s6 + $0x78] sm:$0xff]
        %v4931 = vld [vmem:[%s6 + $0x80] sm:$0xff]
        %s4932 = scalar_lea.vmem %s6, 136
        %v4933 = vld [vmem:[%s4932] sm:$0xff]
        %v4934 = vld [vmem:[%s4932 + $0x8] sm:$0xff]
        %v4935 = vld [vmem:[%s4932 + $0x10] sm:$0xff]
        %v4936 = vld [vmem:[%s4932 + $0x18] sm:$0xff]
        %v4937 = vld [vmem:[%s4932 + $0x20] sm:$0xff]
        %v4938 = vld [vmem:[%s4932 + $0x28] sm:$0xff]
        %v4939 = vld [vmem:[%s4932 + $0x30] sm:$0xff]
        %v4940 = vld [vmem:[%s4932 + $0x38] sm:$0xff]
        %v4941 = vld [vmem:[%s4932 + $0x40] sm:$0xff]
        %v4942 = vld [vmem:[%s4932 + $0x48] sm:$0xff]
        %v4943 = vld [vmem:[%s4932 + $0x50] sm:$0xff]
        %v4944 = vld [vmem:[%s4932 + $0x58] sm:$0xff]
        %v4945 = vld [vmem:[%s4932 + $0x60] sm:$0xff]
        %v4946 = vld [vmem:[%s4932 + $0x68] sm:$0xff]
        %v4947 = vld [vmem:[%s4932 + $0x70] sm:$0xff]
        %v4948 = vld [vmem:[%s4932 + $0x78] sm:$0xff]
        %v4949 = vld [vmem:[%s4932 + $0x80] sm:$0xff]
        %vm4950 = vcmask 64512
        %v4952 = vsel %vm4950, %v4858, 0
        %4954 = vmatprep.subr.mxu0 0.0
        %4955 = vmatpush1.msra.mxu0 %v4933
        %4956 = vmatprep.subr.mxu0 0.0
        %4957 = vmatpush1.msra.mxu0 %v4934
        %4958 = vmatprep.subr.mxu0 0.0
        %4959 = vmatpush1.msra.mxu0 %v4935
        %4960 = vmatprep.subr.mxu0 0.0
        %4961 = vmatpush1.msra.mxu0 %v4936
        %4962 = vmatprep.subr.mxu0 0.0
        %4963 = vmatpush1.msra.mxu0 %v4937
        %4964 = vmatprep.subr.mxu0 0.0
        %4965 = vmatpush1.msra.mxu0 %v4938
        %4966 = vmatprep.subr.mxu0 0.0
        %4967 = vmatpush1.msra.mxu0 %v4939
        %4968 = vmatprep.subr.mxu0 0.0
        %4969 = vmatpush1.msra.mxu0 %v4940
        %4970 = vmatprep.subr.mxu0 0.0
        %4971 = vmatpush1.msra.mxu0 %v4941
        %4972 = vmatprep.subr.mxu0 0.0
        %4973 = vmatpush1.msra.mxu0 %v4942
        %4974 = vmatprep.subr.mxu0 0.0
        %4975 = vmatpush1.msra.mxu0 %v4943
        %4976 = vmatprep.subr.mxu0 0.0
        %4977 = vmatpush1.msra.mxu0 %v4944
        %4978 = vmatprep.subr.mxu0 0.0
        %4979 = vmatpush1.msra.mxu0 %v4945
        %4980 = vmatprep.subr.mxu0 0.0
        %4981 = vmatpush1.msra.mxu0 %v4946
        %4982 = vmatprep.subr.mxu0 0.0
        %4983 = vmatpush1.msra.mxu0 %v4947
        %4984 = vmatprep.subr.mxu0 0.0
        %4985 = vmatpush1.msra.mxu0 %v4948
        %4986 = vmatprep.subr.mxu0 0.0
        %4987 = vmatpush1.msra.mxu0 %v4949
        %4988 = vmatprep.subr.mxu0 0.0
        %4989 = vmatpush1.msra.mxu0 0.0
        %4990 = vmatprep.subr.mxu0 0.0
        %4991 = vmatpush1.msra.mxu0 0.0
        %4992 = vmatprep.subr.mxu0 0.0
        %4993 = vmatpush1.msra.mxu0 0.0
        %4994 = vmatprep.subr.mxu0 0.0
        %4995 = vmatpush1.msra.mxu0 0.0
        %4996 = vmatprep.subr.mxu0 0.0
        %4997 = vmatpush1.msra.mxu0 0.0
        %4998 = vmatprep.subr.mxu0 0.0
        %4999 = vmatpush1.msra.mxu0 0.0
        %5000 = vmatprep.subr.mxu0 0.0
        %5001 = vmatpush1.msra.mxu0 0.0
        %5002 = vmatprep.subr.mxu0 0.0
        %5003 = vmatpush1.msra.mxu0 0.0
        %5004 = vmatprep.subr.mxu0 0.0
        %5005 = vmatpush1.msra.mxu0 0.0
        %5006 = vmatprep.subr.mxu0 0.0
        %5007 = vmatpush1.msra.mxu0 0.0
        %5008 = vmatprep.subr.mxu0 0.0
        %5009 = vmatpush1.msra.mxu0 0.0
        %5010 = vmatprep.subr.mxu0 0.0
        %5011 = vmatpush1.msra.mxu0 0.0
        %5012 = vmatprep.subr.mxu0 0.0
        %5013 = vmatpush1.msra.mxu0 0.0
        %5014 = vmatprep.subr.mxu0 0.0
        %5015 = vmatpush1.msra.mxu0 0.0
        %5016 = vmatprep.subr.mxu0 0.0
        %5017 = vmatpush1.msra.mxu0 0.0
        %5018 = vmatprep.mubr.f32.mxu0 %v4952
        %5019 = vmatmul.mubr.f32.gmra.mrb[0].mxu0 %v4856
        %v5020 = vpop.f32.mrb[0].mxu0
        %v5021 = vadd.f32 0.0, %v5020
        %v5022 = vpop.f32.mrb[0].mxu0
        %5023 = vdwg.mxu0
        %v5025 = vsel %vm4950, %v4854, 0
        %5027 = vmatprep.subr.mxu0 0.0
        %5028 = vmatpush1.msra.mxu0 %v4915
        %5029 = vmatprep.subr.mxu0 0.0
        %5030 = vmatpush1.msra.mxu0 %v4916
        %5031 = vmatprep.subr.mxu0 0.0
        %5032 = vmatpush1.msra.mxu0 %v4917
        %5033 = vmatprep.subr.mxu0 0.0
        %5034 = vmatpush1.msra.mxu0 %v4918
        %5035 = vmatprep.subr.mxu0 0.0
        %5036 = vmatpush1.msra.mxu0 %v4919
        %5037 = vmatprep.subr.mxu0 0.0
        %5038 = vmatpush1.msra.mxu0 %v4920
        %5039 = vmatprep.subr.mxu0 0.0
        %5040 = vmatpush1.msra.mxu0 %v4921
        %5041 = vmatprep.subr.mxu0 0.0
        %5042 = vmatpush1.msra.mxu0 %v4922
        %5043 = vmatprep.subr.mxu0 0.0
        %5044 = vmatpush1.msra.mxu0 %v4923
        %5045 = vmatprep.subr.mxu0 0.0
        %5046 = vmatpush1.msra.mxu0 %v4924
        %5047 = vmatprep.subr.mxu0 0.0
        %5048 = vmatpush1.msra.mxu0 %v4925
        %5049 = vmatprep.subr.mxu0 0.0
        %5050 = vmatpush1.msra.mxu0 %v4926
        %5051 = vmatprep.subr.mxu0 0.0
        %5052 = vmatpush1.msra.mxu0 %v4927
        %5053 = vmatprep.subr.mxu0 0.0
        %5054 = vmatpush1.msra.mxu0 %v4928
        %5055 = vmatprep.subr.mxu0 0.0
        %5056 = vmatpush1.msra.mxu0 %v4929
        %5057 = vmatprep.subr.mxu0 0.0
        %5058 = vmatpush1.msra.mxu0 %v4930
        %5059 = vmatprep.subr.mxu0 0.0
        %5060 = vmatpush1.msra.mxu0 %v4931
        %5061 = vmatprep.subr.mxu0 0.0
        %5062 = vmatpush1.msra.mxu0 0.0
        %5063 = vmatprep.subr.mxu0 0.0
        %5064 = vmatpush1.msra.mxu0 0.0
        %5065 = vmatprep.subr.mxu0 0.0
        %5066 = vmatpush1.msra.mxu0 0.0
        %5067 = vmatprep.subr.mxu0 0.0
        %5068 = vmatpush1.msra.mxu0 0.0
        %5069 = vmatprep.subr.mxu0 0.0
        %5070 = vmatpush1.msra.mxu0 0.0
        %5071 = vmatprep.subr.mxu0 0.0
        %5072 = vmatpush1.msra.mxu0 0.0
        %5073 = vmatprep.subr.mxu0 0.0
        %5074 = vmatpush1.msra.mxu0 0.0
        %5075 = vmatprep.subr.mxu0 0.0
        %5076 = vmatpush1.msra.mxu0 0.0
        %5077 = vmatprep.subr.mxu0 0.0
        %5078 = vmatpush1.msra.mxu0 0.0
        %5079 = vmatprep.subr.mxu0 0.0
        %5080 = vmatpush1.msra.mxu0 0.0
        %5081 = vmatprep.subr.mxu0 0.0
        %5082 = vmatpush1.msra.mxu0 0.0
        %5083 = vmatprep.subr.mxu0 0.0
        %5084 = vmatpush1.msra.mxu0 0.0
        %5085 = vmatprep.subr.mxu0 0.0
        %5086 = vmatpush1.msra.mxu0 0.0
        %5087 = vmatprep.subr.mxu0 0.0
        %5088 = vmatpush1.msra.mxu0 0.0
        %5089 = vmatprep.subr.mxu0 0.0
        %5090 = vmatpush1.msra.mxu0 0.0
        %5091 = vmatprep.mubr.f32.mxu0 %v5025
        %5092 = vmatmul.mubr.f32.gmra.mrb[0].mxu0 %v4852
        %v5093 = vpop.f32.mrb[0].mxu0
        %v5094 = vadd.f32 %v5021, %v5093
        %v5095 = vpop.f32.mrb[0].mxu0
        %5096 = vdwg.mxu0
        %s5097 = scalar_lea.vmem %s6, 272
        %v5098 = vld [vmem:[%s5097] sm:$0xff]
        %v5099 = vld [vmem:[%s5097 + $0x8] sm:$0xff]
        %v5100 = vld [vmem:[%s5097 + $0x10] sm:$0xff]
        %v5101 = vld [vmem:[%s5097 + $0x18] sm:$0xff]
        %v5102 = vld [vmem:[%s5097 + $0x20] sm:$0xff]
        %v5103 = vld [vmem:[%s5097 + $0x28] sm:$0xff]
        %v5104 = vld [vmem:[%s5097 + $0x30] sm:$0xff]
        %v5105 = vld [vmem:[%s5097 + $0x38] sm:$0xff]
        %v5106 = vld [vmem:[%s5097 + $0x40] sm:$0xff]
        %v5107 = vld [vmem:[%s5097 + $0x48] sm:$0xff]
        %v5108 = vld [vmem:[%s5097 + $0x50] sm:$0xff]
        %v5109 = vld [vmem:[%s5097 + $0x58] sm:$0xff]
        %v5110 = vld [vmem:[%s5097 + $0x60] sm:$0xff]
        %v5111 = vld [vmem:[%s5097 + $0x68] sm:$0xff]
        %v5112 = vld [vmem:[%s5097 + $0x70] sm:$0xff]
        %v5113 = vld [vmem:[%s5097 + $0x78] sm:$0xff]
        %v5114 = vld [vmem:[%s5097 + $0x80] sm:$0xff]
        %v5116 = vsel %vm4950, %v4862, 0
        %5118 = vmatprep.subr.mxu0 0.0
        %5119 = vmatpush1.msra.mxu0 %v5098
        %5120 = vmatprep.subr.mxu0 0.0
        %5121 = vmatpush1.msra.mxu0 %v5099
        %5122 = vmatprep.subr.mxu0 0.0
        %5123 = vmatpush1.msra.mxu0 %v5100
        %5124 = vmatprep.subr.mxu0 0.0
        %5125 = vmatpush1.msra.mxu0 %v5101
        %5126 = vmatprep.subr.mxu0 0.0
        %5127 = vmatpush1.msra.mxu0 %v5102
        %5128 = vmatprep.subr.mxu0 0.0
        %5129 = vmatpush1.msra.mxu0 %v5103
        %5130 = vmatprep.subr.mxu0 0.0
        %5131 = vmatpush1.msra.mxu0 %v5104
        %5132 = vmatprep.subr.mxu0 0.0
        %5133 = vmatpush1.msra.mxu0 %v5105
        %5134 = vmatprep.subr.mxu0 0.0
        %5135 = vmatpush1.msra.mxu0 %v5106
        %5136 = vmatprep.subr.mxu0 0.0
        %5137 = vmatpush1.msra.mxu0 %v5107
        %5138 = vmatprep.subr.mxu0 0.0
        %5139 = vmatpush1.msra.mxu0 %v5108
        %5140 = vmatprep.subr.mxu0 0.0
        %5141 = vmatpush1.msra.mxu0 %v5109
        %5142 = vmatprep.subr.mxu0 0.0
        %5143 = vmatpush1.msra.mxu0 %v5110
        %5144 = vmatprep.subr.mxu0 0.0
        %5145 = vmatpush1.msra.mxu0 %v5111
        %5146 = vmatprep.subr.mxu0 0.0
        %5147 = vmatpush1.msra.mxu0 %v5112
        %5148 = vmatprep.subr.mxu0 0.0
        %5149 = vmatpush1.msra.mxu0 %v5113
        %5150 = vmatprep.subr.mxu0 0.0
        %5151 = vmatpush1.msra.mxu0 %v5114
        %5152 = vmatprep.subr.mxu0 0.0
        %5153 = vmatpush1.msra.mxu0 0.0
        %5154 = vmatprep.subr.mxu0 0.0
        %5155 = vmatpush1.msra.mxu0 0.0
        %5156 = vmatprep.subr.mxu0 0.0
        %5157 = vmatpush1.msra.mxu0 0.0
        %5158 = vmatprep.subr.mxu0 0.0
        %5159 = vmatpush1.msra.mxu0 0.0
        %5160 = vmatprep.subr.mxu0 0.0
        %5161 = vmatpush1.msra.mxu0 0.0
        %5162 = vmatprep.subr.mxu0 0.0
        %5163 = vmatpush1.msra.mxu0 0.0
        %5164 = vmatprep.subr.mxu0 0.0
        %5165 = vmatpush1.msra.mxu0 0.0
        %5166 = vmatprep.subr.mxu0 0.0
        %5167 = vmatpush1.msra.mxu0 0.0
        %5168 = vmatprep.subr.mxu0 0.0
        %5169 = vmatpush1.msra.mxu0 0.0
        %5170 = vmatprep.subr.mxu0 0.0
        %5171 = vmatpush1.msra.mxu0 0.0
        %5172 = vmatprep.subr.mxu0 0.0
        %5173 = vmatpush1.msra.mxu0 0.0
        %5174 = vmatprep.subr.mxu0 0.0
        %5175 = vmatpush1.msra.mxu0 0.0
        %5176 = vmatprep.subr.mxu0 0.0
        %5177 = vmatpush1.msra.mxu0 0.0
        %5178 = vmatprep.subr.mxu0 0.0
        %5179 = vmatpush1.msra.mxu0 0.0
        %5180 = vmatprep.subr.mxu0 0.0
        %5181 = vmatpush1.msra.mxu0 0.0
        %5182 = vmatprep.mubr.f32.mxu0 %v5116
        %5183 = vmatmul.mubr.f32.gmra.mrb[0].mxu0 %v4860
        %v5184 = vpop.f32.mrb[0].mxu0
        %v5185 = vadd.f32 0.0, %v5184
        %v5186 = vpop.f32.mrb[0].mxu0
        %5187 = vdwg.mxu0
        %v5188 = vadd.f32 %v5094, %v5185
        %s5189 = scalar_lea.vmem %s6, 408
        %v5190 = vld [vmem:[%s5189] sm:$0xff]
        %v5191 = vld [vmem:[%s5189 + $0x8] sm:$0xff]
        %v5192 = vld [vmem:[%s5189 + $0x10] sm:$0xff]
        %v5193 = vld [vmem:[%s5189 + $0x18] sm:$0xff]
        %v5194 = vld [vmem:[%s5189 + $0x20] sm:$0xff]
        %v5195 = vld [vmem:[%s5189 + $0x28] sm:$0xff]
        %v5196 = vld [vmem:[%s5189 + $0x30] sm:$0xff]
        %v5197 = vld [vmem:[%s5189 + $0x38] sm:$0xff]
        %v5198 = vld [vmem:[%s5189 + $0x40] sm:$0xff]
        %v5199 = vld [vmem:[%s5189 + $0x48] sm:$0xff]
        %v5200 = vld [vmem:[%s5189 + $0x50] sm:$0xff]
        %v5201 = vld [vmem:[%s5189 + $0x58] sm:$0xff]
        %v5202 = vld [vmem:[%s5189 + $0x60] sm:$0xff]
        %v5203 = vld [vmem:[%s5189 + $0x68] sm:$0xff]
        %v5204 = vld [vmem:[%s5189 + $0x70] sm:$0xff]
        %v5205 = vld [vmem:[%s5189 + $0x78] sm:$0xff]
        %v5206 = vld [vmem:[%s5189 + $0x80] sm:$0xff]
        %v5208 = vsel %vm4950, %v4866, 0
        %5210 = vmatprep.subr.mxu0 0.0
        %5211 = vmatpush1.msra.mxu0 %v5190
        %5212 = vmatprep.subr.mxu0 0.0
        %5213 = vmatpush1.msra.mxu0 %v5191
        %5214 = vmatprep.subr.mxu0 0.0
        %5215 = vmatpush1.msra.mxu0 %v5192
        %5216 = vmatprep.subr.mxu0 0.0
        %5217 = vmatpush1.msra.mxu0 %v5193
        %5218 = vmatprep.subr.mxu0 0.0
        %5219 = vmatpush1.msra.mxu0 %v5194
        %5220 = vmatprep.subr.mxu0 0.0
        %5221 = vmatpush1.msra.mxu0 %v5195
        %5222 = vmatprep.subr.mxu0 0.0
        %5223 = vmatpush1.msra.mxu0 %v5196
        %5224 = vmatprep.subr.mxu0 0.0
        %5225 = vmatpush1.msra.mxu0 %v5197
        %5226 = vmatprep.subr.mxu0 0.0
        %5227 = vmatpush1.msra.mxu0 %v5198
        %5228 = vmatprep.subr.mxu0 0.0
        %5229 = vmatpush1.msra.mxu0 %v5199
        %5230 = vmatprep.subr.mxu0 0.0
        %5231 = vmatpush1.msra.mxu0 %v5200
        %5232 = vmatprep.subr.mxu0 0.0
        %5233 = vmatpush1.msra.mxu0 %v5201
        %5234 = vmatprep.subr.mxu0 0.0
        %5235 = vmatpush1.msra.mxu0 %v5202
        %5236 = vmatprep.subr.mxu0 0.0
        %5237 = vmatpush1.msra.mxu0 %v5203
        %5238 = vmatprep.subr.mxu0 0.0
        %5239 = vmatpush1.msra.mxu0 %v5204
        %5240 = vmatprep.subr.mxu0 0.0
        %5241 = vmatpush1.msra.mxu0 %v5205
        %5242 = vmatprep.subr.mxu0 0.0
        %5243 = vmatpush1.msra.mxu0 %v5206
        %5244 = vmatprep.subr.mxu0 0.0
        %5245 = vmatpush1.msra.mxu0 0.0
        %5246 = vmatprep.subr.mxu0 0.0
        %5247 = vmatpush1.msra.mxu0 0.0
        %5248 = vmatprep.subr.mxu0 0.0
        %5249 = vmatpush1.msra.mxu0 0.0
        %5250 = vmatprep.subr.mxu0 0.0
        %5251 = vmatpush1.msra.mxu0 0.0
        %5252 = vmatprep.subr.mxu0 0.0
        %5253 = vmatpush1.msra.mxu0 0.0
        %5254 = vmatprep.subr.mxu0 0.0
        %5255 = vmatpush1.msra.mxu0 0.0
        %5256 = vmatprep.subr.mxu0 0.0
        %5257 = vmatpush1.msra.mxu0 0.0
        %5258 = vmatprep.subr.mxu0 0.0
        %5259 = vmatpush1.msra.mxu0 0.0
        %5260 = vmatprep.subr.mxu0 0.0
        %5261 = vmatpush1.msra.mxu0 0.0
        %5262 = vmatprep.subr.mxu0 0.0
        %5263 = vmatpush1.msra.mxu0 0.0
        %5264 = vmatprep.subr.mxu0 0.0
        %5265 = vmatpush1.msra.mxu0 0.0
        %5266 = vmatprep.subr.mxu0 0.0
        %5267 = vmatpush1.msra.mxu0 0.0
        %5268 = vmatprep.subr.mxu0 0.0
        %5269 = vmatpush1.msra.mxu0 0.0
        %5270 = vmatprep.subr.mxu0 0.0
        %5271 = vmatpush1.msra.mxu0 0.0
        %5272 = vmatprep.subr.mxu0 0.0
        %5273 = vmatpush1.msra.mxu0 0.0
        %5274 = vmatprep.mubr.f32.mxu0 %v5208
        %5275 = vmatmul.mubr.f32.gmra.mrb[0].mxu0 %v4864
        %v5276 = vpop.f32.mrb[0].mxu0
        %v5277 = vadd.f32 0.0, %v5276
        %v5278 = vpop.f32.mrb[0].mxu0
        %5279 = vdwg.mxu0
        %v5280 = vadd.f32 %v5188, %v5277
        %s5281 = scalar_lea.vmem %s6, 544
        %v5282 = vld [vmem:[%s5281] sm:$0xff]
        %v5283 = vld [vmem:[%s5281 + $0x8] sm:$0xff]
        %v5284 = vld [vmem:[%s5281 + $0x10] sm:$0xff]
        %v5285 = vld [vmem:[%s5281 + $0x18] sm:$0xff]
        %v5286 = vld [vmem:[%s5281 + $0x20] sm:$0xff]
        %v5287 = vld [vmem:[%s5281 + $0x28] sm:$0xff]
        %v5288 = vld [vmem:[%s5281 + $0x30] sm:$0xff]
        %v5289 = vld [vmem:[%s5281 + $0x38] sm:$0xff]
        %v5290 = vld [vmem:[%s5281 + $0x40] sm:$0xff]
        %v5291 = vld [vmem:[%s5281 + $0x48] sm:$0xff]
        %v5292 = vld [vmem:[%s5281 + $0x50] sm:$0xff]
        %v5293 = vld [vmem:[%s5281 + $0x58] sm:$0xff]
        %v5294 = vld [vmem:[%s5281 + $0x60] sm:$0xff]
        %v5295 = vld [vmem:[%s5281 + $0x68] sm:$0xff]
        %v5296 = vld [vmem:[%s5281 + $0x70] sm:$0xff]
        %v5297 = vld [vmem:[%s5281 + $0x78] sm:$0xff]
        %v5298 = vld [vmem:[%s5281 + $0x80] sm:$0xff]
        %v5300 = vsel %vm4950, %v4870, 0
        %5302 = vmatprep.subr.mxu0 0.0
        %5303 = vmatpush1.msra.mxu0 %v5282
        %5304 = vmatprep.subr.mxu0 0.0
        %5305 = vmatpush1.msra.mxu0 %v5283
        %5306 = vmatprep.subr.mxu0 0.0
        %5307 = vmatpush1.msra.mxu0 %v5284
        %5308 = vmatprep.subr.mxu0 0.0
        %5309 = vmatpush1.msra.mxu0 %v5285
        %5310 = vmatprep.subr.mxu0 0.0
        %5311 = vmatpush1.msra.mxu0 %v5286
        %5312 = vmatprep.subr.mxu0 0.0
        %5313 = vmatpush1.msra.mxu0 %v5287
        %5314 = vmatprep.subr.mxu0 0.0
        %5315 = vmatpush1.msra.mxu0 %v5288
        %5316 = vmatprep.subr.mxu0 0.0
        %5317 = vmatpush1.msra.mxu0 %v5289
        %5318 = vmatprep.subr.mxu0 0.0
        %5319 = vmatpush1.msra.mxu0 %v5290
        %5320 = vmatprep.subr.mxu0 0.0
        %5321 = vmatpush1.msra.mxu0 %v5291
        %5322 = vmatprep.subr.mxu0 0.0
        %5323 = vmatpush1.msra.mxu0 %v5292
        %5324 = vmatprep.subr.mxu0 0.0
        %5325 = vmatpush1.msra.mxu0 %v5293
        %5326 = vmatprep.subr.mxu0 0.0
        %5327 = vmatpush1.msra.mxu0 %v5294
        %5328 = vmatprep.subr.mxu0 0.0
        %5329 = vmatpush1.msra.mxu0 %v5295
        %5330 = vmatprep.subr.mxu0 0.0
        %5331 = vmatpush1.msra.mxu0 %v5296
        %5332 = vmatprep.subr.mxu0 0.0
        %5333 = vmatpush1.msra.mxu0 %v5297
        %5334 = vmatprep.subr.mxu0 0.0
        %5335 = vmatpush1.msra.mxu0 %v5298
        %5336 = vmatprep.subr.mxu0 0.0
        %5337 = vmatpush1.msra.mxu0 0.0
        %5338 = vmatprep.subr.mxu0 0.0
        %5339 = vmatpush1.msra.mxu0 0.0
        %5340 = vmatprep.subr.mxu0 0.0
        %5341 = vmatpush1.msra.mxu0 0.0
        %5342 = vmatprep.subr.mxu0 0.0
        %5343 = vmatpush1.msra.mxu0 0.0
        %5344 = vmatprep.subr.mxu0 0.0
        %5345 = vmatpush1.msra.mxu0 0.0
        %5346 = vmatprep.subr.mxu0 0.0
        %5347 = vmatpush1.msra.mxu0 0.0
        %5348 = vmatprep.subr.mxu0 0.0
        %5349 = vmatpush1.msra.mxu0 0.0
        %5350 = vmatprep.subr.mxu0 0.0
        %5351 = vmatpush1.msra.mxu0 0.0
        %5352 = vmatprep.subr.mxu0 0.0
        %5353 = vmatpush1.msra.mxu0 0.0
        %5354 = vmatprep.subr.mxu0 0.0
        %5355 = vmatpush1.msra.mxu0 0.0
        %5356 = vmatprep.subr.mxu0 0.0
        %5357 = vmatpush1.msra.mxu0 0.0
        %5358 = vmatprep.subr.mxu0 0.0
        %5359 = vmatpush1.msra.mxu0 0.0
        %5360 = vmatprep.subr.mxu0 0.0
        %5361 = vmatpush1.msra.mxu0 0.0
        %5362 = vmatprep.subr.mxu0 0.0
        %5363 = vmatpush1.msra.mxu0 0.0
        %5364 = vmatprep.subr.mxu0 0.0
        %5365 = vmatpush1.msra.mxu0 0.0
        %5366 = vmatprep.mubr.f32.mxu0 %v5300
        %5367 = vmatmul.mubr.f32.gmra.mrb[0].mxu0 %v4868
        %v5368 = vpop.f32.mrb[0].mxu0
        %v5369 = vadd.f32 0.0, %v5368
        %v5370 = vpop.f32.mrb[0].mxu0
        %5371 = vdwg.mxu0
        %v5372 = vadd.f32 %v5280, %v5369
        %s5373 = scalar_lea.vmem %s6, 680
        %v5374 = vld [vmem:[%s5373] sm:$0xff]
        %v5375 = vld [vmem:[%s5373 + $0x8] sm:$0xff]
        %v5376 = vld [vmem:[%s5373 + $0x10] sm:$0xff]
        %v5377 = vld [vmem:[%s5373 + $0x18] sm:$0xff]
        %v5378 = vld [vmem:[%s5373 + $0x20] sm:$0xff]
        %v5379 = vld [vmem:[%s5373 + $0x28] sm:$0xff]
        %v5380 = vld [vmem:[%s5373 + $0x30] sm:$0xff]
        %v5381 = vld [vmem:[%s5373 + $0x38] sm:$0xff]
        %v5382 = vld [vmem:[%s5373 + $0x40] sm:$0xff]
        %v5383 = vld [vmem:[%s5373 + $0x48] sm:$0xff]
        %v5384 = vld [vmem:[%s5373 + $0x50] sm:$0xff]
        %v5385 = vld [vmem:[%s5373 + $0x58] sm:$0xff]
        %v5386 = vld [vmem:[%s5373 + $0x60] sm:$0xff]
        %v5387 = vld [vmem:[%s5373 + $0x68] sm:$0xff]
        %v5388 = vld [vmem:[%s5373 + $0x70] sm:$0xff]
        %v5389 = vld [vmem:[%s5373 + $0x78] sm:$0xff]
        %v5390 = vld [vmem:[%s5373 + $0x80] sm:$0xff]
        %v5392 = vsel %vm4950, %v4874, 0
        %5394 = vmatprep.subr.mxu0 0.0
        %5395 = vmatpush1.msra.mxu0 %v5374
        %5396 = vmatprep.subr.mxu0 0.0
        %5397 = vmatpush1.msra.mxu0 %v5375
        %5398 = vmatprep.subr.mxu0 0.0
        %5399 = vmatpush1.msra.mxu0 %v5376
        %5400 = vmatprep.subr.mxu0 0.0
        %5401 = vmatpush1.msra.mxu0 %v5377
        %5402 = vmatprep.subr.mxu0 0.0
        %5403 = vmatpush1.msra.mxu0 %v5378
        %5404 = vmatprep.subr.mxu0 0.0
        %5405 = vmatpush1.msra.mxu0 %v5379
        %5406 = vmatprep.subr.mxu0 0.0
        %5407 = vmatpush1.msra.mxu0 %v5380
        %5408 = vmatprep.subr.mxu0 0.0
        %5409 = vmatpush1.msra.mxu0 %v5381
        %5410 = vmatprep.subr.mxu0 0.0
        %5411 = vmatpush1.msra.mxu0 %v5382
        %5412 = vmatprep.subr.mxu0 0.0
        %5413 = vmatpush1.msra.mxu0 %v5383
        %5414 = vmatprep.subr.mxu0 0.0
        %5415 = vmatpush1.msra.mxu0 %v5384
        %5416 = vmatprep.subr.mxu0 0.0
        %5417 = vmatpush1.msra.mxu0 %v5385
        %5418 = vmatprep.subr.mxu0 0.0
        %5419 = vmatpush1.msra.mxu0 %v5386
        %5420 = vmatprep.subr.mxu0 0.0
        %5421 = vmatpush1.msra.mxu0 %v5387
        %5422 = vmatprep.subr.mxu0 0.0
        %5423 = vmatpush1.msra.mxu0 %v5388
        %5424 = vmatprep.subr.mxu0 0.0
        %5425 = vmatpush1.msra.mxu0 %v5389
        %5426 = vmatprep.subr.mxu0 0.0
        %5427 = vmatpush1.msra.mxu0 %v5390
        %5428 = vmatprep.subr.mxu0 0.0
        %5429 = vmatpush1.msra.mxu0 0.0
        %5430 = vmatprep.subr.mxu0 0.0
        %5431 = vmatpush1.msra.mxu0 0.0
        %5432 = vmatprep.subr.mxu0 0.0
        %5433 = vmatpush1.msra.mxu0 0.0
        %5434 = vmatprep.subr.mxu0 0.0
        %5435 = vmatpush1.msra.mxu0 0.0
        %5436 = vmatprep.subr.mxu0 0.0
        %5437 = vmatpush1.msra.mxu0 0.0
        %5438 = vmatprep.subr.mxu0 0.0
        %5439 = vmatpush1.msra.mxu0 0.0
        %5440 = vmatprep.subr.mxu0 0.0
        %5441 = vmatpush1.msra.mxu0 0.0
        %5442 = vmatprep.subr.mxu0 0.0
        %5443 = vmatpush1.msra.mxu0 0.0
        %5444 = vmatprep.subr.mxu0 0.0
        %5445 = vmatpush1.msra.mxu0 0.0
        %5446 = vmatprep.subr.mxu0 0.0
        %5447 = vmatpush1.msra.mxu0 0.0
        %5448 = vmatprep.subr.mxu0 0.0
        %5449 = vmatpush1.msra.mxu0 0.0
        %5450 = vmatprep.subr.mxu0 0.0
        %5451 = vmatpush1.msra.mxu0 0.0
        %5452 = vmatprep.subr.mxu0 0.0
        %5453 = vmatpush1.msra.mxu0 0.0
        %5454 = vmatprep.subr.mxu0 0.0
        %5455 = vmatpush1.msra.mxu0 0.0
        %5456 = vmatprep.subr.mxu0 0.0
        %5457 = vmatpush1.msra.mxu0 0.0
        %5458 = vmatprep.mubr.f32.mxu0 %v5392
        %5459 = vmatmul.mubr.f32.gmra.mrb[0].mxu0 %v4872
        %v5460 = vpop.f32.mrb[0].mxu0
        %v5461 = vadd.f32 0.0, %v5460
        %v5462 = vpop.f32.mrb[0].mxu0
        %5463 = vdwg.mxu0
        %v5464 = vadd.f32 %v5372, %v5461
        %s5465 = scalar_lea.vmem %s6, 816
        %v5466 = vld [vmem:[%s5465] sm:$0xff]
        %v5467 = vld [vmem:[%s5465 + $0x8] sm:$0xff]
        %v5468 = vld [vmem:[%s5465 + $0x10] sm:$0xff]
        %v5469 = vld [vmem:[%s5465 + $0x18] sm:$0xff]
        %v5470 = vld [vmem:[%s5465 + $0x20] sm:$0xff]
        %v5471 = vld [vmem:[%s5465 + $0x28] sm:$0xff]
        %v5472 = vld [vmem:[%s5465 + $0x30] sm:$0xff]
        %v5473 = vld [vmem:[%s5465 + $0x38] sm:$0xff]
        %v5474 = vld [vmem:[%s5465 + $0x40] sm:$0xff]
        %v5475 = vld [vmem:[%s5465 + $0x48] sm:$0xff]
        %v5476 = vld [vmem:[%s5465 + $0x50] sm:$0xff]
        %v5477 = vld [vmem:[%s5465 + $0x58] sm:$0xff]
        %v5478 = vld [vmem:[%s5465 + $0x60] sm:$0xff]
        %v5479 = vld [vmem:[%s5465 + $0x68] sm:$0xff]
        %v5480 = vld [vmem:[%s5465 + $0x70] sm:$0xff]
        %v5481 = vld [vmem:[%s5465 + $0x78] sm:$0xff]
        %v5482 = vld [vmem:[%s5465 + $0x80] sm:$0xff]
        %v5484 = vsel %vm4950, %v4878, 0
        %5486 = vmatprep.subr.mxu0 0.0
        %5487 = vmatpush1.msra.mxu0 %v5466
        %5488 = vmatprep.subr.mxu0 0.0
        %5489 = vmatpush1.msra.mxu0 %v5467
        %5490 = vmatprep.subr.mxu0 0.0
        %5491 = vmatpush1.msra.mxu0 %v5468
        %5492 = vmatprep.subr.mxu0 0.0
        %5493 = vmatpush1.msra.mxu0 %v5469
        %5494 = vmatprep.subr.mxu0 0.0
        %5495 = vmatpush1.msra.mxu0 %v5470
        %5496 = vmatprep.subr.mxu0 0.0
        %5497 = vmatpush1.msra.mxu0 %v5471
        %5498 = vmatprep.subr.mxu0 0.0
        %5499 = vmatpush1.msra.mxu0 %v5472
        %5500 = vmatprep.subr.mxu0 0.0
        %5501 = vmatpush1.msra.mxu0 %v5473
        %5502 = vmatprep.subr.mxu0 0.0
        %5503 = vmatpush1.msra.mxu0 %v5474
        %5504 = vmatprep.subr.mxu0 0.0
        %5505 = vmatpush1.msra.mxu0 %v5475
        %5506 = vmatprep.subr.mxu0 0.0
        %5507 = vmatpush1.msra.mxu0 %v5476
        %5508 = vmatprep.subr.mxu0 0.0
        %5509 = vmatpush1.msra.mxu0 %v5477
        %5510 = vmatprep.subr.mxu0 0.0
        %5511 = vmatpush1.msra.mxu0 %v5478
        %5512 = vmatprep.subr.mxu0 0.0
        %5513 = vmatpush1.msra.mxu0 %v5479
        %5514 = vmatprep.subr.mxu0 0.0
        %5515 = vmatpush1.msra.mxu0 %v5480
        %5516 = vmatprep.subr.mxu0 0.0
        %5517 = vmatpush1.msra.mxu0 %v5481
        %5518 = vmatprep.subr.mxu0 0.0
        %5519 = vmatpush1.msra.mxu0 %v5482
        %5520 = vmatprep.subr.mxu0 0.0
        %5521 = vmatpush1.msra.mxu0 0.0
        %5522 = vmatprep.subr.mxu0 0.0
        %5523 = vmatpush1.msra.mxu0 0.0
        %5524 = vmatprep.subr.mxu0 0.0
        %5525 = vmatpush1.msra.mxu0 0.0
        %5526 = vmatprep.subr.mxu0 0.0
        %5527 = vmatpush1.msra.mxu0 0.0
        %5528 = vmatprep.subr.mxu0 0.0
        %5529 = vmatpush1.msra.mxu0 0.0
        %5530 = vmatprep.subr.mxu0 0.0
        %5531 = vmatpush1.msra.mxu0 0.0
        %5532 = vmatprep.subr.mxu0 0.0
        %5533 = vmatpush1.msra.mxu0 0.0
        %5534 = vmatprep.subr.mxu0 0.0
        %5535 = vmatpush1.msra.mxu0 0.0
        %5536 = vmatprep.subr.mxu0 0.0
        %5537 = vmatpush1.msra.mxu0 0.0
        %5538 = vmatprep.subr.mxu0 0.0
        %5539 = vmatpush1.msra.mxu0 0.0
        %5540 = vmatprep.subr.mxu0 0.0
        %5541 = vmatpush1.msra.mxu0 0.0
        %5542 = vmatprep.subr.mxu0 0.0
        %5543 = vmatpush1.msra.mxu0 0.0
        %5544 = vmatprep.subr.mxu0 0.0
        %5545 = vmatpush1.msra.mxu0 0.0
        %5546 = vmatprep.subr.mxu0 0.0
        %5547 = vmatpush1.msra.mxu0 0.0
        %5548 = vmatprep.subr.mxu0 0.0
        %5549 = vmatpush1.msra.mxu0 0.0
        %5550 = vmatprep.mubr.f32.mxu0 %v5484
        %5551 = vmatmul.mubr.f32.gmra.mrb[0].mxu0 %v4876
        %v5552 = vpop.f32.mrb[0].mxu0
        %v5553 = vadd.f32 0.0, %v5552
        %v5554 = vpop.f32.mrb[0].mxu0
        %5555 = vdwg.mxu0
        %v5556 = vadd.f32 %v5464, %v5553
        %s5557 = scalar_lea.vmem %s6, 952
        %v5558 = vld [vmem:[%s5557] sm:$0xff]
        %v5559 = vld [vmem:[%s5557 + $0x8] sm:$0xff]
        %v5560 = vld [vmem:[%s5557 + $0x10] sm:$0xff]
        %v5561 = vld [vmem:[%s5557 + $0x18] sm:$0xff]
        %v5562 = vld [vmem:[%s5557 + $0x20] sm:$0xff]
        %v5563 = vld [vmem:[%s5557 + $0x28] sm:$0xff]
        %v5564 = vld [vmem:[%s5557 + $0x30] sm:$0xff]
        %v5565 = vld [vmem:[%s5557 + $0x38] sm:$0xff]
        %v5566 = vld [vmem:[%s5557 + $0x40] sm:$0xff]
        %v5567 = vld [vmem:[%s5557 + $0x48] sm:$0xff]
        %v5568 = vld [vmem:[%s5557 + $0x50] sm:$0xff]
        %v5569 = vld [vmem:[%s5557 + $0x58] sm:$0xff]
        %v5570 = vld [vmem:[%s5557 + $0x60] sm:$0xff]
        %v5571 = vld [vmem:[%s5557 + $0x68] sm:$0xff]
        %v5572 = vld [vmem:[%s5557 + $0x70] sm:$0xff]
        %v5573 = vld [vmem:[%s5557 + $0x78] sm:$0xff]
        %v5574 = vld [vmem:[%s5557 + $0x80] sm:$0xff]
        %v5576 = vsel %vm4950, %v4882, 0
        %5578 = vmatprep.subr.mxu0 0.0
        %5579 = vmatpush1.msra.mxu0 %v5558
        %5580 = vmatprep.subr.mxu0 0.0
        %5581 = vmatpush1.msra.mxu0 %v5559
        %5582 = vmatprep.subr.mxu0 0.0
        %5583 = vmatpush1.msra.mxu0 %v5560
        %5584 = vmatprep.subr.mxu0 0.0
        %5585 = vmatpush1.msra.mxu0 %v5561
        %5586 = vmatprep.subr.mxu0 0.0
        %5587 = vmatpush1.msra.mxu0 %v5562
        %5588 = vmatprep.subr.mxu0 0.0
        %5589 = vmatpush1.msra.mxu0 %v5563
        %5590 = vmatprep.subr.mxu0 0.0
        %5591 = vmatpush1.msra.mxu0 %v5564
        %5592 = vmatprep.subr.mxu0 0.0
        %5593 = vmatpush1.msra.mxu0 %v5565
        %5594 = vmatprep.subr.mxu0 0.0
        %5595 = vmatpush1.msra.mxu0 %v5566
        %5596 = vmatprep.subr.mxu0 0.0
        %5597 = vmatpush1.msra.mxu0 %v5567
        %5598 = vmatprep.subr.mxu0 0.0
        %5599 = vmatpush1.msra.mxu0 %v5568
        %5600 = vmatprep.subr.mxu0 0.0
        %5601 = vmatpush1.msra.mxu0 %v5569
        %5602 = vmatprep.subr.mxu0 0.0
        %5603 = vmatpush1.msra.mxu0 %v5570
        %5604 = vmatprep.subr.mxu0 0.0
        %5605 = vmatpush1.msra.mxu0 %v5571
        %5606 = vmatprep.subr.mxu0 0.0
        %5607 = vmatpush1.msra.mxu0 %v5572
        %5608 = vmatprep.subr.mxu0 0.0
        %5609 = vmatpush1.msra.mxu0 %v5573
        %5610 = vmatprep.subr.mxu0 0.0
        %5611 = vmatpush1.msra.mxu0 %v5574
        %5612 = vmatprep.subr.mxu0 0.0
        %5613 = vmatpush1.msra.mxu0 0.0
        %5614 = vmatprep.subr.mxu0 0.0
        %5615 = vmatpush1.msra.mxu0 0.0
        %5616 = vmatprep.subr.mxu0 0.0
        %5617 = vmatpush1.msra.mxu0 0.0
        %5618 = vmatprep.subr.mxu0 0.0
        %5619 = vmatpush1.msra.mxu0 0.0
        %5620 = vmatprep.subr.mxu0 0.0
        %5621 = vmatpush1.msra.mxu0 0.0
        %5622 = vmatprep.subr.mxu0 0.0
        %5623 = vmatpush1.msra.mxu0 0.0
        %5624 = vmatprep.subr.mxu0 0.0
        %5625 = vmatpush1.msra.mxu0 0.0
        %5626 = vmatprep.subr.mxu0 0.0
        %5627 = vmatpush1.msra.mxu0 0.0
        %5628 = vmatprep.subr.mxu0 0.0
        %5629 = vmatpush1.msra.mxu0 0.0
        %5630 = vmatprep.subr.mxu0 0.0
        %5631 = vmatpush1.msra.mxu0 0.0
        %5632 = vmatprep.subr.mxu0 0.0
        %5633 = vmatpush1.msra.mxu0 0.0
        %5634 = vmatprep.subr.mxu0 0.0
        %5635 = vmatpush1.msra.mxu0 0.0
        %5636 = vmatprep.subr.mxu0 0.0
        %5637 = vmatpush1.msra.mxu0 0.0
        %5638 = vmatprep.subr.mxu0 0.0
        %5639 = vmatpush1.msra.mxu0 0.0
        %5640 = vmatprep.subr.mxu0 0.0
        %5641 = vmatpush1.msra.mxu0 0.0
        %5642 = vmatprep.mubr.f32.mxu0 %v5576
        %5643 = vmatmul.mubr.f32.gmra.mrb[0].mxu0 %v4880
        %v5644 = vpop.f32.mrb[0].mxu0
        %v5645 = vadd.f32 0.0, %v5644
        %v5646 = vpop.f32.mrb[0].mxu0
        %5647 = vdwg.mxu0
        %v5648 = vadd.f32 %v5556, %v5645
        %s5649 = scalar_lea.vmem %s6, 1088
        %v5650 = vld [vmem:[%s5649] sm:$0xff]
        %v5651 = vld [vmem:[%s5649 + $0x8] sm:$0xff]
        %v5652 = vld [vmem:[%s5649 + $0x10] sm:$0xff]
        %v5653 = vld [vmem:[%s5649 + $0x18] sm:$0xff]
        %v5654 = vld [vmem:[%s5649 + $0x20] sm:$0xff]
        %v5655 = vld [vmem:[%s5649 + $0x28] sm:$0xff]
        %v5656 = vld [vmem:[%s5649 + $0x30] sm:$0xff]
        %v5657 = vld [vmem:[%s5649 + $0x38] sm:$0xff]
        %v5658 = vld [vmem:[%s5649 + $0x40] sm:$0xff]
        %v5659 = vld [vmem:[%s5649 + $0x48] sm:$0xff]
        %v5660 = vld [vmem:[%s5649 + $0x50] sm:$0xff]
        %v5661 = vld [vmem:[%s5649 + $0x58] sm:$0xff]
        %v5662 = vld [vmem:[%s5649 + $0x60] sm:$0xff]
        %v5663 = vld [vmem:[%s5649 + $0x68] sm:$0xff]
        %v5664 = vld [vmem:[%s5649 + $0x70] sm:$0xff]
        %v5665 = vld [vmem:[%s5649 + $0x78] sm:$0xff]
        %v5666 = vld [vmem:[%s5649 + $0x80] sm:$0xff]
        %v5668 = vsel %vm4950, %v4886, 0
        %5670 = vmatprep.subr.mxu0 0.0
        %5671 = vmatpush1.msra.mxu0 %v5650
        %5672 = vmatprep.subr.mxu0 0.0
        %5673 = vmatpush1.msra.mxu0 %v5651
        %5674 = vmatprep.subr.mxu0 0.0
        %5675 = vmatpush1.msra.mxu0 %v5652
        %5676 = vmatprep.subr.mxu0 0.0
        %5677 = vmatpush1.msra.mxu0 %v5653
        %5678 = vmatprep.subr.mxu0 0.0
        %5679 = vmatpush1.msra.mxu0 %v5654
        %5680 = vmatprep.subr.mxu0 0.0
        %5681 = vmatpush1.msra.mxu0 %v5655
        %5682 = vmatprep.subr.mxu0 0.0
        %5683 = vmatpush1.msra.mxu0 %v5656
        %5684 = vmatprep.subr.mxu0 0.0
        %5685 = vmatpush1.msra.mxu0 %v5657
        %5686 = vmatprep.subr.mxu0 0.0
        %5687 = vmatpush1.msra.mxu0 %v5658
        %5688 = vmatprep.subr.mxu0 0.0
        %5689 = vmatpush1.msra.mxu0 %v5659
        %5690 = vmatprep.subr.mxu0 0.0
        %5691 = vmatpush1.msra.mxu0 %v5660
        %5692 = vmatprep.subr.mxu0 0.0
        %5693 = vmatpush1.msra.mxu0 %v5661
        %5694 = vmatprep.subr.mxu0 0.0
        %5695 = vmatpush1.msra.mxu0 %v5662
        %5696 = vmatprep.subr.mxu0 0.0
        %5697 = vmatpush1.msra.mxu0 %v5663
        %5698 = vmatprep.subr.mxu0 0.0
        %5699 = vmatpush1.msra.mxu0 %v5664
        %5700 = vmatprep.subr.mxu0 0.0
        %5701 = vmatpush1.msra.mxu0 %v5665
        %5702 = vmatprep.subr.mxu0 0.0
        %5703 = vmatpush1.msra.mxu0 %v5666
        %5704 = vmatprep.subr.mxu0 0.0
        %5705 = vmatpush1.msra.mxu0 0.0
        %5706 = vmatprep.subr.mxu0 0.0
        %5707 = vmatpush1.msra.mxu0 0.0
        %5708 = vmatprep.subr.mxu0 0.0
        %5709 = vmatpush1.msra.mxu0 0.0
        %5710 = vmatprep.subr.mxu0 0.0
        %5711 = vmatpush1.msra.mxu0 0.0
        %5712 = vmatprep.subr.mxu0 0.0
        %5713 = vmatpush1.msra.mxu0 0.0
        %5714 = vmatprep.subr.mxu0 0.0
        %5715 = vmatpush1.msra.mxu0 0.0
        %5716 = vmatprep.subr.mxu0 0.0
        %5717 = vmatpush1.msra.mxu0 0.0
        %5718 = vmatprep.subr.mxu0 0.0
        %5719 = vmatpush1.msra.mxu0 0.0
        %5720 = vmatprep.subr.mxu0 0.0
        %5721 = vmatpush1.msra.mxu0 0.0
        %5722 = vmatprep.subr.mxu0 0.0
        %5723 = vmatpush1.msra.mxu0 0.0
        %5724 = vmatprep.subr.mxu0 0.0
        %5725 = vmatpush1.msra.mxu0 0.0
        %5726 = vmatprep.subr.mxu0 0.0
        %5727 = vmatpush1.msra.mxu0 0.0
        %5728 = vmatprep.subr.mxu0 0.0
        %5729 = vmatpush1.msra.mxu0 0.0
        %5730 = vmatprep.subr.mxu0 0.0
        %5731 = vmatpush1.msra.mxu0 0.0
        %5732 = vmatprep.subr.mxu0 0.0
        %5733 = vmatpush1.msra.mxu0 0.0
        %5734 = vmatprep.mubr.f32.mxu0 %v5668
        %5735 = vmatmul.mubr.f32.gmra.mrb[0].mxu0 %v4884
        %v5736 = vpop.f32.mrb[0].mxu0
        %v5737 = vadd.f32 0.0, %v5736
        %v5738 = vpop.f32.mrb[0].mxu0
        %5739 = vdwg.mxu0
        %v5740 = vadd.f32 %v5648, %v5737
        %s5741 = scalar_lea.vmem %s6, 1224
        %v5742 = vld [vmem:[%s5741] sm:$0xff]
        %v5743 = vld [vmem:[%s5741 + $0x8] sm:$0xff]
        %v5744 = vld [vmem:[%s5741 + $0x10] sm:$0xff]
        %v5745 = vld [vmem:[%s5741 + $0x18] sm:$0xff]
        %v5746 = vld [vmem:[%s5741 + $0x20] sm:$0xff]
        %v5747 = vld [vmem:[%s5741 + $0x28] sm:$0xff]
        %v5748 = vld [vmem:[%s5741 + $0x30] sm:$0xff]
        %v5749 = vld [vmem:[%s5741 + $0x38] sm:$0xff]
        %v5750 = vld [vmem:[%s5741 + $0x40] sm:$0xff]
        %v5751 = vld [vmem:[%s5741 + $0x48] sm:$0xff]
        %v5752 = vld [vmem:[%s5741 + $0x50] sm:$0xff]
        %v5753 = vld [vmem:[%s5741 + $0x58] sm:$0xff]
        %v5754 = vld [vmem:[%s5741 + $0x60] sm:$0xff]
        %v5755 = vld [vmem:[%s5741 + $0x68] sm:$0xff]
        %v5756 = vld [vmem:[%s5741 + $0x70] sm:$0xff]
        %v5757 = vld [vmem:[%s5741 + $0x78] sm:$0xff]
        %v5758 = vld [vmem:[%s5741 + $0x80] sm:$0xff]
        %v5760 = vsel %vm4950, %v4890, 0
        %5762 = vmatprep.subr.mxu0 0.0
        %5763 = vmatpush1.msra.mxu0 %v5742
        %5764 = vmatprep.subr.mxu0 0.0
        %5765 = vmatpush1.msra.mxu0 %v5743
        %5766 = vmatprep.subr.mxu0 0.0
        %5767 = vmatpush1.msra.mxu0 %v5744
        %5768 = vmatprep.subr.mxu0 0.0
        %5769 = vmatpush1.msra.mxu0 %v5745
        %5770 = vmatprep.subr.mxu0 0.0
        %5771 = vmatpush1.msra.mxu0 %v5746
        %5772 = vmatprep.subr.mxu0 0.0
        %5773 = vmatpush1.msra.mxu0 %v5747
        %5774 = vmatprep.subr.mxu0 0.0
        %5775 = vmatpush1.msra.mxu0 %v5748
        %5776 = vmatprep.subr.mxu0 0.0
        %5777 = vmatpush1.msra.mxu0 %v5749
        %5778 = vmatprep.subr.mxu0 0.0
        %5779 = vmatpush1.msra.mxu0 %v5750
        %5780 = vmatprep.subr.mxu0 0.0
        %5781 = vmatpush1.msra.mxu0 %v5751
        %5782 = vmatprep.subr.mxu0 0.0
        %5783 = vmatpush1.msra.mxu0 %v5752
        %5784 = vmatprep.subr.mxu0 0.0
        %5785 = vmatpush1.msra.mxu0 %v5753
        %5786 = vmatprep.subr.mxu0 0.0
        %5787 = vmatpush1.msra.mxu0 %v5754
        %5788 = vmatprep.subr.mxu0 0.0
        %5789 = vmatpush1.msra.mxu0 %v5755
        %5790 = vmatprep.subr.mxu0 0.0
        %5791 = vmatpush1.msra.mxu0 %v5756
        %5792 = vmatprep.subr.mxu0 0.0
        %5793 = vmatpush1.msra.mxu0 %v5757
        %5794 = vmatprep.subr.mxu0 0.0
        %5795 = vmatpush1.msra.mxu0 %v5758
        %5796 = vmatprep.subr.mxu0 0.0
        %5797 = vmatpush1.msra.mxu0 0.0
        %5798 = vmatprep.subr.mxu0 0.0
        %5799 = vmatpush1.msra.mxu0 0.0
        %5800 = vmatprep.subr.mxu0 0.0
        %5801 = vmatpush1.msra.mxu0 0.0
        %5802 = vmatprep.subr.mxu0 0.0
        %5803 = vmatpush1.msra.mxu0 0.0
        %5804 = vmatprep.subr.mxu0 0.0
        %5805 = vmatpush1.msra.mxu0 0.0
        %5806 = vmatprep.subr.mxu0 0.0
        %5807 = vmatpush1.msra.mxu0 0.0
        %5808 = vmatprep.subr.mxu0 0.0
        %5809 = vmatpush1.msra.mxu0 0.0
        %5810 = vmatprep.subr.mxu0 0.0
        %5811 = vmatpush1.msra.mxu0 0.0
        %5812 = vmatprep.subr.mxu0 0.0
        %5813 = vmatpush1.msra.mxu0 0.0
        %5814 = vmatprep.subr.mxu0 0.0
        %5815 = vmatpush1.msra.mxu0 0.0
        %5816 = vmatprep.subr.mxu0 0.0
        %5817 = vmatpush1.msra.mxu0 0.0
        %5818 = vmatprep.subr.mxu0 0.0
        %5819 = vmatpush1.msra.mxu0 0.0
        %5820 = vmatprep.subr.mxu0 0.0
        %5821 = vmatpush1.msra.mxu0 0.0
        %5822 = vmatprep.subr.mxu0 0.0
        %5823 = vmatpush1.msra.mxu0 0.0
        %5824 = vmatprep.subr.mxu0 0.0
        %5825 = vmatpush1.msra.mxu0 0.0
        %5826 = vmatprep.mubr.f32.mxu0 %v5760
        %5827 = vmatmul.mubr.f32.gmra.mrb[0].mxu0 %v4888
        %v5828 = vpop.f32.mrb[0].mxu0
        %v5829 = vadd.f32 0.0, %v5828
        %v5830 = vpop.f32.mrb[0].mxu0
        %5831 = vdwg.mxu0
        %v5832 = vadd.f32 %v5740, %v5829
        %s5833 = scalar_lea.vmem %s6, 1360
        %v5834 = vld [vmem:[%s5833] sm:$0xff]
        %v5835 = vld [vmem:[%s5833 + $0x8] sm:$0xff]
        %v5836 = vld [vmem:[%s5833 + $0x10] sm:$0xff]
        %v5837 = vld [vmem:[%s5833 + $0x18] sm:$0xff]
        %v5838 = vld [vmem:[%s5833 + $0x20] sm:$0xff]
        %v5839 = vld [vmem:[%s5833 + $0x28] sm:$0xff]
        %v5840 = vld [vmem:[%s5833 + $0x30] sm:$0xff]
        %v5841 = vld [vmem:[%s5833 + $0x38] sm:$0xff]
        %v5842 = vld [vmem:[%s5833 + $0x40] sm:$0xff]
        %v5843 = vld [vmem:[%s5833 + $0x48] sm:$0xff]
        %v5844 = vld [vmem:[%s5833 + $0x50] sm:$0xff]
        %v5845 = vld [vmem:[%s5833 + $0x58] sm:$0xff]
        %v5846 = vld [vmem:[%s5833 + $0x60] sm:$0xff]
        %v5847 = vld [vmem:[%s5833 + $0x68] sm:$0xff]
        %v5848 = vld [vmem:[%s5833 + $0x70] sm:$0xff]
        %v5849 = vld [vmem:[%s5833 + $0x78] sm:$0xff]
        %v5850 = vld [vmem:[%s5833 + $0x80] sm:$0xff]
        %v5852 = vsel %vm4950, %v4894, 0
        %5854 = vmatprep.subr.mxu0 0.0
        %5855 = vmatpush1.msra.mxu0 %v5834
        %5856 = vmatprep.subr.mxu0 0.0
        %5857 = vmatpush1.msra.mxu0 %v5835
        %5858 = vmatprep.subr.mxu0 0.0
        %5859 = vmatpush1.msra.mxu0 %v5836
        %5860 = vmatprep.subr.mxu0 0.0
        %5861 = vmatpush1.msra.mxu0 %v5837
        %5862 = vmatprep.subr.mxu0 0.0
        %5863 = vmatpush1.msra.mxu0 %v5838
        %5864 = vmatprep.subr.mxu0 0.0
        %5865 = vmatpush1.msra.mxu0 %v5839
        %5866 = vmatprep.subr.mxu0 0.0
        %5867 = vmatpush1.msra.mxu0 %v5840
        %5868 = vmatprep.subr.mxu0 0.0
        %5869 = vmatpush1.msra.mxu0 %v5841
        %5870 = vmatprep.subr.mxu0 0.0
        %5871 = vmatpush1.msra.mxu0 %v5842
        %5872 = vmatprep.subr.mxu0 0.0
        %5873 = vmatpush1.msra.mxu0 %v5843
        %5874 = vmatprep.subr.mxu0 0.0
        %5875 = vmatpush1.msra.mxu0 %v5844
        %5876 = vmatprep.subr.mxu0 0.0
        %5877 = vmatpush1.msra.mxu0 %v5845
        %5878 = vmatprep.subr.mxu0 0.0
        %5879 = vmatpush1.msra.mxu0 %v5846
        %5880 = vmatprep.subr.mxu0 0.0
        %5881 = vmatpush1.msra.mxu0 %v5847
        %5882 = vmatprep.subr.mxu0 0.0
        %5883 = vmatpush1.msra.mxu0 %v5848
        %5884 = vmatprep.subr.mxu0 0.0
        %5885 = vmatpush1.msra.mxu0 %v5849
        %5886 = vmatprep.subr.mxu0 0.0
        %5887 = vmatpush1.msra.mxu0 %v5850
        %5888 = vmatprep.subr.mxu0 0.0
        %5889 = vmatpush1.msra.mxu0 0.0
        %5890 = vmatprep.subr.mxu0 0.0
        %5891 = vmatpush1.msra.mxu0 0.0
        %5892 = vmatprep.subr.mxu0 0.0
        %5893 = vmatpush1.msra.mxu0 0.0
        %5894 = vmatprep.subr.mxu0 0.0
        %5895 = vmatpush1.msra.mxu0 0.0
        %5896 = vmatprep.subr.mxu0 0.0
        %5897 = vmatpush1.msra.mxu0 0.0
        %5898 = vmatprep.subr.mxu0 0.0
        %5899 = vmatpush1.msra.mxu0 0.0
        %5900 = vmatprep.subr.mxu0 0.0
        %5901 = vmatpush1.msra.mxu0 0.0
        %5902 = vmatprep.subr.mxu0 0.0
        %5903 = vmatpush1.msra.mxu0 0.0
        %5904 = vmatprep.subr.mxu0 0.0
        %5905 = vmatpush1.msra.mxu0 0.0
        %5906 = vmatprep.subr.mxu0 0.0
        %5907 = vmatpush1.msra.mxu0 0.0
        %5908 = vmatprep.subr.mxu0 0.0
        %5909 = vmatpush1.msra.mxu0 0.0
        %5910 = vmatprep.subr.mxu0 0.0
        %5911 = vmatpush1.msra.mxu0 0.0
        %5912 = vmatprep.subr.mxu0 0.0
        %5913 = vmatpush1.msra.mxu0 0.0
        %5914 = vmatprep.subr.mxu0 0.0
        %5915 = vmatpush1.msra.mxu0 0.0
        %5916 = vmatprep.subr.mxu0 0.0
        %5917 = vmatpush1.msra.mxu0 0.0
        %5918 = vmatprep.mubr.f32.mxu0 %v5852
        %5919 = vmatmul.mubr.f32.gmra.mrb[0].mxu0 %v4892
        %v5920 = vpop.f32.mrb[0].mxu0
        %v5921 = vadd.f32 0.0, %v5920
        %v5922 = vpop.f32.mrb[0].mxu0
        %5923 = vdwg.mxu0
        %v5924 = vadd.f32 %v5832, %v5921
        %s5925 = scalar_lea.vmem %s6, 1496
        %v5926 = vld [vmem:[%s5925] sm:$0xff]
        %v5927 = vld [vmem:[%s5925 + $0x8] sm:$0xff]
        %v5928 = vld [vmem:[%s5925 + $0x10] sm:$0xff]
        %v5929 = vld [vmem:[%s5925 + $0x18] sm:$0xff]
        %v5930 = vld [vmem:[%s5925 + $0x20] sm:$0xff]
        %v5931 = vld [vmem:[%s5925 + $0x28] sm:$0xff]
        %v5932 = vld [vmem:[%s5925 + $0x30] sm:$0xff]
        %v5933 = vld [vmem:[%s5925 + $0x38] sm:$0xff]
        %v5934 = vld [vmem:[%s5925 + $0x40] sm:$0xff]
        %v5935 = vld [vmem:[%s5925 + $0x48] sm:$0xff]
        %v5936 = vld [vmem:[%s5925 + $0x50] sm:$0xff]
        %v5937 = vld [vmem:[%s5925 + $0x58] sm:$0xff]
        %v5938 = vld [vmem:[%s5925 + $0x60] sm:$0xff]
        %v5939 = vld [vmem:[%s5925 + $0x68] sm:$0xff]
        %v5940 = vld [vmem:[%s5925 + $0x70] sm:$0xff]
        %v5941 = vld [vmem:[%s5925 + $0x78] sm:$0xff]
        %v5942 = vld [vmem:[%s5925 + $0x80] sm:$0xff]
        %v5944 = vsel %vm4950, %v4898, 0
        %5946 = vmatprep.subr.mxu0 0.0
        %5947 = vmatpush1.msra.mxu0 %v5926
        %5948 = vmatprep.subr.mxu0 0.0
        %5949 = vmatpush1.msra.mxu0 %v5927
        %5950 = vmatprep.subr.mxu0 0.0
        %5951 = vmatpush1.msra.mxu0 %v5928
        %5952 = vmatprep.subr.mxu0 0.0
        %5953 = vmatpush1.msra.mxu0 %v5929
        %5954 = vmatprep.subr.mxu0 0.0
        %5955 = vmatpush1.msra.mxu0 %v5930
        %5956 = vmatprep.subr.mxu0 0.0
        %5957 = vmatpush1.msra.mxu0 %v5931
        %5958 = vmatprep.subr.mxu0 0.0
        %5959 = vmatpush1.msra.mxu0 %v5932
        %5960 = vmatprep.subr.mxu0 0.0
        %5961 = vmatpush1.msra.mxu0 %v5933
        %5962 = vmatprep.subr.mxu0 0.0
        %5963 = vmatpush1.msra.mxu0 %v5934
        %5964 = vmatprep.subr.mxu0 0.0
        %5965 = vmatpush1.msra.mxu0 %v5935
        %5966 = vmatprep.subr.mxu0 0.0
        %5967 = vmatpush1.msra.mxu0 %v5936
        %5968 = vmatprep.subr.mxu0 0.0
        %5969 = vmatpush1.msra.mxu0 %v5937
        %5970 = vmatprep.subr.mxu0 0.0
        %5971 = vmatpush1.msra.mxu0 %v5938
        %5972 = vmatprep.subr.mxu0 0.0
        %5973 = vmatpush1.msra.mxu0 %v5939
        %5974 = vmatprep.subr.mxu0 0.0
        %5975 = vmatpush1.msra.mxu0 %v5940
        %5976 = vmatprep.subr.mxu0 0.0
        %5977 = vmatpush1.msra.mxu0 %v5941
        %5978 = vmatprep.subr.mxu0 0.0
        %5979 = vmatpush1.msra.mxu0 %v5942
        %5980 = vmatprep.subr.mxu0 0.0
        %5981 = vmatpush1.msra.mxu0 0.0
        %5982 = vmatprep.subr.mxu0 0.0
        %5983 = vmatpush1.msra.mxu0 0.0
        %5984 = vmatprep.subr.mxu0 0.0
        %5985 = vmatpush1.msra.mxu0 0.0
        %5986 = vmatprep.subr.mxu0 0.0
        %5987 = vmatpush1.msra.mxu0 0.0
        %5988 = vmatprep.subr.mxu0 0.0
        %5989 = vmatpush1.msra.mxu0 0.0
        %5990 = vmatprep.subr.mxu0 0.0
        %5991 = vmatpush1.msra.mxu0 0.0
        %5992 = vmatprep.subr.mxu0 0.0
        %5993 = vmatpush1.msra.mxu0 0.0
        %5994 = vmatprep.subr.mxu0 0.0
        %5995 = vmatpush1.msra.mxu0 0.0
        %5996 = vmatprep.subr.mxu0 0.0
        %5997 = vmatpush1.msra.mxu0 0.0
        %5998 = vmatprep.subr.mxu0 0.0
        %5999 = vmatpush1.msra.mxu0 0.0
        %6000 = vmatprep.subr.mxu0 0.0
        %6001 = vmatpush1.msra.mxu0 0.0
        %6002 = vmatprep.subr.mxu0 0.0
        %6003 = vmatpush1.msra.mxu0 0.0
        %6004 = vmatprep.subr.mxu0 0.0
        %6005 = vmatpush1.msra.mxu0 0.0
        %6006 = vmatprep.subr.mxu0 0.0
        %6007 = vmatpush1.msra.mxu0 0.0
        %6008 = vmatprep.subr.mxu0 0.0
        %6009 = vmatpush1.msra.mxu0 0.0
        %6010 = vmatprep.mubr.f32.mxu0 %v5944
        %6011 = vmatmul.mubr.f32.gmra.mrb[0].mxu0 %v4896
        %v6012 = vpop.f32.mrb[0].mxu0
        %v6013 = vadd.f32 0.0, %v6012
        %v6014 = vpop.f32.mrb[0].mxu0
        %6015 = vdwg.mxu0
        %v6016 = vadd.f32 %v5924, %v6013
        %s6017 = scalar_lea.vmem %s6, 1632
        %v6018 = vld [vmem:[%s6017] sm:$0xff]
        %v6019 = vld [vmem:[%s6017 + $0x8] sm:$0xff]
        %v6020 = vld [vmem:[%s6017 + $0x10] sm:$0xff]
        %v6021 = vld [vmem:[%s6017 + $0x18] sm:$0xff]
        %v6022 = vld [vmem:[%s6017 + $0x20] sm:$0xff]
        %v6023 = vld [vmem:[%s6017 + $0x28] sm:$0xff]
        %v6024 = vld [vmem:[%s6017 + $0x30] sm:$0xff]
        %v6025 = vld [vmem:[%s6017 + $0x38] sm:$0xff]
        %v6026 = vld [vmem:[%s6017 + $0x40] sm:$0xff]
        %v6027 = vld [vmem:[%s6017 + $0x48] sm:$0xff]
        %v6028 = vld [vmem:[%s6017 + $0x50] sm:$0xff]
        %v6029 = vld [vmem:[%s6017 + $0x58] sm:$0xff]
        %v6030 = vld [vmem:[%s6017 + $0x60] sm:$0xff]
        %v6031 = vld [vmem:[%s6017 + $0x68] sm:$0xff]
        %v6032 = vld [vmem:[%s6017 + $0x70] sm:$0xff]
        %v6033 = vld [vmem:[%s6017 + $0x78] sm:$0xff]
        %v6034 = vld [vmem:[%s6017 + $0x80] sm:$0xff]
        %v6036 = vsel %vm4950, %v4902, 0
        %6038 = vmatprep.subr.mxu0 0.0
        %6039 = vmatpush1.msra.mxu0 %v6018
        %6040 = vmatprep.subr.mxu0 0.0
        %6041 = vmatpush1.msra.mxu0 %v6019
        %6042 = vmatprep.subr.mxu0 0.0
        %6043 = vmatpush1.msra.mxu0 %v6020
        %6044 = vmatprep.subr.mxu0 0.0
        %6045 = vmatpush1.msra.mxu0 %v6021
        %6046 = vmatprep.subr.mxu0 0.0
        %6047 = vmatpush1.msra.mxu0 %v6022
        %6048 = vmatprep.subr.mxu0 0.0
        %6049 = vmatpush1.msra.mxu0 %v6023
        %6050 = vmatprep.subr.mxu0 0.0
        %6051 = vmatpush1.msra.mxu0 %v6024
        %6052 = vmatprep.subr.mxu0 0.0
        %6053 = vmatpush1.msra.mxu0 %v6025
        %6054 = vmatprep.subr.mxu0 0.0
        %6055 = vmatpush1.msra.mxu0 %v6026
        %6056 = vmatprep.subr.mxu0 0.0
        %6057 = vmatpush1.msra.mxu0 %v6027
        %6058 = vmatprep.subr.mxu0 0.0
        %6059 = vmatpush1.msra.mxu0 %v6028
        %6060 = vmatprep.subr.mxu0 0.0
        %6061 = vmatpush1.msra.mxu0 %v6029
        %6062 = vmatprep.subr.mxu0 0.0
        %6063 = vmatpush1.msra.mxu0 %v6030
        %6064 = vmatprep.subr.mxu0 0.0
        %6065 = vmatpush1.msra.mxu0 %v6031
        %6066 = vmatprep.subr.mxu0 0.0
        %6067 = vmatpush1.msra.mxu0 %v6032
        %6068 = vmatprep.subr.mxu0 0.0
        %6069 = vmatpush1.msra.mxu0 %v6033
        %6070 = vmatprep.subr.mxu0 0.0
        %6071 = vmatpush1.msra.mxu0 %v6034
        %6072 = vmatprep.subr.mxu0 0.0
        %6073 = vmatpush1.msra.mxu0 0.0
        %6074 = vmatprep.subr.mxu0 0.0
        %6075 = vmatpush1.msra.mxu0 0.0
        %6076 = vmatprep.subr.mxu0 0.0
        %6077 = vmatpush1.msra.mxu0 0.0
        %6078 = vmatprep.subr.mxu0 0.0
        %6079 = vmatpush1.msra.mxu0 0.0
        %6080 = vmatprep.subr.mxu0 0.0
        %6081 = vmatpush1.msra.mxu0 0.0
        %6082 = vmatprep.subr.mxu0 0.0
        %6083 = vmatpush1.msra.mxu0 0.0
        %6084 = vmatprep.subr.mxu0 0.0
        %6085 = vmatpush1.msra.mxu0 0.0
        %6086 = vmatprep.subr.mxu0 0.0
        %6087 = vmatpush1.msra.mxu0 0.0
        %6088 = vmatprep.subr.mxu0 0.0
        %6089 = vmatpush1.msra.mxu0 0.0
        %6090 = vmatprep.subr.mxu0 0.0
        %6091 = vmatpush1.msra.mxu0 0.0
        %6092 = vmatprep.subr.mxu0 0.0
        %6093 = vmatpush1.msra.mxu0 0.0
        %6094 = vmatprep.subr.mxu0 0.0
        %6095 = vmatpush1.msra.mxu0 0.0
        %6096 = vmatprep.subr.mxu0 0.0
        %6097 = vmatpush1.msra.mxu0 0.0
        %6098 = vmatprep.subr.mxu0 0.0
        %6099 = vmatpush1.msra.mxu0 0.0
        %6100 = vmatprep.subr.mxu0 0.0
        %6101 = vmatpush1.msra.mxu0 0.0
        %6102 = vmatprep.mubr.f32.mxu0 %v6036
        %6103 = vmatmul.mubr.f32.gmra.mrb[0].mxu0 %v4900
        %v6104 = vpop.f32.mrb[0].mxu0
        %v6105 = vadd.f32 0.0, %v6104
        %v6106 = vpop.f32.mrb[0].mxu0
        %6107 = vdwg.mxu0
        %v6108 = vadd.f32 %v6016, %v6105
        %s6109 = scalar_lea.vmem %s6, 1768
        %v6110 = vld [vmem:[%s6109] sm:$0xff]
        %v6111 = vld [vmem:[%s6109 + $0x8] sm:$0xff]
        %v6112 = vld [vmem:[%s6109 + $0x10] sm:$0xff]
        %v6113 = vld [vmem:[%s6109 + $0x18] sm:$0xff]
        %v6114 = vld [vmem:[%s6109 + $0x20] sm:$0xff]
        %v6115 = vld [vmem:[%s6109 + $0x28] sm:$0xff]
        %v6116 = vld [vmem:[%s6109 + $0x30] sm:$0xff]
        %v6117 = vld [vmem:[%s6109 + $0x38] sm:$0xff]
        %v6118 = vld [vmem:[%s6109 + $0x40] sm:$0xff]
        %v6119 = vld [vmem:[%s6109 + $0x48] sm:$0xff]
        %v6120 = vld [vmem:[%s6109 + $0x50] sm:$0xff]
        %v6121 = vld [vmem:[%s6109 + $0x58] sm:$0xff]
        %v6122 = vld [vmem:[%s6109 + $0x60] sm:$0xff]
        %v6123 = vld [vmem:[%s6109 + $0x68] sm:$0xff]
        %v6124 = vld [vmem:[%s6109 + $0x70] sm:$0xff]
        %v6125 = vld [vmem:[%s6109 + $0x78] sm:$0xff]
        %v6126 = vld [vmem:[%s6109 + $0x80] sm:$0xff]
        %v6128 = vsel %vm4950, %v4906, 0
        %6130 = vmatprep.subr.mxu0 0.0
        %6131 = vmatpush1.msra.mxu0 %v6110
        %6132 = vmatprep.subr.mxu0 0.0
        %6133 = vmatpush1.msra.mxu0 %v6111
        %6134 = vmatprep.subr.mxu0 0.0
        %6135 = vmatpush1.msra.mxu0 %v6112
        %6136 = vmatprep.subr.mxu0 0.0
        %6137 = vmatpush1.msra.mxu0 %v6113
        %6138 = vmatprep.subr.mxu0 0.0
        %6139 = vmatpush1.msra.mxu0 %v6114
        %6140 = vmatprep.subr.mxu0 0.0
        %6141 = vmatpush1.msra.mxu0 %v6115
        %6142 = vmatprep.subr.mxu0 0.0
        %6143 = vmatpush1.msra.mxu0 %v6116
        %6144 = vmatprep.subr.mxu0 0.0
        %6145 = vmatpush1.msra.mxu0 %v6117
        %6146 = vmatprep.subr.mxu0 0.0
        %6147 = vmatpush1.msra.mxu0 %v6118
        %6148 = vmatprep.subr.mxu0 0.0
        %6149 = vmatpush1.msra.mxu0 %v6119
        %6150 = vmatprep.subr.mxu0 0.0
        %6151 = vmatpush1.msra.mxu0 %v6120
        %6152 = vmatprep.subr.mxu0 0.0
        %6153 = vmatpush1.msra.mxu0 %v6121
        %6154 = vmatprep.subr.mxu0 0.0
        %6155 = vmatpush1.msra.mxu0 %v6122
        %6156 = vmatprep.subr.mxu0 0.0
        %6157 = vmatpush1.msra.mxu0 %v6123
        %6158 = vmatprep.subr.mxu0 0.0
        %6159 = vmatpush1.msra.mxu0 %v6124
        %6160 = vmatprep.subr.mxu0 0.0
        %6161 = vmatpush1.msra.mxu0 %v6125
        %6162 = vmatprep.subr.mxu0 0.0
        %6163 = vmatpush1.msra.mxu0 %v6126
        %6164 = vmatprep.subr.mxu0 0.0
        %6165 = vmatpush1.msra.mxu0 0.0
        %6166 = vmatprep.subr.mxu0 0.0
        %6167 = vmatpush1.msra.mxu0 0.0
        %6168 = vmatprep.subr.mxu0 0.0
        %6169 = vmatpush1.msra.mxu0 0.0
        %6170 = vmatprep.subr.mxu0 0.0
        %6171 = vmatpush1.msra.mxu0 0.0
        %6172 = vmatprep.subr.mxu0 0.0
        %6173 = vmatpush1.msra.mxu0 0.0
        %6174 = vmatprep.subr.mxu0 0.0
        %6175 = vmatpush1.msra.mxu0 0.0
        %6176 = vmatprep.subr.mxu0 0.0
        %6177 = vmatpush1.msra.mxu0 0.0
        %6178 = vmatprep.subr.mxu0 0.0
        %6179 = vmatpush1.msra.mxu0 0.0
        %6180 = vmatprep.subr.mxu0 0.0
        %6181 = vmatpush1.msra.mxu0 0.0
        %6182 = vmatprep.subr.mxu0 0.0
        %6183 = vmatpush1.msra.mxu0 0.0
        %6184 = vmatprep.subr.mxu0 0.0
        %6185 = vmatpush1.msra.mxu0 0.0
        %6186 = vmatprep.subr.mxu0 0.0
        %6187 = vmatpush1.msra.mxu0 0.0
        %6188 = vmatprep.subr.mxu0 0.0
        %6189 = vmatpush1.msra.mxu0 0.0
        %6190 = vmatprep.subr.mxu0 0.0
        %6191 = vmatpush1.msra.mxu0 0.0
        %6192 = vmatprep.subr.mxu0 0.0
        %6193 = vmatpush1.msra.mxu0 0.0
        %6194 = vmatprep.mubr.f32.mxu0 %v6128
        %6195 = vmatmul.mubr.f32.gmra.mrb[0].mxu0 %v4904
        %v6196 = vpop.f32.mrb[0].mxu0
        %v6197 = vadd.f32 0.0, %v6196
        %v6198 = vpop.f32.mrb[0].mxu0
        %6199 = vdwg.mxu0
        %v6200 = vadd.f32 %v6108, %v6197
        %s6201 = scalar_lea.vmem %s6, 1904
        %v6202 = vld [vmem:[%s6201] sm:$0xff]
        %v6203 = vld [vmem:[%s6201 + $0x8] sm:$0xff]
        %v6204 = vld [vmem:[%s6201 + $0x10] sm:$0xff]
        %v6205 = vld [vmem:[%s6201 + $0x18] sm:$0xff]
        %v6206 = vld [vmem:[%s6201 + $0x20] sm:$0xff]
        %v6207 = vld [vmem:[%s6201 + $0x28] sm:$0xff]
        %v6208 = vld [vmem:[%s6201 + $0x30] sm:$0xff]
        %v6209 = vld [vmem:[%s6201 + $0x38] sm:$0xff]
        %v6210 = vld [vmem:[%s6201 + $0x40] sm:$0xff]
        %v6211 = vld [vmem:[%s6201 + $0x48] sm:$0xff]
        %v6212 = vld [vmem:[%s6201 + $0x50] sm:$0xff]
        %v6213 = vld [vmem:[%s6201 + $0x58] sm:$0xff]
        %v6214 = vld [vmem:[%s6201 + $0x60] sm:$0xff]
        %v6215 = vld [vmem:[%s6201 + $0x68] sm:$0xff]
        %v6216 = vld [vmem:[%s6201 + $0x70] sm:$0xff]
        %v6217 = vld [vmem:[%s6201 + $0x78] sm:$0xff]
        %v6218 = vld [vmem:[%s6201 + $0x80] sm:$0xff]
        %v6220 = vsel %vm4950, %v4910, 0
        %6222 = vmatprep.subr.mxu0 0.0
        %6223 = vmatpush1.msra.mxu0 %v6202
        %6224 = vmatprep.subr.mxu0 0.0
        %6225 = vmatpush1.msra.mxu0 %v6203
        %6226 = vmatprep.subr.mxu0 0.0
        %6227 = vmatpush1.msra.mxu0 %v6204
        %6228 = vmatprep.subr.mxu0 0.0
        %6229 = vmatpush1.msra.mxu0 %v6205
        %6230 = vmatprep.subr.mxu0 0.0
        %6231 = vmatpush1.msra.mxu0 %v6206
        %6232 = vmatprep.subr.mxu0 0.0
        %6233 = vmatpush1.msra.mxu0 %v6207
        %6234 = vmatprep.subr.mxu0 0.0
        %6235 = vmatpush1.msra.mxu0 %v6208
        %6236 = vmatprep.subr.mxu0 0.0
        %6237 = vmatpush1.msra.mxu0 %v6209
        %6238 = vmatprep.subr.mxu0 0.0
        %6239 = vmatpush1.msra.mxu0 %v6210
        %6240 = vmatprep.subr.mxu0 0.0
        %6241 = vmatpush1.msra.mxu0 %v6211
        %6242 = vmatprep.subr.mxu0 0.0
        %6243 = vmatpush1.msra.mxu0 %v6212
        %6244 = vmatprep.subr.mxu0 0.0
        %6245 = vmatpush1.msra.mxu0 %v6213
        %6246 = vmatprep.subr.mxu0 0.0
        %6247 = vmatpush1.msra.mxu0 %v6214
        %6248 = vmatprep.subr.mxu0 0.0
        %6249 = vmatpush1.msra.mxu0 %v6215
        %6250 = vmatprep.subr.mxu0 0.0
        %6251 = vmatpush1.msra.mxu0 %v6216
        %6252 = vmatprep.subr.mxu0 0.0
        %6253 = vmatpush1.msra.mxu0 %v6217
        %6254 = vmatprep.subr.mxu0 0.0
        %6255 = vmatpush1.msra.mxu0 %v6218
        %6256 = vmatprep.subr.mxu0 0.0
        %6257 = vmatpush1.msra.mxu0 0.0
        %6258 = vmatprep.subr.mxu0 0.0
        %6259 = vmatpush1.msra.mxu0 0.0
        %6260 = vmatprep.subr.mxu0 0.0
        %6261 = vmatpush1.msra.mxu0 0.0
        %6262 = vmatprep.subr.mxu0 0.0
        %6263 = vmatpush1.msra.mxu0 0.0
        %6264 = vmatprep.subr.mxu0 0.0
        %6265 = vmatpush1.msra.mxu0 0.0
        %6266 = vmatprep.subr.mxu0 0.0
        %6267 = vmatpush1.msra.mxu0 0.0
        %6268 = vmatprep.subr.mxu0 0.0
        %6269 = vmatpush1.msra.mxu0 0.0
        %6270 = vmatprep.subr.mxu0 0.0
        %6271 = vmatpush1.msra.mxu0 0.0
        %6272 = vmatprep.subr.mxu0 0.0
        %6273 = vmatpush1.msra.mxu0 0.0
        %6274 = vmatprep.subr.mxu0 0.0
        %6275 = vmatpush1.msra.mxu0 0.0
        %6276 = vmatprep.subr.mxu0 0.0
        %6277 = vmatpush1.msra.mxu0 0.0
        %6278 = vmatprep.subr.mxu0 0.0
        %6279 = vmatpush1.msra.mxu0 0.0
        %6280 = vmatprep.subr.mxu0 0.0
        %6281 = vmatpush1.msra.mxu0 0.0
        %6282 = vmatprep.subr.mxu0 0.0
        %6283 = vmatpush1.msra.mxu0 0.0
        %6284 = vmatprep.subr.mxu0 0.0
        %6285 = vmatpush1.msra.mxu0 0.0
        %6286 = vmatprep.mubr.f32.mxu0 %v6220
        %6287 = vmatmul.mubr.f32.gmra.mrb[0].mxu0 %v4908
        %v6288 = vpop.f32.mrb[0].mxu0
        %v6289 = vadd.f32 0.0, %v6288
        %v6290 = vpop.f32.mrb[0].mxu0
        %6291 = vdwg.mxu0
        %v6292 = vadd.f32 %v6200, %v6289
        %s6293 = scalar_lea.vmem %s6, 2040
        %v6294 = vld [vmem:[%s6293] sm:$0xff]
        %v6295 = vld [vmem:[%s6293 + $0x8] sm:$0xff]
        %v6296 = vld [vmem:[%s6293 + $0x10] sm:$0xff]
        %v6297 = vld [vmem:[%s6293 + $0x18] sm:$0xff]
        %v6298 = vld [vmem:[%s6293 + $0x20] sm:$0xff]
        %v6299 = vld [vmem:[%s6293 + $0x28] sm:$0xff]
        %v6300 = vld [vmem:[%s6293 + $0x30] sm:$0xff]
        %v6301 = vld [vmem:[%s6293 + $0x38] sm:$0xff]
        %v6302 = vld [vmem:[%s6293 + $0x40] sm:$0xff]
        %v6303 = vld [vmem:[%s6293 + $0x48] sm:$0xff]
        %v6304 = vld [vmem:[%s6293 + $0x50] sm:$0xff]
        %v6305 = vld [vmem:[%s6293 + $0x58] sm:$0xff]
        %v6306 = vld [vmem:[%s6293 + $0x60] sm:$0xff]
        %v6307 = vld [vmem:[%s6293 + $0x68] sm:$0xff]
        %v6308 = vld [vmem:[%s6293 + $0x70] sm:$0xff]
        %v6309 = vld [vmem:[%s6293 + $0x78] sm:$0xff]
        %v6310 = vld [vmem:[%s6293 + $0x80] sm:$0xff]
        %v6312 = vsel %vm4950, %v4914, 0
        %6314 = vmatprep.subr.mxu0 0.0
        %6315 = vmatpush1.msra.mxu0 %v6294
        %6316 = vmatprep.subr.mxu0 0.0
        %6317 = vmatpush1.msra.mxu0 %v6295
        %6318 = vmatprep.subr.mxu0 0.0
        %6319 = vmatpush1.msra.mxu0 %v6296
        %6320 = vmatprep.subr.mxu0 0.0
        %6321 = vmatpush1.msra.mxu0 %v6297
        %6322 = vmatprep.subr.mxu0 0.0
        %6323 = vmatpush1.msra.mxu0 %v6298
        %6324 = vmatprep.subr.mxu0 0.0
        %6325 = vmatpush1.msra.mxu0 %v6299
        %6326 = vmatprep.subr.mxu0 0.0
        %6327 = vmatpush1.msra.mxu0 %v6300
        %6328 = vmatprep.subr.mxu0 0.0
        %6329 = vmatpush1.msra.mxu0 %v6301
        %6330 = vmatprep.subr.mxu0 0.0
        %6331 = vmatpush1.msra.mxu0 %v6302
        %6332 = vmatprep.subr.mxu0 0.0
        %6333 = vmatpush1.msra.mxu0 %v6303
        %6334 = vmatprep.subr.mxu0 0.0
        %6335 = vmatpush1.msra.mxu0 %v6304
        %6336 = vmatprep.subr.mxu0 0.0
        %6337 = vmatpush1.msra.mxu0 %v6305
        %6338 = vmatprep.subr.mxu0 0.0
        %6339 = vmatpush1.msra.mxu0 %v6306
        %6340 = vmatprep.subr.mxu0 0.0
        %6341 = vmatpush1.msra.mxu0 %v6307
        %6342 = vmatprep.subr.mxu0 0.0
        %6343 = vmatpush1.msra.mxu0 %v6308
        %6344 = vmatprep.subr.mxu0 0.0
        %6345 = vmatpush1.msra.mxu0 %v6309
        %6346 = vmatprep.subr.mxu0 0.0
        %6347 = vmatpush1.msra.mxu0 %v6310
        %6348 = vmatprep.subr.mxu0 0.0
        %6349 = vmatpush1.msra.mxu0 0.0
        %6350 = vmatprep.subr.mxu0 0.0
        %6351 = vmatpush1.msra.mxu0 0.0
        %6352 = vmatprep.subr.mxu0 0.0
        %6353 = vmatpush1.msra.mxu0 0.0
        %6354 = vmatprep.subr.mxu0 0.0
        %6355 = vmatpush1.msra.mxu0 0.0
        %6356 = vmatprep.subr.mxu0 0.0
        %6357 = vmatpush1.msra.mxu0 0.0
        %6358 = vmatprep.subr.mxu0 0.0
        %6359 = vmatpush1.msra.mxu0 0.0
        %6360 = vmatprep.subr.mxu0 0.0
        %6361 = vmatpush1.msra.mxu0 0.0
        %6362 = vmatprep.subr.mxu0 0.0
        %6363 = vmatpush1.msra.mxu0 0.0
        %6364 = vmatprep.subr.mxu0 0.0
        %6365 = vmatpush1.msra.mxu0 0.0
        %6366 = vmatprep.subr.mxu0 0.0
        %6367 = vmatpush1.msra.mxu0 0.0
        %6368 = vmatprep.subr.mxu0 0.0
        %6369 = vmatpush1.msra.mxu0 0.0
        %6370 = vmatprep.subr.mxu0 0.0
        %6371 = vmatpush1.msra.mxu0 0.0
        %6372 = vmatprep.subr.mxu0 0.0
        %6373 = vmatpush1.msra.mxu0 0.0
        %6374 = vmatprep.subr.mxu0 0.0
        %6375 = vmatpush1.msra.mxu0 0.0
        %6376 = vmatprep.subr.mxu0 0.0
        %6377 = vmatpush1.msra.mxu0 0.0
        %6378 = vmatprep.mubr.f32.mxu0 %v6312
        %6379 = vmatmul.mubr.f32.gmra.mrb[0].mxu0 %v4912
        %v6380 = vpop.f32.mrb[0].mxu0
        %v6381 = vadd.f32 0.0, %v6380
        %v6382 = vpop.f32.mrb[0].mxu0
        %6383 = vdwg.mxu0
        %v6384 = vadd.f32 %v6292, %v6381
        %v6385 = vld [vmem:[%s7] sm:$0x1]
        %v6387 = vlaneseq
        %v6388 = vshrl.u32 %v6387, 7
        %v6389 = vsub.s32 0, %v6388
        %v6390 = vrot.slane %v6385, %v6389
        %v6392 = vadd.f32 %v6384, %v6390
        %v6393 = vsub.f32 0.0, %v6392
        %v6394 = vmul.f32 %v6393, 1.442695
        %v6395 = vpow.pop %v6394
        %v6396 = vadd.f32 %v6395, 1.0
        %v6397 = vrcp.pop %v6396
        %v6398 = vmul.f32 1.0, %v6397
        %v6399 = vld [vmem:[%s8] sm:$0xff]
        %v6400 = vld [vmem:[%s8 + $0x8] sm:$0xff]
        %v6401 = vld [vmem:[%s8 + $0x10] sm:$0xff]
        %v6402 = vld [vmem:[%s8 + $0x18] sm:$0xff]
        %v6403 = vld [vmem:[%s8 + $0x20] sm:$0xff]
        %v6404 = vld [vmem:[%s8 + $0x28] sm:$0xff]
        %v6405 = vld [vmem:[%s8 + $0x30] sm:$0xff]
        %v6406 = vld [vmem:[%s8 + $0x38] sm:$0xff]
        %v6407 = vld [vmem:[%s8 + $0x40] sm:$0xff]
        %v6408 = vld [vmem:[%s8 + $0x48] sm:$0xff]
        %v6409 = vld [vmem:[%s8 + $0x50] sm:$0xff]
        %v6410 = vld [vmem:[%s8 + $0x58] sm:$0xff]
        %v6411 = vld [vmem:[%s8 + $0x60] sm:$0xff]
        %v6412 = vld [vmem:[%s8 + $0x68] sm:$0xff]
        %v6413 = vld [vmem:[%s8 + $0x70] sm:$0xff]
        %v6414 = vld [vmem:[%s9] sm:$0x1]
        %v6416 = vlaneseq
        %v6417 = vshrl.u32 %v6416, 7
        %v6418 = vsub.s32 0, %v6417
        %v6419 = vrot.slane %v6414, %v6418
        %vm6421 = vcmask 982016
        %v6423 = vsel %vm6421, %v6398, 0
        %6425 = vmatprep.subr.mxu0 0.0
        %6426 = vmatpush1.msra.mxu0 %v6399
        %6427 = vmatprep.subr.mxu0 0.0
        %6428 = vmatpush1.msra.mxu0 %v6400
        %6429 = vmatprep.subr.mxu0 0.0
        %6430 = vmatpush1.msra.mxu0 %v6401
        %6431 = vmatprep.subr.mxu0 0.0
        %6432 = vmatpush1.msra.mxu0 %v6402
        %6433 = vmatprep.subr.mxu0 0.0
        %6434 = vmatpush1.msra.mxu0 %v6403
        %6435 = vmatprep.subr.mxu0 0.0
        %6436 = vmatpush1.msra.mxu0 %v6404
        %6437 = vmatprep.subr.mxu0 0.0
        %6438 = vmatpush1.msra.mxu0 %v6405
        %6439 = vmatprep.subr.mxu0 0.0
        %6440 = vmatpush1.msra.mxu0 %v6406
        %6441 = vmatprep.subr.mxu0 0.0
        %6442 = vmatpush1.msra.mxu0 %v6407
        %6443 = vmatprep.subr.mxu0 0.0
        %6444 = vmatpush1.msra.mxu0 %v6408
        %6445 = vmatprep.subr.mxu0 0.0
        %6446 = vmatpush1.msra.mxu0 %v6409
        %6447 = vmatprep.subr.mxu0 0.0
        %6448 = vmatpush1.msra.mxu0 %v6410
        %6449 = vmatprep.subr.mxu0 0.0
        %6450 = vmatpush1.msra.mxu0 %v6411
        %6451 = vmatprep.subr.mxu0 0.0
        %6452 = vmatpush1.msra.mxu0 %v6412
        %6453 = vmatprep.subr.mxu0 0.0
        %6454 = vmatpush1.msra.mxu0 %v6413
        %6455 = vmatprep.subr.mxu0 0.0
        %6456 = vmatpush1.msra.mxu0 0.0
        %6457 = vmatprep.subr.mxu0 0.0
        %6458 = vmatpush1.msra.mxu0 0.0
        %6459 = vmatprep.subr.mxu0 0.0
        %6460 = vmatpush1.msra.mxu0 0.0
        %6461 = vmatprep.subr.mxu0 0.0
        %6462 = vmatpush1.msra.mxu0 0.0
        %6463 = vmatprep.subr.mxu0 0.0
        %6464 = vmatpush1.msra.mxu0 0.0
        %6465 = vmatprep.subr.mxu0 0.0
        %6466 = vmatpush1.msra.mxu0 0.0
        %6467 = vmatprep.subr.mxu0 0.0
        %6468 = vmatpush1.msra.mxu0 0.0
        %6469 = vmatprep.subr.mxu0 0.0
        %6470 = vmatpush1.msra.mxu0 0.0
        %6471 = vmatprep.subr.mxu0 0.0
        %6472 = vmatpush1.msra.mxu0 0.0
        %6473 = vmatprep.subr.mxu0 0.0
        %6474 = vmatpush1.msra.mxu0 0.0
        %6475 = vmatprep.subr.mxu0 0.0
        %6476 = vmatpush1.msra.mxu0 0.0
        %6477 = vmatprep.subr.mxu0 0.0
        %6478 = vmatpush1.msra.mxu0 0.0
        %6479 = vmatprep.subr.mxu0 0.0
        %6480 = vmatpush1.msra.mxu0 0.0
        %6481 = vmatprep.subr.mxu0 0.0
        %6482 = vmatpush1.msra.mxu0 0.0
        %6483 = vmatprep.subr.mxu0 0.0
        %6484 = vmatpush1.msra.mxu0 0.0
        %6485 = vmatprep.subr.mxu0 0.0
        %6486 = vmatpush1.msra.mxu0 0.0
        %6487 = vmatprep.subr.mxu0 0.0
        %6488 = vmatpush1.msra.mxu0 0.0
        %6489 = vmatprep.mubr.f32.mxu0 0.0
        %6490 = vmatmul.mubr.f32.gmra.mrb[0].mxu0 %v6423
        %v6491 = vpop.f32.mrb[0].mxu0
        %v6492 = vadd.f32 %v6419, %v6491
        %v6493 = vpop.f32.mrb[0].mxu0
        %6494 = vdwg.mxu0
        %v6495 = vsub.f32 0.0, %v6492
        %v6496 = vmul.f32 %v6495, 1.442695
        %v6497 = vpow.pop %v6496
        %v6498 = vadd.f32 %v6497, 1.0
        %v6499 = vrcp.pop %v6498
        %v6500 = vmul.f32 1.0, %v6499
        %v6501 = vld [vmem:[%s10] sm:$0xff]
        %v6502 = vld [vmem:[%s10 + $0x8] sm:$0xff]
        %v6503 = vld [vmem:[%s10 + $0x10] sm:$0xff]
        %v6504 = vld [vmem:[%s10 + $0x18] sm:$0xff]
        %v6505 = vld [vmem:[%s10 + $0x20] sm:$0xff]
        %v6506 = vld [vmem:[%s10 + $0x28] sm:$0xff]
        %v6507 = vld [vmem:[%s10 + $0x30] sm:$0xff]
        %v6508 = vld [vmem:[%s10 + $0x38] sm:$0xff]
        %v6509 = vld [vmem:[%s10 + $0x40] sm:$0xff]
        %v6510 = vld [vmem:[%s10 + $0x48] sm:$0xff]
        %v6511 = vld [vmem:[%s10 + $0x50] sm:$0xf]
        %v6512 = vld [vmem:[%s11] sm:$0x1]
        %v6514 = vlaneseq
        %v6515 = vshrl.u32 %v6514, 7
        %v6516 = vsub.s32 0, %v6515
        %v6517 = vrot.slane %v6512, %v6516
        %vm6519 = vcmask 687104
        %v6521 = vsel %vm6519, %v6500, 0
        %v6524 = vsel %vm2141, %v6511, 0
        %6526 = vmatprep.subr.mxu0 0.0
        %6527 = vmatpush1.msra.mxu0 %v6501
        %6528 = vmatprep.subr.mxu0 0.0
        %6529 = vmatpush1.msra.mxu0 %v6502
        %6530 = vmatprep.subr.mxu0 0.0
        %6531 = vmatpush1.msra.mxu0 %v6503
        %6532 = vmatprep.subr.mxu0 0.0
        %6533 = vmatpush1.msra.mxu0 %v6504
        %6534 = vmatprep.subr.mxu0 0.0
        %6535 = vmatpush1.msra.mxu0 %v6505
        %6536 = vmatprep.subr.mxu0 0.0
        %6537 = vmatpush1.msra.mxu0 %v6506
        %6538 = vmatprep.subr.mxu0 0.0
        %6539 = vmatpush1.msra.mxu0 %v6507
        %6540 = vmatprep.subr.mxu0 0.0
        %6541 = vmatpush1.msra.mxu0 %v6508
        %6542 = vmatprep.subr.mxu0 0.0
        %6543 = vmatpush1.msra.mxu0 %v6509
        %6544 = vmatprep.subr.mxu0 0.0
        %6545 = vmatpush1.msra.mxu0 %v6510
        %6546 = vmatprep.subr.mxu0 0.0
        %6547 = vmatpush1.msra.mxu0 %v6524
        %6548 = vmatprep.subr.mxu0 0.0
        %6549 = vmatpush1.msra.mxu0 0.0
        %6550 = vmatprep.subr.mxu0 0.0
        %6551 = vmatpush1.msra.mxu0 0.0
        %6552 = vmatprep.subr.mxu0 0.0
        %6553 = vmatpush1.msra.mxu0 0.0
        %6554 = vmatprep.subr.mxu0 0.0
        %6555 = vmatpush1.msra.mxu0 0.0
        %6556 = vmatprep.subr.mxu0 0.0
        %6557 = vmatpush1.msra.mxu0 0.0
        %6558 = vmatprep.subr.mxu0 0.0
        %6559 = vmatpush1.msra.mxu0 0.0
        %6560 = vmatprep.subr.mxu0 0.0
        %6561 = vmatpush1.msra.mxu0 0.0
        %6562 = vmatprep.subr.mxu0 0.0
        %6563 = vmatpush1.msra.mxu0 0.0
        %6564 = vmatprep.subr.mxu0 0.0
        %6565 = vmatpush1.msra.mxu0 0.0
        %6566 = vmatprep.subr.mxu0 0.0
        %6567 = vmatpush1.msra.mxu0 0.0
        %6568 = vmatprep.subr.mxu0 0.0
        %6569 = vmatpush1.msra.mxu0 0.0
        %6570 = vmatprep.subr.mxu0 0.0
        %6571 = vmatpush1.msra.mxu0 0.0
        %6572 = vmatprep.subr.mxu0 0.0
        %6573 = vmatpush1.msra.mxu0 0.0
        %6574 = vmatprep.subr.mxu0 0.0
        %6575 = vmatpush1.msra.mxu0 0.0
        %6576 = vmatprep.subr.mxu0 0.0
        %6577 = vmatpush1.msra.mxu0 0.0
        %6578 = vmatprep.subr.mxu0 0.0
        %6579 = vmatpush1.msra.mxu0 0.0
        %6580 = vmatprep.subr.mxu0 0.0
        %6581 = vmatpush1.msra.mxu0 0.0
        %6582 = vmatprep.subr.mxu0 0.0
        %6583 = vmatpush1.msra.mxu0 0.0
        %6584 = vmatprep.subr.mxu0 0.0
        %6585 = vmatpush1.msra.mxu0 0.0
        %6586 = vmatprep.subr.mxu0 0.0
        %6587 = vmatpush1.msra.mxu0 0.0
        %6588 = vmatprep.subr.mxu0 0.0
        %6589 = vmatpush1.msra.mxu0 0.0
        %6590 = vmatprep.mubr.f32.mxu0 0.0
        %6591 = vmatmul.mubr.f32.gmra.mrb[0].mxu0 %v6521
        %v6592 = vpop.f32.mrb[0].mxu0
        %v6593 = vadd.f32 %v6517, %v6592
        %v6594 = vpop.f32.mrb[0].mxu0
        %6595 = vdwg.mxu0
        %6596 = vst [vmem:[%s406] sm:$0xff] %v6593
        %s6597 = sand.u32 %s291, 1
        %s6598 = scalar_lea.sflag [#allocation3], %s6597
        %s6599 = sand.u32 %s291, 1
        %s6600 = smul.addr %s6599, 8
        %s6601 = scalar_lea.vmem [#allocation2], %s6600
        // Predicated region
        $region69: #{lenet5_forward.1} parent=67 // pred_check
          %p6602 = pneg %p301
        $region70: #{lenet5_forward.1} parent=67 // pred_check_branch
          %6604 = sbr.rel (%p6602) target = $region72
        $region71: #{lenet5_forward.1} parent=67 // pred_region
          %s6606 = ssub.s32 128, 128
          %6607 = vsyncadd %s6598, %s6606
          %s6608 = smul.addr %s26, 128
          %s6609 = scalar_lea.hbm %s12, %s6608
          %s6611 = sshll.u32 %s6601, 4
          %s6612 = int_to_ptr.vmem [resolvable:$true] %s6611
          %6614 = dma.vmem_to_hbm [thread:$0]  %s6612, 128, %s6609, %s6598
        $region72: #{lenet5_forward.1} parent=67 // pred_fallthru
          _
      $region68: #{lenet5_forward.1} parent=5 // pred_fallthru
        _
      %p6615 = scmp.le.s32.totalorder 2, %s21
      // Predicated region
      $region73: #{lenet5_forward.1} parent=5 // pred_check
        %p6616 = pneg %p6615
      $region74: #{lenet5_forward.1} parent=5 // pred_check_branch
        %6618 = sbr.rel (%p6616) target = $region76
      $region75: #{lenet5_forward.1} parent=5 // pred_region
        %s6619 = ssub.s32 %s21, 2
        // Predicated region
        $region77: #{lenet5_forward.1} parent=75 // pred_check
          %p6620 = pneg %p307
        $region78: #{lenet5_forward.1} parent=75 // pred_check_branch
          %6622 = sbr.rel (%p6620) target = $region80
        $region79: #{lenet5_forward.1} parent=75 // pred_region
          %s6623 = sand.u32 %s292, 1
          %s6624 = scalar_lea.sflag [#allocation3], %s6623
          %s6625 = sand.u32 %s292, 1
          %s6626 = smul.addr %s6625, 8
          %s6627 = scalar_lea.vmem [#allocation2], %s6626
          %6628 = dma.done %s6624, 128
        $region80: #{lenet5_forward.1} parent=75 // pred_fallthru
          _
      $region76: #{lenet5_forward.1} parent=5 // pred_fallthru
        _
    $region6: #{lenet5_forward.1} parent=1 // loop_footer
      %s25 = sadd.s32 1, %s21
    $region7: #{lenet5_forward.1} parent=1 // loop_footer_branch
      %20 = sbr.rel target = $region3
    $region8: #{lenet5_forward.1} parent=1 // loop_exit
      _
    %6629 = vsyncpa [#allocation3], 1
    %s6630 = scalar_lea.sflag [#allocation3], 1
    %6631 = vsyncpa %s6630, 1

</llo_original>
